<compile_context>
chip_gen: v7x
topology: tpu7x:2x2x1
jax: 0.10.0
libtpu: 0.0.40
codegen_flags: <defaults>
</compile_context>

<pallas_src>
import functools

import jax
import jax.numpy as jnp
from jax import lax
from jax.experimental import pallas as pl
from jax.experimental.pallas import tpu as pltpu


def _full_spec(shape):
    nd = len(shape)
    return pl.BlockSpec(shape, lambda b, _nd=nd: (0,) * _nd)


# ---------------------------------------------------------------------------
# Fused per-graph kernel: embeddings + L GatedGCN layers + edge MLP readout
# ---------------------------------------------------------------------------
def _fused_forward_kernel(*refs, n_layers, layer_dims, residual_flags,
                          batch_norm, bn_use_batch_stats, bn_eps,
                          n_nodes, hidden_dim, n_classes, d0h, d1):
    it = iter(refs)
    h_ref = next(it)                    # (1, N, in_dim)  f32   node coords
    e_ref = next(it)                    # (1, N, N)       f32   edge distances (dst on lanes)
    w_eh = next(it); b_eh = next(it)    # (in_dim, H) bf16, (1, H) f32
    w_ee = next(it); b_ee = next(it)    # (1, H) f32, (1, H) f32   (in_dim_edge == 1 -> VPU)
    layers = [tuple(next(it) for _ in range(12)) for _ in range(n_layers)]
    w0a = next(it); w0b = next(it); b0 = next(it)   # (out, d0h) bf16 x2, (1, d0h) f32
    w1 = next(it); b1 = next(it)                    # (d0h, d1) bf16, (1, d1) f32
    w2t = next(it); b2 = next(it)                   # (n_classes, d1) f32, (1, n_classes) f32
    y_ref = next(it)                                # OUTPUT (1, n_classes, N, N) f32

    N = n_nodes
    NN = N * N
    f32 = jnp.float32
    bf16 = jnp.bfloat16
    inv_E = 1.0 / float(N * (N - 1))                # number of real edges (complete, no loops)

    # complete-graph mask built in-kernel (no 128x lane-padded (N,N,1) adjacency input);
    # hoisted/cached once per channel width and reused by every layer.
    _mask_cache = {}

    def get_mask(d):
        if d not in _mask_cache:
            r = lax.broadcasted_iota(jnp.int32, (N, N, d), 0)
            c = lax.broadcasted_iota(jnp.int32, (N, N, d), 1)
            _mask_cache[d] = (r != c).astype(f32)
        return _mask_cache[d]

    # ---- input embeddings ---------------------------------------------------
    h0 = h_ref[0].astype(bf16)                                               # (N, in_dim)
    h = (jnp.dot(h0, w_eh[...], preferred_element_type=f32) + b_eh[...]).astype(bf16)

    # edge embedding (in_dim_edge == 1): VPU broadcast-multiply, no K=1 matmul
    e_dist = e_ref[0]                                                        # (N, N) f32
    e = (e_dist[:, :, None] * w_ee[...] + b_ee[...]).astype(bf16)            # (N, N, H)

    # ---- GatedGCN layers ----------------------------------------------------
    for li in range(n_layers):
        (w_node, b_node, w_C, b_C,
         g_h, bt_h, rm_h, rv_h,
         g_e, bt_e, rm_e, rv_e) = layers[li]
        in_d, out_d = layer_dims[li]
        maskH = get_mask(out_d)
        h_in, e_in = h, e

        # fused A|B|D|E projection -> lane-dense (N, 4*out_d), bf16 in / f32 acc
        hp = jnp.dot(h, w_node[...], preferred_element_type=f32) + b_node[...]
        Ah = hp[:, 0 * out_d:1 * out_d]
        Bh = hp[:, 1 * out_d:2 * out_d]
        Dh = hp[:, 2 * out_d:3 * out_d]
        Eh = hp[:, 3 * out_d:4 * out_d]

        Ce = (jnp.dot(e.reshape(NN, in_d), w_C[...], preferred_element_type=f32)
              + b_C[...]).reshape(N, N, out_d)

        # edge (i -> j):  e_ij = Ce_ij + Dh[src=i] + Eh[dst=j]
        e_pre = Ce + Dh[:, None, :] + Eh[None, :, :]
        sigma = jax.nn.sigmoid(e_pre) * maskH

        # per-dst aggregation over incoming edges = masked sum over the src axis
        num = jnp.sum(sigma * Bh[:, None, :], axis=0)        # (N, out_d)
        den = jnp.sum(sigma, axis=0)                         # (N, out_d)
        h_pre = Ah + num / (den + 1e-6)                      # exact division (parity)

        if batch_norm:
            if bn_use_batch_stats:
                mh = jnp.mean(h_pre, axis=0, keepdims=True)
                vh = jnp.maximum(
                    jnp.mean(h_pre * h_pre, axis=0, keepdims=True) - mh * mh, 0.0)
                em = e_pre * maskH                           # reused for both stats
                se = jnp.sum(jnp.sum(em, axis=0, keepdims=True), axis=1, keepdims=True)
                se2 = jnp.sum(jnp.sum(e_pre * em, axis=0, keepdims=True),
                              axis=1, keepdims=True)
                me = se * inv_E
                ve = jnp.maximum(se2 * inv_E - me * me, 0.0)
            else:  # eval mode: running statistics
                mh, vh = rm_h[...], rv_h[...]
                me, ve = rm_e[...], rv_e[...]
            h_n = (h_pre - mh) * lax.rsqrt(vh + bn_eps) * g_h[...] + bt_h[...]
            e_n = (e_pre - me) * lax.rsqrt(ve + bn_eps) * g_e[...] + bt_e[...]
        else:
            h_n, e_n = h_pre, e_pre

        h_n = jnp.maximum(h_n, 0.0)
        e_n = jnp.maximum(e_n, 0.0)
        if residual_flags[li]:              # only when in_dim == out_dim (like the reference)
            h_n = h_in + h_n
            e_n = e_in + e_n
        h = h_n.astype(bf16)
        e = e_n.astype(bf16)

    # ---- per-edge MLP readout: MLP(concat[h_src, h_dst]) --------------------
    p = jnp.dot(h, w0a[...], preferred_element_type=f32)                     # (N, d0h)
    q = jnp.dot(h, w0b[...], preferred_element_type=f32)                     # (N, d0h)
    y0 = jnp.maximum(p[:, None, :] + q[None, :, :] + b0[...], 0.0)           # (N, N, d0h)
    y1 = jnp.maximum(
        jnp.dot(y0.reshape(NN, d0h).astype(jnp.bfloat16), w1[...],
                preferred_element_type=f32) + b1[...], 0.0)                  # (NN, d1)
    y1 = y1.reshape(N, N, d1)

    # final projection per class as a VPU lane-contraction -> class-major (n_classes, N, N)
    # planes with dst on lanes (no 64x-padded (NN, 128) output slab).
    w2_all = w2t[...]                                                        # (n_classes, d1)
    b2_all = b2[...]                                                         # (1, n_classes)
    for c in range(n_classes):
        plane = jnp.sum(y1 * w2_all[c:c + 1, :], axis=-1) + b2_all[:, c:c + 1]
        y_ref[0, c] = plane


# ---------------------------------------------------------------------------
# Parameter construction (deterministic, synthetic; matmul weights bf16, pre-transposed)
# ---------------------------------------------------------------------------
def make_params(key, in_dim, in_dim_edge, hidden_dim, out_dim, n_classes, n_layers):
    assert in_dim_edge == 1, "TSP edge feature is the scalar distance (in_dim_edge == 1)"
    keys = iter(jax.random.split(key, 128))
    bf16 = jnp.bfloat16

    def lin(in_d, out_d, scale=0.1):
        w = scale * jax.random.normal(next(keys), (in_d, out_d), jnp.float32)  # (in, out)
        b = 0.01 * jax.random.normal(next(keys), (1, out_d), jnp.float32)
        return w, b

    w_eh, b_eh = lin(in_dim, hidden_dim)
    w_ee, b_ee = lin(in_dim_edge, hidden_dim)
    params = {"emb_h": (w_eh.astype(bf16), b_eh),
              "emb_e": (w_ee, b_ee)}          # edge embedding stays f32 (VPU path)

    layers = []
    dims = [hidden_dim] * (n_layers - 1) + [out_dim]
    in_d = hidden_dim
    for od in dims:
        ws, bs = [], []
        for _ in range(4):                     # A, B, D, E fused (lane-dense 4*od output)
            w, b = lin(in_d, od)
            ws.append(w); bs.append(b)
        w_C, b_C = lin(in_d, od)
        layers.append({
            "w_node": jnp.concatenate(ws, axis=1).astype(bf16),   # (in_d, 4*od)
            "b_node": jnp.concatenate(bs, axis=1),                # (1, 4*od)
            "w_C": w_C.astype(bf16), "b_C": b_C,
            # BatchNorm1d params + running stats (defaults)
            "bn_h_g": jnp.ones((1, od), jnp.float32),
            "bn_h_b": jnp.zeros((1, od), jnp.float32),
            "bn_h_m": jnp.zeros((1, od), jnp.float32),
            "bn_h_v": jnp.ones((1, od), jnp.float32),
            "bn_e_g": jnp.ones((1, od), jnp.float32),
            "bn_e_b": jnp.zeros((1, od), jnp.float32),
            "bn_e_m": jnp.zeros((1, od), jnp.float32),
            "bn_e_v": jnp.ones((1, od), jnp.float32),
        })
        in_d = od
    params["layers"] = layers

    # MLPReadout(2*out_dim, n_classes, L=2): 2H -> H -> H/2 -> n_classes
    d0 = 2 * out_dim
    d0h, d1 = d0 // 2, d0 // 4
    w0, b0 = lin(d0, d0h)
    params["mlp_w0a"] = w0[:out_dim].astype(bf16)   # applied to h_src
    params["mlp_w0b"] = w0[out_dim:].astype(bf16)   # applied to h_dst
    params["mlp_b0"] = b0                           # (1, d0h)
    w1, b1 = lin(d0h, d1)
    params["mlp_w1"], params["mlp_b1"] = w1.astype(bf16), b1
    w2, b2 = lin(d1, n_classes)
    params["mlp_w2t"] = w2.T                        # (n_classes, d1) f32 (VPU contraction)
    params["mlp_b2"] = b2                           # (1, n_classes)
    return params


# ---------------------------------------------------------------------------
# Forward pass wrapper (GatedGCNNet.forward), batched over graphs
# ---------------------------------------------------------------------------
def gated_gcn_net_forward(params, h_nodes, e_dist, *, edge_feat=True, batch_norm=True,
                          residual=True, bn_use_batch_stats=True, n_classes=2):
    if h_nodes.ndim == 2:          # allow a single unbatched graph
        h_nodes, e_dist = h_nodes[None], e_dist[None]
    B, N, in_dim = h_nodes.shape
    assert e_dist.shape == (B, N, N), "edge feature must be the (B, N, N) distance matrix"

    h_b = h_nodes.astype(jnp.float32)
    e_b = e_dist.astype(jnp.float32)
    if not edge_feat:
        e_b = jnp.ones_like(e_b)

    hidden_dim = params["emb_h"][0].shape[1]
    layer_dims = tuple((lp["w_C"].shape[0], lp["w_C"].shape[1]) for lp in params["layers"])
    residual_flags = tuple(residual and (i == o) for (i, o) in layer_dims)
    d0h = params["mlp_w0a"].shape[1]
    d1 = params["mlp_w1"].shape[1]
    assert params["mlp_w2t"].shape[0] == n_classes

    args = [h_b, e_b,
            params["emb_h"][0], params["emb_h"][1],
            params["emb_e"][0], params["emb_e"][1]]
    for lp in params["layers"]:
        args += [lp["w_node"], lp["b_node"], lp["w_C"], lp["b_C"],
                 lp["bn_h_g"], lp["bn_h_b"], lp["bn_h_m"], lp["bn_h_v"],
                 lp["bn_e_g"], lp["bn_e_b"], lp["bn_e_m"], lp["bn_e_v"]]
    args += [params["mlp_w0a"], params["mlp_w0b"], params["mlp_b0"],
             params["mlp_w1"], params["mlp_b1"],
             params["mlp_w2t"], params["mlp_b2"]]

    in_specs = [pl.BlockSpec((1, N, in_dim), lambda b: (b, 0, 0)),
                pl.BlockSpec((1, N, N), lambda b: (b, 0, 0))]
    in_specs += [_full_spec(a.shape) for a in args[2:]]
    out_specs = pl.BlockSpec((1, n_classes, N, N), lambda b: (b, 0, 0, 0))

    # generation-aware VMEM budget: ~3/4 of physical capacity (~48 MiB v7x, ~96 MiB v5e/v6e)
    try:
        vmem_cap = int(pltpu.get_tpu_info().vmem_capacity_bytes)
    except Exception:
        vmem_cap = 128 * 1024 * 1024
    vmem_limit = max(32 * 1024 * 1024, (vmem_cap * 3) // 4)

    kernel = functools.partial(
        _fused_forward_kernel,
        n_layers=len(params["layers"]), layer_dims=layer_dims,
        residual_flags=residual_flags, batch_norm=batch_norm,
        bn_use_batch_stats=bn_use_batch_stats, bn_eps=1e-5,
        n_nodes=N, hidden_dim=hidden_dim, n_classes=n_classes, d0h=d0h, d1=d1)

    y_planes = pl.pallas_call(
        kernel,
        out_shape=jax.ShapeDtypeStruct((B, n_classes, N, N), jnp.float32),
        grid=(B,),                                        # one graph per step, megacore-parallel
        in_specs=in_specs,
        out_specs=out_specs,
        compiler_params=pltpu.CompilerParams(
            dimension_semantics=("parallel",),
            vmem_limit_bytes=vmem_limit),
    )(*args)

    y_dense = jnp.transpose(y_planes, (0, 2, 3, 1))       # (B, N_src, N_dst, n_classes)

    # TODO(synk): beamsearch_tour_nodes_shortest / mean_tour_len_nodes are sequential
    # host-side beam-search algorithms with no clean Pallas equivalent; 0.0 placeholder.
    pred_tour_len = jnp.float32(0.0)
    return y_dense, pred_tour_len


# ---------------------------------------------------------------------------
# Pure-JAX f32 reference (same dense formulation) for a loose numerical check
# ---------------------------------------------------------------------------
def _reference_forward(params, h_nodes, e_dist, *, batch_norm=True, residual=True,
                       bn_use_batch_stats=True, n_classes=2):
    B, N, _ = h_nodes.shape
    f32 = jnp.float32
    mask = (1.0 - jnp.eye(N, dtype=f32))[:, :, None]
    inv_E = 1.0 / (N * (N - 1))
    outs = []
    for b in range(B):
        h = h_nodes[b].astype(f32)
        ed = e_dist[b].astype(f32)
        w_eh, b_eh = params["emb_h"]
        w_ee, b_ee = params["emb_e"]
        h = h @ w_eh.astype(f32) + b_eh
        e = ed[:, :, None] * w_ee + b_ee
        for lp in params["layers"]:
            in_d, out_d = lp["w_C"].shape
            h_in, e_in = h, e
            hp = h @ lp["w_node"].astype(f32) + lp["b_node"]
            Ah, Bh, Dh, Eh = (hp[:, i * out_d:(i + 1) * out_d] for i in range(4))
            Ce = (e.reshape(N * N, in_d) @ lp["w_C"].astype(f32)
                  + lp["b_C"]).reshape(N, N, out_d)
            e_pre = Ce + Dh[:, None, :] + Eh[None, :, :]
            sigma = jax.nn.sigmoid(e_pre) * mask
            num = jnp.sum(sigma * Bh[:, None, :], axis=0)
            den = jnp.sum(sigma, axis=0)
            h_pre = Ah + num / (den + 1e-6)
            if batch_norm:
                if bn_use_batch_stats:
                    mh = h_pre.mean(0, keepdims=True)
                    vh = jnp.maximum((h_pre * h_pre).mean(0, keepdims=True) - mh * mh, 0.0)
                    em = e_pre * mask
                    se = em.sum((0, 1)); se2 = (e_pre * em).sum((0, 1))
                    me = se * inv_E
                    ve = jnp.maximum(se2 * inv_E - me * me, 0.0)
                else:
                    mh, vh = lp["bn_h_m"], lp["bn_h_v"]
                    me, ve = lp["bn_e_m"], lp["bn_e_v"]
                h_n = (h_pre - mh) * jax.lax.rsqrt(vh + 1e-5) * lp["bn_h_g"] + lp["bn_h_b"]
                e_n = (e_pre - me) * jax.lax.rsqrt(ve + 1e-5) * lp["bn_e_g"] + lp["bn_e_b"]
            else:
                h_n, e_n = h_pre, e_pre
            h_n = jax.nn.relu(h_n); e_n = jax.nn.relu(e_n)
            if residual and in_d == out_d:
                h_n, e_n = h_in + h_n, e_in + e_n
            h, e = h_n, e_n
        p = h @ params["mlp_w0a"].astype(f32)
        q = h @ params["mlp_w0b"].astype(f32)
        y0 = jax.nn.relu(p[:, None, :] + q[None, :, :] + params["mlp_b0"])
        y1 = jax.nn.relu(y0.reshape(N * N, -1) @ params["mlp_w1"].astype(f32)
                         + params["mlp_b1"])
        y2 = y1 @ params["mlp_w2t"].T + params["mlp_b2"]
        outs.append(y2.reshape(N, N, n_classes))
    return jnp.stack(outs)


# ---------------------------------------------------------------------------
if __name__ == "__main__":
    key = jax.random.PRNGKey(0)
    k_coord, k_param = jax.random.split(key)

    # Small synthetic batch of TSP instances: complete graphs without self loops.
    B, N = 4, 16
    in_dim, in_dim_edge = 2, 1          # node = 2-D coordinates, edge = euclidean distance
    hidden_dim = out_dim = 32
    n_classes, n_layers = 2, 2

    coords = jax.random.uniform(k_coord, (B, N, in_dim), jnp.float32)
    diff = coords[:, :, None, :] - coords[:, None, :, :]
    dist = jnp.sqrt(jnp.sum(diff * diff, axis=-1))          # (B, N, N) distance matrices

    params = make_params(k_param, in_dim, in_dim_edge, hidden_dim, out_dim,
                         n_classes, n_layers)

    y_dense, pred_tour_len = gated_gcn_net_forward(
        params, coords, dist,
        edge_feat=True, batch_norm=True, residual=True,
        bn_use_batch_stats=True, n_classes=n_classes)
    jax.block_until_ready(y_dense)
    jax.block_until_ready(pred_tour_len)

    # edge-list-form predictions (row-major (src, dst), self loops dropped), like g.edata['e']
    adj = 1.0 - jnp.eye(N, dtype=jnp.float32)
    src, dst = jnp.nonzero(adj, size=N * (N - 1))
    y_pred_edges = y_dense[0][src, dst]
    jax.block_until_ready(y_pred_edges)

    # loose check against a pure-JAX f32 reference (kernel stores activations in bf16)
    y_ref = _reference_forward(params, coords, dist,
                               batch_norm=True, residual=True,
                               bn_use_batch_stats=True, n_classes=n_classes)
    max_diff = float(jnp.max(jnp.abs(y_dense - y_ref)))

    assert y_dense.shape == (B, N, N, n_classes)
    assert y_pred_edges.shape == (N * (N - 1), n_classes)
    assert bool(jnp.all(jnp.isfinite(y_dense)))
    assert max_diff < 0.15, f"kernel/reference mismatch: {max_diff}"
    print("KERNEL_OK")
</pallas_src>

<mosaic_0001>
module attributes {stable_mosaic.version = 11 : i64} {
  func.func @_fused_forward_kernel(%arg0: i32, %arg1: memref<1x16x2xf32, #tpu.memory_space<vmem>>, %arg2: memref<1x16x16xf32, #tpu.memory_space<vmem>>, %arg3: memref<2x32xbf16, #tpu.memory_space<vmem>>, %arg4: memref<1x32xf32, #tpu.memory_space<vmem>>, %arg5: memref<1x32xf32, #tpu.memory_space<vmem>>, %arg6: memref<1x32xf32, #tpu.memory_space<vmem>>, %arg7: memref<32x128xbf16, #tpu.memory_space<vmem>>, %arg8: memref<1x128xf32, #tpu.memory_space<vmem>>, %arg9: memref<32x32xbf16, #tpu.memory_space<vmem>>, %arg10: memref<1x32xf32, #tpu.memory_space<vmem>>, %arg11: memref<1x32xf32, #tpu.memory_space<vmem>>, %arg12: memref<1x32xf32, #tpu.memory_space<vmem>>, %arg13: memref<1x32xf32, #tpu.memory_space<vmem>>, %arg14: memref<1x32xf32, #tpu.memory_space<vmem>>, %arg15: memref<1x32xf32, #tpu.memory_space<vmem>>, %arg16: memref<1x32xf32, #tpu.memory_space<vmem>>, %arg17: memref<1x32xf32, #tpu.memory_space<vmem>>, %arg18: memref<1x32xf32, #tpu.memory_space<vmem>>, %arg19: memref<32x128xbf16, #tpu.memory_space<vmem>>, %arg20: memref<1x128xf32, #tpu.memory_space<vmem>>, %arg21: memref<32x32xbf16, #tpu.memory_space<vmem>>, %arg22: memref<1x32xf32, #tpu.memory_space<vmem>>, %arg23: memref<1x32xf32, #tpu.memory_space<vmem>>, %arg24: memref<1x32xf32, #tpu.memory_space<vmem>>, %arg25: memref<1x32xf32, #tpu.memory_space<vmem>>, %arg26: memref<1x32xf32, #tpu.memory_space<vmem>>, %arg27: memref<1x32xf32, #tpu.memory_space<vmem>>, %arg28: memref<1x32xf32, #tpu.memory_space<vmem>>, %arg29: memref<1x32xf32, #tpu.memory_space<vmem>>, %arg30: memref<1x32xf32, #tpu.memory_space<vmem>>, %arg31: memref<32x32xbf16, #tpu.memory_space<vmem>>, %arg32: memref<32x32xbf16, #tpu.memory_space<vmem>>, %arg33: memref<1x32xf32, #tpu.memory_space<vmem>>, %arg34: memref<32x16xbf16, #tpu.memory_space<vmem>>, %arg35: memref<1x16xf32, #tpu.memory_space<vmem>>, %arg36: memref<2x16xf32, #tpu.memory_space<vmem>>, %arg37: memref<1x2xf32, #tpu.memory_space<vmem>>, %arg38: memref<1x2x16x16xf32, #tpu.memory_space<vmem>>) attributes {dimension_semantics = [#tpu.dimension_semantics<parallel>], iteration_bounds = array<i64: 4>, scalar_prefetch = 0 : i64, scratch_operands = 0 : i64, tpu.core_type = #tpu.core_type<tc>, window_params = [{transform_indices = @transform_0, window_bounds = array<i64: 1, 16, 2>}, {transform_indices = @transform_1, window_bounds = array<i64: 1, 16, 16>}, {pipeline_mode = #tpu.pipeline_mode<synchronous>, transform_indices = @transform_2, window_bounds = array<i64: 2, 32>}, {pipeline_mode = #tpu.pipeline_mode<synchronous>, transform_indices = @transform_3, window_bounds = array<i64: 1, 32>}, {pipeline_mode = #tpu.pipeline_mode<synchronous>, transform_indices = @transform_4, window_bounds = array<i64: 1, 32>}, {pipeline_mode = #tpu.pipeline_mode<synchronous>, transform_indices = @transform_5, window_bounds = array<i64: 1, 32>}, {pipeline_mode = #tpu.pipeline_mode<synchronous>, transform_indices = @transform_6, window_bounds = array<i64: 32, 128>}, {pipeline_mode = #tpu.pipeline_mode<synchronous>, transform_indices = @transform_7, window_bounds = array<i64: 1, 128>}, {pipeline_mode = #tpu.pipeline_mode<synchronous>, transform_indices = @transform_8, window_bounds = array<i64: 32, 32>}, {pipeline_mode = #tpu.pipeline_mode<synchronous>, transform_indices = @transform_9, window_bounds = array<i64: 1, 32>}, {pipeline_mode = #tpu.pipeline_mode<synchronous>, transform_indices = @transform_10, window_bounds = array<i64: 1, 32>}, {pipeline_mode = #tpu.pipeline_mode<synchronous>, transform_indices = @transform_11, window_bounds = array<i64: 1, 32>}, {pipeline_mode = #tpu.pipeline_mode<synchronous>, transform_indices = @transform_12, window_bounds = array<i64: 1, 32>}, {pipeline_mode = #tpu.pipeline_mode<synchronous>, transform_indices = @transform_13, window_bounds = array<i64: 1, 32>}, {pipeline_mode = #tpu.pipeline_mode<synchronous>, transform_indices = @transform_14, window_bounds = array<i64: 1, 32>}, {pipeline_mode = #tpu.pipeline_mode<synchronous>, transform_indices = @transform_15, window_bounds = array<i64: 1, 32>}, {pipeline_mode = #tpu.pipeline_mode<synchronous>, transform_indices = @transform_16, window_bounds = array<i64: 1, 32>}, {pipeline_mode = #tpu.pipeline_mode<synchronous>, transform_indices = @transform_17, window_bounds = array<i64: 1, 32>}, {pipeline_mode = #tpu.pipeline_mode<synchronous>, transform_indices = @transform_18, window_bounds = array<i64: 32, 128>}, {pipeline_mode = #tpu.pipeline_mode<synchronous>, transform_indices = @transform_19, window_bounds = array<i64: 1, 128>}, {pipeline_mode = #tpu.pipeline_mode<synchronous>, transform_indices = @transform_20, window_bounds = array<i64: 32, 32>}, {pipeline_mode = #tpu.pipeline_mode<synchronous>, transform_indices = @transform_21, window_bounds = array<i64: 1, 32>}, {pipeline_mode = #tpu.pipeline_mode<synchronous>, transform_indices = @transform_22, window_bounds = array<i64: 1, 32>}, {pipeline_mode = #tpu.pipeline_mode<synchronous>, transform_indices = @transform_23, window_bounds = array<i64: 1, 32>}, {pipeline_mode = #tpu.pipeline_mode<synchronous>, transform_indices = @transform_24, window_bounds = array<i64: 1, 32>}, {pipeline_mode = #tpu.pipeline_mode<synchronous>, transform_indices = @transform_25, window_bounds = array<i64: 1, 32>}, {pipeline_mode = #tpu.pipeline_mode<synchronous>, transform_indices = @transform_26, window_bounds = array<i64: 1, 32>}, {pipeline_mode = #tpu.pipeline_mode<synchronous>, transform_indices = @transform_27, window_bounds = array<i64: 1, 32>}, {pipeline_mode = #tpu.pipeline_mode<synchronous>, transform_indices = @transform_28, window_bounds = array<i64: 1, 32>}, {pipeline_mode = #tpu.pipeline_mode<synchronous>, transform_indices = @transform_29, window_bounds = array<i64: 1, 32>}, {pipeline_mode = #tpu.pipeline_mode<synchronous>, transform_indices = @transform_30, window_bounds = array<i64: 32, 32>}, {pipeline_mode = #tpu.pipeline_mode<synchronous>, transform_indices = @transform_31, window_bounds = array<i64: 32, 32>}, {pipeline_mode = #tpu.pipeline_mode<synchronous>, transform_indices = @transform_32, window_bounds = array<i64: 1, 32>}, {pipeline_mode = #tpu.pipeline_mode<synchronous>, transform_indices = @transform_33, window_bounds = array<i64: 32, 16>}, {pipeline_mode = #tpu.pipeline_mode<synchronous>, transform_indices = @transform_34, window_bounds = array<i64: 1, 16>}, {pipeline_mode = #tpu.pipeline_mode<synchronous>, transform_indices = @transform_35, window_bounds = array<i64: 2, 16>}, {pipeline_mode = #tpu.pipeline_mode<synchronous>, transform_indices = @transform_36, window_bounds = array<i64: 1, 2>}, {transform_indices = @transform_37, window_bounds = array<i64: 1, 2, 16, 16>}]} {
    %c0 = arith.constant 0 : index
    %c0_0 = arith.constant 0 : index
    %c0_1 = arith.constant 0 : index
    %0 = vector.load %arg1[%c0, %c0_0, %c0_1] : memref<1x16x2xf32, #tpu.memory_space<vmem>>, vector<1x16x2xf32>
    %1 = vector.shape_cast %0 : vector<1x16x2xf32> to vector<16x2xf32>
    %2 = arith.truncf %1 : vector<16x2xf32> to vector<16x2xbf16>
    %c0_2 = arith.constant 0 : index
    %c0_3 = arith.constant 0 : index
    %3 = vector.load %arg3[%c0_2, %c0_3] : memref<2x32xbf16, #tpu.memory_space<vmem>>, vector<2x32xbf16>
    %cst = arith.constant dense<0.000000e+00> : vector<16x32xf32>
    %4 = tpu.matmul %2, %3, %cst {dimension_numbers = #tpu.dot_dimension_numbers<[1], [0], [0], [1], [0, 0, 1, 1], [], []>} : vector<16x2xbf16>, vector<2x32xbf16>, vector<16x32xf32> -> vector<16x32xf32>
    %c0_4 = arith.constant 0 : index
    %c0_5 = arith.constant 0 : index
    %5 = vector.load %arg4[%c0_4, %c0_5] : memref<1x32xf32, #tpu.memory_space<vmem>>, vector<1x32xf32>
    %6 = vector.broadcast %5 : vector<1x32xf32> to vector<16x32xf32>
    %7 = arith.addf %4, %6 : vector<16x32xf32>
    %8 = arith.truncf %7 : vector<16x32xf32> to vector<16x32xbf16>
    %c0_6 = arith.constant 0 : index
    %c0_7 = arith.constant 0 : index
    %c0_8 = arith.constant 0 : index
    %9 = vector.load %arg2[%c0_6, %c0_7, %c0_8] : memref<1x16x16xf32, #tpu.memory_space<vmem>>, vector<1x16x16xf32>
    %10 = vector.shape_cast %9 : vector<1x16x16xf32> to vector<16x16xf32>
    %11 = vector.shape_cast %10 : vector<16x16xf32> to vector<16x16x1xf32>
    %c0_9 = arith.constant 0 : index
    %c0_10 = arith.constant 0 : index
    %12 = vector.load %arg5[%c0_9, %c0_10] : memref<1x32xf32, #tpu.memory_space<vmem>>, vector<1x32xf32>
    %13 = vector.shape_cast %12 : vector<1x32xf32> to vector<1x1x32xf32>
    %14 = vector.broadcast %11 : vector<16x16x1xf32> to vector<16x16x32xf32>
    %15 = vector.broadcast %13 : vector<1x1x32xf32> to vector<16x16x32xf32>
    %16 = arith.mulf %14, %15 : vector<16x16x32xf32>
    %c0_11 = arith.constant 0 : index
    %c0_12 = arith.constant 0 : index
    %17 = vector.load %arg6[%c0_11, %c0_12] : memref<1x32xf32, #tpu.memory_space<vmem>>, vector<1x32xf32>
    %18 = vector.shape_cast %17 : vector<1x32xf32> to vector<1x1x32xf32>
    %19 = vector.broadcast %18 : vector<1x1x32xf32> to vector<16x16x32xf32>
    %20 = arith.addf %16, %19 : vector<16x16x32xf32>
    %21 = arith.truncf %20 : vector<16x16x32xf32> to vector<16x16x32xbf16>
    %22 = tpu.iota {dimensions = array<i32: 0>} : vector<16x16x32xi32>
    %23 = tpu.iota {dimensions = array<i32: 1>} : vector<16x16x32xi32>
    %24 = arith.cmpi ne, %22, %23 : vector<16x16x32xi32>
    %25 = arith.extui %24 : vector<16x16x32xi1> to vector<16x16x32xi32>
    %26 = arith.sitofp %25 : vector<16x16x32xi32> to vector<16x16x32xf32>
    %c0_13 = arith.constant 0 : index
    %c0_14 = arith.constant 0 : index
    %27 = vector.load %arg7[%c0_13, %c0_14] : memref<32x128xbf16, #tpu.memory_space<vmem>>, vector<32x128xbf16>
    %cst_15 = arith.constant dense<0.000000e+00> : vector<16x128xf32>
    %28 = tpu.matmul %8, %27, %cst_15 {dimension_numbers = #tpu.dot_dimension_numbers<[1], [0], [0], [1], [0, 0, 1, 1], [], []>} : vector<16x32xbf16>, vector<32x128xbf16>, vector<16x128xf32> -> vector<16x128xf32>
    %c0_16 = arith.constant 0 : index
    %c0_17 = arith.constant 0 : index
    %29 = vector.load %arg8[%c0_16, %c0_17] : memref<1x128xf32, #tpu.memory_space<vmem>>, vector<1x128xf32>
    %30 = vector.broadcast %29 : vector<1x128xf32> to vector<16x128xf32>
    %31 = arith.addf %28, %30 : vector<16x128xf32>
    %32 = vector.extract_strided_slice %31 {offsets = [0, 0], sizes = [16, 32], strides = [1, 1]} : vector<16x128xf32> to vector<16x32xf32>
    %33 = vector.extract_strided_slice %31 {offsets = [0, 32], sizes = [16, 32], strides = [1, 1]} : vector<16x128xf32> to vector<16x32xf32>
    %34 = vector.extract_strided_slice %31 {offsets = [0, 64], sizes = [16, 32], strides = [1, 1]} : vector<16x128xf32> to vector<16x32xf32>
    %35 = vector.extract_strided_slice %31 {offsets = [0, 96], sizes = [16, 32], strides = [1, 1]} : vector<16x128xf32> to vector<16x32xf32>
    %36 = vector.shape_cast %21 : vector<16x16x32xbf16> to vector<256x32xbf16>
    %c0_18 = arith.constant 0 : index
    %c0_19 = arith.constant 0 : index
    %37 = vector.load %arg9[%c0_18, %c0_19] : memref<32x32xbf16, #tpu.memory_space<vmem>>, vector<32x32xbf16>
    %cst_20 = arith.constant dense<0.000000e+00> : vector<256x32xf32>
    %38 = tpu.matmul %36, %37, %cst_20 {dimension_numbers = #tpu.dot_dimension_numbers<[1], [0], [0], [1], [0, 0, 1, 1], [], []>} : vector<256x32xbf16>, vector<32x32xbf16>, vector<256x32xf32> -> vector<256x32xf32>
    %c0_21 = arith.constant 0 : index
    %c0_22 = arith.constant 0 : index
    %39 = vector.load %arg10[%c0_21, %c0_22] : memref<1x32xf32, #tpu.memory_space<vmem>>, vector<1x32xf32>
    %40 = vector.broadcast %39 : vector<1x32xf32> to vector<256x32xf32>
    %41 = arith.addf %38, %40 : vector<256x32xf32>
    %42 = vector.shape_cast %41 : vector<256x32xf32> to vector<16x16x32xf32>
    %43 = vector.shape_cast %34 : vector<16x32xf32> to vector<16x1x32xf32>
    %44 = vector.broadcast %43 : vector<16x1x32xf32> to vector<16x16x32xf32>
    %45 = arith.addf %42, %44 : vector<16x16x32xf32>
    %46 = vector.shape_cast %35 : vector<16x32xf32> to vector<1x16x32xf32>
    %47 = vector.broadcast %46 : vector<1x16x32xf32> to vector<16x16x32xf32>
    %48 = arith.addf %45, %47 : vector<16x16x32xf32>
    %49 = arith.negf %48 : vector<16x16x32xf32>
    %50 = math.exp %49 : vector<16x16x32xf32>
    %cst_23 = arith.constant 1.000000e+00 : f32
    %51 = vector.broadcast %cst_23 : f32 to vector<16x16x32xf32>
    %52 = arith.addf %51, %50 : vector<16x16x32xf32>
    %53 = arith.divf %51, %52 : vector<16x16x32xf32>
    %54 = arith.mulf %53, %26 : vector<16x16x32xf32>
    %55 = vector.shape_cast %33 : vector<16x32xf32> to vector<16x1x32xf32>
    %56 = vector.broadcast %55 : vector<16x1x32xf32> to vector<16x16x32xf32>
    %57 = arith.mulf %54, %56 : vector<16x16x32xf32>
    %cst_24 = arith.constant dense<0.000000e+00> : vector<16x32xf32>
    %58 = vector.multi_reduction <add>, %57, %cst_24 [0] : vector<16x16x32xf32> to vector<16x32xf32>
    %cst_25 = arith.constant dense<0.000000e+00> : vector<16x32xf32>
    %59 = vector.multi_reduction <add>, %54, %cst_25 [0] : vector<16x16x32xf32> to vector<16x32xf32>
    %cst_26 = arith.constant 9.99999997E-7 : f32
    %60 = vector.broadcast %cst_26 : f32 to vector<16x32xf32>
    %61 = arith.addf %59, %60 : vector<16x32xf32>
    %62 = arith.divf %58, %61 : vector<16x32xf32>
    %63 = arith.addf %32, %62 : vector<16x32xf32>
    %cst_27 = arith.constant dense<0.000000e+00> : vector<32xf32>
    %64 = vector.multi_reduction <add>, %63, %cst_27 [0] : vector<16x32xf32> to vector<32xf32>
    %65 = vector.shape_cast %64 : vector<32xf32> to vector<1x32xf32>
    %cst_28 = arith.constant 1.600000e+01 : f32
    %66 = vector.broadcast %cst_28 : f32 to vector<1x32xf32>
    %67 = arith.divf %65, %66 : vector<1x32xf32>
    %68 = arith.mulf %63, %63 : vector<16x32xf32>
    %cst_29 = arith.constant dense<0.000000e+00> : vector<32xf32>
    %69 = vector.multi_reduction <add>, %68, %cst_29 [0] : vector<16x32xf32> to vector<32xf32>
    %70 = vector.shape_cast %69 : vector<32xf32> to vector<1x32xf32>
    %cst_30 = arith.constant 1.600000e+01 : f32
    %71 = vector.broadcast %cst_30 : f32 to vector<1x32xf32>
    %72 = arith.divf %70, %71 : vector<1x32xf32>
    %73 = arith.mulf %67, %67 : vector<1x32xf32>
    %74 = arith.subf %72, %73 : vector<1x32xf32>
    %cst_31 = arith.constant 0.000000e+00 : f32
    %75 = vector.broadcast %cst_31 : f32 to vector<1x32xf32>
    %76 = arith.maximumf %74, %75 : vector<1x32xf32>
    %77 = arith.mulf %48, %26 : vector<16x16x32xf32>
    %cst_32 = arith.constant dense<0.000000e+00> : vector<16x32xf32>
    %78 = vector.multi_reduction <add>, %77, %cst_32 [0] : vector<16x16x32xf32> to vector<16x32xf32>
    %79 = vector.shape_cast %78 : vector<16x32xf32> to vector<1x16x32xf32>
    %cst_33 = arith.constant dense<0.000000e+00> : vector<1x32xf32>
    %80 = vector.multi_reduction <add>, %79, %cst_33 [1] : vector<1x16x32xf32> to vector<1x32xf32>
    %81 = vector.shape_cast %80 : vector<1x32xf32> to vector<1x1x32xf32>
    %82 = arith.mulf %48, %77 : vector<16x16x32xf32>
    %cst_34 = arith.constant dense<0.000000e+00> : vector<16x32xf32>
    %83 = vector.multi_reduction <add>, %82, %cst_34 [0] : vector<16x16x32xf32> to vector<16x32xf32>
    %84 = vector.shape_cast %83 : vector<16x32xf32> to vector<1x16x32xf32>
    %cst_35 = arith.constant dense<0.000000e+00> : vector<1x32xf32>
    %85 = vector.multi_reduction <add>, %84, %cst_35 [1] : vector<1x16x32xf32> to vector<1x32xf32>
    %86 = vector.shape_cast %85 : vector<1x32xf32> to vector<1x1x32xf32>
    %cst_36 = arith.constant 0.00416666688 : f32
    %87 = vector.broadcast %cst_36 : f32 to vector<1x1x32xf32>
    %88 = arith.mulf %81, %87 : vector<1x1x32xf32>
    %cst_37 = arith.constant 0.00416666688 : f32
    %89 = vector.broadcast %cst_37 : f32 to vector<1x1x32xf32>
    %90 = arith.mulf %86, %89 : vector<1x1x32xf32>
    %91 = arith.mulf %88, %88 : vector<1x1x32xf32>
    %92 = arith.subf %90, %91 : vector<1x1x32xf32>
    %cst_38 = arith.constant 0.000000e+00 : f32
    %93 = vector.broadcast %cst_38 : f32 to vector<1x1x32xf32>
    %94 = arith.maximumf %92, %93 : vector<1x1x32xf32>
    %95 = vector.broadcast %67 : vector<1x32xf32> to vector<16x32xf32>
    %96 = arith.subf %63, %95 : vector<16x32xf32>
    %cst_39 = arith.constant 9.99999974E-6 : f32
    %97 = vector.broadcast %cst_39 : f32 to vector<1x32xf32>
    %98 = arith.addf %76, %97 : vector<1x32xf32>
    %99 = math.rsqrt %98 : vector<1x32xf32>
    %100 = vector.broadcast %99 : vector<1x32xf32> to vector<16x32xf32>
    %101 = arith.mulf %96, %100 : vector<16x32xf32>
    %c0_40 = arith.constant 0 : index
    %c0_41 = arith.constant 0 : index
    %102 = vector.load %arg11[%c0_40, %c0_41] : memref<1x32xf32, #tpu.memory_space<vmem>>, vector<1x32xf32>
    %103 = vector.broadcast %102 : vector<1x32xf32> to vector<16x32xf32>
    %104 = arith.mulf %101, %103 : vector<16x32xf32>
    %c0_42 = arith.constant 0 : index
    %c0_43 = arith.constant 0 : index
    %105 = vector.load %arg12[%c0_42, %c0_43] : memref<1x32xf32, #tpu.memory_space<vmem>>, vector<1x32xf32>
    %106 = vector.broadcast %105 : vector<1x32xf32> to vector<16x32xf32>
    %107 = arith.addf %104, %106 : vector<16x32xf32>
    %108 = vector.broadcast %88 : vector<1x1x32xf32> to vector<16x16x32xf32>
    %109 = arith.subf %48, %108 : vector<16x16x32xf32>
    %cst_44 = arith.constant 9.99999974E-6 : f32
    %110 = vector.broadcast %cst_44 : f32 to vector<1x1x32xf32>
    %111 = arith.addf %94, %110 : vector<1x1x32xf32>
    %112 = math.rsqrt %111 : vector<1x1x32xf32>
    %113 = vector.broadcast %112 : vector<1x1x32xf32> to vector<16x16x32xf32>
    %114 = arith.mulf %109, %113 : vector<16x16x32xf32>
    %c0_45 = arith.constant 0 : index
    %c0_46 = arith.constant 0 : index
    %115 = vector.load %arg15[%c0_45, %c0_46] : memref<1x32xf32, #tpu.memory_space<vmem>>, vector<1x32xf32>
    %116 = vector.shape_cast %115 : vector<1x32xf32> to vector<1x1x32xf32>
    %117 = vector.broadcast %116 : vector<1x1x32xf32> to vector<16x16x32xf32>
    %118 = arith.mulf %114, %117 : vector<16x16x32xf32>
    %c0_47 = arith.constant 0 : index
    %c0_48 = arith.constant 0 : index
    %119 = vector.load %arg16[%c0_47, %c0_48] : memref<1x32xf32, #tpu.memory_space<vmem>>, vector<1x32xf32>
    %120 = vector.shape_cast %119 : vector<1x32xf32> to vector<1x1x32xf32>
    %121 = vector.broadcast %120 : vector<1x1x32xf32> to vector<16x16x32xf32>
    %122 = arith.addf %118, %121 : vector<16x16x32xf32>
    %cst_49 = arith.constant 0.000000e+00 : f32
    %123 = vector.broadcast %cst_49 : f32 to vector<16x32xf32>
    %124 = arith.maximumf %107, %123 : vector<16x32xf32>
    %cst_50 = arith.constant 0.000000e+00 : f32
    %125 = vector.broadcast %cst_50 : f32 to vector<16x16x32xf32>
    %126 = arith.maximumf %122, %125 : vector<16x16x32xf32>
    %127 = arith.extf %8 : vector<16x32xbf16> to vector<16x32xf32>
    %128 = arith.addf %127, %124 : vector<16x32xf32>
    %129 = arith.extf %21 : vector<16x16x32xbf16> to vector<16x16x32xf32>
    %130 = arith.addf %129, %126 : vector<16x16x32xf32>
    %131 = arith.truncf %128 : vector<16x32xf32> to vector<16x32xbf16>
    %132 = arith.truncf %130 : vector<16x16x32xf32> to vector<16x16x32xbf16>
    %c0_51 = arith.constant 0 : index
    %c0_52 = arith.constant 0 : index
    %133 = vector.load %arg19[%c0_51, %c0_52] : memref<32x128xbf16, #tpu.memory_space<vmem>>, vector<32x128xbf16>
    %cst_53 = arith.constant dense<0.000000e+00> : vector<16x128xf32>
    %134 = tpu.matmul %131, %133, %cst_53 {dimension_numbers = #tpu.dot_dimension_numbers<[1], [0], [0], [1], [0, 0, 1, 1], [], []>} : vector<16x32xbf16>, vector<32x128xbf16>, vector<16x128xf32> -> vector<16x128xf32>
    %c0_54 = arith.constant 0 : index
    %c0_55 = arith.constant 0 : index
    %135 = vector.load %arg20[%c0_54, %c0_55] : memref<1x128xf32, #tpu.memory_space<vmem>>, vector<1x128xf32>
    %136 = vector.broadcast %135 : vector<1x128xf32> to vector<16x128xf32>
    %137 = arith.addf %134, %136 : vector<16x128xf32>
    %138 = vector.extract_strided_slice %137 {offsets = [0, 0], sizes = [16, 32], strides = [1, 1]} : vector<16x128xf32> to vector<16x32xf32>
    %139 = vector.extract_strided_slice %137 {offsets = [0, 32], sizes = [16, 32], strides = [1, 1]} : vector<16x128xf32> to vector<16x32xf32>
    %140 = vector.extract_strided_slice %137 {offsets = [0, 64], sizes = [16, 32], strides = [1, 1]} : vector<16x128xf32> to vector<16x32xf32>
    %141 = vector.extract_strided_slice %137 {offsets = [0, 96], sizes = [16, 32], strides = [1, 1]} : vector<16x128xf32> to vector<16x32xf32>
    %142 = vector.shape_cast %132 : vector<16x16x32xbf16> to vector<256x32xbf16>
    %c0_56 = arith.constant 0 : index
    %c0_57 = arith.constant 0 : index
    %143 = vector.load %arg21[%c0_56, %c0_57] : memref<32x32xbf16, #tpu.memory_space<vmem>>, vector<32x32xbf16>
    %cst_58 = arith.constant dense<0.000000e+00> : vector<256x32xf32>
    %144 = tpu.matmul %142, %143, %cst_58 {dimension_numbers = #tpu.dot_dimension_numbers<[1], [0], [0], [1], [0, 0, 1, 1], [], []>} : vector<256x32xbf16>, vector<32x32xbf16>, vector<256x32xf32> -> vector<256x32xf32>
    %c0_59 = arith.constant 0 : index
    %c0_60 = arith.constant 0 : index
    %145 = vector.load %arg22[%c0_59, %c0_60] : memref<1x32xf32, #tpu.memory_space<vmem>>, vector<1x32xf32>
    %146 = vector.broadcast %145 : vector<1x32xf32> to vector<256x32xf32>
    %147 = arith.addf %144, %146 : vector<256x32xf32>
    %148 = vector.shape_cast %147 : vector<256x32xf32> to vector<16x16x32xf32>
    %149 = vector.shape_cast %140 : vector<16x32xf32> to vector<16x1x32xf32>
    %150 = vector.broadcast %149 : vector<16x1x32xf32> to vector<16x16x32xf32>
    %151 = arith.addf %148, %150 : vector<16x16x32xf32>
    %152 = vector.shape_cast %141 : vector<16x32xf32> to vector<1x16x32xf32>
    %153 = vector.broadcast %152 : vector<1x16x32xf32> to vector<16x16x32xf32>
    %154 = arith.addf %151, %153 : vector<16x16x32xf32>
    %155 = arith.negf %154 : vector<16x16x32xf32>
    %156 = math.exp %155 : vector<16x16x32xf32>
    %cst_61 = arith.constant 1.000000e+00 : f32
    %157 = vector.broadcast %cst_61 : f32 to vector<16x16x32xf32>
    %158 = arith.addf %157, %156 : vector<16x16x32xf32>
    %159 = arith.divf %157, %158 : vector<16x16x32xf32>
    %160 = arith.mulf %159, %26 : vector<16x16x32xf32>
    %161 = vector.shape_cast %139 : vector<16x32xf32> to vector<16x1x32xf32>
    %162 = vector.broadcast %161 : vector<16x1x32xf32> to vector<16x16x32xf32>
    %163 = arith.mulf %160, %162 : vector<16x16x32xf32>
    %cst_62 = arith.constant dense<0.000000e+00> : vector<16x32xf32>
    %164 = vector.multi_reduction <add>, %163, %cst_62 [0] : vector<16x16x32xf32> to vector<16x32xf32>
    %cst_63 = arith.constant dense<0.000000e+00> : vector<16x32xf32>
    %165 = vector.multi_reduction <add>, %160, %cst_63 [0] : vector<16x16x32xf32> to vector<16x32xf32>
    %cst_64 = arith.constant 9.99999997E-7 : f32
    %166 = vector.broadcast %cst_64 : f32 to vector<16x32xf32>
    %167 = arith.addf %165, %166 : vector<16x32xf32>
    %168 = arith.divf %164, %167 : vector<16x32xf32>
    %169 = arith.addf %138, %168 : vector<16x32xf32>
    %cst_65 = arith.constant dense<0.000000e+00> : vector<32xf32>
    %170 = vector.multi_reduction <add>, %169, %cst_65 [0] : vector<16x32xf32> to vector<32xf32>
    %171 = vector.shape_cast %170 : vector<32xf32> to vector<1x32xf32>
    %cst_66 = arith.constant 1.600000e+01 : f32
    %172 = vector.broadcast %cst_66 : f32 to vector<1x32xf32>
    %173 = arith.divf %171, %172 : vector<1x32xf32>
    %174 = arith.mulf %169, %169 : vector<16x32xf32>
    %cst_67 = arith.constant dense<0.000000e+00> : vector<32xf32>
    %175 = vector.multi_reduction <add>, %174, %cst_67 [0] : vector<16x32xf32> to vector<32xf32>
    %176 = vector.shape_cast %175 : vector<32xf32> to vector<1x32xf32>
    %cst_68 = arith.constant 1.600000e+01 : f32
    %177 = vector.broadcast %cst_68 : f32 to vector<1x32xf32>
    %178 = arith.divf %176, %177 : vector<1x32xf32>
    %179 = arith.mulf %173, %173 : vector<1x32xf32>
    %180 = arith.subf %178, %179 : vector<1x32xf32>
    %cst_69 = arith.constant 0.000000e+00 : f32
    %181 = vector.broadcast %cst_69 : f32 to vector<1x32xf32>
    %182 = arith.maximumf %180, %181 : vector<1x32xf32>
    %183 = vector.broadcast %173 : vector<1x32xf32> to vector<16x32xf32>
    %184 = arith.subf %169, %183 : vector<16x32xf32>
    %cst_70 = arith.constant 9.99999974E-6 : f32
    %185 = vector.broadcast %cst_70 : f32 to vector<1x32xf32>
    %186 = arith.addf %182, %185 : vector<1x32xf32>
    %187 = math.rsqrt %186 : vector<1x32xf32>
    %188 = vector.broadcast %187 : vector<1x32xf32> to vector<16x32xf32>
    %189 = arith.mulf %184, %188 : vector<16x32xf32>
    %c0_71 = arith.constant 0 : index
    %c0_72 = arith.constant 0 : index
    %190 = vector.load %arg23[%c0_71, %c0_72] : memref<1x32xf32, #tpu.memory_space<vmem>>, vector<1x32xf32>
    %191 = vector.broadcast %190 : vector<1x32xf32> to vector<16x32xf32>
    %192 = arith.mulf %189, %191 : vector<16x32xf32>
    %c0_73 = arith.constant 0 : index
    %c0_74 = arith.constant 0 : index
    %193 = vector.load %arg24[%c0_73, %c0_74] : memref<1x32xf32, #tpu.memory_space<vmem>>, vector<1x32xf32>
    %194 = vector.broadcast %193 : vector<1x32xf32> to vector<16x32xf32>
    %195 = arith.addf %192, %194 : vector<16x32xf32>
    %cst_75 = arith.constant 0.000000e+00 : f32
    %196 = vector.broadcast %cst_75 : f32 to vector<16x32xf32>
    %197 = arith.maximumf %195, %196 : vector<16x32xf32>
    %198 = arith.extf %131 : vector<16x32xbf16> to vector<16x32xf32>
    %199 = arith.addf %198, %197 : vector<16x32xf32>
    %200 = arith.truncf %199 : vector<16x32xf32> to vector<16x32xbf16>
    %c0_76 = arith.constant 0 : index
    %c0_77 = arith.constant 0 : index
    %201 = vector.load %arg31[%c0_76, %c0_77] : memref<32x32xbf16, #tpu.memory_space<vmem>>, vector<32x32xbf16>
    %cst_78 = arith.constant dense<0.000000e+00> : vector<16x32xf32>
    %202 = tpu.matmul %200, %201, %cst_78 {dimension_numbers = #tpu.dot_dimension_numbers<[1], [0], [0], [1], [0, 0, 1, 1], [], []>} : vector<16x32xbf16>, vector<32x32xbf16>, vector<16x32xf32> -> vector<16x32xf32>
    %c0_79 = arith.constant 0 : index
    %c0_80 = arith.constant 0 : index
    %203 = vector.load %arg32[%c0_79, %c0_80] : memref<32x32xbf16, #tpu.memory_space<vmem>>, vector<32x32xbf16>
    %cst_81 = arith.constant dense<0.000000e+00> : vector<16x32xf32>
    %204 = tpu.matmul %200, %203, %cst_81 {dimension_numbers = #tpu.dot_dimension_numbers<[1], [0], [0], [1], [0, 0, 1, 1], [], []>} : vector<16x32xbf16>, vector<32x32xbf16>, vector<16x32xf32> -> vector<16x32xf32>
    %205 = vector.shape_cast %202 : vector<16x32xf32> to vector<16x1x32xf32>
    %206 = vector.shape_cast %204 : vector<16x32xf32> to vector<1x16x32xf32>
    %207 = vector.broadcast %205 : vector<16x1x32xf32> to vector<16x16x32xf32>
    %208 = vector.broadcast %206 : vector<1x16x32xf32> to vector<16x16x32xf32>
    %209 = arith.addf %207, %208 : vector<16x16x32xf32>
    %c0_82 = arith.constant 0 : index
    %c0_83 = arith.constant 0 : index
    %210 = vector.load %arg33[%c0_82, %c0_83] : memref<1x32xf32, #tpu.memory_space<vmem>>, vector<1x32xf32>
    %211 = vector.shape_cast %210 : vector<1x32xf32> to vector<1x1x32xf32>
    %212 = vector.broadcast %211 : vector<1x1x32xf32> to vector<16x16x32xf32>
    %213 = arith.addf %209, %212 : vector<16x16x32xf32>
    %cst_84 = arith.constant 0.000000e+00 : f32
    %214 = vector.broadcast %cst_84 : f32 to vector<16x16x32xf32>
    %215 = arith.maximumf %213, %214 : vector<16x16x32xf32>
    %216 = vector.shape_cast %215 : vector<16x16x32xf32> to vector<256x32xf32>
    %217 = arith.truncf %216 : vector<256x32xf32> to vector<256x32xbf16>
    %c0_85 = arith.constant 0 : index
    %c0_86 = arith.constant 0 : index
    %218 = vector.load %arg34[%c0_85, %c0_86] : memref<32x16xbf16, #tpu.memory_space<vmem>>, vector<32x16xbf16>
    %cst_87 = arith.constant dense<0.000000e+00> : vector<256x16xf32>
    %219 = tpu.matmul %217, %218, %cst_87 {dimension_numbers = #tpu.dot_dimension_numbers<[1], [0], [0], [1], [0, 0, 1, 1], [], []>} : vector<256x32xbf16>, vector<32x16xbf16>, vector<256x16xf32> -> vector<256x16xf32>
    %c0_88 = arith.constant 0 : index
    %c0_89 = arith.constant 0 : index
    %220 = vector.load %arg35[%c0_88, %c0_89] : memref<1x16xf32, #tpu.memory_space<vmem>>, vector<1x16xf32>
    %221 = vector.broadcast %220 : vector<1x16xf32> to vector<256x16xf32>
    %222 = arith.addf %219, %221 : vector<256x16xf32>
    %cst_90 = arith.constant 0.000000e+00 : f32
    %223 = vector.broadcast %cst_90 : f32 to vector<256x16xf32>
    %224 = arith.maximumf %222, %223 : vector<256x16xf32>
    %225 = vector.shape_cast %224 : vector<256x16xf32> to vector<16x16x16xf32>
    %c0_91 = arith.constant 0 : index
    %c0_92 = arith.constant 0 : index
    %226 = vector.load %arg36[%c0_91, %c0_92] : memref<2x16xf32, #tpu.memory_space<vmem>>, vector<2x16xf32>
    %c0_93 = arith.constant 0 : index
    %c0_94 = arith.constant 0 : index
    %227 = vector.load %arg37[%c0_93, %c0_94] : memref<1x2xf32, #tpu.memory_space<vmem>>, vector<1x2xf32>
    %228 = vector.extract_strided_slice %226 {offsets = [0, 0], sizes = [1, 16], strides = [1, 1]} : vector<2x16xf32> to vector<1x16xf32>
    %229 = vector.shape_cast %228 : vector<1x16xf32> to vector<1x1x16xf32>
    %230 = vector.broadcast %229 : vector<1x1x16xf32> to vector<16x16x16xf32>
    %231 = arith.mulf %225, %230 : vector<16x16x16xf32>
    %cst_95 = arith.constant dense<0.000000e+00> : vector<16x16xf32>
    %232 = vector.multi_reduction <add>, %231, %cst_95 [2] : vector<16x16x16xf32> to vector<16x16xf32>
    %233 = vector.extract_strided_slice %227 {offsets = [0, 0], sizes = [1, 1], strides = [1, 1]} : vector<1x2xf32> to vector<1x1xf32>
    %234 = vector.broadcast %233 : vector<1x1xf32> to vector<16x16xf32>
    %235 = arith.addf %232, %234 : vector<16x16xf32>
    %c0_96 = arith.constant 0 : index
    %c0_97 = arith.constant 0 : index
    %c0_98 = arith.constant 0 : index
    %c0_99 = arith.constant 0 : index
    %236 = vector.load %arg38[%c0_96, %c0_97, %c0_98, %c0_99] : memref<1x2x16x16xf32, #tpu.memory_space<vmem>>, vector<1x1x16x16xf32>
    %237 = vector.shape_cast %236 : vector<1x1x16x16xf32> to vector<16x16xf32>
    %238 = vector.shape_cast %235 : vector<16x16xf32> to vector<1x1x16x16xf32>
    tpu.vector_store %arg38[%c0_96, %c0_97, %c0_98, %c0_99], %238 {strides = array<i32>} : memref<1x2x16x16xf32, #tpu.memory_space<vmem>>, vector<1x1x16x16xf32>,
    %239 = vector.extract_strided_slice %226 {offsets = [1, 0], sizes = [1, 16], strides = [1, 1]} : vector<2x16xf32> to vector<1x16xf32>
    %240 = vector.shape_cast %239 : vector<1x16xf32> to vector<1x1x16xf32>
    %241 = vector.broadcast %240 : vector<1x1x16xf32> to vector<16x16x16xf32>
    %242 = arith.mulf %225, %241 : vector<16x16x16xf32>
    %cst_100 = arith.constant dense<0.000000e+00> : vector<16x16xf32>
    %243 = vector.multi_reduction <add>, %242, %cst_100 [2] : vector<16x16x16xf32> to vector<16x16xf32>
    %244 = vector.extract_strided_slice %227 {offsets = [0, 1], sizes = [1, 1], strides = [1, 1]} : vector<1x2xf32> to vector<1x1xf32>
    %245 = vector.broadcast %244 : vector<1x1xf32> to vector<16x16xf32>
    %246 = arith.addf %243, %245 : vector<16x16xf32>
    %c0_101 = arith.constant 0 : index
    %c1 = arith.constant 1 : index
    %c0_102 = arith.constant 0 : index
    %c0_103 = arith.constant 0 : index
    %247 = vector.load %arg38[%c0_101, %c1, %c0_102, %c0_103] : memref<1x2x16x16xf32, #tpu.memory_space<vmem>>, vector<1x1x16x16xf32>
    %248 = vector.shape_cast %247 : vector<1x1x16x16xf32> to vector<16x16xf32>
    %249 = vector.shape_cast %246 : vector<16x16xf32> to vector<1x1x16x16xf32>
    tpu.vector_store %arg38[%c0_101, %c1, %c0_102, %c0_103], %249 {strides = array<i32>} : memref<1x2x16x16xf32, #tpu.memory_space<vmem>>, vector<1x1x16x16xf32>,
    return
  }
  func.func @transform_0(%arg0: i32) -> (i32, i32, i32) {
    %c0_i32 = arith.constant 0 : i32
    %c0_i32_0 = arith.constant 0 : i32
    %c0_i32_1 = arith.constant 0 : i32
    return %arg0, %c0_i32, %c0_i32_0 : i32, i32, i32
  }
  func.func @transform_1(%arg0: i32) -> (i32, i32, i32) {
    %c0_i32 = arith.constant 0 : i32
    %c0_i32_0 = arith.constant 0 : i32
    %c0_i32_1 = arith.constant 0 : i32
    return %arg0, %c0_i32, %c0_i32_0 : i32, i32, i32
  }
  func.func @transform_2(%arg0: i32) -> (i32, i32) {
    %c0_i32 = arith.constant 0 : i32
    %c0_i32_0 = arith.constant 0 : i32
    %c0_i32_1 = arith.constant 0 : i32
    return %c0_i32, %c0_i32_0 : i32, i32
  }
  func.func @transform_3(%arg0: i32) -> (i32, i32) {
    %c0_i32 = arith.constant 0 : i32
    %c0_i32_0 = arith.constant 0 : i32
    %c0_i32_1 = arith.constant 0 : i32
    return %c0_i32, %c0_i32_0 : i32, i32
  }
  func.func @transform_4(%arg0: i32) -> (i32, i32) {
    %c0_i32 = arith.constant 0 : i32
    %c0_i32_0 = arith.constant 0 : i32
    %c0_i32_1 = arith.constant 0 : i32
    return %c0_i32, %c0_i32_0 : i32, i32
  }
  func.func @transform_5(%arg0: i32) -> (i32, i32) {
    %c0_i32 = arith.constant 0 : i32
    %c0_i32_0 = arith.constant 0 : i32
    %c0_i32_1 = arith.constant 0 : i32
    return %c0_i32, %c0_i32_0 : i32, i32
  }
  func.func @transform_6(%arg0: i32) -> (i32, i32) {
    %c0_i32 = arith.constant 0 : i32
    %c0_i32_0 = arith.constant 0 : i32
    %c0_i32_1 = arith.constant 0 : i32
    return %c0_i32, %c0_i32_0 : i32, i32
  }
  func.func @transform_7(%arg0: i32) -> (i32, i32) {
    %c0_i32 = arith.constant 0 : i32
    %c0_i32_0 = arith.constant 0 : i32
    %c0_i32_1 = arith.constant 0 : i32
    return %c0_i32, %c0_i32_0 : i32, i32
  }
  func.func @transform_8(%arg0: i32) -> (i32, i32) {
    %c0_i32 = arith.constant 0 : i32
    %c0_i32_0 = arith.constant 0 : i32
    %c0_i32_1 = arith.constant 0 : i32
    return %c0_i32, %c0_i32_0 : i32, i32
  }
  func.func @transform_9(%arg0: i32) -> (i32, i32) {
    %c0_i32 = arith.constant 0 : i32
    %c0_i32_0 = arith.constant 0 : i32
    %c0_i32_1 = arith.constant 0 : i32
    return %c0_i32, %c0_i32_0 : i32, i32
  }
  func.func @transform_10(%arg0: i32) -> (i32, i32) {
    %c0_i32 = arith.constant 0 : i32
    %c0_i32_0 = arith.constant 0 : i32
    %c0_i32_1 = arith.constant 0 : i32
    return %c0_i32, %c0_i32_0 : i32, i32
  }
  func.func @transform_11(%arg0: i32) -> (i32, i32) {
    %c0_i32 = arith.constant 0 : i32
    %c0_i32_0 = arith.constant 0 : i32
    %c0_i32_1 = arith.constant 0 : i32
    return %c0_i32, %c0_i32_0 : i32, i32
  }
  func.func @transform_12(%arg0: i32) -> (i32, i32) {
    %c0_i32 = arith.constant 0 : i32
    %c0_i32_0 = arith.constant 0 : i32
    %c0_i32_1 = arith.constant 0 : i32
    return %c0_i32, %c0_i32_0 : i32, i32
  }
  func.func @transform_13(%arg0: i32) -> (i32, i32) {
    %c0_i32 = arith.constant 0 : i32
    %c0_i32_0 = arith.constant 0 : i32
    %c0_i32_1 = arith.constant 0 : i32
    return %c0_i32, %c0_i32_0 : i32, i32
  }
  func.func @transform_14(%arg0: i32) -> (i32, i32) {
    %c0_i32 = arith.constant 0 : i32
    %c0_i32_0 = arith.constant 0 : i32
    %c0_i32_1 = arith.constant 0 : i32
    return %c0_i32, %c0_i32_0 : i32, i32
  }
  func.func @transform_15(%arg0: i32) -> (i32, i32) {
    %c0_i32 = arith.constant 0 : i32
    %c0_i32_0 = arith.constant 0 : i32
    %c0_i32_1 = arith.constant 0 : i32
    return %c0_i32, %c0_i32_0 : i32, i32
  }
  func.func @transform_16(%arg0: i32) -> (i32, i32) {
    %c0_i32 = arith.constant 0 : i32
    %c0_i32_0 = arith.constant 0 : i32
    %c0_i32_1 = arith.constant 0 : i32
    return %c0_i32, %c0_i32_0 : i32, i32
  }
  func.func @transform_17(%arg0: i32) -> (i32, i32) {
    %c0_i32 = arith.constant 0 : i32
    %c0_i32_0 = arith.constant 0 : i32
    %c0_i32_1 = arith.constant 0 : i32
    return %c0_i32, %c0_i32_0 : i32, i32
  }
  func.func @transform_18(%arg0: i32) -> (i32, i32) {
    %c0_i32 = arith.constant 0 : i32
    %c0_i32_0 = arith.constant 0 : i32
    %c0_i32_1 = arith.constant 0 : i32
    return %c0_i32, %c0_i32_0 : i32, i32
  }
  func.func @transform_19(%arg0: i32) -> (i32, i32) {
    %c0_i32 = arith.constant 0 : i32
    %c0_i32_0 = arith.constant 0 : i32
    %c0_i32_1 = arith.constant 0 : i32
    return %c0_i32, %c0_i32_0 : i32, i32
  }
  func.func @transform_20(%arg0: i32) -> (i32, i32) {
    %c0_i32 = arith.constant 0 : i32
    %c0_i32_0 = arith.constant 0 : i32
    %c0_i32_1 = arith.constant 0 : i32
    return %c0_i32, %c0_i32_0 : i32, i32
  }
  func.func @transform_21(%arg0: i32) -> (i32, i32) {
    %c0_i32 = arith.constant 0 : i32
    %c0_i32_0 = arith.constant 0 : i32
    %c0_i32_1 = arith.constant 0 : i32
    return %c0_i32, %c0_i32_0 : i32, i32
  }
  func.func @transform_22(%arg0: i32) -> (i32, i32) {
    %c0_i32 = arith.constant 0 : i32
    %c0_i32_0 = arith.constant 0 : i32
    %c0_i32_1 = arith.constant 0 : i32
    return %c0_i32, %c0_i32_0 : i32, i32
  }
  func.func @transform_23(%arg0: i32) -> (i32, i32) {
    %c0_i32 = arith.constant 0 : i32
    %c0_i32_0 = arith.constant 0 : i32
    %c0_i32_1 = arith.constant 0 : i32
    return %c0_i32, %c0_i32_0 : i32, i32
  }
  func.func @transform_24(%arg0: i32) -> (i32, i32) {
    %c0_i32 = arith.constant 0 : i32
    %c0_i32_0 = arith.constant 0 : i32
    %c0_i32_1 = arith.constant 0 : i32
    return %c0_i32, %c0_i32_0 : i32, i32
  }
  func.func @transform_25(%arg0: i32) -> (i32, i32) {
    %c0_i32 = arith.constant 0 : i32
    %c0_i32_0 = arith.constant 0 : i32
    %c0_i32_1 = arith.constant 0 : i32
    return %c0_i32, %c0_i32_0 : i32, i32
  }
  func.func @transform_26(%arg0: i32) -> (i32, i32) {
    %c0_i32 = arith.constant 0 : i32
    %c0_i32_0 = arith.constant 0 : i32
    %c0_i32_1 = arith.constant 0 : i32
    return %c0_i32, %c0_i32_0 : i32, i32
  }
  func.func @transform_27(%arg0: i32) -> (i32, i32) {
    %c0_i32 = arith.constant 0 : i32
    %c0_i32_0 = arith.constant 0 : i32
    %c0_i32_1 = arith.constant 0 : i32
    return %c0_i32, %c0_i32_0 : i32, i32
  }
  func.func @transform_28(%arg0: i32) -> (i32, i32) {
    %c0_i32 = arith.constant 0 : i32
    %c0_i32_0 = arith.constant 0 : i32
    %c0_i32_1 = arith.constant 0 : i32
    return %c0_i32, %c0_i32_0 : i32, i32
  }
  func.func @transform_29(%arg0: i32) -> (i32, i32) {
    %c0_i32 = arith.constant 0 : i32
    %c0_i32_0 = arith.constant 0 : i32
    %c0_i32_1 = arith.constant 0 : i32
    return %c0_i32, %c0_i32_0 : i32, i32
  }
  func.func @transform_30(%arg0: i32) -> (i32, i32) {
    %c0_i32 = arith.constant 0 : i32
    %c0_i32_0 = arith.constant 0 : i32
    %c0_i32_1 = arith.constant 0 : i32
    return %c0_i32, %c0_i32_0 : i32, i32
  }
  func.func @transform_31(%arg0: i32) -> (i32, i32) {
    %c0_i32 = arith.constant 0 : i32
    %c0_i32_0 = arith.constant 0 : i32
    %c0_i32_1 = arith.constant 0 : i32
    return %c0_i32, %c0_i32_0 : i32, i32
  }
  func.func @transform_32(%arg0: i32) -> (i32, i32) {
    %c0_i32 = arith.constant 0 : i32
    %c0_i32_0 = arith.constant 0 : i32
    %c0_i32_1 = arith.constant 0 : i32
    return %c0_i32, %c0_i32_0 : i32, i32
  }
  func.func @transform_33(%arg0: i32) -> (i32, i32) {
    %c0_i32 = arith.constant 0 : i32
    %c0_i32_0 = arith.constant 0 : i32
    %c0_i32_1 = arith.constant 0 : i32
    return %c0_i32, %c0_i32_0 : i32, i32
  }
  func.func @transform_34(%arg0: i32) -> (i32, i32) {
    %c0_i32 = arith.constant 0 : i32
    %c0_i32_0 = arith.constant 0 : i32
    %c0_i32_1 = arith.constant 0 : i32
    return %c0_i32, %c0_i32_0 : i32, i32
  }
  func.func @transform_35(%arg0: i32) -> (i32, i32) {
    %c0_i32 = arith.constant 0 : i32
    %c0_i32_0 = arith.constant 0 : i32
    %c0_i32_1 = arith.constant 0 : i32
    return %c0_i32, %c0_i32_0 : i32, i32
  }
  func.func @transform_36(%arg0: i32) -> (i32, i32) {
    %c0_i32 = arith.constant 0 : i32
    %c0_i32_0 = arith.constant 0 : i32
    %c0_i32_1 = arith.constant 0 : i32
    return %c0_i32, %c0_i32_0 : i32, i32
  }
  func.func @transform_37(%arg0: i32) -> (i32, i32, i32, i32) {
    %c0_i32 = arith.constant 0 : i32
    %c0_i32_0 = arith.constant 0 : i32
    %c0_i32_1 = arith.constant 0 : i32
    %c0_i32_2 = arith.constant 0 : i32
    return %arg0, %c0_i32, %c0_i32_0, %c0_i32_1 : i32, i32, i32, i32
  }
}

</mosaic_0001>

<llo_original>
// kernel: tpu_custom_call.1
$region0: #{tpu_custom_call.1}
  #allocation0 [shape = 'u32[]', space=smem, size = 0x4, offset = 0x4, fixed_abs, tag = 'smem constant byte address 0x4 - core index']
  #allocation1 [shape = 'u32[144,128]{1,0:T(1,128)}', space=vmem, size = 0x12000, scoped, tag = 'internal scratch']
  %s0 = inlined_call_operand.smem [shape: u32[38], index: -1, kind: input, shape index: {}]
  %s1 = sld [smem:[%s0]]
  %s2 = scalar_lea.smem %s0, 1
  %s3 = sld [smem:[%s2]]
  %s4 = scalar_lea.smem %s0, 2
  %s5 = sld [smem:[%s4]]
  %s6 = scalar_lea.smem %s0, 3
  %s7 = sld [smem:[%s6]]
  %s8 = scalar_lea.smem %s0, 4
  %s9 = sld [smem:[%s8]]
  %s10 = scalar_lea.smem %s0, 5
  %s11 = sld [smem:[%s10]]
  %s12 = scalar_lea.smem %s0, 6
  %s13 = sld [smem:[%s12]]
  %s14 = scalar_lea.smem %s0, 7
  %s15 = sld [smem:[%s14]]
  %s16 = scalar_lea.smem %s0, 8
  %s17 = sld [smem:[%s16]]
  %s18 = scalar_lea.smem %s0, 9
  %s19 = sld [smem:[%s18]]
  %s20 = scalar_lea.smem %s0, 10
  %s21 = sld [smem:[%s20]]
  %s22 = scalar_lea.smem %s0, 11
  %s23 = sld [smem:[%s22]]
  %s24 = scalar_lea.smem %s0, 12
  %s25 = sld [smem:[%s24]]
  %s26 = scalar_lea.smem %s0, 13
  %s27 = sld [smem:[%s26]]
  %s28 = scalar_lea.smem %s0, 14
  %s29 = sld [smem:[%s28]]
  %s30 = scalar_lea.smem %s0, 15
  %s31 = sld [smem:[%s30]]
  %s32 = scalar_lea.smem %s0, 16
  %s33 = sld [smem:[%s32]]
  %s34 = scalar_lea.smem %s0, 17
  %s35 = sld [smem:[%s34]]
  %s36 = scalar_lea.smem %s0, 18
  %s37 = sld [smem:[%s36]]
  %s38 = scalar_lea.smem %s0, 19
  %s39 = sld [smem:[%s38]]
  %s40 = scalar_lea.smem %s0, 20
  %s41 = sld [smem:[%s40]]
  %s42 = scalar_lea.smem %s0, 21
  %s43 = sld [smem:[%s42]]
  %s44 = scalar_lea.smem %s0, 22
  %s45 = sld [smem:[%s44]]
  %s46 = scalar_lea.smem %s0, 23
  %s47 = sld [smem:[%s46]]
  %s48 = scalar_lea.smem %s0, 24
  %s49 = sld [smem:[%s48]]
  %s50 = scalar_lea.smem %s0, 25
  %s51 = sld [smem:[%s50]]
  %s52 = scalar_lea.smem %s0, 26
  %s53 = sld [smem:[%s52]]
  %s54 = scalar_lea.smem %s0, 27
  %s55 = sld [smem:[%s54]]
  %s56 = scalar_lea.smem %s0, 28
  %s57 = sld [smem:[%s56]]
  %s58 = scalar_lea.smem %s0, 29
  %s59 = sld [smem:[%s58]]
  %s60 = scalar_lea.smem %s0, 30
  %s61 = sld [smem:[%s60]]
  %s62 = scalar_lea.smem %s0, 31
  %s63 = sld [smem:[%s62]]
  %s64 = scalar_lea.smem %s0, 32
  %s65 = sld [smem:[%s64]]
  %s66 = scalar_lea.smem %s0, 33
  %s67 = sld [smem:[%s66]]
  %s68 = scalar_lea.smem %s0, 34
  %s69 = sld [smem:[%s68]]
  %s70 = scalar_lea.smem %s0, 35
  %s71 = sld [smem:[%s70]]
  %s72 = scalar_lea.smem %s0, 36
  %s73 = sld [smem:[%s72]]
  %s74 = scalar_lea.smem %s0, 37
  %s75 = sld [smem:[%s74]]
  %s76 = sld [smem:[#allocation0]]
  $region329: #{tpu_custom_call.1} parent=0
    _
  %s78 = ssub.s32 1, %s76
  %s79 = scalar_select 0, %s78, %s76
  $region1: #{tpu_custom_call.1} parent=0
    #allocation2 [shape = 'u8[16384]{0}', space=vmem, size = 0x4000, scoped, tag = 'input window, operand 0']
    #allocation3 [shape = 's32[2]{0}', space=sflag, size = 0x8, scoped, tag = 'scoped memory for tpu_custom_call.1']
    #allocation4 [shape = 's32[2]{0}', space=sflag, size = 0x8, scoped, tag = 'scoped memory for tpu_custom_call.1']
    #allocation5 [shape = 'u8[16384]{0}', space=vmem, size = 0x4000, scoped, tag = 'input window, operand 1']
    #allocation6 [shape = 's32[2]{0}', space=sflag, size = 0x8, scoped, tag = 'scoped memory for tpu_custom_call.1']
    #allocation7 [shape = 'u8[512]{0}', space=vmem, size = 0x400, scoped, tag = 'input window, operand 2, single buffered']
    #allocation8 [shape = 'u8[512]{0}', space=vmem, size = 0x400, scoped, tag = 'input window, operand 3, single buffered']
    #allocation9 [shape = 's32[1]{0}', space=sflag, size = 0x4, scoped, tag = 'scoped memory for tpu_custom_call.1']
    #allocation10 [shape = 'u8[512]{0}', space=vmem, size = 0x400, scoped, tag = 'input window, operand 4, single buffered']
    #allocation11 [shape = 'u8[512]{0}', space=vmem, size = 0x400, scoped, tag = 'input window, operand 5, single buffered']
    #allocation12 [shape = 's32[1]{0}', space=sflag, size = 0x4, scoped, tag = 'scoped memory for tpu_custom_call.1']
    #allocation13 [shape = 'u8[8192]{0}', space=vmem, size = 0x2000, scoped, tag = 'input window, operand 6, single buffered']
    #allocation14 [shape = 'u8[512]{0}', space=vmem, size = 0x400, scoped, tag = 'input window, operand 7, single buffered']
    #allocation15 [shape = 's32[1]{0}', space=sflag, size = 0x4, scoped, tag = 'scoped memory for tpu_custom_call.1']
    #allocation16 [shape = 'u8[8192]{0}', space=vmem, size = 0x2000, scoped, tag = 'input window, operand 8, single buffered']
    #allocation17 [shape = 'u8[512]{0}', space=vmem, size = 0x400, scoped, tag = 'input window, operand 9, single buffered']
    #allocation18 [shape = 's32[1]{0}', space=sflag, size = 0x4, scoped, tag = 'scoped memory for tpu_custom_call.1']
    #allocation19 [shape = 'u8[512]{0}', space=vmem, size = 0x400, scoped, tag = 'input window, operand 10, single buffered']
    #allocation20 [shape = 'u8[512]{0}', space=vmem, size = 0x400, scoped, tag = 'input window, operand 11, single buffered']
    #allocation21 [shape = 's32[1]{0}', space=sflag, size = 0x4, scoped, tag = 'scoped memory for tpu_custom_call.1']
    #allocation22 [shape = 'u8[512]{0}', space=vmem, size = 0x400, scoped, tag = 'input window, operand 12, single buffered']
    #allocation23 [shape = 'u8[512]{0}', space=vmem, size = 0x400, scoped, tag = 'input window, operand 13, single buffered']
    #allocation24 [shape = 's32[1]{0}', space=sflag, size = 0x4, scoped, tag = 'scoped memory for tpu_custom_call.1']
    #allocation25 [shape = 'u8[512]{0}', space=vmem, size = 0x400, scoped, tag = 'input window, operand 14, single buffered']
    #allocation26 [shape = 'u8[512]{0}', space=vmem, size = 0x400, scoped, tag = 'input window, operand 15, single buffered']
    #allocation27 [shape = 's32[1]{0}', space=sflag, size = 0x4, scoped, tag = 'scoped memory for tpu_custom_call.1']
    #allocation28 [shape = 'u8[512]{0}', space=vmem, size = 0x400, scoped, tag = 'input window, operand 16, single buffered']
    #allocation29 [shape = 'u8[512]{0}', space=vmem, size = 0x400, scoped, tag = 'input window, operand 17, single buffered']
    #allocation30 [shape = 's32[1]{0}', space=sflag, size = 0x4, scoped, tag = 'scoped memory for tpu_custom_call.1']
    #allocation31 [shape = 'u8[8192]{0}', space=vmem, size = 0x2000, scoped, tag = 'input window, operand 18, single buffered']
    #allocation32 [shape = 'u8[512]{0}', space=vmem, size = 0x400, scoped, tag = 'input window, operand 19, single buffered']
    #allocation33 [shape = 's32[1]{0}', space=sflag, size = 0x4, scoped, tag = 'scoped memory for tpu_custom_call.1']
    #allocation34 [shape = 'u8[8192]{0}', space=vmem, size = 0x2000, scoped, tag = 'input window, operand 20, single buffered']
    #allocation35 [shape = 'u8[512]{0}', space=vmem, size = 0x400, scoped, tag = 'input window, operand 21, single buffered']
    #allocation36 [shape = 's32[1]{0}', space=sflag, size = 0x4, scoped, tag = 'scoped memory for tpu_custom_call.1']
    #allocation37 [shape = 'u8[512]{0}', space=vmem, size = 0x400, scoped, tag = 'input window, operand 22, single buffered']
    #allocation38 [shape = 'u8[512]{0}', space=vmem, size = 0x400, scoped, tag = 'input window, operand 23, single buffered']
    #allocation39 [shape = 's32[1]{0}', space=sflag, size = 0x4, scoped, tag = 'scoped memory for tpu_custom_call.1']
    #allocation40 [shape = 'u8[512]{0}', space=vmem, size = 0x400, scoped, tag = 'input window, operand 24, single buffered']
    #allocation41 [shape = 'u8[512]{0}', space=vmem, size = 0x400, scoped, tag = 'input window, operand 25, single buffered']
    #allocation42 [shape = 's32[1]{0}', space=sflag, size = 0x4, scoped, tag = 'scoped memory for tpu_custom_call.1']
    #allocation43 [shape = 'u8[512]{0}', space=vmem, size = 0x400, scoped, tag = 'input window, operand 26, single buffered']
    #allocation44 [shape = 'u8[512]{0}', space=vmem, size = 0x400, scoped, tag = 'input window, operand 27, single buffered']
    #allocation45 [shape = 's32[1]{0}', space=sflag, size = 0x4, scoped, tag = 'scoped memory for tpu_custom_call.1']
    #allocation46 [shape = 'u8[512]{0}', space=vmem, size = 0x400, scoped, tag = 'input window, operand 28, single buffered']
    #allocation47 [shape = 'u8[512]{0}', space=vmem, size = 0x400, scoped, tag = 'input window, operand 29, single buffered']
    #allocation48 [shape = 's32[1]{0}', space=sflag, size = 0x4, scoped, tag = 'scoped memory for tpu_custom_call.1']
    #allocation49 [shape = 'u8[8192]{0}', space=vmem, size = 0x2000, scoped, tag = 'input window, operand 30, single buffered']
    #allocation50 [shape = 'u8[8192]{0}', space=vmem, size = 0x2000, scoped, tag = 'input window, operand 31, single buffered']
    #allocation51 [shape = 's32[1]{0}', space=sflag, size = 0x4, scoped, tag = 'scoped memory for tpu_custom_call.1']
    #allocation52 [shape = 'u8[512]{0}', space=vmem, size = 0x400, scoped, tag = 'input window, operand 32, single buffered']
    #allocation53 [shape = 'u8[8192]{0}', space=vmem, size = 0x2000, scoped, tag = 'input window, operand 33, single buffered']
    #allocation54 [shape = 's32[1]{0}', space=sflag, size = 0x4, scoped, tag = 'scoped memory for tpu_custom_call.1']
    #allocation55 [shape = 'u8[512]{0}', space=vmem, size = 0x400, scoped, tag = 'input window, operand 34, single buffered']
    #allocation56 [shape = 'u8[1024]{0}', space=vmem, size = 0x400, scoped, tag = 'input window, operand 35, single buffered']
    #allocation57 [shape = 's32[1]{0}', space=sflag, size = 0x4, scoped, tag = 'scoped memory for tpu_custom_call.1']
    #allocation58 [shape = 'u8[512]{0}', space=vmem, size = 0x400, scoped, tag = 'input window, operand 36, single buffered']
    #allocation59 [shape = 'u8[32768]{0}', space=vmem, size = 0x8000, scoped, tag = 'output window, operand 0']
    %80 = vsyncpa [#allocation3], 0
    %s81 = scalar_lea.sflag [#allocation3], 1
    %82 = vsyncpa %s81, 0
    %83 = vsyncpa [#allocation6], 0
    %s84 = scalar_lea.sflag [#allocation6], 1
    %85 = vsyncpa %s84, 0
    %86 = vsyncpa [#allocation9], 0
    %87 = vsyncpa [#allocation12], 0
    %88 = vsyncpa [#allocation15], 0
    %89 = vsyncpa [#allocation18], 0
    %90 = vsyncpa [#allocation21], 0
    %91 = vsyncpa [#allocation24], 0
    %92 = vsyncpa [#allocation27], 0
    %93 = vsyncpa [#allocation30], 0
    %94 = vsyncpa [#allocation33], 0
    %95 = vsyncpa [#allocation36], 0
    %96 = vsyncpa [#allocation39], 0
    %97 = vsyncpa [#allocation42], 0
    %98 = vsyncpa [#allocation45], 0
    %99 = vsyncpa [#allocation48], 0
    %100 = vsyncpa [#allocation51], 0
    %101 = vsyncpa [#allocation54], 0
    %102 = vsyncpa [#allocation57], 0
    %103 = vsyncpa [#allocation4], 0
    %s104 = scalar_lea.sflag [#allocation4], 1
    %105 = vsyncpa %s104, 0
    loop: start=0, step=1, limit=6
    $region2: #{tpu_custom_call.1} parent=1 // loop_pre_header
      _
    $region3: #{tpu_custom_call.1} parent=1 // loop_header
      %s107 = sphi 0, %s111
      %p108 = scmp.ge.s32.totalorder %s107, 6
      %s117 = sphi 0, %s119
      %s120 = sphi 0, %s117
      %s121 = sphi 0, %s120
      %s137 = sphi 0, %s121
      %s143 = sphi 0, %s145
      %s146 = sphi 0, %s143
      %s147 = sphi 0, %s146
      %s163 = sphi 0, %s147
      %s167 = sphi 0, %s167
      %s169 = sphi 0, %s167
      %s170 = sphi 0, %s169
      %s184 = sphi 0, %s170
      %s188 = sphi 0, %s188
      %s190 = sphi 0, %s188
      %s191 = sphi 0, %s190
      %s205 = sphi 0, %s191
      %s209 = sphi 0, %s209
      %s211 = sphi 0, %s209
      %s212 = sphi 0, %s211
      %s226 = sphi 0, %s212
      %s230 = sphi 0, %s230
      %s232 = sphi 0, %s230
      %s233 = sphi 0, %s232
      %s247 = sphi 0, %s233
      %s251 = sphi 0, %s251
      %s253 = sphi 0, %s251
      %s254 = sphi 0, %s253
      %s268 = sphi 0, %s254
      %s272 = sphi 0, %s272
      %s274 = sphi 0, %s272
      %s275 = sphi 0, %s274
      %s289 = sphi 0, %s275
      %s293 = sphi 0, %s293
      %s295 = sphi 0, %s293
      %s296 = sphi 0, %s295
      %s310 = sphi 0, %s296
      %s314 = sphi 0, %s314
      %s316 = sphi 0, %s314
      %s317 = sphi 0, %s316
      %s331 = sphi 0, %s317
      %s335 = sphi 0, %s335
      %s337 = sphi 0, %s335
      %s338 = sphi 0, %s337
      %s352 = sphi 0, %s338
      %s356 = sphi 0, %s356
      %s358 = sphi 0, %s356
      %s359 = sphi 0, %s358
      %s373 = sphi 0, %s359
      %s377 = sphi 0, %s377
      %s379 = sphi 0, %s377
      %s380 = sphi 0, %s379
      %s394 = sphi 0, %s380
      %s398 = sphi 0, %s398
      %s400 = sphi 0, %s398
      %s401 = sphi 0, %s400
      %s415 = sphi 0, %s401
      %s419 = sphi 0, %s419
      %s421 = sphi 0, %s419
      %s422 = sphi 0, %s421
      %s436 = sphi 0, %s422
      %s440 = sphi 0, %s440
      %s442 = sphi 0, %s440
      %s443 = sphi 0, %s442
      %s457 = sphi 0, %s443
      %s461 = sphi 0, %s461
      %s463 = sphi 0, %s461
      %s464 = sphi 0, %s463
      %s478 = sphi 0, %s464
      %s482 = sphi 0, %s482
      %s484 = sphi 0, %s482
      %s485 = sphi 0, %s484
      %s499 = sphi 0, %s485
      %s503 = sphi 0, %s503
      %s505 = sphi 0, %s503
      %s506 = sphi 0, %s505
      %s520 = sphi 0, %s506
      %s524 = sphi 0, %s524
      %s526 = sphi 0, %s524
      %s527 = sphi 0, %s526
      %s541 = sphi 0, %s527
      %s545 = sphi 0, %s545
      %s547 = sphi 0, %s545
      %s548 = sphi 0, %s547
      %s562 = sphi 0, %s548
      %s566 = sphi 0, %s566
      %s568 = sphi 0, %s566
      %s569 = sphi 0, %s568
      %s583 = sphi 0, %s569
      %s587 = sphi 0, %s587
      %s589 = sphi 0, %s587
      %s590 = sphi 0, %s589
      %s604 = sphi 0, %s590
      %s608 = sphi 0, %s608
      %s610 = sphi 0, %s608
      %s611 = sphi 0, %s610
      %s625 = sphi 0, %s611
      %s629 = sphi 0, %s629
      %s631 = sphi 0, %s629
      %s632 = sphi 0, %s631
      %s646 = sphi 0, %s632
      %s650 = sphi 0, %s650
      %s652 = sphi 0, %s650
      %s653 = sphi 0, %s652
      %s667 = sphi 0, %s653
      %s671 = sphi 0, %s671
      %s673 = sphi 0, %s671
      %s674 = sphi 0, %s673
      %s688 = sphi 0, %s674
      %s692 = sphi 0, %s692
      %s694 = sphi 0, %s692
      %s695 = sphi 0, %s694
      %s709 = sphi 0, %s695
      %s713 = sphi 0, %s713
      %s715 = sphi 0, %s713
      %s716 = sphi 0, %s715
      %s730 = sphi 0, %s716
      %s734 = sphi 0, %s734
      %s736 = sphi 0, %s734
      %s737 = sphi 0, %s736
      %s751 = sphi 0, %s737
      %s755 = sphi 0, %s755
      %s757 = sphi 0, %s755
      %s758 = sphi 0, %s757
      %s772 = sphi 0, %s758
      %s776 = sphi 0, %s776
      %s778 = sphi 0, %s776
      %s779 = sphi 0, %s778
      %s793 = sphi 0, %s779
      %s797 = sphi 0, %s797
      %s799 = sphi 0, %s797
      %s800 = sphi 0, %s799
      %s814 = sphi 0, %s800
      %s818 = sphi 0, %s818
      %s820 = sphi 0, %s818
      %s821 = sphi 0, %s820
      %s835 = sphi 0, %s821
      %s839 = sphi 0, %s839
      %s841 = sphi 0, %s839
      %s842 = sphi 0, %s841
      %s856 = sphi 0, %s842
      %s860 = sphi 0, %s860
      %s862 = sphi 0, %s860
      %s863 = sphi 0, %s862
      %s877 = sphi 0, %s863
      %s881 = sphi 0, %s881
      %s883 = sphi 0, %s881
      %s884 = sphi 0, %s883
      %s898 = sphi 0, %s884
      %s904 = sphi 0, %s906
      %s907 = sphi 0, %s904
      %s908 = sphi 0, %s907
      %s924 = sphi 0, %s908
    $region4: #{tpu_custom_call.1} parent=1 // loop_header_branch
      %110 = sbr.rel (%p108) target = $region8
    $region5: #{tpu_custom_call.1} parent=1 // loop_body
      %s112 = ssub.s32 %s107, 1
      %s113 = ssub.s32 %s107, 2
      %s114 = sadd.s32 %s107, 1
      %s115 = ssub.s32 %s107, %s114
      %p116 = scmp.eq.s32.totalorder %s115, 0
      %s118 = sadd.s32 %s117, 1
      %s119 = scalar_select %p116, %s117, %s118
      %p122 = pneg %p116
      %p123 = scmp.eq.s32.totalorder %s107, 3
      %p124 = por %p122, %p123
      %p125 = scmp.ne.s32.totalorder %s117, %s120
      %p126 = scmp.eq.s32.totalorder %s107, 0
      %p127 = por %p125, %p126
      %p128 = scmp.ne.s32.totalorder %s117, %s120
      %p129 = scmp.eq.s32.totalorder %s112, 3
      %p130 = por %p128, %p129
      %p131 = scmp.ne.s32.totalorder %s120, %s121
      %p132 = scmp.eq.s32.totalorder %s112, 0
      %p133 = por %p131, %p132
      %p134 = scmp.ne.s32.totalorder %s120, %s121
      %p135 = scmp.eq.s32.totalorder %s113, 3
      %p136 = por %p134, %p135
      %p138 = scmp.ne.s32.totalorder %s121, %s137
      %p139 = scmp.eq.s32.totalorder %s113, 0
      %p140 = por %p138, %p139
      %s141 = ssub.s32 %s107, %s114
      %p142 = scmp.eq.s32.totalorder %s141, 0
      %s144 = sadd.s32 %s143, 1
      %s145 = scalar_select %p142, %s143, %s144
      %p148 = pneg %p142
      %p149 = scmp.eq.s32.totalorder %s107, 3
      %p150 = por %p148, %p149
      %p151 = scmp.ne.s32.totalorder %s143, %s146
      %p152 = scmp.eq.s32.totalorder %s107, 0
      %p153 = por %p151, %p152
      %p154 = scmp.ne.s32.totalorder %s143, %s146
      %p155 = scmp.eq.s32.totalorder %s112, 3
      %p156 = por %p154, %p155
      %p157 = scmp.ne.s32.totalorder %s146, %s147
      %p158 = scmp.eq.s32.totalorder %s112, 0
      %p159 = por %p157, %p158
      %p160 = scmp.ne.s32.totalorder %s146, %s147
      %p161 = scmp.eq.s32.totalorder %s113, 3
      %p162 = por %p160, %p161
      %p164 = scmp.ne.s32.totalorder %s147, %s163
      %p165 = scmp.eq.s32.totalorder %s113, 0
      %p166 = por %p164, %p165
      %s168 = sadd.s32 %s167, 1
      %p171 = scmp.eq.s32.totalorder %s107, 3
      %p172 = scmp.ne.s32.totalorder %s167, %s169
      %p173 = scmp.eq.s32.totalorder %s107, 0
      %p174 = por %p172, %p173
      %p175 = scmp.ne.s32.totalorder %s167, %s169
      %p176 = scmp.eq.s32.totalorder %s112, 3
      %p177 = por %p175, %p176
      %p178 = scmp.ne.s32.totalorder %s169, %s170
      %p179 = scmp.eq.s32.totalorder %s112, 0
      %p180 = por %p178, %p179
      %p181 = scmp.ne.s32.totalorder %s169, %s170
      %p182 = scmp.eq.s32.totalorder %s113, 3
      %p183 = por %p181, %p182
      %p185 = scmp.ne.s32.totalorder %s170, %s184
      %p186 = scmp.eq.s32.totalorder %s113, 0
      %p187 = por %p185, %p186
      %s189 = sadd.s32 %s188, 1
      %p192 = scmp.eq.s32.totalorder %s107, 3
      %p193 = scmp.ne.s32.totalorder %s188, %s190
      %p194 = scmp.eq.s32.totalorder %s107, 0
      %p195 = por %p193, %p194
      %p196 = scmp.ne.s32.totalorder %s188, %s190
      %p197 = scmp.eq.s32.totalorder %s112, 3
      %p198 = por %p196, %p197
      %p199 = scmp.ne.s32.totalorder %s190, %s191
      %p200 = scmp.eq.s32.totalorder %s112, 0
      %p201 = por %p199, %p200
      %p202 = scmp.ne.s32.totalorder %s190, %s191
      %p203 = scmp.eq.s32.totalorder %s113, 3
      %p204 = por %p202, %p203
      %p206 = scmp.ne.s32.totalorder %s191, %s205
      %p207 = scmp.eq.s32.totalorder %s113, 0
      %p208 = por %p206, %p207
      %s210 = sadd.s32 %s209, 1
      %p213 = scmp.eq.s32.totalorder %s107, 3
      %p214 = scmp.ne.s32.totalorder %s209, %s211
      %p215 = scmp.eq.s32.totalorder %s107, 0
      %p216 = por %p214, %p215
      %p217 = scmp.ne.s32.totalorder %s209, %s211
      %p218 = scmp.eq.s32.totalorder %s112, 3
      %p219 = por %p217, %p218
      %p220 = scmp.ne.s32.totalorder %s211, %s212
      %p221 = scmp.eq.s32.totalorder %s112, 0
      %p222 = por %p220, %p221
      %p223 = scmp.ne.s32.totalorder %s211, %s212
      %p224 = scmp.eq.s32.totalorder %s113, 3
      %p225 = por %p223, %p224
      %p227 = scmp.ne.s32.totalorder %s212, %s226
      %p228 = scmp.eq.s32.totalorder %s113, 0
      %p229 = por %p227, %p228
      %s231 = sadd.s32 %s230, 1
      %p234 = scmp.eq.s32.totalorder %s107, 3
      %p235 = scmp.ne.s32.totalorder %s230, %s232
      %p236 = scmp.eq.s32.totalorder %s107, 0
      %p237 = por %p235, %p236
      %p238 = scmp.ne.s32.totalorder %s230, %s232
      %p239 = scmp.eq.s32.totalorder %s112, 3
      %p240 = por %p238, %p239
      %p241 = scmp.ne.s32.totalorder %s232, %s233
      %p242 = scmp.eq.s32.totalorder %s112, 0
      %p243 = por %p241, %p242
      %p244 = scmp.ne.s32.totalorder %s232, %s233
      %p245 = scmp.eq.s32.totalorder %s113, 3
      %p246 = por %p244, %p245
      %p248 = scmp.ne.s32.totalorder %s233, %s247
      %p249 = scmp.eq.s32.totalorder %s113, 0
      %p250 = por %p248, %p249
      %s252 = sadd.s32 %s251, 1
      %p255 = scmp.eq.s32.totalorder %s107, 3
      %p256 = scmp.ne.s32.totalorder %s251, %s253
      %p257 = scmp.eq.s32.totalorder %s107, 0
      %p258 = por %p256, %p257
      %p259 = scmp.ne.s32.totalorder %s251, %s253
      %p260 = scmp.eq.s32.totalorder %s112, 3
      %p261 = por %p259, %p260
      %p262 = scmp.ne.s32.totalorder %s253, %s254
      %p263 = scmp.eq.s32.totalorder %s112, 0
      %p264 = por %p262, %p263
      %p265 = scmp.ne.s32.totalorder %s253, %s254
      %p266 = scmp.eq.s32.totalorder %s113, 3
      %p267 = por %p265, %p266
      %p269 = scmp.ne.s32.totalorder %s254, %s268
      %p270 = scmp.eq.s32.totalorder %s113, 0
      %p271 = por %p269, %p270
      %s273 = sadd.s32 %s272, 1
      %p276 = scmp.eq.s32.totalorder %s107, 3
      %p277 = scmp.ne.s32.totalorder %s272, %s274
      %p278 = scmp.eq.s32.totalorder %s107, 0
      %p279 = por %p277, %p278
      %p280 = scmp.ne.s32.totalorder %s272, %s274
      %p281 = scmp.eq.s32.totalorder %s112, 3
      %p282 = por %p280, %p281
      %p283 = scmp.ne.s32.totalorder %s274, %s275
      %p284 = scmp.eq.s32.totalorder %s112, 0
      %p285 = por %p283, %p284
      %p286 = scmp.ne.s32.totalorder %s274, %s275
      %p287 = scmp.eq.s32.totalorder %s113, 3
      %p288 = por %p286, %p287
      %p290 = scmp.ne.s32.totalorder %s275, %s289
      %p291 = scmp.eq.s32.totalorder %s113, 0
      %p292 = por %p290, %p291
      %s294 = sadd.s32 %s293, 1
      %p297 = scmp.eq.s32.totalorder %s107, 3
      %p298 = scmp.ne.s32.totalorder %s293, %s295
      %p299 = scmp.eq.s32.totalorder %s107, 0
      %p300 = por %p298, %p299
      %p301 = scmp.ne.s32.totalorder %s293, %s295
      %p302 = scmp.eq.s32.totalorder %s112, 3
      %p303 = por %p301, %p302
      %p304 = scmp.ne.s32.totalorder %s295, %s296
      %p305 = scmp.eq.s32.totalorder %s112, 0
      %p306 = por %p304, %p305
      %p307 = scmp.ne.s32.totalorder %s295, %s296
      %p308 = scmp.eq.s32.totalorder %s113, 3
      %p309 = por %p307, %p308
      %p311 = scmp.ne.s32.totalorder %s296, %s310
      %p312 = scmp.eq.s32.totalorder %s113, 0
      %p313 = por %p311, %p312
      %s315 = sadd.s32 %s314, 1
      %p318 = scmp.eq.s32.totalorder %s107, 3
      %p319 = scmp.ne.s32.totalorder %s314, %s316
      %p320 = scmp.eq.s32.totalorder %s107, 0
      %p321 = por %p319, %p320
      %p322 = scmp.ne.s32.totalorder %s314, %s316
      %p323 = scmp.eq.s32.totalorder %s112, 3
      %p324 = por %p322, %p323
      %p325 = scmp.ne.s32.totalorder %s316, %s317
      %p326 = scmp.eq.s32.totalorder %s112, 0
      %p327 = por %p325, %p326
      %p328 = scmp.ne.s32.totalorder %s316, %s317
      %p329 = scmp.eq.s32.totalorder %s113, 3
      %p330 = por %p328, %p329
      %p332 = scmp.ne.s32.totalorder %s317, %s331
      %p333 = scmp.eq.s32.totalorder %s113, 0
      %p334 = por %p332, %p333
      %s336 = sadd.s32 %s335, 1
      %p339 = scmp.eq.s32.totalorder %s107, 3
      %p340 = scmp.ne.s32.totalorder %s335, %s337
      %p341 = scmp.eq.s32.totalorder %s107, 0
      %p342 = por %p340, %p341
      %p343 = scmp.ne.s32.totalorder %s335, %s337
      %p344 = scmp.eq.s32.totalorder %s112, 3
      %p345 = por %p343, %p344
      %p346 = scmp.ne.s32.totalorder %s337, %s338
      %p347 = scmp.eq.s32.totalorder %s112, 0
      %p348 = por %p346, %p347
      %p349 = scmp.ne.s32.totalorder %s337, %s338
      %p350 = scmp.eq.s32.totalorder %s113, 3
      %p351 = por %p349, %p350
      %p353 = scmp.ne.s32.totalorder %s338, %s352
      %p354 = scmp.eq.s32.totalorder %s113, 0
      %p355 = por %p353, %p354
      %s357 = sadd.s32 %s356, 1
      %p360 = scmp.eq.s32.totalorder %s107, 3
      %p361 = scmp.ne.s32.totalorder %s356, %s358
      %p362 = scmp.eq.s32.totalorder %s107, 0
      %p363 = por %p361, %p362
      %p364 = scmp.ne.s32.totalorder %s356, %s358
      %p365 = scmp.eq.s32.totalorder %s112, 3
      %p366 = por %p364, %p365
      %p367 = scmp.ne.s32.totalorder %s358, %s359
      %p368 = scmp.eq.s32.totalorder %s112, 0
      %p369 = por %p367, %p368
      %p370 = scmp.ne.s32.totalorder %s358, %s359
      %p371 = scmp.eq.s32.totalorder %s113, 3
      %p372 = por %p370, %p371
      %p374 = scmp.ne.s32.totalorder %s359, %s373
      %p375 = scmp.eq.s32.totalorder %s113, 0
      %p376 = por %p374, %p375
      %s378 = sadd.s32 %s377, 1
      %p381 = scmp.eq.s32.totalorder %s107, 3
      %p382 = scmp.ne.s32.totalorder %s377, %s379
      %p383 = scmp.eq.s32.totalorder %s107, 0
      %p384 = por %p382, %p383
      %p385 = scmp.ne.s32.totalorder %s377, %s379
      %p386 = scmp.eq.s32.totalorder %s112, 3
      %p387 = por %p385, %p386
      %p388 = scmp.ne.s32.totalorder %s379, %s380
      %p389 = scmp.eq.s32.totalorder %s112, 0
      %p390 = por %p388, %p389
      %p391 = scmp.ne.s32.totalorder %s379, %s380
      %p392 = scmp.eq.s32.totalorder %s113, 3
      %p393 = por %p391, %p392
      %p395 = scmp.ne.s32.totalorder %s380, %s394
      %p396 = scmp.eq.s32.totalorder %s113, 0
      %p397 = por %p395, %p396
      %s399 = sadd.s32 %s398, 1
      %p402 = scmp.eq.s32.totalorder %s107, 3
      %p403 = scmp.ne.s32.totalorder %s398, %s400
      %p404 = scmp.eq.s32.totalorder %s107, 0
      %p405 = por %p403, %p404
      %p406 = scmp.ne.s32.totalorder %s398, %s400
      %p407 = scmp.eq.s32.totalorder %s112, 3
      %p408 = por %p406, %p407
      %p409 = scmp.ne.s32.totalorder %s400, %s401
      %p410 = scmp.eq.s32.totalorder %s112, 0
      %p411 = por %p409, %p410
      %p412 = scmp.ne.s32.totalorder %s400, %s401
      %p413 = scmp.eq.s32.totalorder %s113, 3
      %p414 = por %p412, %p413
      %p416 = scmp.ne.s32.totalorder %s401, %s415
      %p417 = scmp.eq.s32.totalorder %s113, 0
      %p418 = por %p416, %p417
      %s420 = sadd.s32 %s419, 1
      %p423 = scmp.eq.s32.totalorder %s107, 3
      %p424 = scmp.ne.s32.totalorder %s419, %s421
      %p425 = scmp.eq.s32.totalorder %s107, 0
      %p426 = por %p424, %p425
      %p427 = scmp.ne.s32.totalorder %s419, %s421
      %p428 = scmp.eq.s32.totalorder %s112, 3
      %p429 = por %p427, %p428
      %p430 = scmp.ne.s32.totalorder %s421, %s422
      %p431 = scmp.eq.s32.totalorder %s112, 0
      %p432 = por %p430, %p431
      %p433 = scmp.ne.s32.totalorder %s421, %s422
      %p434 = scmp.eq.s32.totalorder %s113, 3
      %p435 = por %p433, %p434
      %p437 = scmp.ne.s32.totalorder %s422, %s436
      %p438 = scmp.eq.s32.totalorder %s113, 0
      %p439 = por %p437, %p438
      %s441 = sadd.s32 %s440, 1
      %p444 = scmp.eq.s32.totalorder %s107, 3
      %p445 = scmp.ne.s32.totalorder %s440, %s442
      %p446 = scmp.eq.s32.totalorder %s107, 0
      %p447 = por %p445, %p446
      %p448 = scmp.ne.s32.totalorder %s440, %s442
      %p449 = scmp.eq.s32.totalorder %s112, 3
      %p450 = por %p448, %p449
      %p451 = scmp.ne.s32.totalorder %s442, %s443
      %p452 = scmp.eq.s32.totalorder %s112, 0
      %p453 = por %p451, %p452
      %p454 = scmp.ne.s32.totalorder %s442, %s443
      %p455 = scmp.eq.s32.totalorder %s113, 3
      %p456 = por %p454, %p455
      %p458 = scmp.ne.s32.totalorder %s443, %s457
      %p459 = scmp.eq.s32.totalorder %s113, 0
      %p460 = por %p458, %p459
      %s462 = sadd.s32 %s461, 1
      %p465 = scmp.eq.s32.totalorder %s107, 3
      %p466 = scmp.ne.s32.totalorder %s461, %s463
      %p467 = scmp.eq.s32.totalorder %s107, 0
      %p468 = por %p466, %p467
      %p469 = scmp.ne.s32.totalorder %s461, %s463
      %p470 = scmp.eq.s32.totalorder %s112, 3
      %p471 = por %p469, %p470
      %p472 = scmp.ne.s32.totalorder %s463, %s464
      %p473 = scmp.eq.s32.totalorder %s112, 0
      %p474 = por %p472, %p473
      %p475 = scmp.ne.s32.totalorder %s463, %s464
      %p476 = scmp.eq.s32.totalorder %s113, 3
      %p477 = por %p475, %p476
      %p479 = scmp.ne.s32.totalorder %s464, %s478
      %p480 = scmp.eq.s32.totalorder %s113, 0
      %p481 = por %p479, %p480
      %s483 = sadd.s32 %s482, 1
      %p486 = scmp.eq.s32.totalorder %s107, 3
      %p487 = scmp.ne.s32.totalorder %s482, %s484
      %p488 = scmp.eq.s32.totalorder %s107, 0
      %p489 = por %p487, %p488
      %p490 = scmp.ne.s32.totalorder %s482, %s484
      %p491 = scmp.eq.s32.totalorder %s112, 3
      %p492 = por %p490, %p491
      %p493 = scmp.ne.s32.totalorder %s484, %s485
      %p494 = scmp.eq.s32.totalorder %s112, 0
      %p495 = por %p493, %p494
      %p496 = scmp.ne.s32.totalorder %s484, %s485
      %p497 = scmp.eq.s32.totalorder %s113, 3
      %p498 = por %p496, %p497
      %p500 = scmp.ne.s32.totalorder %s485, %s499
      %p501 = scmp.eq.s32.totalorder %s113, 0
      %p502 = por %p500, %p501
      %s504 = sadd.s32 %s503, 1
      %p507 = scmp.eq.s32.totalorder %s107, 3
      %p508 = scmp.ne.s32.totalorder %s503, %s505
      %p509 = scmp.eq.s32.totalorder %s107, 0
      %p510 = por %p508, %p509
      %p511 = scmp.ne.s32.totalorder %s503, %s505
      %p512 = scmp.eq.s32.totalorder %s112, 3
      %p513 = por %p511, %p512
      %p514 = scmp.ne.s32.totalorder %s505, %s506
      %p515 = scmp.eq.s32.totalorder %s112, 0
      %p516 = por %p514, %p515
      %p517 = scmp.ne.s32.totalorder %s505, %s506
      %p518 = scmp.eq.s32.totalorder %s113, 3
      %p519 = por %p517, %p518
      %p521 = scmp.ne.s32.totalorder %s506, %s520
      %p522 = scmp.eq.s32.totalorder %s113, 0
      %p523 = por %p521, %p522
      %s525 = sadd.s32 %s524, 1
      %p528 = scmp.eq.s32.totalorder %s107, 3
      %p529 = scmp.ne.s32.totalorder %s524, %s526
      %p530 = scmp.eq.s32.totalorder %s107, 0
      %p531 = por %p529, %p530
      %p532 = scmp.ne.s32.totalorder %s524, %s526
      %p533 = scmp.eq.s32.totalorder %s112, 3
      %p534 = por %p532, %p533
      %p535 = scmp.ne.s32.totalorder %s526, %s527
      %p536 = scmp.eq.s32.totalorder %s112, 0
      %p537 = por %p535, %p536
      %p538 = scmp.ne.s32.totalorder %s526, %s527
      %p539 = scmp.eq.s32.totalorder %s113, 3
      %p540 = por %p538, %p539
      %p542 = scmp.ne.s32.totalorder %s527, %s541
      %p543 = scmp.eq.s32.totalorder %s113, 0
      %p544 = por %p542, %p543
      %s546 = sadd.s32 %s545, 1
      %p549 = scmp.eq.s32.totalorder %s107, 3
      %p550 = scmp.ne.s32.totalorder %s545, %s547
      %p551 = scmp.eq.s32.totalorder %s107, 0
      %p552 = por %p550, %p551
      %p553 = scmp.ne.s32.totalorder %s545, %s547
      %p554 = scmp.eq.s32.totalorder %s112, 3
      %p555 = por %p553, %p554
      %p556 = scmp.ne.s32.totalorder %s547, %s548
      %p557 = scmp.eq.s32.totalorder %s112, 0
      %p558 = por %p556, %p557
      %p559 = scmp.ne.s32.totalorder %s547, %s548
      %p560 = scmp.eq.s32.totalorder %s113, 3
      %p561 = por %p559, %p560
      %p563 = scmp.ne.s32.totalorder %s548, %s562
      %p564 = scmp.eq.s32.totalorder %s113, 0
      %p565 = por %p563, %p564
      %s567 = sadd.s32 %s566, 1
      %p570 = scmp.eq.s32.totalorder %s107, 3
      %p571 = scmp.ne.s32.totalorder %s566, %s568
      %p572 = scmp.eq.s32.totalorder %s107, 0
      %p573 = por %p571, %p572
      %p574 = scmp.ne.s32.totalorder %s566, %s568
      %p575 = scmp.eq.s32.totalorder %s112, 3
      %p576 = por %p574, %p575
      %p577 = scmp.ne.s32.totalorder %s568, %s569
      %p578 = scmp.eq.s32.totalorder %s112, 0
      %p579 = por %p577, %p578
      %p580 = scmp.ne.s32.totalorder %s568, %s569
      %p581 = scmp.eq.s32.totalorder %s113, 3
      %p582 = por %p580, %p581
      %p584 = scmp.ne.s32.totalorder %s569, %s583
      %p585 = scmp.eq.s32.totalorder %s113, 0
      %p586 = por %p584, %p585
      %s588 = sadd.s32 %s587, 1
      %p591 = scmp.eq.s32.totalorder %s107, 3
      %p592 = scmp.ne.s32.totalorder %s587, %s589
      %p593 = scmp.eq.s32.totalorder %s107, 0
      %p594 = por %p592, %p593
      %p595 = scmp.ne.s32.totalorder %s587, %s589
      %p596 = scmp.eq.s32.totalorder %s112, 3
      %p597 = por %p595, %p596
      %p598 = scmp.ne.s32.totalorder %s589, %s590
      %p599 = scmp.eq.s32.totalorder %s112, 0
      %p600 = por %p598, %p599
      %p601 = scmp.ne.s32.totalorder %s589, %s590
      %p602 = scmp.eq.s32.totalorder %s113, 3
      %p603 = por %p601, %p602
      %p605 = scmp.ne.s32.totalorder %s590, %s604
      %p606 = scmp.eq.s32.totalorder %s113, 0
      %p607 = por %p605, %p606
      %s609 = sadd.s32 %s608, 1
      %p612 = scmp.eq.s32.totalorder %s107, 3
      %p613 = scmp.ne.s32.totalorder %s608, %s610
      %p614 = scmp.eq.s32.totalorder %s107, 0
      %p615 = por %p613, %p614
      %p616 = scmp.ne.s32.totalorder %s608, %s610
      %p617 = scmp.eq.s32.totalorder %s112, 3
      %p618 = por %p616, %p617
      %p619 = scmp.ne.s32.totalorder %s610, %s611
      %p620 = scmp.eq.s32.totalorder %s112, 0
      %p621 = por %p619, %p620
      %p622 = scmp.ne.s32.totalorder %s610, %s611
      %p623 = scmp.eq.s32.totalorder %s113, 3
      %p624 = por %p622, %p623
      %p626 = scmp.ne.s32.totalorder %s611, %s625
      %p627 = scmp.eq.s32.totalorder %s113, 0
      %p628 = por %p626, %p627
      %s630 = sadd.s32 %s629, 1
      %p633 = scmp.eq.s32.totalorder %s107, 3
      %p634 = scmp.ne.s32.totalorder %s629, %s631
      %p635 = scmp.eq.s32.totalorder %s107, 0
      %p636 = por %p634, %p635
      %p637 = scmp.ne.s32.totalorder %s629, %s631
      %p638 = scmp.eq.s32.totalorder %s112, 3
      %p639 = por %p637, %p638
      %p640 = scmp.ne.s32.totalorder %s631, %s632
      %p641 = scmp.eq.s32.totalorder %s112, 0
      %p642 = por %p640, %p641
      %p643 = scmp.ne.s32.totalorder %s631, %s632
      %p644 = scmp.eq.s32.totalorder %s113, 3
      %p645 = por %p643, %p644
      %p647 = scmp.ne.s32.totalorder %s632, %s646
      %p648 = scmp.eq.s32.totalorder %s113, 0
      %p649 = por %p647, %p648
      %s651 = sadd.s32 %s650, 1
      %p654 = scmp.eq.s32.totalorder %s107, 3
      %p655 = scmp.ne.s32.totalorder %s650, %s652
      %p656 = scmp.eq.s32.totalorder %s107, 0
      %p657 = por %p655, %p656
      %p658 = scmp.ne.s32.totalorder %s650, %s652
      %p659 = scmp.eq.s32.totalorder %s112, 3
      %p660 = por %p658, %p659
      %p661 = scmp.ne.s32.totalorder %s652, %s653
      %p662 = scmp.eq.s32.totalorder %s112, 0
      %p663 = por %p661, %p662
      %p664 = scmp.ne.s32.totalorder %s652, %s653
      %p665 = scmp.eq.s32.totalorder %s113, 3
      %p666 = por %p664, %p665
      %p668 = scmp.ne.s32.totalorder %s653, %s667
      %p669 = scmp.eq.s32.totalorder %s113, 0
      %p670 = por %p668, %p669
      %s672 = sadd.s32 %s671, 1
      %p675 = scmp.eq.s32.totalorder %s107, 3
      %p676 = scmp.ne.s32.totalorder %s671, %s673
      %p677 = scmp.eq.s32.totalorder %s107, 0
      %p678 = por %p676, %p677
      %p679 = scmp.ne.s32.totalorder %s671, %s673
      %p680 = scmp.eq.s32.totalorder %s112, 3
      %p681 = por %p679, %p680
      %p682 = scmp.ne.s32.totalorder %s673, %s674
      %p683 = scmp.eq.s32.totalorder %s112, 0
      %p684 = por %p682, %p683
      %p685 = scmp.ne.s32.totalorder %s673, %s674
      %p686 = scmp.eq.s32.totalorder %s113, 3
      %p687 = por %p685, %p686
      %p689 = scmp.ne.s32.totalorder %s674, %s688
      %p690 = scmp.eq.s32.totalorder %s113, 0
      %p691 = por %p689, %p690
      %s693 = sadd.s32 %s692, 1
      %p696 = scmp.eq.s32.totalorder %s107, 3
      %p697 = scmp.ne.s32.totalorder %s692, %s694
      %p698 = scmp.eq.s32.totalorder %s107, 0
      %p699 = por %p697, %p698
      %p700 = scmp.ne.s32.totalorder %s692, %s694
      %p701 = scmp.eq.s32.totalorder %s112, 3
      %p702 = por %p700, %p701
      %p703 = scmp.ne.s32.totalorder %s694, %s695
      %p704 = scmp.eq.s32.totalorder %s112, 0
      %p705 = por %p703, %p704
      %p706 = scmp.ne.s32.totalorder %s694, %s695
      %p707 = scmp.eq.s32.totalorder %s113, 3
      %p708 = por %p706, %p707
      %p710 = scmp.ne.s32.totalorder %s695, %s709
      %p711 = scmp.eq.s32.totalorder %s113, 0
      %p712 = por %p710, %p711
      %s714 = sadd.s32 %s713, 1
      %p717 = scmp.eq.s32.totalorder %s107, 3
      %p718 = scmp.ne.s32.totalorder %s713, %s715
      %p719 = scmp.eq.s32.totalorder %s107, 0
      %p720 = por %p718, %p719
      %p721 = scmp.ne.s32.totalorder %s713, %s715
      %p722 = scmp.eq.s32.totalorder %s112, 3
      %p723 = por %p721, %p722
      %p724 = scmp.ne.s32.totalorder %s715, %s716
      %p725 = scmp.eq.s32.totalorder %s112, 0
      %p726 = por %p724, %p725
      %p727 = scmp.ne.s32.totalorder %s715, %s716
      %p728 = scmp.eq.s32.totalorder %s113, 3
      %p729 = por %p727, %p728
      %p731 = scmp.ne.s32.totalorder %s716, %s730
      %p732 = scmp.eq.s32.totalorder %s113, 0
      %p733 = por %p731, %p732
      %s735 = sadd.s32 %s734, 1
      %p738 = scmp.eq.s32.totalorder %s107, 3
      %p739 = scmp.ne.s32.totalorder %s734, %s736
      %p740 = scmp.eq.s32.totalorder %s107, 0
      %p741 = por %p739, %p740
      %p742 = scmp.ne.s32.totalorder %s734, %s736
      %p743 = scmp.eq.s32.totalorder %s112, 3
      %p744 = por %p742, %p743
      %p745 = scmp.ne.s32.totalorder %s736, %s737
      %p746 = scmp.eq.s32.totalorder %s112, 0
      %p747 = por %p745, %p746
      %p748 = scmp.ne.s32.totalorder %s736, %s737
      %p749 = scmp.eq.s32.totalorder %s113, 3
      %p750 = por %p748, %p749
      %p752 = scmp.ne.s32.totalorder %s737, %s751
      %p753 = scmp.eq.s32.totalorder %s113, 0
      %p754 = por %p752, %p753
      %s756 = sadd.s32 %s755, 1
      %p759 = scmp.eq.s32.totalorder %s107, 3
      %p760 = scmp.ne.s32.totalorder %s755, %s757
      %p761 = scmp.eq.s32.totalorder %s107, 0
      %p762 = por %p760, %p761
      %p763 = scmp.ne.s32.totalorder %s755, %s757
      %p764 = scmp.eq.s32.totalorder %s112, 3
      %p765 = por %p763, %p764
      %p766 = scmp.ne.s32.totalorder %s757, %s758
      %p767 = scmp.eq.s32.totalorder %s112, 0
      %p768 = por %p766, %p767
      %p769 = scmp.ne.s32.totalorder %s757, %s758
      %p770 = scmp.eq.s32.totalorder %s113, 3
      %p771 = por %p769, %p770
      %p773 = scmp.ne.s32.totalorder %s758, %s772
      %p774 = scmp.eq.s32.totalorder %s113, 0
      %p775 = por %p773, %p774
      %s777 = sadd.s32 %s776, 1
      %p780 = scmp.eq.s32.totalorder %s107, 3
      %p781 = scmp.ne.s32.totalorder %s776, %s778
      %p782 = scmp.eq.s32.totalorder %s107, 0
      %p783 = por %p781, %p782
      %p784 = scmp.ne.s32.totalorder %s776, %s778
      %p785 = scmp.eq.s32.totalorder %s112, 3
      %p786 = por %p784, %p785
      %p787 = scmp.ne.s32.totalorder %s778, %s779
      %p788 = scmp.eq.s32.totalorder %s112, 0
      %p789 = por %p787, %p788
      %p790 = scmp.ne.s32.totalorder %s778, %s779
      %p791 = scmp.eq.s32.totalorder %s113, 3
      %p792 = por %p790, %p791
      %p794 = scmp.ne.s32.totalorder %s779, %s793
      %p795 = scmp.eq.s32.totalorder %s113, 0
      %p796 = por %p794, %p795
      %s798 = sadd.s32 %s797, 1
      %p801 = scmp.eq.s32.totalorder %s107, 3
      %p802 = scmp.ne.s32.totalorder %s797, %s799
      %p803 = scmp.eq.s32.totalorder %s107, 0
      %p804 = por %p802, %p803
      %p805 = scmp.ne.s32.totalorder %s797, %s799
      %p806 = scmp.eq.s32.totalorder %s112, 3
      %p807 = por %p805, %p806
      %p808 = scmp.ne.s32.totalorder %s799, %s800
      %p809 = scmp.eq.s32.totalorder %s112, 0
      %p810 = por %p808, %p809
      %p811 = scmp.ne.s32.totalorder %s799, %s800
      %p812 = scmp.eq.s32.totalorder %s113, 3
      %p813 = por %p811, %p812
      %p815 = scmp.ne.s32.totalorder %s800, %s814
      %p816 = scmp.eq.s32.totalorder %s113, 0
      %p817 = por %p815, %p816
      %s819 = sadd.s32 %s818, 1
      %p822 = scmp.eq.s32.totalorder %s107, 3
      %p823 = scmp.ne.s32.totalorder %s818, %s820
      %p824 = scmp.eq.s32.totalorder %s107, 0
      %p825 = por %p823, %p824
      %p826 = scmp.ne.s32.totalorder %s818, %s820
      %p827 = scmp.eq.s32.totalorder %s112, 3
      %p828 = por %p826, %p827
      %p829 = scmp.ne.s32.totalorder %s820, %s821
      %p830 = scmp.eq.s32.totalorder %s112, 0
      %p831 = por %p829, %p830
      %p832 = scmp.ne.s32.totalorder %s820, %s821
      %p833 = scmp.eq.s32.totalorder %s113, 3
      %p834 = por %p832, %p833
      %p836 = scmp.ne.s32.totalorder %s821, %s835
      %p837 = scmp.eq.s32.totalorder %s113, 0
      %p838 = por %p836, %p837
      %s840 = sadd.s32 %s839, 1
      %p843 = scmp.eq.s32.totalorder %s107, 3
      %p844 = scmp.ne.s32.totalorder %s839, %s841
      %p845 = scmp.eq.s32.totalorder %s107, 0
      %p846 = por %p844, %p845
      %p847 = scmp.ne.s32.totalorder %s839, %s841
      %p848 = scmp.eq.s32.totalorder %s112, 3
      %p849 = por %p847, %p848
      %p850 = scmp.ne.s32.totalorder %s841, %s842
      %p851 = scmp.eq.s32.totalorder %s112, 0
      %p852 = por %p850, %p851
      %p853 = scmp.ne.s32.totalorder %s841, %s842
      %p854 = scmp.eq.s32.totalorder %s113, 3
      %p855 = por %p853, %p854
      %p857 = scmp.ne.s32.totalorder %s842, %s856
      %p858 = scmp.eq.s32.totalorder %s113, 0
      %p859 = por %p857, %p858
      %s861 = sadd.s32 %s860, 1
      %p864 = scmp.eq.s32.totalorder %s107, 3
      %p865 = scmp.ne.s32.totalorder %s860, %s862
      %p866 = scmp.eq.s32.totalorder %s107, 0
      %p867 = por %p865, %p866
      %p868 = scmp.ne.s32.totalorder %s860, %s862
      %p869 = scmp.eq.s32.totalorder %s112, 3
      %p870 = por %p868, %p869
      %p871 = scmp.ne.s32.totalorder %s862, %s863
      %p872 = scmp.eq.s32.totalorder %s112, 0
      %p873 = por %p871, %p872
      %p874 = scmp.ne.s32.totalorder %s862, %s863
      %p875 = scmp.eq.s32.totalorder %s113, 3
      %p876 = por %p874, %p875
      %p878 = scmp.ne.s32.totalorder %s863, %s877
      %p879 = scmp.eq.s32.totalorder %s113, 0
      %p880 = por %p878, %p879
      %s882 = sadd.s32 %s881, 1
      %p885 = scmp.eq.s32.totalorder %s107, 3
      %p886 = scmp.ne.s32.totalorder %s881, %s883
      %p887 = scmp.eq.s32.totalorder %s107, 0
      %p888 = por %p886, %p887
      %p889 = scmp.ne.s32.totalorder %s881, %s883
      %p890 = scmp.eq.s32.totalorder %s112, 3
      %p891 = por %p889, %p890
      %p892 = scmp.ne.s32.totalorder %s883, %s884
      %p893 = scmp.eq.s32.totalorder %s112, 0
      %p894 = por %p892, %p893
      %p895 = scmp.ne.s32.totalorder %s883, %s884
      %p896 = scmp.eq.s32.totalorder %s113, 3
      %p897 = por %p895, %p896
      %p899 = scmp.ne.s32.totalorder %s884, %s898
      %p900 = scmp.eq.s32.totalorder %s113, 0
      %p901 = por %p899, %p900
      %s902 = ssub.s32 %s107, %s114
      %p903 = scmp.eq.s32.totalorder %s902, 0
      %s905 = sadd.s32 %s904, 1
      %s906 = scalar_select %p903, %s904, %s905
      %p909 = pneg %p903
      %p910 = scmp.eq.s32.totalorder %s107, 3
      %p911 = por %p909, %p910
      %p912 = scmp.ne.s32.totalorder %s904, %s907
      %p913 = scmp.eq.s32.totalorder %s107, 0
      %p914 = por %p912, %p913
      %p915 = scmp.ne.s32.totalorder %s904, %s907
      %p916 = scmp.eq.s32.totalorder %s112, 3
      %p917 = por %p915, %p916
      %p918 = scmp.ne.s32.totalorder %s907, %s908
      %p919 = scmp.eq.s32.totalorder %s112, 0
      %p920 = por %p918, %p919
      %p921 = scmp.ne.s32.totalorder %s907, %s908
      %p922 = scmp.eq.s32.totalorder %s113, 3
      %p923 = por %p921, %p922
      %p925 = scmp.ne.s32.totalorder %s908, %s924
      %p926 = scmp.eq.s32.totalorder %s113, 0
      %p927 = por %p925, %p926
      %p928 = scmp.le.s32.totalorder 1, %s107
      %p929 = scmp.lt.s32.totalorder %s107, 5
      %p930 = pnand %p928, %p929
      %p931 = pneg %p930
      // Predicated region
      $region9: #{tpu_custom_call.1} parent=5 // pred_check
        _
      $region10: #{tpu_custom_call.1} parent=5 // pred_check_branch
        %933 = sbr.rel (%p930) target = $region12
      $region11: #{tpu_custom_call.1} parent=5 // pred_region
        %s934 = ssub.s32 %s107, 1
        // Predicated region
        $region13: #{tpu_custom_call.1} parent=11 // pred_check
          %p935 = pneg %p180
        $region14: #{tpu_custom_call.1} parent=11 // pred_check_branch
          %937 = sbr.rel (%p935) target = $region16
        $region15: #{tpu_custom_call.1} parent=11 // pred_region
          %s939 = ssub.s32 16, 16
          %940 = vsyncadd [#allocation6], %s939
          %s942 = sshll.u32 [#allocation7], 4
          %s943 = int_to_ptr.vmem [resolvable:$true] %s942
          %945 = dma.hbm_to_vmem [thread:$0]  %s5, 16, %s943, [#allocation6]
        $region16: #{tpu_custom_call.1} parent=11 // pred_fallthru
          _
        // Predicated region
        $region17: #{tpu_custom_call.1} parent=11 // pred_check
          %p946 = pneg %p201
        $region18: #{tpu_custom_call.1} parent=11 // pred_check_branch
          %948 = sbr.rel (%p946) target = $region20
        $region19: #{tpu_custom_call.1} parent=11 // pred_region
          %s950 = ssub.s32 16, 16
          %951 = vsyncadd [#allocation9], %s950
          %s953 = sshll.u32 [#allocation8], 4
          %s954 = int_to_ptr.vmem [resolvable:$true] %s953
          %956 = dma.hbm_to_vmem [thread:$0]  %s7, 16, %s954, [#allocation9]
        $region20: #{tpu_custom_call.1} parent=11 // pred_fallthru
          _
        // Predicated region
        $region21: #{tpu_custom_call.1} parent=11 // pred_check
          %p957 = pneg %p222
        $region22: #{tpu_custom_call.1} parent=11 // pred_check_branch
          %959 = sbr.rel (%p957) target = $region24
        $region23: #{tpu_custom_call.1} parent=11 // pred_region
          %s961 = ssub.s32 16, 16
          %962 = vsyncadd [#allocation9], %s961
          %s964 = sshll.u32 [#allocation10], 4
          %s965 = int_to_ptr.vmem [resolvable:$true] %s964
          %967 = dma.hbm_to_vmem [thread:$0]  %s9, 16, %s965, [#allocation9]
        $region24: #{tpu_custom_call.1} parent=11 // pred_fallthru
          _
        // Predicated region
        $region25: #{tpu_custom_call.1} parent=11 // pred_check
          %p968 = pneg %p243
        $region26: #{tpu_custom_call.1} parent=11 // pred_check_branch
          %970 = sbr.rel (%p968) target = $region28
        $region27: #{tpu_custom_call.1} parent=11 // pred_region
          %s972 = ssub.s32 16, 16
          %973 = vsyncadd [#allocation12], %s972
          %s975 = sshll.u32 [#allocation11], 4
          %s976 = int_to_ptr.vmem [resolvable:$true] %s975
          %978 = dma.hbm_to_vmem [thread:$0]  %s11, 16, %s976, [#allocation12]
        $region28: #{tpu_custom_call.1} parent=11 // pred_fallthru
          _
        // Predicated region
        $region29: #{tpu_custom_call.1} parent=11 // pred_check
          %p979 = pneg %p264
        $region30: #{tpu_custom_call.1} parent=11 // pred_check_branch
          %981 = sbr.rel (%p979) target = $region32
        $region31: #{tpu_custom_call.1} parent=11 // pred_region
          %s983 = ssub.s32 256, 256
          %984 = vsyncadd [#allocation12], %s983
          %s985 = sshll.u32 [#allocation13], 4
          %s986 = int_to_ptr.vmem [resolvable:$true] %s985
          %991 = dma.hbm_to_vmem [thread:$0]  %s13, 256, %s986, [#allocation12], 64, 64, 4
        $region32: #{tpu_custom_call.1} parent=11 // pred_fallthru
          _
        // Predicated region
        $region33: #{tpu_custom_call.1} parent=11 // pred_check
          %p992 = pneg %p285
        $region34: #{tpu_custom_call.1} parent=11 // pred_check_branch
          %994 = sbr.rel (%p992) target = $region36
        $region35: #{tpu_custom_call.1} parent=11 // pred_region
          %s996 = ssub.s32 16, 16
          %997 = vsyncadd [#allocation15], %s996
          %s999 = sshll.u32 [#allocation14], 4
          %s1000 = int_to_ptr.vmem [resolvable:$true] %s999
          %1002 = dma.hbm_to_vmem [thread:$0]  %s15, 16, %s1000, [#allocation15]
        $region36: #{tpu_custom_call.1} parent=11 // pred_fallthru
          _
        // Predicated region
        $region37: #{tpu_custom_call.1} parent=11 // pred_check
          %p1003 = pneg %p306
        $region38: #{tpu_custom_call.1} parent=11 // pred_check_branch
          %1005 = sbr.rel (%p1003) target = $region40
        $region39: #{tpu_custom_call.1} parent=11 // pred_region
          %s1007 = ssub.s32 256, 256
          %1008 = vsyncadd [#allocation15], %s1007
          %s1009 = sshll.u32 [#allocation16], 4
          %s1010 = int_to_ptr.vmem [resolvable:$true] %s1009
          %1015 = dma.hbm_to_vmem [thread:$0]  %s17, 256, %s1010, [#allocation15], 64, 64, 4
        $region40: #{tpu_custom_call.1} parent=11 // pred_fallthru
          _
        // Predicated region
        $region41: #{tpu_custom_call.1} parent=11 // pred_check
          %p1016 = pneg %p327
        $region42: #{tpu_custom_call.1} parent=11 // pred_check_branch
          %1018 = sbr.rel (%p1016) target = $region44
        $region43: #{tpu_custom_call.1} parent=11 // pred_region
          %s1020 = ssub.s32 16, 16
          %1021 = vsyncadd [#allocation18], %s1020
          %s1023 = sshll.u32 [#allocation17], 4
          %s1024 = int_to_ptr.vmem [resolvable:$true] %s1023
          %1026 = dma.hbm_to_vmem [thread:$0]  %s19, 16, %s1024, [#allocation18]
        $region44: #{tpu_custom_call.1} parent=11 // pred_fallthru
          _
        // Predicated region
        $region45: #{tpu_custom_call.1} parent=11 // pred_check
          %p1027 = pneg %p348
        $region46: #{tpu_custom_call.1} parent=11 // pred_check_branch
          %1029 = sbr.rel (%p1027) target = $region48
        $region47: #{tpu_custom_call.1} parent=11 // pred_region
          %s1031 = ssub.s32 16, 16
          %1032 = vsyncadd [#allocation18], %s1031
          %s1034 = sshll.u32 [#allocation19], 4
          %s1035 = int_to_ptr.vmem [resolvable:$true] %s1034
          %1037 = dma.hbm_to_vmem [thread:$0]  %s21, 16, %s1035, [#allocation18]
        $region48: #{tpu_custom_call.1} parent=11 // pred_fallthru
          _
        // Predicated region
        $region49: #{tpu_custom_call.1} parent=11 // pred_check
          %p1038 = pneg %p369
        $region50: #{tpu_custom_call.1} parent=11 // pred_check_branch
          %1040 = sbr.rel (%p1038) target = $region52
        $region51: #{tpu_custom_call.1} parent=11 // pred_region
          %s1042 = ssub.s32 16, 16
          %1043 = vsyncadd [#allocation21], %s1042
          %s1045 = sshll.u32 [#allocation20], 4
          %s1046 = int_to_ptr.vmem [resolvable:$true] %s1045
          %1048 = dma.hbm_to_vmem [thread:$0]  %s23, 16, %s1046, [#allocation21]
        $region52: #{tpu_custom_call.1} parent=11 // pred_fallthru
          _
        // Predicated region
        $region53: #{tpu_custom_call.1} parent=11 // pred_check
          %p1049 = pneg %p390
        $region54: #{tpu_custom_call.1} parent=11 // pred_check_branch
          %1051 = sbr.rel (%p1049) target = $region56
        $region55: #{tpu_custom_call.1} parent=11 // pred_region
          %s1053 = ssub.s32 16, 16
          %1054 = vsyncadd [#allocation21], %s1053
          %s1056 = sshll.u32 [#allocation22], 4
          %s1057 = int_to_ptr.vmem [resolvable:$true] %s1056
          %1059 = dma.hbm_to_vmem [thread:$0]  %s25, 16, %s1057, [#allocation21]
        $region56: #{tpu_custom_call.1} parent=11 // pred_fallthru
          _
        // Predicated region
        $region57: #{tpu_custom_call.1} parent=11 // pred_check
          %p1060 = pneg %p411
        $region58: #{tpu_custom_call.1} parent=11 // pred_check_branch
          %1062 = sbr.rel (%p1060) target = $region60
        $region59: #{tpu_custom_call.1} parent=11 // pred_region
          %s1064 = ssub.s32 16, 16
          %1065 = vsyncadd [#allocation24], %s1064
          %s1067 = sshll.u32 [#allocation23], 4
          %s1068 = int_to_ptr.vmem [resolvable:$true] %s1067
          %1070 = dma.hbm_to_vmem [thread:$0]  %s27, 16, %s1068, [#allocation24]
        $region60: #{tpu_custom_call.1} parent=11 // pred_fallthru
          _
        // Predicated region
        $region61: #{tpu_custom_call.1} parent=11 // pred_check
          %p1071 = pneg %p432
        $region62: #{tpu_custom_call.1} parent=11 // pred_check_branch
          %1073 = sbr.rel (%p1071) target = $region64
        $region63: #{tpu_custom_call.1} parent=11 // pred_region
          %s1075 = ssub.s32 16, 16
          %1076 = vsyncadd [#allocation24], %s1075
          %s1078 = sshll.u32 [#allocation25], 4
          %s1079 = int_to_ptr.vmem [resolvable:$true] %s1078
          %1081 = dma.hbm_to_vmem [thread:$0]  %s29, 16, %s1079, [#allocation24]
        $region64: #{tpu_custom_call.1} parent=11 // pred_fallthru
          _
        // Predicated region
        $region65: #{tpu_custom_call.1} parent=11 // pred_check
          %p1082 = pneg %p453
        $region66: #{tpu_custom_call.1} parent=11 // pred_check_branch
          %1084 = sbr.rel (%p1082) target = $region68
        $region67: #{tpu_custom_call.1} parent=11 // pred_region
          %s1086 = ssub.s32 16, 16
          %1087 = vsyncadd [#allocation27], %s1086
          %s1089 = sshll.u32 [#allocation26], 4
          %s1090 = int_to_ptr.vmem [resolvable:$true] %s1089
          %1092 = dma.hbm_to_vmem [thread:$0]  %s31, 16, %s1090, [#allocation27]
        $region68: #{tpu_custom_call.1} parent=11 // pred_fallthru
          _
        // Predicated region
        $region69: #{tpu_custom_call.1} parent=11 // pred_check
          %p1093 = pneg %p474
        $region70: #{tpu_custom_call.1} parent=11 // pred_check_branch
          %1095 = sbr.rel (%p1093) target = $region72
        $region71: #{tpu_custom_call.1} parent=11 // pred_region
          %s1097 = ssub.s32 16, 16
          %1098 = vsyncadd [#allocation27], %s1097
          %s1100 = sshll.u32 [#allocation28], 4
          %s1101 = int_to_ptr.vmem [resolvable:$true] %s1100
          %1103 = dma.hbm_to_vmem [thread:$0]  %s33, 16, %s1101, [#allocation27]
        $region72: #{tpu_custom_call.1} parent=11 // pred_fallthru
          _
        // Predicated region
        $region73: #{tpu_custom_call.1} parent=11 // pred_check
          %p1104 = pneg %p495
        $region74: #{tpu_custom_call.1} parent=11 // pred_check_branch
          %1106 = sbr.rel (%p1104) target = $region76
        $region75: #{tpu_custom_call.1} parent=11 // pred_region
          %s1108 = ssub.s32 16, 16
          %1109 = vsyncadd [#allocation30], %s1108
          %s1111 = sshll.u32 [#allocation29], 4
          %s1112 = int_to_ptr.vmem [resolvable:$true] %s1111
          %1114 = dma.hbm_to_vmem [thread:$0]  %s35, 16, %s1112, [#allocation30]
        $region76: #{tpu_custom_call.1} parent=11 // pred_fallthru
          _
        // Predicated region
        $region77: #{tpu_custom_call.1} parent=11 // pred_check
          %p1115 = pneg %p516
        $region78: #{tpu_custom_call.1} parent=11 // pred_check_branch
          %1117 = sbr.rel (%p1115) target = $region80
        $region79: #{tpu_custom_call.1} parent=11 // pred_region
          %s1119 = ssub.s32 256, 256
          %1120 = vsyncadd [#allocation30], %s1119
          %s1121 = sshll.u32 [#allocation31], 4
          %s1122 = int_to_ptr.vmem [resolvable:$true] %s1121
          %1127 = dma.hbm_to_vmem [thread:$0]  %s37, 256, %s1122, [#allocation30], 64, 64, 4
        $region80: #{tpu_custom_call.1} parent=11 // pred_fallthru
          _
        // Predicated region
        $region81: #{tpu_custom_call.1} parent=11 // pred_check
          %p1128 = pneg %p537
        $region82: #{tpu_custom_call.1} parent=11 // pred_check_branch
          %1130 = sbr.rel (%p1128) target = $region84
        $region83: #{tpu_custom_call.1} parent=11 // pred_region
          %s1132 = ssub.s32 16, 16
          %1133 = vsyncadd [#allocation33], %s1132
          %s1135 = sshll.u32 [#allocation32], 4
          %s1136 = int_to_ptr.vmem [resolvable:$true] %s1135
          %1138 = dma.hbm_to_vmem [thread:$0]  %s39, 16, %s1136, [#allocation33]
        $region84: #{tpu_custom_call.1} parent=11 // pred_fallthru
          _
        // Predicated region
        $region85: #{tpu_custom_call.1} parent=11 // pred_check
          %p1139 = pneg %p558
        $region86: #{tpu_custom_call.1} parent=11 // pred_check_branch
          %1141 = sbr.rel (%p1139) target = $region88
        $region87: #{tpu_custom_call.1} parent=11 // pred_region
          %s1143 = ssub.s32 256, 256
          %1144 = vsyncadd [#allocation33], %s1143
          %s1145 = sshll.u32 [#allocation34], 4
          %s1146 = int_to_ptr.vmem [resolvable:$true] %s1145
          %1151 = dma.hbm_to_vmem [thread:$0]  %s41, 256, %s1146, [#allocation33], 64, 64, 4
        $region88: #{tpu_custom_call.1} parent=11 // pred_fallthru
          _
        // Predicated region
        $region89: #{tpu_custom_call.1} parent=11 // pred_check
          %p1152 = pneg %p579
        $region90: #{tpu_custom_call.1} parent=11 // pred_check_branch
          %1154 = sbr.rel (%p1152) target = $region92
        $region91: #{tpu_custom_call.1} parent=11 // pred_region
          %s1156 = ssub.s32 16, 16
          %1157 = vsyncadd [#allocation36], %s1156
          %s1159 = sshll.u32 [#allocation35], 4
          %s1160 = int_to_ptr.vmem [resolvable:$true] %s1159
          %1162 = dma.hbm_to_vmem [thread:$0]  %s43, 16, %s1160, [#allocation36]
        $region92: #{tpu_custom_call.1} parent=11 // pred_fallthru
          _
        // Predicated region
        $region93: #{tpu_custom_call.1} parent=11 // pred_check
          %p1163 = pneg %p600
        $region94: #{tpu_custom_call.1} parent=11 // pred_check_branch
          %1165 = sbr.rel (%p1163) target = $region96
        $region95: #{tpu_custom_call.1} parent=11 // pred_region
          %s1167 = ssub.s32 16, 16
          %1168 = vsyncadd [#allocation36], %s1167
          %s1170 = sshll.u32 [#allocation37], 4
          %s1171 = int_to_ptr.vmem [resolvable:$true] %s1170
          %1173 = dma.hbm_to_vmem [thread:$0]  %s45, 16, %s1171, [#allocation36]
        $region96: #{tpu_custom_call.1} parent=11 // pred_fallthru
          _
        // Predicated region
        $region97: #{tpu_custom_call.1} parent=11 // pred_check
          %p1174 = pneg %p621
        $region98: #{tpu_custom_call.1} parent=11 // pred_check_branch
          %1176 = sbr.rel (%p1174) target = $region100
        $region99: #{tpu_custom_call.1} parent=11 // pred_region
          %s1178 = ssub.s32 16, 16
          %1179 = vsyncadd [#allocation39], %s1178
          %s1181 = sshll.u32 [#allocation38], 4
          %s1182 = int_to_ptr.vmem [resolvable:$true] %s1181
          %1184 = dma.hbm_to_vmem [thread:$0]  %s47, 16, %s1182, [#allocation39]
        $region100: #{tpu_custom_call.1} parent=11 // pred_fallthru
          _
        // Predicated region
        $region101: #{tpu_custom_call.1} parent=11 // pred_check
          %p1185 = pneg %p642
        $region102: #{tpu_custom_call.1} parent=11 // pred_check_branch
          %1187 = sbr.rel (%p1185) target = $region104
        $region103: #{tpu_custom_call.1} parent=11 // pred_region
          %s1189 = ssub.s32 16, 16
          %1190 = vsyncadd [#allocation39], %s1189
          %s1192 = sshll.u32 [#allocation40], 4
          %s1193 = int_to_ptr.vmem [resolvable:$true] %s1192
          %1195 = dma.hbm_to_vmem [thread:$0]  %s49, 16, %s1193, [#allocation39]
        $region104: #{tpu_custom_call.1} parent=11 // pred_fallthru
          _
        // Predicated region
        $region105: #{tpu_custom_call.1} parent=11 // pred_check
          %p1196 = pneg %p663
        $region106: #{tpu_custom_call.1} parent=11 // pred_check_branch
          %1198 = sbr.rel (%p1196) target = $region108
        $region107: #{tpu_custom_call.1} parent=11 // pred_region
          %s1200 = ssub.s32 16, 16
          %1201 = vsyncadd [#allocation42], %s1200
          %s1203 = sshll.u32 [#allocation41], 4
          %s1204 = int_to_ptr.vmem [resolvable:$true] %s1203
          %1206 = dma.hbm_to_vmem [thread:$0]  %s51, 16, %s1204, [#allocation42]
        $region108: #{tpu_custom_call.1} parent=11 // pred_fallthru
          _
        // Predicated region
        $region109: #{tpu_custom_call.1} parent=11 // pred_check
          %p1207 = pneg %p684
        $region110: #{tpu_custom_call.1} parent=11 // pred_check_branch
          %1209 = sbr.rel (%p1207) target = $region112
        $region111: #{tpu_custom_call.1} parent=11 // pred_region
          %s1211 = ssub.s32 16, 16
          %1212 = vsyncadd [#allocation42], %s1211
          %s1214 = sshll.u32 [#allocation43], 4
          %s1215 = int_to_ptr.vmem [resolvable:$true] %s1214
          %1217 = dma.hbm_to_vmem [thread:$0]  %s53, 16, %s1215, [#allocation42]
        $region112: #{tpu_custom_call.1} parent=11 // pred_fallthru
          _
        // Predicated region
        $region113: #{tpu_custom_call.1} parent=11 // pred_check
          %p1218 = pneg %p705
        $region114: #{tpu_custom_call.1} parent=11 // pred_check_branch
          %1220 = sbr.rel (%p1218) target = $region116
        $region115: #{tpu_custom_call.1} parent=11 // pred_region
          %s1222 = ssub.s32 16, 16
          %1223 = vsyncadd [#allocation45], %s1222
          %s1225 = sshll.u32 [#allocation44], 4
          %s1226 = int_to_ptr.vmem [resolvable:$true] %s1225
          %1228 = dma.hbm_to_vmem [thread:$0]  %s55, 16, %s1226, [#allocation45]
        $region116: #{tpu_custom_call.1} parent=11 // pred_fallthru
          _
        // Predicated region
        $region117: #{tpu_custom_call.1} parent=11 // pred_check
          %p1229 = pneg %p726
        $region118: #{tpu_custom_call.1} parent=11 // pred_check_branch
          %1231 = sbr.rel (%p1229) target = $region120
        $region119: #{tpu_custom_call.1} parent=11 // pred_region
          %s1233 = ssub.s32 16, 16
          %1234 = vsyncadd [#allocation45], %s1233
          %s1236 = sshll.u32 [#allocation46], 4
          %s1237 = int_to_ptr.vmem [resolvable:$true] %s1236
          %1239 = dma.hbm_to_vmem [thread:$0]  %s57, 16, %s1237, [#allocation45]
        $region120: #{tpu_custom_call.1} parent=11 // pred_fallthru
          _
        // Predicated region
        $region121: #{tpu_custom_call.1} parent=11 // pred_check
          %p1240 = pneg %p747
        $region122: #{tpu_custom_call.1} parent=11 // pred_check_branch
          %1242 = sbr.rel (%p1240) target = $region124
        $region123: #{tpu_custom_call.1} parent=11 // pred_region
          %s1244 = ssub.s32 16, 16
          %1245 = vsyncadd [#allocation48], %s1244
          %s1247 = sshll.u32 [#allocation47], 4
          %s1248 = int_to_ptr.vmem [resolvable:$true] %s1247
          %1250 = dma.hbm_to_vmem [thread:$0]  %s59, 16, %s1248, [#allocation48]
        $region124: #{tpu_custom_call.1} parent=11 // pred_fallthru
          _
        // Predicated region
        $region125: #{tpu_custom_call.1} parent=11 // pred_check
          %p1251 = pneg %p768
        $region126: #{tpu_custom_call.1} parent=11 // pred_check_branch
          %1253 = sbr.rel (%p1251) target = $region128
        $region127: #{tpu_custom_call.1} parent=11 // pred_region
          %s1255 = ssub.s32 256, 256
          %1256 = vsyncadd [#allocation48], %s1255
          %s1257 = sshll.u32 [#allocation49], 4
          %s1258 = int_to_ptr.vmem [resolvable:$true] %s1257
          %1263 = dma.hbm_to_vmem [thread:$0]  %s61, 256, %s1258, [#allocation48], 64, 64, 4
        $region128: #{tpu_custom_call.1} parent=11 // pred_fallthru
          _
        // Predicated region
        $region129: #{tpu_custom_call.1} parent=11 // pred_check
          %p1264 = pneg %p789
        $region130: #{tpu_custom_call.1} parent=11 // pred_check_branch
          %1266 = sbr.rel (%p1264) target = $region132
        $region131: #{tpu_custom_call.1} parent=11 // pred_region
          %s1268 = ssub.s32 256, 256
          %1269 = vsyncadd [#allocation51], %s1268
          %s1270 = sshll.u32 [#allocation50], 4
          %s1271 = int_to_ptr.vmem [resolvable:$true] %s1270
          %1276 = dma.hbm_to_vmem [thread:$0]  %s63, 256, %s1271, [#allocation51], 64, 64, 4
        $region132: #{tpu_custom_call.1} parent=11 // pred_fallthru
          _
        // Predicated region
        $region133: #{tpu_custom_call.1} parent=11 // pred_check
          %p1277 = pneg %p810
        $region134: #{tpu_custom_call.1} parent=11 // pred_check_branch
          %1279 = sbr.rel (%p1277) target = $region136
        $region135: #{tpu_custom_call.1} parent=11 // pred_region
          %s1281 = ssub.s32 16, 16
          %1282 = vsyncadd [#allocation51], %s1281
          %s1284 = sshll.u32 [#allocation52], 4
          %s1285 = int_to_ptr.vmem [resolvable:$true] %s1284
          %1287 = dma.hbm_to_vmem [thread:$0]  %s65, 16, %s1285, [#allocation51]
        $region136: #{tpu_custom_call.1} parent=11 // pred_fallthru
          _
        // Predicated region
        $region137: #{tpu_custom_call.1} parent=11 // pred_check
          %p1288 = pneg %p831
        $region138: #{tpu_custom_call.1} parent=11 // pred_check_branch
          %1290 = sbr.rel (%p1288) target = $region140
        $region139: #{tpu_custom_call.1} parent=11 // pred_region
          %s1292 = ssub.s32 256, 256
          %1293 = vsyncadd [#allocation54], %s1292
          %s1294 = sshll.u32 [#allocation53], 4
          %s1295 = int_to_ptr.vmem [resolvable:$true] %s1294
          %1300 = dma.hbm_to_vmem [thread:$0]  %s67, 256, %s1295, [#allocation54], 64, 64, 4
        $region140: #{tpu_custom_call.1} parent=11 // pred_fallthru
          _
        // Predicated region
        $region141: #{tpu_custom_call.1} parent=11 // pred_check
          %p1301 = pneg %p852
        $region142: #{tpu_custom_call.1} parent=11 // pred_check_branch
          %1303 = sbr.rel (%p1301) target = $region144
        $region143: #{tpu_custom_call.1} parent=11 // pred_region
          %s1305 = ssub.s32 16, 16
          %1306 = vsyncadd [#allocation54], %s1305
          %s1308 = sshll.u32 [#allocation55], 4
          %s1309 = int_to_ptr.vmem [resolvable:$true] %s1308
          %1311 = dma.hbm_to_vmem [thread:$0]  %s69, 16, %s1309, [#allocation54]
        $region144: #{tpu_custom_call.1} parent=11 // pred_fallthru
          _
        // Predicated region
        $region145: #{tpu_custom_call.1} parent=11 // pred_check
          %p1312 = pneg %p873
        $region146: #{tpu_custom_call.1} parent=11 // pred_check_branch
          %1314 = sbr.rel (%p1312) target = $region148
        $region147: #{tpu_custom_call.1} parent=11 // pred_region
          %s1316 = ssub.s32 32, 32
          %1317 = vsyncadd [#allocation57], %s1316
          %s1319 = sshll.u32 [#allocation56], 4
          %s1320 = int_to_ptr.vmem [resolvable:$true] %s1319
          %1322 = dma.hbm_to_vmem [thread:$0]  %s71, 32, %s1320, [#allocation57]
        $region148: #{tpu_custom_call.1} parent=11 // pred_fallthru
          _
        // Predicated region
        $region149: #{tpu_custom_call.1} parent=11 // pred_check
          %p1323 = pneg %p894
        $region150: #{tpu_custom_call.1} parent=11 // pred_check_branch
          %1325 = sbr.rel (%p1323) target = $region152
        $region151: #{tpu_custom_call.1} parent=11 // pred_region
          %s1327 = ssub.s32 16, 16
          %1328 = vsyncadd [#allocation57], %s1327
          %s1330 = sshll.u32 [#allocation58], 4
          %s1331 = int_to_ptr.vmem [resolvable:$true] %s1330
          %1333 = dma.hbm_to_vmem [thread:$0]  %s73, 16, %s1331, [#allocation57]
        $region152: #{tpu_custom_call.1} parent=11 // pred_fallthru
          _
      $region12: #{tpu_custom_call.1} parent=5 // pred_fallthru
        _
      %p1334 = scmp.lt.s32.totalorder %s107, 4
      // Predicated region
      $region153: #{tpu_custom_call.1} parent=5 // pred_check
        %p1335 = pneg %p1334
      $region154: #{tpu_custom_call.1} parent=5 // pred_check_branch
        %1337 = sbr.rel (%p1335) target = $region156
      $region155: #{tpu_custom_call.1} parent=5 // pred_region
        // Predicated region
        $region157: #{tpu_custom_call.1} parent=155 // pred_check
          %p1338 = pneg %p127
        $region158: #{tpu_custom_call.1} parent=155 // pred_check_branch
          %1340 = sbr.rel (%p1338) target = $region160
        $region159: #{tpu_custom_call.1} parent=155 // pred_region
          %s1341 = sand.u32 %s117, 1
          %s1342 = scalar_lea.sflag [#allocation3], %s1341
          %s1343 = sand.u32 %s117, 1
          %s1344 = smul.addr %s1343, 16
          %s1345 = scalar_lea.vmem [#allocation2], %s1344
          %s1347 = ssub.s32 256, 256
          %1348 = vsyncadd %s1342, %s1347
          %s1349 = smul.addr %s107, 2
          %s1350 = smul.addr %s1349, 128
          %s1351 = scalar_lea.hbm %s1, %s1350
          %s1352 = sshll.u32 %s1345, 4
          %s1353 = int_to_ptr.vmem [resolvable:$true] %s1352
          %1358 = dma.hbm_to_vmem [thread:$0]  %s1351, 256, %s1353, %s1342, 128, 128, 8
        $region160: #{tpu_custom_call.1} parent=155 // pred_fallthru
          _
        // Predicated region
        $region161: #{tpu_custom_call.1} parent=155 // pred_check
          %p1359 = pneg %p153
        $region162: #{tpu_custom_call.1} parent=155 // pred_check_branch
          %1361 = sbr.rel (%p1359) target = $region164
        $region163: #{tpu_custom_call.1} parent=155 // pred_region
          %s1362 = sand.u32 %s107, 1
          %s1363 = scalar_lea.sflag [#allocation6], %s1362
          %s1364 = sand.u32 %s143, 1
          %s1365 = smul.addr %s1364, 16
          %s1366 = scalar_lea.vmem [#allocation5], %s1365
          %s1368 = ssub.s32 256, 256
          %1369 = vsyncadd %s1363, %s1368
          %s1370 = smul.addr %s107, 2
          %s1371 = smul.addr %s1370, 128
          %s1372 = scalar_lea.hbm %s3, %s1371
          %s1373 = sshll.u32 %s1366, 4
          %s1374 = int_to_ptr.vmem [resolvable:$true] %s1373
          %1379 = dma.hbm_to_vmem [thread:$0]  %s1372, 256, %s1374, %s1363, 128, 128, 8
        $region164: #{tpu_custom_call.1} parent=155 // pred_fallthru
          _
      $region156: #{tpu_custom_call.1} parent=5 // pred_fallthru
        _
      %p1380 = scmp.le.s32.totalorder 1, %s107
      %p1381 = scmp.lt.s32.totalorder %s107, 5
      %p1382 = pnand %p1380, %p1381
      %p1383 = pneg %p1382
      // Predicated region
      $region165: #{tpu_custom_call.1} parent=5 // pred_check
        _
      $region166: #{tpu_custom_call.1} parent=5 // pred_check_branch
        %1385 = sbr.rel (%p1382) target = $region168
      $region167: #{tpu_custom_call.1} parent=5 // pred_region
        %s1386 = ssub.s32 %s107, 1
        %s1387 = sand.u32 %s120, 1
        %s1388 = scalar_lea.sflag [#allocation3], %s1387
        %s1389 = sand.u32 %s120, 1
        %s1390 = smul.addr %s1389, 16
        %s1391 = scalar_lea.vmem [#allocation2], %s1390
        // Predicated region
        $region169: #{tpu_custom_call.1} parent=167 // pred_check
          %p1392 = pneg %p133
        $region170: #{tpu_custom_call.1} parent=167 // pred_check_branch
          %1394 = sbr.rel (%p1392) target = $region172
        $region171: #{tpu_custom_call.1} parent=167 // pred_region
          %1395 = dma.done %s1388, 256
        $region172: #{tpu_custom_call.1} parent=167 // pred_fallthru
          _
        %s1396 = sand.u32 %s112, 1
        %s1397 = scalar_lea.sflag [#allocation6], %s1396
        %s1398 = sand.u32 %s146, 1
        %s1399 = smul.addr %s1398, 16
        %s1400 = scalar_lea.vmem [#allocation5], %s1399
        // Predicated region
        $region173: #{tpu_custom_call.1} parent=167 // pred_check
          %p1401 = pneg %p159
        $region174: #{tpu_custom_call.1} parent=167 // pred_check_branch
          %1403 = sbr.rel (%p1401) target = $region176
        $region175: #{tpu_custom_call.1} parent=167 // pred_region
          %1404 = dma.done %s1397, 256
        $region176: #{tpu_custom_call.1} parent=167 // pred_fallthru
          _
        // Predicated region
        $region177: #{tpu_custom_call.1} parent=167 // pred_check
          %p1405 = pneg %p180
        $region178: #{tpu_custom_call.1} parent=167 // pred_check_branch
          %1407 = sbr.rel (%p1405) target = $region180
        $region179: #{tpu_custom_call.1} parent=167 // pred_region
          %1408 = dma.done [#allocation6], 16
        $region180: #{tpu_custom_call.1} parent=167 // pred_fallthru
          _
        // Predicated region
        $region181: #{tpu_custom_call.1} parent=167 // pred_check
          %p1409 = pneg %p201
        $region182: #{tpu_custom_call.1} parent=167 // pred_check_branch
          %1411 = sbr.rel (%p1409) target = $region184
        $region183: #{tpu_custom_call.1} parent=167 // pred_region
          %1412 = dma.done [#allocation9], 16
        $region184: #{tpu_custom_call.1} parent=167 // pred_fallthru
          _
        // Predicated region
        $region185: #{tpu_custom_call.1} parent=167 // pred_check
          %p1413 = pneg %p222
        $region186: #{tpu_custom_call.1} parent=167 // pred_check_branch
          %1415 = sbr.rel (%p1413) target = $region188
        $region187: #{tpu_custom_call.1} parent=167 // pred_region
          %1416 = dma.done [#allocation9], 16
        $region188: #{tpu_custom_call.1} parent=167 // pred_fallthru
          _
        // Predicated region
        $region189: #{tpu_custom_call.1} parent=167 // pred_check
          %p1417 = pneg %p243
        $region190: #{tpu_custom_call.1} parent=167 // pred_check_branch
          %1419 = sbr.rel (%p1417) target = $region192
        $region191: #{tpu_custom_call.1} parent=167 // pred_region
          %1420 = dma.done [#allocation12], 16
        $region192: #{tpu_custom_call.1} parent=167 // pred_fallthru
          _
        // Predicated region
        $region193: #{tpu_custom_call.1} parent=167 // pred_check
          %p1421 = pneg %p264
        $region194: #{tpu_custom_call.1} parent=167 // pred_check_branch
          %1423 = sbr.rel (%p1421) target = $region196
        $region195: #{tpu_custom_call.1} parent=167 // pred_region
          %1424 = dma.done [#allocation12], 256
        $region196: #{tpu_custom_call.1} parent=167 // pred_fallthru
          _
        // Predicated region
        $region197: #{tpu_custom_call.1} parent=167 // pred_check
          %p1425 = pneg %p285
        $region198: #{tpu_custom_call.1} parent=167 // pred_check_branch
          %1427 = sbr.rel (%p1425) target = $region200
        $region199: #{tpu_custom_call.1} parent=167 // pred_region
          %1428 = dma.done [#allocation15], 16
        $region200: #{tpu_custom_call.1} parent=167 // pred_fallthru
          _
        // Predicated region
        $region201: #{tpu_custom_call.1} parent=167 // pred_check
          %p1429 = pneg %p306
        $region202: #{tpu_custom_call.1} parent=167 // pred_check_branch
          %1431 = sbr.rel (%p1429) target = $region204
        $region203: #{tpu_custom_call.1} parent=167 // pred_region
          %1432 = dma.done [#allocation15], 256
        $region204: #{tpu_custom_call.1} parent=167 // pred_fallthru
          _
        // Predicated region
        $region205: #{tpu_custom_call.1} parent=167 // pred_check
          %p1433 = pneg %p327
        $region206: #{tpu_custom_call.1} parent=167 // pred_check_branch
          %1435 = sbr.rel (%p1433) target = $region208
        $region207: #{tpu_custom_call.1} parent=167 // pred_region
          %1436 = dma.done [#allocation18], 16
        $region208: #{tpu_custom_call.1} parent=167 // pred_fallthru
          _
        // Predicated region
        $region209: #{tpu_custom_call.1} parent=167 // pred_check
          %p1437 = pneg %p348
        $region210: #{tpu_custom_call.1} parent=167 // pred_check_branch
          %1439 = sbr.rel (%p1437) target = $region212
        $region211: #{tpu_custom_call.1} parent=167 // pred_region
          %1440 = dma.done [#allocation18], 16
        $region212: #{tpu_custom_call.1} parent=167 // pred_fallthru
          _
        // Predicated region
        $region213: #{tpu_custom_call.1} parent=167 // pred_check
          %p1441 = pneg %p369
        $region214: #{tpu_custom_call.1} parent=167 // pred_check_branch
          %1443 = sbr.rel (%p1441) target = $region216
        $region215: #{tpu_custom_call.1} parent=167 // pred_region
          %1444 = dma.done [#allocation21], 16
        $region216: #{tpu_custom_call.1} parent=167 // pred_fallthru
          _
        // Predicated region
        $region217: #{tpu_custom_call.1} parent=167 // pred_check
          %p1445 = pneg %p390
        $region218: #{tpu_custom_call.1} parent=167 // pred_check_branch
          %1447 = sbr.rel (%p1445) target = $region220
        $region219: #{tpu_custom_call.1} parent=167 // pred_region
          %1448 = dma.done [#allocation21], 16
        $region220: #{tpu_custom_call.1} parent=167 // pred_fallthru
          _
        // Predicated region
        $region221: #{tpu_custom_call.1} parent=167 // pred_check
          %p1449 = pneg %p411
        $region222: #{tpu_custom_call.1} parent=167 // pred_check_branch
          %1451 = sbr.rel (%p1449) target = $region224
        $region223: #{tpu_custom_call.1} parent=167 // pred_region
          %1452 = dma.done [#allocation24], 16
        $region224: #{tpu_custom_call.1} parent=167 // pred_fallthru
          _
        // Predicated region
        $region225: #{tpu_custom_call.1} parent=167 // pred_check
          %p1453 = pneg %p432
        $region226: #{tpu_custom_call.1} parent=167 // pred_check_branch
          %1455 = sbr.rel (%p1453) target = $region228
        $region227: #{tpu_custom_call.1} parent=167 // pred_region
          %1456 = dma.done [#allocation24], 16
        $region228: #{tpu_custom_call.1} parent=167 // pred_fallthru
          _
        // Predicated region
        $region229: #{tpu_custom_call.1} parent=167 // pred_check
          %p1457 = pneg %p453
        $region230: #{tpu_custom_call.1} parent=167 // pred_check_branch
          %1459 = sbr.rel (%p1457) target = $region232
        $region231: #{tpu_custom_call.1} parent=167 // pred_region
          %1460 = dma.done [#allocation27], 16
        $region232: #{tpu_custom_call.1} parent=167 // pred_fallthru
          _
        // Predicated region
        $region233: #{tpu_custom_call.1} parent=167 // pred_check
          %p1461 = pneg %p474
        $region234: #{tpu_custom_call.1} parent=167 // pred_check_branch
          %1463 = sbr.rel (%p1461) target = $region236
        $region235: #{tpu_custom_call.1} parent=167 // pred_region
          %1464 = dma.done [#allocation27], 16
        $region236: #{tpu_custom_call.1} parent=167 // pred_fallthru
          _
        // Predicated region
        $region237: #{tpu_custom_call.1} parent=167 // pred_check
          %p1465 = pneg %p495
        $region238: #{tpu_custom_call.1} parent=167 // pred_check_branch
          %1467 = sbr.rel (%p1465) target = $region240
        $region239: #{tpu_custom_call.1} parent=167 // pred_region
          %1468 = dma.done [#allocation30], 16
        $region240: #{tpu_custom_call.1} parent=167 // pred_fallthru
          _
        // Predicated region
        $region241: #{tpu_custom_call.1} parent=167 // pred_check
          %p1469 = pneg %p516
        $region242: #{tpu_custom_call.1} parent=167 // pred_check_branch
          %1471 = sbr.rel (%p1469) target = $region244
        $region243: #{tpu_custom_call.1} parent=167 // pred_region
          %1472 = dma.done [#allocation30], 256
        $region244: #{tpu_custom_call.1} parent=167 // pred_fallthru
          _
        // Predicated region
        $region245: #{tpu_custom_call.1} parent=167 // pred_check
          %p1473 = pneg %p537
        $region246: #{tpu_custom_call.1} parent=167 // pred_check_branch
          %1475 = sbr.rel (%p1473) target = $region248
        $region247: #{tpu_custom_call.1} parent=167 // pred_region
          %1476 = dma.done [#allocation33], 16
        $region248: #{tpu_custom_call.1} parent=167 // pred_fallthru
          _
        // Predicated region
        $region249: #{tpu_custom_call.1} parent=167 // pred_check
          %p1477 = pneg %p558
        $region250: #{tpu_custom_call.1} parent=167 // pred_check_branch
          %1479 = sbr.rel (%p1477) target = $region252
        $region251: #{tpu_custom_call.1} parent=167 // pred_region
          %1480 = dma.done [#allocation33], 256
        $region252: #{tpu_custom_call.1} parent=167 // pred_fallthru
          _
        // Predicated region
        $region253: #{tpu_custom_call.1} parent=167 // pred_check
          %p1481 = pneg %p579
        $region254: #{tpu_custom_call.1} parent=167 // pred_check_branch
          %1483 = sbr.rel (%p1481) target = $region256
        $region255: #{tpu_custom_call.1} parent=167 // pred_region
          %1484 = dma.done [#allocation36], 16
        $region256: #{tpu_custom_call.1} parent=167 // pred_fallthru
          _
        // Predicated region
        $region257: #{tpu_custom_call.1} parent=167 // pred_check
          %p1485 = pneg %p600
        $region258: #{tpu_custom_call.1} parent=167 // pred_check_branch
          %1487 = sbr.rel (%p1485) target = $region260
        $region259: #{tpu_custom_call.1} parent=167 // pred_region
          %1488 = dma.done [#allocation36], 16
        $region260: #{tpu_custom_call.1} parent=167 // pred_fallthru
          _
        // Predicated region
        $region261: #{tpu_custom_call.1} parent=167 // pred_check
          %p1489 = pneg %p621
        $region262: #{tpu_custom_call.1} parent=167 // pred_check_branch
          %1491 = sbr.rel (%p1489) target = $region264
        $region263: #{tpu_custom_call.1} parent=167 // pred_region
          %1492 = dma.done [#allocation39], 16
        $region264: #{tpu_custom_call.1} parent=167 // pred_fallthru
          _
        // Predicated region
        $region265: #{tpu_custom_call.1} parent=167 // pred_check
          %p1493 = pneg %p642
        $region266: #{tpu_custom_call.1} parent=167 // pred_check_branch
          %1495 = sbr.rel (%p1493) target = $region268
        $region267: #{tpu_custom_call.1} parent=167 // pred_region
          %1496 = dma.done [#allocation39], 16
        $region268: #{tpu_custom_call.1} parent=167 // pred_fallthru
          _
        // Predicated region
        $region269: #{tpu_custom_call.1} parent=167 // pred_check
          %p1497 = pneg %p663
        $region270: #{tpu_custom_call.1} parent=167 // pred_check_branch
          %1499 = sbr.rel (%p1497) target = $region272
        $region271: #{tpu_custom_call.1} parent=167 // pred_region
          %1500 = dma.done [#allocation42], 16
        $region272: #{tpu_custom_call.1} parent=167 // pred_fallthru
          _
        // Predicated region
        $region273: #{tpu_custom_call.1} parent=167 // pred_check
          %p1501 = pneg %p684
        $region274: #{tpu_custom_call.1} parent=167 // pred_check_branch
          %1503 = sbr.rel (%p1501) target = $region276
        $region275: #{tpu_custom_call.1} parent=167 // pred_region
          %1504 = dma.done [#allocation42], 16
        $region276: #{tpu_custom_call.1} parent=167 // pred_fallthru
          _
        // Predicated region
        $region277: #{tpu_custom_call.1} parent=167 // pred_check
          %p1505 = pneg %p705
        $region278: #{tpu_custom_call.1} parent=167 // pred_check_branch
          %1507 = sbr.rel (%p1505) target = $region280
        $region279: #{tpu_custom_call.1} parent=167 // pred_region
          %1508 = dma.done [#allocation45], 16
        $region280: #{tpu_custom_call.1} parent=167 // pred_fallthru
          _
        // Predicated region
        $region281: #{tpu_custom_call.1} parent=167 // pred_check
          %p1509 = pneg %p726
        $region282: #{tpu_custom_call.1} parent=167 // pred_check_branch
          %1511 = sbr.rel (%p1509) target = $region284
        $region283: #{tpu_custom_call.1} parent=167 // pred_region
          %1512 = dma.done [#allocation45], 16
        $region284: #{tpu_custom_call.1} parent=167 // pred_fallthru
          _
        // Predicated region
        $region285: #{tpu_custom_call.1} parent=167 // pred_check
          %p1513 = pneg %p747
        $region286: #{tpu_custom_call.1} parent=167 // pred_check_branch
          %1515 = sbr.rel (%p1513) target = $region288
        $region287: #{tpu_custom_call.1} parent=167 // pred_region
          %1516 = dma.done [#allocation48], 16
        $region288: #{tpu_custom_call.1} parent=167 // pred_fallthru
          _
        // Predicated region
        $region289: #{tpu_custom_call.1} parent=167 // pred_check
          %p1517 = pneg %p768
        $region290: #{tpu_custom_call.1} parent=167 // pred_check_branch
          %1519 = sbr.rel (%p1517) target = $region292
        $region291: #{tpu_custom_call.1} parent=167 // pred_region
          %1520 = dma.done [#allocation48], 256
        $region292: #{tpu_custom_call.1} parent=167 // pred_fallthru
          _
        // Predicated region
        $region293: #{tpu_custom_call.1} parent=167 // pred_check
          %p1521 = pneg %p789
        $region294: #{tpu_custom_call.1} parent=167 // pred_check_branch
          %1523 = sbr.rel (%p1521) target = $region296
        $region295: #{tpu_custom_call.1} parent=167 // pred_region
          %1524 = dma.done [#allocation51], 256
        $region296: #{tpu_custom_call.1} parent=167 // pred_fallthru
          _
        // Predicated region
        $region297: #{tpu_custom_call.1} parent=167 // pred_check
          %p1525 = pneg %p810
        $region298: #{tpu_custom_call.1} parent=167 // pred_check_branch
          %1527 = sbr.rel (%p1525) target = $region300
        $region299: #{tpu_custom_call.1} parent=167 // pred_region
          %1528 = dma.done [#allocation51], 16
        $region300: #{tpu_custom_call.1} parent=167 // pred_fallthru
          _
        // Predicated region
        $region301: #{tpu_custom_call.1} parent=167 // pred_check
          %p1529 = pneg %p831
        $region302: #{tpu_custom_call.1} parent=167 // pred_check_branch
          %1531 = sbr.rel (%p1529) target = $region304
        $region303: #{tpu_custom_call.1} parent=167 // pred_region
          %1532 = dma.done [#allocation54], 256
        $region304: #{tpu_custom_call.1} parent=167 // pred_fallthru
          _
        // Predicated region
        $region305: #{tpu_custom_call.1} parent=167 // pred_check
          %p1533 = pneg %p852
        $region306: #{tpu_custom_call.1} parent=167 // pred_check_branch
          %1535 = sbr.rel (%p1533) target = $region308
        $region307: #{tpu_custom_call.1} parent=167 // pred_region
          %1536 = dma.done [#allocation54], 16
        $region308: #{tpu_custom_call.1} parent=167 // pred_fallthru
          _
        // Predicated region
        $region309: #{tpu_custom_call.1} parent=167 // pred_check
          %p1537 = pneg %p873
        $region310: #{tpu_custom_call.1} parent=167 // pred_check_branch
          %1539 = sbr.rel (%p1537) target = $region312
        $region311: #{tpu_custom_call.1} parent=167 // pred_region
          %1540 = dma.done [#allocation57], 32
        $region312: #{tpu_custom_call.1} parent=167 // pred_fallthru
          _
        // Predicated region
        $region313: #{tpu_custom_call.1} parent=167 // pred_check
          %p1541 = pneg %p894
        $region314: #{tpu_custom_call.1} parent=167 // pred_check_branch
          %1543 = sbr.rel (%p1541) target = $region316
        $region315: #{tpu_custom_call.1} parent=167 // pred_region
          %1544 = dma.done [#allocation57], 16
        $region316: #{tpu_custom_call.1} parent=167 // pred_fallthru
          _
        %s1545 = sand.u32 %s120, 1
        %s1546 = scalar_lea.sflag [#allocation3], %s1545
        %s1547 = sand.u32 %s120, 1
        %s1548 = smul.addr %s1547, 16
        %s1549 = scalar_lea.vmem [#allocation2], %s1548
        %p1550 = pneg %p133
        %p1551 = pneg %p130
        %s1552 = sand.u32 %s112, 1
        %s1553 = scalar_lea.sflag [#allocation6], %s1552
        %s1554 = sand.u32 %s146, 1
        %s1555 = smul.addr %s1554, 16
        %s1556 = scalar_lea.vmem [#allocation5], %s1555
        %p1557 = pneg %p159
        %p1558 = pneg %p156
        %p1559 = pneg %p180
        %p1560 = pneg %p177
        %p1561 = pneg %p201
        %p1562 = pneg %p198
        %p1563 = pneg %p222
        %p1564 = pneg %p219
        %p1565 = pneg %p243
        %p1566 = pneg %p240
        %p1567 = pneg %p264
        %p1568 = pneg %p261
        %p1569 = pneg %p285
        %p1570 = pneg %p282
        %p1571 = pneg %p306
        %p1572 = pneg %p303
        %p1573 = pneg %p327
        %p1574 = pneg %p324
        %p1575 = pneg %p348
        %p1576 = pneg %p345
        %p1577 = pneg %p369
        %p1578 = pneg %p366
        %p1579 = pneg %p390
        %p1580 = pneg %p387
        %p1581 = pneg %p411
        %p1582 = pneg %p408
        %p1583 = pneg %p432
        %p1584 = pneg %p429
        %p1585 = pneg %p453
        %p1586 = pneg %p450
        %p1587 = pneg %p474
        %p1588 = pneg %p471
        %p1589 = pneg %p495
        %p1590 = pneg %p492
        %p1591 = pneg %p516
        %p1592 = pneg %p513
        %p1593 = pneg %p537
        %p1594 = pneg %p534
        %p1595 = pneg %p558
        %p1596 = pneg %p555
        %p1597 = pneg %p579
        %p1598 = pneg %p576
        %p1599 = pneg %p600
        %p1600 = pneg %p597
        %p1601 = pneg %p621
        %p1602 = pneg %p618
        %p1603 = pneg %p642
        %p1604 = pneg %p639
        %p1605 = pneg %p663
        %p1606 = pneg %p660
        %p1607 = pneg %p684
        %p1608 = pneg %p681
        %p1609 = pneg %p705
        %p1610 = pneg %p702
        %p1611 = pneg %p726
        %p1612 = pneg %p723
        %p1613 = pneg %p747
        %p1614 = pneg %p744
        %p1615 = pneg %p768
        %p1616 = pneg %p765
        %p1617 = pneg %p789
        %p1618 = pneg %p786
        %p1619 = pneg %p810
        %p1620 = pneg %p807
        %p1621 = pneg %p831
        %p1622 = pneg %p828
        %p1623 = pneg %p852
        %p1624 = pneg %p849
        %p1625 = pneg %p873
        %p1626 = pneg %p870
        %p1627 = pneg %p894
        %p1628 = pneg %p891
        %p1629 = pneg %p920
        %p1630 = pneg %p917
        %s1631 = sand.u32 %s907, 1
        %s1632 = scalar_lea.sflag [#allocation4], %s1631
        %s1633 = sand.u32 %s907, 1
        %s1634 = smul.addr %s1633, 32
        %s1635 = scalar_lea.vmem [#allocation59], %s1634
        %v1637 = vld [vmem:[%s1391] sm:$0xff]
        %v1638 = vld [vmem:[%s1391 + $0x8] sm:$0xff]
        %v1639 = vpack.c.bf16 %v1638, %v1637
        %v1640 = vld [vmem:[#allocation7] sm:$0x1]
        %v1641 = vld [vmem:[#allocation8] sm:$0x1]
        %v1643 = vlaneseq
        %v1644 = vshrl.u32 %v1643, 7
        %v1645 = vsub.s32 0, %v1644
        %v1646 = vrot.slane %v1641, %v1645
        %vm1648 = vcmask 15360
        %v1650 = vsel %vm1648, %v1639, 0
        %vm1652 = vcmask 1040384
        %v1654 = vsel %vm1652, %v1640, 0
        %1656 = vmatprep.subr.bf16.mxu0 0
        %1657 = vmatpush1.bf16.msra.mxu0 %v1654
        %1658 = vmatprep.subr.bf16.mxu0 0
        %1659 = vmatpush1.bf16.msra.mxu0 0
        %1660 = vmatprep.subr.bf16.mxu0 0
        %1661 = vmatpush1.bf16.msra.mxu0 0
        %1662 = vmatprep.subr.bf16.mxu0 0
        %1663 = vmatpush1.bf16.msra.mxu0 0
        %1664 = vmatprep.subr.bf16.mxu0 0
        %1665 = vmatpush1.bf16.msra.mxu0 0
        %1666 = vmatprep.subr.bf16.mxu0 0
        %1667 = vmatpush1.bf16.msra.mxu0 0
        %1668 = vmatprep.subr.bf16.mxu0 0
        %1669 = vmatpush1.bf16.msra.mxu0 0
        %1670 = vmatprep.subr.bf16.mxu0 0
        %1671 = vmatpush1.bf16.msra.mxu0 0
        %1672 = vmatprep.subr.bf16.mxu0 0
        %1673 = vmatpush1.bf16.msra.mxu0 0
        %1674 = vmatprep.subr.bf16.mxu0 0
        %1675 = vmatpush1.bf16.msra.mxu0 0
        %1676 = vmatprep.subr.bf16.mxu0 0
        %1677 = vmatpush1.bf16.msra.mxu0 0
        %1678 = vmatprep.subr.bf16.mxu0 0
        %1679 = vmatpush1.bf16.msra.mxu0 0
        %1680 = vmatprep.subr.bf16.mxu0 0
        %1681 = vmatpush1.bf16.msra.mxu0 0
        %1682 = vmatprep.subr.bf16.mxu0 0
        %1683 = vmatpush1.bf16.msra.mxu0 0
        %1684 = vmatprep.subr.bf16.mxu0 0
        %1685 = vmatpush1.bf16.msra.mxu0 0
        %1686 = vmatprep.subr.bf16.mxu0 0
        %1687 = vmatpush1.bf16.msra.mxu0 0
        %1688 = vmatprep.mubr.bf16.mxu0 0
        %1689 = vmatmul.mubr.bf16.gmra.mrb[0].mxu0 %v1650
        %v1690 = vpop.f32.mrb[0].mxu0
        %v1691 = vadd.f32 %v1646, %v1690
        %v1692 = vpop.f32.mrb[0].mxu0
        %v1693 = vpop.f32.mrb[0].mxu0
        %v1694 = vadd.f32 %v1646, %v1693
        %v1695 = vpop.f32.mrb[0].mxu0
        %1696 = vdwg.mxu0
        %v1697 = vpack.c.bf16 %v1694, %v1691
        %v1698 = vld [vmem:[%s1400] sm:$0xff]
        %v1699 = vld [vmem:[%s1400 + $0x8] sm:$0xff]
        %v1700 = vlaneseq
        %v1701 = vshrl.u32 %v1700, 7
        %v1702 = vsub.s32 0, %v1701
        %v1703 = vrot.slane %v1698, %v1702
        %1705 = vbcast.lane.b32.xlu0 %v1703, 256
        %v1706 = vpop.permute.xlu0 %1705
        %s1708 = sor.u32 256, 8
        %1709 = vbcast.lane.b32.xlu0 %v1703, %s1708
        %v1710 = vpop.permute.xlu0 %1709
        %v1711 = vlaneseq
        %v1712 = vshrl.u32 %v1711, 7
        %v1713 = vsub.s32 1, %v1712
        %v1714 = vrot.slane %v1698, %v1713
        %1716 = vbcast.lane.b32.xlu0 %v1714, 256
        %v1717 = vpop.permute.xlu0 %1716
        %s1719 = sor.u32 256, 8
        %1720 = vbcast.lane.b32.xlu0 %v1714, %s1719
        %v1721 = vpop.permute.xlu0 %1720
        %v1722 = vlaneseq
        %v1723 = vshrl.u32 %v1722, 7
        %v1724 = vsub.s32 2, %v1723
        %v1725 = vrot.slane %v1698, %v1724
        %1727 = vbcast.lane.b32.xlu0 %v1725, 256
        %v1728 = vpop.permute.xlu0 %1727
        %s1730 = sor.u32 256, 8
        %1731 = vbcast.lane.b32.xlu0 %v1725, %s1730
        %v1732 = vpop.permute.xlu0 %1731
        %v1733 = vlaneseq
        %v1734 = vshrl.u32 %v1733, 7
        %v1735 = vsub.s32 3, %v1734
        %v1736 = vrot.slane %v1698, %v1735
        %1738 = vbcast.lane.b32.xlu0 %v1736, 256
        %v1739 = vpop.permute.xlu0 %1738
        %s1741 = sor.u32 256, 8
        %1742 = vbcast.lane.b32.xlu0 %v1736, %s1741
        %v1743 = vpop.permute.xlu0 %1742
        %v1744 = vlaneseq
        %v1745 = vshrl.u32 %v1744, 7
        %v1746 = vsub.s32 4, %v1745
        %v1747 = vrot.slane %v1698, %v1746
        %1749 = vbcast.lane.b32.xlu0 %v1747, 256
        %v1750 = vpop.permute.xlu0 %1749
        %s1752 = sor.u32 256, 8
        %1753 = vbcast.lane.b32.xlu0 %v1747, %s1752
        %v1754 = vpop.permute.xlu0 %1753
        %v1755 = vlaneseq
        %v1756 = vshrl.u32 %v1755, 7
        %v1757 = vsub.s32 5, %v1756
        %v1758 = vrot.slane %v1698, %v1757
        %1760 = vbcast.lane.b32.xlu0 %v1758, 256
        %v1761 = vpop.permute.xlu0 %1760
        %s1763 = sor.u32 256, 8
        %1764 = vbcast.lane.b32.xlu0 %v1758, %s1763
        %v1765 = vpop.permute.xlu0 %1764
        %v1766 = vlaneseq
        %v1767 = vshrl.u32 %v1766, 7
        %v1768 = vsub.s32 6, %v1767
        %v1769 = vrot.slane %v1698, %v1768
        %1771 = vbcast.lane.b32.xlu0 %v1769, 256
        %v1772 = vpop.permute.xlu0 %1771
        %s1774 = sor.u32 256, 8
        %1775 = vbcast.lane.b32.xlu0 %v1769, %s1774
        %v1776 = vpop.permute.xlu0 %1775
        %v1777 = vlaneseq
        %v1778 = vshrl.u32 %v1777, 7
        %v1779 = vsub.s32 7, %v1778
        %v1780 = vrot.slane %v1698, %v1779
        %1782 = vbcast.lane.b32.xlu0 %v1780, 256
        %v1783 = vpop.permute.xlu0 %1782
        %s1785 = sor.u32 256, 8
        %1786 = vbcast.lane.b32.xlu0 %v1780, %s1785
        %v1787 = vpop.permute.xlu0 %1786
        %v1788 = vlaneseq
        %v1789 = vshrl.u32 %v1788, 7
        %v1790 = vsub.s32 0, %v1789
        %v1791 = vrot.slane %v1699, %v1790
        %1793 = vbcast.lane.b32.xlu0 %v1791, 256
        %v1794 = vpop.permute.xlu0 %1793
        %s1796 = sor.u32 256, 8
        %1797 = vbcast.lane.b32.xlu0 %v1791, %s1796
        %v1798 = vpop.permute.xlu0 %1797
        %v1799 = vlaneseq
        %v1800 = vshrl.u32 %v1799, 7
        %v1801 = vsub.s32 1, %v1800
        %v1802 = vrot.slane %v1699, %v1801
        %1804 = vbcast.lane.b32.xlu0 %v1802, 256
        %v1805 = vpop.permute.xlu0 %1804
        %s1807 = sor.u32 256, 8
        %1808 = vbcast.lane.b32.xlu0 %v1802, %s1807
        %v1809 = vpop.permute.xlu0 %1808
        %v1810 = vlaneseq
        %v1811 = vshrl.u32 %v1810, 7
        %v1812 = vsub.s32 2, %v1811
        %v1813 = vrot.slane %v1699, %v1812
        %1815 = vbcast.lane.b32.xlu0 %v1813, 256
        %v1816 = vpop.permute.xlu0 %1815
        %s1818 = sor.u32 256, 8
        %1819 = vbcast.lane.b32.xlu0 %v1813, %s1818
        %v1820 = vpop.permute.xlu0 %1819
        %v1821 = vlaneseq
        %v1822 = vshrl.u32 %v1821, 7
        %v1823 = vsub.s32 3, %v1822
        %v1824 = vrot.slane %v1699, %v1823
        %1826 = vbcast.lane.b32.xlu0 %v1824, 256
        %v1827 = vpop.permute.xlu0 %1826
        %s1829 = sor.u32 256, 8
        %1830 = vbcast.lane.b32.xlu0 %v1824, %s1829
        %v1831 = vpop.permute.xlu0 %1830
        %v1832 = vlaneseq
        %v1833 = vshrl.u32 %v1832, 7
        %v1834 = vsub.s32 4, %v1833
        %v1835 = vrot.slane %v1699, %v1834
        %1837 = vbcast.lane.b32.xlu0 %v1835, 256
        %v1838 = vpop.permute.xlu0 %1837
        %s1840 = sor.u32 256, 8
        %1841 = vbcast.lane.b32.xlu0 %v1835, %s1840
        %v1842 = vpop.permute.xlu0 %1841
        %v1843 = vlaneseq
        %v1844 = vshrl.u32 %v1843, 7
        %v1845 = vsub.s32 5, %v1844
        %v1846 = vrot.slane %v1699, %v1845
        %1848 = vbcast.lane.b32.xlu0 %v1846, 256
        %v1849 = vpop.permute.xlu0 %1848
        %s1851 = sor.u32 256, 8
        %1852 = vbcast.lane.b32.xlu0 %v1846, %s1851
        %v1853 = vpop.permute.xlu0 %1852
        %v1854 = vlaneseq
        %v1855 = vshrl.u32 %v1854, 7
        %v1856 = vsub.s32 6, %v1855
        %v1857 = vrot.slane %v1699, %v1856
        %1859 = vbcast.lane.b32.xlu0 %v1857, 256
        %v1860 = vpop.permute.xlu0 %1859
        %s1862 = sor.u32 256, 8
        %1863 = vbcast.lane.b32.xlu0 %v1857, %s1862
        %v1864 = vpop.permute.xlu0 %1863
        %v1865 = vlaneseq
        %v1866 = vshrl.u32 %v1865, 7
        %v1867 = vsub.s32 7, %v1866
        %v1868 = vrot.slane %v1699, %v1867
        %1870 = vbcast.lane.b32.xlu0 %v1868, 256
        %v1871 = vpop.permute.xlu0 %1870
        %s1873 = sor.u32 256, 8
        %1874 = vbcast.lane.b32.xlu0 %v1868, %s1873
        %v1875 = vpop.permute.xlu0 %1874
        %v1876 = vld [vmem:[#allocation10] sm:$0x1]
        %v1878 = vlaneseq
        %v1879 = vshrl.u32 %v1878, 7
        %v1880 = vsub.s32 0, %v1879
        %v1881 = vrot.slane %v1876, %v1880
        %v1883 = vmul.f32 %v1706, %v1881
        %v1884 = vmul.f32 %v1710, %v1881
        %v1885 = vmul.f32 %v1717, %v1881
        %v1886 = vmul.f32 %v1721, %v1881
        %v1887 = vmul.f32 %v1728, %v1881
        %v1888 = vmul.f32 %v1732, %v1881
        %v1889 = vmul.f32 %v1739, %v1881
        %v1890 = vmul.f32 %v1743, %v1881
        %v1891 = vmul.f32 %v1750, %v1881
        %v1892 = vmul.f32 %v1754, %v1881
        %v1893 = vmul.f32 %v1761, %v1881
        %v1894 = vmul.f32 %v1765, %v1881
        %v1895 = vmul.f32 %v1772, %v1881
        %v1896 = vmul.f32 %v1776, %v1881
        %v1897 = vmul.f32 %v1783, %v1881
        %v1898 = vmul.f32 %v1787, %v1881
        %v1899 = vmul.f32 %v1794, %v1881
        %v1900 = vmul.f32 %v1798, %v1881
        %v1901 = vmul.f32 %v1805, %v1881
        %v1902 = vmul.f32 %v1809, %v1881
        %v1903 = vmul.f32 %v1816, %v1881
        %v1904 = vmul.f32 %v1820, %v1881
        %v1905 = vmul.f32 %v1827, %v1881
        %v1906 = vmul.f32 %v1831, %v1881
        %v1907 = vmul.f32 %v1838, %v1881
        %v1908 = vmul.f32 %v1842, %v1881
        %v1909 = vmul.f32 %v1849, %v1881
        %v1910 = vmul.f32 %v1853, %v1881
        %v1911 = vmul.f32 %v1860, %v1881
        %v1912 = vmul.f32 %v1864, %v1881
        %v1913 = vmul.f32 %v1871, %v1881
        %v1914 = vmul.f32 %v1875, %v1881
        %v1915 = vld [vmem:[#allocation11] sm:$0x1]
        %v1917 = vlaneseq
        %v1918 = vshrl.u32 %v1917, 7
        %v1919 = vsub.s32 0, %v1918
        %v1920 = vrot.slane %v1915, %v1919
        %v1922 = vadd.f32 %v1883, %v1920
        %v1923 = vadd.f32 %v1884, %v1920
        %v1924 = vadd.f32 %v1885, %v1920
        %v1925 = vadd.f32 %v1886, %v1920
        %v1926 = vadd.f32 %v1887, %v1920
        %v1927 = vadd.f32 %v1888, %v1920
        %v1928 = vadd.f32 %v1889, %v1920
        %v1929 = vadd.f32 %v1890, %v1920
        %v1930 = vadd.f32 %v1891, %v1920
        %v1931 = vadd.f32 %v1892, %v1920
        %v1932 = vadd.f32 %v1893, %v1920
        %v1933 = vadd.f32 %v1894, %v1920
        %v1934 = vadd.f32 %v1895, %v1920
        %v1935 = vadd.f32 %v1896, %v1920
        %v1936 = vadd.f32 %v1897, %v1920
        %v1937 = vadd.f32 %v1898, %v1920
        %v1938 = vadd.f32 %v1899, %v1920
        %v1939 = vadd.f32 %v1900, %v1920
        %v1940 = vadd.f32 %v1901, %v1920
        %v1941 = vadd.f32 %v1902, %v1920
        %v1942 = vadd.f32 %v1903, %v1920
        %v1943 = vadd.f32 %v1904, %v1920
        %v1944 = vadd.f32 %v1905, %v1920
        %v1945 = vadd.f32 %v1906, %v1920
        %v1946 = vadd.f32 %v1907, %v1920
        %v1947 = vadd.f32 %v1908, %v1920
        %v1948 = vadd.f32 %v1909, %v1920
        %v1949 = vadd.f32 %v1910, %v1920
        %v1950 = vadd.f32 %v1911, %v1920
        %v1951 = vadd.f32 %v1912, %v1920
        %v1952 = vadd.f32 %v1913, %v1920
        %v1953 = vadd.f32 %v1914, %v1920
        %v1954 = vpack.c.bf16 %v1923, %v1922
        %v1955 = vpack.c.bf16 %v1925, %v1924
        %v1956 = vpack.c.bf16 %v1927, %v1926
        %v1957 = vpack.c.bf16 %v1929, %v1928
        %v1958 = vpack.c.bf16 %v1931, %v1930
        %v1959 = vpack.c.bf16 %v1933, %v1932
        %v1960 = vpack.c.bf16 %v1935, %v1934
        %v1961 = vpack.c.bf16 %v1937, %v1936
        %v1962 = vpack.c.bf16 %v1939, %v1938
        %v1963 = vpack.c.bf16 %v1941, %v1940
        %v1964 = vpack.c.bf16 %v1943, %v1942
        %v1965 = vpack.c.bf16 %v1945, %v1944
        %v1966 = vpack.c.bf16 %v1947, %v1946
        %v1967 = vpack.c.bf16 %v1949, %v1948
        %v1968 = vpack.c.bf16 %v1951, %v1950
        %v1969 = vpack.c.bf16 %v1953, %v1952
        %v1970 = vlaneseq
        %v1971 = vshrl.u32 %v1970, 7
        %v1972 = vadd.s32 %v1971, 8
        %vm1973 = vcmp.ne.s32.totalorder %v1971, 0
        %vm1974 = vcmp.ne.s32.totalorder %v1972, 0
        %vm1975 = vcmp.ne.s32.totalorder %v1971, 1
        %vm1976 = vcmp.ne.s32.totalorder %v1972, 1
        %vm1977 = vcmp.ne.s32.totalorder %v1971, 2
        %vm1978 = vcmp.ne.s32.totalorder %v1972, 2
        %vm1979 = vcmp.ne.s32.totalorder %v1971, 3
        %vm1980 = vcmp.ne.s32.totalorder %v1972, 3
        %vm1981 = vcmp.ne.s32.totalorder %v1971, 4
        %vm1982 = vcmp.ne.s32.totalorder %v1972, 4
        %vm1983 = vcmp.ne.s32.totalorder %v1971, 5
        %vm1984 = vcmp.ne.s32.totalorder %v1972, 5
        %vm1985 = vcmp.ne.s32.totalorder %v1971, 6
        %vm1986 = vcmp.ne.s32.totalorder %v1972, 6
        %vm1987 = vcmp.ne.s32.totalorder %v1971, 7
        %vm1988 = vcmp.ne.s32.totalorder %v1972, 7
        %vm1989 = vcmp.ne.s32.totalorder %v1971, 8
        %vm1990 = vcmp.ne.s32.totalorder %v1972, 8
        %vm1991 = vcmp.ne.s32.totalorder %v1971, 9
        %vm1992 = vcmp.ne.s32.totalorder %v1972, 9
        %vm1993 = vcmp.ne.s32.totalorder %v1971, 10
        %vm1994 = vcmp.ne.s32.totalorder %v1972, 10
        %vm1995 = vcmp.ne.s32.totalorder %v1971, 11
        %vm1996 = vcmp.ne.s32.totalorder %v1972, 11
        %vm1997 = vcmp.ne.s32.totalorder %v1971, 12
        %vm1998 = vcmp.ne.s32.totalorder %v1972, 12
        %vm1999 = vcmp.ne.s32.totalorder %v1971, 13
        %vm2000 = vcmp.ne.s32.totalorder %v1972, 13
        %vm2001 = vcmp.ne.s32.totalorder %v1971, 14
        %vm2002 = vcmp.ne.s32.totalorder %v1972, 14
        %vm2003 = vcmp.ne.s32.totalorder %v1971, 15
        %vm2004 = vcmp.ne.s32.totalorder %v1972, 15
        %v2005 = vsel %vm1973, 1, 0
        %v2006 = vsel %vm1974, 1, 0
        %v2007 = vsel %vm1975, 1, 0
        %v2008 = vsel %vm1976, 1, 0
        %v2009 = vsel %vm1977, 1, 0
        %v2010 = vsel %vm1978, 1, 0
        %v2011 = vsel %vm1979, 1, 0
        %v2012 = vsel %vm1980, 1, 0
        %v2013 = vsel %vm1981, 1, 0
        %v2014 = vsel %vm1982, 1, 0
        %v2015 = vsel %vm1983, 1, 0
        %v2016 = vsel %vm1984, 1, 0
        %v2017 = vsel %vm1985, 1, 0
        %v2018 = vsel %vm1986, 1, 0
        %v2019 = vsel %vm1987, 1, 0
        %v2020 = vsel %vm1988, 1, 0
        %v2021 = vsel %vm1989, 1, 0
        %v2022 = vsel %vm1990, 1, 0
        %v2023 = vsel %vm1991, 1, 0
        %v2024 = vsel %vm1992, 1, 0
        %v2025 = vsel %vm1993, 1, 0
        %v2026 = vsel %vm1994, 1, 0
        %v2027 = vsel %vm1995, 1, 0
        %v2028 = vsel %vm1996, 1, 0
        %v2029 = vsel %vm1997, 1, 0
        %v2030 = vsel %vm1998, 1, 0
        %v2031 = vsel %vm1999, 1, 0
        %v2032 = vsel %vm2000, 1, 0
        %v2033 = vsel %vm2001, 1, 0
        %v2034 = vsel %vm2002, 1, 0
        %v2035 = vsel %vm2003, 1, 0
        %v2036 = vsel %vm2004, 1, 0
        %v2037 = vcvt.s32.f32 %v2005
        %v2038 = vcvt.s32.f32 %v2006
        %v2039 = vcvt.s32.f32 %v2007
        %v2040 = vcvt.s32.f32 %v2008
        %v2041 = vcvt.s32.f32 %v2009
        %v2042 = vcvt.s32.f32 %v2010
        %v2043 = vcvt.s32.f32 %v2011
        %v2044 = vcvt.s32.f32 %v2012
        %v2045 = vcvt.s32.f32 %v2013
        %v2046 = vcvt.s32.f32 %v2014
        %v2047 = vcvt.s32.f32 %v2015
        %v2048 = vcvt.s32.f32 %v2016
        %v2049 = vcvt.s32.f32 %v2017
        %v2050 = vcvt.s32.f32 %v2018
        %v2051 = vcvt.s32.f32 %v2019
        %v2052 = vcvt.s32.f32 %v2020
        %v2053 = vcvt.s32.f32 %v2021
        %v2054 = vcvt.s32.f32 %v2022
        %v2055 = vcvt.s32.f32 %v2023
        %v2056 = vcvt.s32.f32 %v2024
        %v2057 = vcvt.s32.f32 %v2025
        %v2058 = vcvt.s32.f32 %v2026
        %v2059 = vcvt.s32.f32 %v2027
        %v2060 = vcvt.s32.f32 %v2028
        %v2061 = vcvt.s32.f32 %v2029
        %v2062 = vcvt.s32.f32 %v2030
        %v2063 = vcvt.s32.f32 %v2031
        %v2064 = vcvt.s32.f32 %v2032
        %v2065 = vcvt.s32.f32 %v2033
        %v2066 = vcvt.s32.f32 %v2034
        %v2067 = vcvt.s32.f32 %v2035
        %v2068 = vcvt.s32.f32 %v2036
        %v2069 = vld [vmem:[#allocation13] sm:$0xf]
        %v2070 = vld [vmem:[#allocation13 + $0x4] sm:$0xf]
        %v2071 = vld [vmem:[#allocation13 + $0x8] sm:$0xf]
        %v2072 = vld [vmem:[#allocation13 + $0xc] sm:$0xf]
        %v2073 = vld [vmem:[#allocation14] sm:$0x1]
        %v2075 = vlaneseq
        %v2076 = vshrl.u32 %v2075, 7
        %v2077 = vsub.s32 0, %v2076
        %v2078 = vrot.slane %v2073, %v2077
        %v2084 = vunpack.c.l.b16 %v2069
        %v2085 = vunpack.c.l.b16 %v2070
        %v2086 = vunpack.c.l.b16 %v2071
        %v2087 = vunpack.c.l.b16 %v2072
        %v2088 = vpack.c.b16 %v2085, %v2084
        %v2089 = vpack.c.b16 %v2087, %v2086
        %vm2092 = vcmask 261120
        %v2094 = vsel %vm2092, %v1697, 0
        %2096 = vmatprep.subr.bf16.mxu0 0
        %2097 = vmatpush1.bf16.msra.mxu0 %v2088
        %2098 = vmatprep.subr.bf16.mxu0 0
        %2099 = vmatpush1.bf16.msra.mxu0 %v2089
        %2100 = vmatprep.subr.bf16.mxu0 0
        %2101 = vmatpush1.bf16.msra.mxu0 0
        %2102 = vmatprep.subr.bf16.mxu0 0
        %2103 = vmatpush1.bf16.msra.mxu0 0
        %2104 = vmatprep.subr.bf16.mxu0 0
        %2105 = vmatpush1.bf16.msra.mxu0 0
        %2106 = vmatprep.subr.bf16.mxu0 0
        %2107 = vmatpush1.bf16.msra.mxu0 0
        %2108 = vmatprep.subr.bf16.mxu0 0
        %2109 = vmatpush1.bf16.msra.mxu0 0
        %2110 = vmatprep.subr.bf16.mxu0 0
        %2111 = vmatpush1.bf16.msra.mxu0 0
        %2112 = vmatprep.subr.bf16.mxu0 0
        %2113 = vmatpush1.bf16.msra.mxu0 0
        %2114 = vmatprep.subr.bf16.mxu0 0
        %2115 = vmatpush1.bf16.msra.mxu0 0
        %2116 = vmatprep.subr.bf16.mxu0 0
        %2117 = vmatpush1.bf16.msra.mxu0 0
        %2118 = vmatprep.subr.bf16.mxu0 0
        %2119 = vmatpush1.bf16.msra.mxu0 0
        %2120 = vmatprep.subr.bf16.mxu0 0
        %2121 = vmatpush1.bf16.msra.mxu0 0
        %2122 = vmatprep.subr.bf16.mxu0 0
        %2123 = vmatpush1.bf16.msra.mxu0 0
        %2124 = vmatprep.subr.bf16.mxu0 0
        %2125 = vmatpush1.bf16.msra.mxu0 0
        %2126 = vmatprep.subr.bf16.mxu0 0
        %2127 = vmatpush1.bf16.msra.mxu0 0
        %2128 = vmatprep.mubr.bf16.mxu0 0
        %2129 = vmatmul.mubr.bf16.gmra.mrb[0].mxu0 %v2094
        %v2130 = vpop.f32.mrb[0].mxu0
        %v2131 = vadd.f32 %v2078, %v2130
        %v2132 = vpop.f32.mrb[0].mxu0
        %v2133 = vpop.f32.mrb[0].mxu0
        %v2134 = vadd.f32 %v2078, %v2133
        %v2135 = vpop.f32.mrb[0].mxu0
        %2136 = vdwg.mxu0
        %v2137 = vld [vmem:[#allocation16] sm:$0xf]
        %v2138 = vld [vmem:[#allocation16 + $0x4] sm:$0xf]
        %v2139 = vld [vmem:[#allocation16 + $0x8] sm:$0xf]
        %v2140 = vld [vmem:[#allocation16 + $0xc] sm:$0xf]
        %v2141 = vld [vmem:[#allocation17] sm:$0x1]
        %v2143 = vlaneseq
        %v2144 = vshrl.u32 %v2143, 7
        %v2145 = vsub.s32 0, %v2144
        %v2146 = vrot.slane %v2141, %v2145
        %v2152 = vunpack.c.l.b16 %v2137
        %v2153 = vunpack.c.l.b16 %v2138
        %v2154 = vunpack.c.l.b16 %v2139
        %v2155 = vunpack.c.l.b16 %v2140
        %v2156 = vpack.c.b16 %v2153, %v2152
        %v2157 = vpack.c.b16 %v2155, %v2154
        %v2161 = vsel %vm2092, %v1954, 0
        %v2164 = vsel %vm2092, %v1955, 0
        %v2167 = vsel %vm2092, %v1956, 0
        %v2170 = vsel %vm2092, %v1957, 0
        %v2173 = vsel %vm2092, %v1958, 0
        %v2176 = vsel %vm2092, %v1959, 0
        %v2179 = vsel %vm2092, %v1960, 0
        %v2182 = vsel %vm2092, %v1961, 0
        %v2185 = vsel %vm2092, %v1962, 0
        %v2188 = vsel %vm2092, %v1963, 0
        %v2191 = vsel %vm2092, %v1964, 0
        %v2194 = vsel %vm2092, %v1965, 0
        %v2197 = vsel %vm2092, %v1966, 0
        %v2200 = vsel %vm2092, %v1967, 0
        %v2203 = vsel %vm2092, %v1968, 0
        %v2206 = vsel %vm2092, %v1969, 0
        %2208 = vmatprep.subr.bf16.mxu0 0
        %2209 = vmatpush1.bf16.msra.mxu0 %v2156
        %2210 = vmatprep.subr.bf16.mxu0 0
        %2211 = vmatpush1.bf16.msra.mxu0 %v2157
        %2212 = vmatprep.subr.bf16.mxu0 0
        %2213 = vmatpush1.bf16.msra.mxu0 0
        %2214 = vmatprep.subr.bf16.mxu0 0
        %2215 = vmatpush1.bf16.msra.mxu0 0
        %2216 = vmatprep.subr.bf16.mxu0 0
        %2217 = vmatpush1.bf16.msra.mxu0 0
        %2218 = vmatprep.subr.bf16.mxu0 0
        %2219 = vmatpush1.bf16.msra.mxu0 0
        %2220 = vmatprep.subr.bf16.mxu0 0
        %2221 = vmatpush1.bf16.msra.mxu0 0
        %2222 = vmatprep.subr.bf16.mxu0 0
        %2223 = vmatpush1.bf16.msra.mxu0 0
        %2224 = vmatprep.subr.bf16.mxu0 0
        %2225 = vmatpush1.bf16.msra.mxu0 0
        %2226 = vmatprep.subr.bf16.mxu0 0
        %2227 = vmatpush1.bf16.msra.mxu0 0
        %2228 = vmatprep.subr.bf16.mxu0 0
        %2229 = vmatpush1.bf16.msra.mxu0 0
        %2230 = vmatprep.subr.bf16.mxu0 0
        %2231 = vmatpush1.bf16.msra.mxu0 0
        %2232 = vmatprep.subr.bf16.mxu0 0
        %2233 = vmatpush1.bf16.msra.mxu0 0
        %2234 = vmatprep.subr.bf16.mxu0 0
        %2235 = vmatpush1.bf16.msra.mxu0 0
        %2236 = vmatprep.subr.bf16.mxu0 0
        %2237 = vmatpush1.bf16.msra.mxu0 0
        %2238 = vmatprep.subr.bf16.mxu0 0
        %2239 = vmatpush1.bf16.msra.mxu0 0
        %2240 = vmatprep.mubr.bf16.mxu0 0
        %2241 = vmatmul.mubr.bf16.gmra.mrb[0].mxu0 %v2161
        %v2242 = vpop.f32.mrb[0].mxu0
        %v2243 = vadd.f32 %v2146, %v2242
        %v2244 = vpop.f32.mrb[0].mxu0
        %v2245 = vpop.f32.mrb[0].mxu0
        %v2246 = vadd.f32 %v2146, %v2245
        %v2247 = vpop.f32.mrb[0].mxu0
        %2248 = vmatprep.mubr.bf16.mxu0 0
        %2249 = vmatmul.mubr.bf16.gmra.mrb[0].mxu0 %v2164
        %v2250 = vpop.f32.mrb[0].mxu0
        %v2251 = vadd.f32 %v2146, %v2250
        %v2252 = vpop.f32.mrb[0].mxu0
        %v2253 = vpop.f32.mrb[0].mxu0
        %v2254 = vadd.f32 %v2146, %v2253
        %v2255 = vpop.f32.mrb[0].mxu0
        %2256 = vmatprep.mubr.bf16.mxu0 0
        %2257 = vmatmul.mubr.bf16.gmra.mrb[0].mxu0 %v2167
        %v2258 = vpop.f32.mrb[0].mxu0
        %v2259 = vadd.f32 %v2146, %v2258
        %v2260 = vpop.f32.mrb[0].mxu0
        %v2261 = vpop.f32.mrb[0].mxu0
        %v2262 = vadd.f32 %v2146, %v2261
        %v2263 = vpop.f32.mrb[0].mxu0
        %2264 = vmatprep.mubr.bf16.mxu0 0
        %2265 = vmatmul.mubr.bf16.gmra.mrb[0].mxu0 %v2170
        %v2266 = vpop.f32.mrb[0].mxu0
        %v2267 = vadd.f32 %v2146, %v2266
        %v2268 = vpop.f32.mrb[0].mxu0
        %v2269 = vpop.f32.mrb[0].mxu0
        %v2270 = vadd.f32 %v2146, %v2269
        %v2271 = vpop.f32.mrb[0].mxu0
        %2272 = vmatprep.mubr.bf16.mxu0 0
        %2273 = vmatmul.mubr.bf16.gmra.mrb[0].mxu0 %v2173
        %v2274 = vpop.f32.mrb[0].mxu0
        %v2275 = vadd.f32 %v2146, %v2274
        %v2276 = vpop.f32.mrb[0].mxu0
        %v2277 = vpop.f32.mrb[0].mxu0
        %v2278 = vadd.f32 %v2146, %v2277
        %v2279 = vpop.f32.mrb[0].mxu0
        %2280 = vmatprep.mubr.bf16.mxu0 0
        %2281 = vmatmul.mubr.bf16.gmra.mrb[0].mxu0 %v2176
        %v2282 = vpop.f32.mrb[0].mxu0
        %v2283 = vadd.f32 %v2146, %v2282
        %v2284 = vpop.f32.mrb[0].mxu0
        %v2285 = vpop.f32.mrb[0].mxu0
        %v2286 = vadd.f32 %v2146, %v2285
        %v2287 = vpop.f32.mrb[0].mxu0
        %2288 = vmatprep.mubr.bf16.mxu0 0
        %2289 = vmatmul.mubr.bf16.gmra.mrb[0].mxu0 %v2179
        %v2290 = vpop.f32.mrb[0].mxu0
        %v2291 = vadd.f32 %v2146, %v2290
        %v2292 = vpop.f32.mrb[0].mxu0
        %v2293 = vpop.f32.mrb[0].mxu0
        %v2294 = vadd.f32 %v2146, %v2293
        %v2295 = vpop.f32.mrb[0].mxu0
        %2296 = vmatprep.mubr.bf16.mxu0 0
        %2297 = vmatmul.mubr.bf16.gmra.mrb[0].mxu0 %v2182
        %v2298 = vpop.f32.mrb[0].mxu0
        %v2299 = vadd.f32 %v2146, %v2298
        %v2300 = vpop.f32.mrb[0].mxu0
        %v2301 = vpop.f32.mrb[0].mxu0
        %v2302 = vadd.f32 %v2146, %v2301
        %v2303 = vpop.f32.mrb[0].mxu0
        %2304 = vmatprep.mubr.bf16.mxu0 0
        %2305 = vmatmul.mubr.bf16.gmra.mrb[0].mxu0 %v2185
        %v2306 = vpop.f32.mrb[0].mxu0
        %v2307 = vadd.f32 %v2146, %v2306
        %v2308 = vpop.f32.mrb[0].mxu0
        %v2309 = vpop.f32.mrb[0].mxu0
        %v2310 = vadd.f32 %v2146, %v2309
        %v2311 = vpop.f32.mrb[0].mxu0
        %2312 = vmatprep.mubr.bf16.mxu0 0
        %2313 = vmatmul.mubr.bf16.gmra.mrb[0].mxu0 %v2188
        %v2314 = vpop.f32.mrb[0].mxu0
        %v2315 = vadd.f32 %v2146, %v2314
        %v2316 = vpop.f32.mrb[0].mxu0
        %v2317 = vpop.f32.mrb[0].mxu0
        %v2318 = vadd.f32 %v2146, %v2317
        %v2319 = vpop.f32.mrb[0].mxu0
        %2320 = vmatprep.mubr.bf16.mxu0 0
        %2321 = vmatmul.mubr.bf16.gmra.mrb[0].mxu0 %v2191
        %v2322 = vpop.f32.mrb[0].mxu0
        %v2323 = vadd.f32 %v2146, %v2322
        %v2324 = vpop.f32.mrb[0].mxu0
        %v2325 = vpop.f32.mrb[0].mxu0
        %v2326 = vadd.f32 %v2146, %v2325
        %v2327 = vpop.f32.mrb[0].mxu0
        %2328 = vmatprep.mubr.bf16.mxu0 0
        %2329 = vmatmul.mubr.bf16.gmra.mrb[0].mxu0 %v2194
        %v2330 = vpop.f32.mrb[0].mxu0
        %v2331 = vadd.f32 %v2146, %v2330
        %v2332 = vpop.f32.mrb[0].mxu0
        %v2333 = vpop.f32.mrb[0].mxu0
        %v2334 = vadd.f32 %v2146, %v2333
        %v2335 = vpop.f32.mrb[0].mxu0
        %2336 = vmatprep.mubr.bf16.mxu0 0
        %2337 = vmatmul.mubr.bf16.gmra.mrb[0].mxu0 %v2197
        %v2338 = vpop.f32.mrb[0].mxu0
        %v2339 = vadd.f32 %v2146, %v2338
        %v2340 = vpop.f32.mrb[0].mxu0
        %v2341 = vpop.f32.mrb[0].mxu0
        %v2342 = vadd.f32 %v2146, %v2341
        %v2343 = vpop.f32.mrb[0].mxu0
        %2344 = vmatprep.mubr.bf16.mxu0 0
        %2345 = vmatmul.mubr.bf16.gmra.mrb[0].mxu0 %v2200
        %v2346 = vpop.f32.mrb[0].mxu0
        %v2347 = vadd.f32 %v2146, %v2346
        %v2348 = vpop.f32.mrb[0].mxu0
        %v2349 = vpop.f32.mrb[0].mxu0
        %v2350 = vadd.f32 %v2146, %v2349
        %v2351 = vpop.f32.mrb[0].mxu0
        %2352 = vmatprep.mubr.bf16.mxu0 0
        %2353 = vmatmul.mubr.bf16.gmra.mrb[0].mxu0 %v2203
        %v2354 = vpop.f32.mrb[0].mxu0
        %v2355 = vadd.f32 %v2146, %v2354
        %v2356 = vpop.f32.mrb[0].mxu0
        %v2357 = vpop.f32.mrb[0].mxu0
        %v2358 = vadd.f32 %v2146, %v2357
        %v2359 = vpop.f32.mrb[0].mxu0
        %2360 = vmatprep.mubr.bf16.mxu0 0
        %2361 = vmatmul.mubr.bf16.gmra.mrb[0].mxu0 %v2206
        %v2362 = vpop.f32.mrb[0].mxu0
        %v2363 = vadd.f32 %v2146, %v2362
        %v2364 = vpop.f32.mrb[0].mxu0
        %v2365 = vpop.f32.mrb[0].mxu0
        %v2366 = vadd.f32 %v2146, %v2365
        %v2367 = vpop.f32.mrb[0].mxu0
        %2368 = vdwg.mxu0
        %v2371 = vcombine.high %v2131, %v2131
        %v2373 = vunpack.c.l.s4 1966171168
        %v2374 = vunpack.c.0.s8 %v2373
        %v2375 = vlaneseq
        %v2376 = vshrl.u32 %v2375, 7
        %v2377 = vsub.s32 %v2374, %v2376
        %v2378 = vrot.slane %v2131, %v2377
        %v2380 = vunpack.c.l.s4 1966171168
        %v2381 = vunpack.c.0.s8 %v2380
        %v2382 = vlaneseq
        %v2383 = vshrl.u32 %v2382, 7
        %v2384 = vsub.s32 %v2381, %v2383
        %v2385 = vrot.slane %v2371, %v2384
        %v2386 = vcombine.high %v2378, %v2378
        %v2387 = vcombine.high %v2385, %v2385
        %v2389 = vunpack.c.l.s4 1966171168
        %v2390 = vunpack.c.0.s8 %v2389
        %v2391 = vlaneseq
        %v2392 = vshrl.u32 %v2391, 7
        %v2393 = vsub.s32 %v2390, %v2392
        %v2394 = vrot.slane %v2378, %v2393
        %v2396 = vunpack.c.l.s4 1966171168
        %v2397 = vunpack.c.0.s8 %v2396
        %v2398 = vlaneseq
        %v2399 = vshrl.u32 %v2398, 7
        %v2400 = vsub.s32 %v2397, %v2399
        %v2401 = vrot.slane %v2385, %v2400
        %v2403 = vunpack.c.l.s4 1966171168
        %v2404 = vunpack.c.0.s8 %v2403
        %v2405 = vlaneseq
        %v2406 = vshrl.u32 %v2405, 7
        %v2407 = vsub.s32 %v2404, %v2406
        %v2408 = vrot.slane %v2386, %v2407
        %v2410 = vunpack.c.l.s4 1966171168
        %v2411 = vunpack.c.0.s8 %v2410
        %v2412 = vlaneseq
        %v2413 = vshrl.u32 %v2412, 7
        %v2414 = vsub.s32 %v2411, %v2413
        %v2415 = vrot.slane %v2387, %v2414
        %v2416 = vcombine.high %v2394, %v2394
        %v2417 = vcombine.high %v2401, %v2401
        %v2418 = vcombine.high %v2408, %v2408
        %v2419 = vcombine.high %v2415, %v2415
        %v2420 = vcombine.high %v2134, %v2134
        %v2422 = vunpack.c.l.s4 1966171168
        %v2423 = vunpack.c.0.s8 %v2422
        %v2424 = vlaneseq
        %v2425 = vshrl.u32 %v2424, 7
        %v2426 = vsub.s32 %v2423, %v2425
        %v2427 = vrot.slane %v2134, %v2426
        %v2429 = vunpack.c.l.s4 1966171168
        %v2430 = vunpack.c.0.s8 %v2429
        %v2431 = vlaneseq
        %v2432 = vshrl.u32 %v2431, 7
        %v2433 = vsub.s32 %v2430, %v2432
        %v2434 = vrot.slane %v2420, %v2433
        %v2435 = vcombine.high %v2427, %v2427
        %v2436 = vcombine.high %v2434, %v2434
        %v2438 = vunpack.c.l.s4 1966171168
        %v2439 = vunpack.c.0.s8 %v2438
        %v2440 = vlaneseq
        %v2441 = vshrl.u32 %v2440, 7
        %v2442 = vsub.s32 %v2439, %v2441
        %v2443 = vrot.slane %v2427, %v2442
        %v2445 = vunpack.c.l.s4 1966171168
        %v2446 = vunpack.c.0.s8 %v2445
        %v2447 = vlaneseq
        %v2448 = vshrl.u32 %v2447, 7
        %v2449 = vsub.s32 %v2446, %v2448
        %v2450 = vrot.slane %v2434, %v2449
        %v2452 = vunpack.c.l.s4 1966171168
        %v2453 = vunpack.c.0.s8 %v2452
        %v2454 = vlaneseq
        %v2455 = vshrl.u32 %v2454, 7
        %v2456 = vsub.s32 %v2453, %v2455
        %v2457 = vrot.slane %v2435, %v2456
        %v2459 = vunpack.c.l.s4 1966171168
        %v2460 = vunpack.c.0.s8 %v2459
        %v2461 = vlaneseq
        %v2462 = vshrl.u32 %v2461, 7
        %v2463 = vsub.s32 %v2460, %v2462
        %v2464 = vrot.slane %v2436, %v2463
        %v2465 = vcombine.high %v2443, %v2443
        %v2466 = vcombine.high %v2450, %v2450
        %v2467 = vcombine.high %v2457, %v2457
        %v2468 = vcombine.high %v2464, %v2464
        %v2469 = vlaneseq
        %v2470 = vshrl.u32 %v2469, 7
        %v2471 = vsub.s32 0, %v2470
        %v2472 = vrot.slane %v2394, %v2471
        %v2473 = vlaneseq
        %v2474 = vshrl.u32 %v2473, 7
        %v2475 = vsub.s32 0, %v2474
        %v2476 = vrot.slane %v2408, %v2475
        %v2477 = vlaneseq
        %v2478 = vshrl.u32 %v2477, 7
        %v2479 = vsub.s32 0, %v2478
        %v2480 = vrot.slane %v2416, %v2479
        %v2481 = vlaneseq
        %v2482 = vshrl.u32 %v2481, 7
        %v2483 = vsub.s32 0, %v2482
        %v2484 = vrot.slane %v2418, %v2483
        %v2485 = vlaneseq
        %v2486 = vshrl.u32 %v2485, 7
        %v2487 = vsub.s32 0, %v2486
        %v2488 = vrot.slane %v2401, %v2487
        %v2489 = vlaneseq
        %v2490 = vshrl.u32 %v2489, 7
        %v2491 = vsub.s32 0, %v2490
        %v2492 = vrot.slane %v2415, %v2491
        %v2493 = vlaneseq
        %v2494 = vshrl.u32 %v2493, 7
        %v2495 = vsub.s32 0, %v2494
        %v2496 = vrot.slane %v2417, %v2495
        %v2497 = vlaneseq
        %v2498 = vshrl.u32 %v2497, 7
        %v2499 = vsub.s32 0, %v2498
        %v2500 = vrot.slane %v2419, %v2499
        %v2501 = vlaneseq
        %v2502 = vshrl.u32 %v2501, 7
        %v2503 = vsub.s32 0, %v2502
        %v2504 = vrot.slane %v2443, %v2503
        %v2505 = vlaneseq
        %v2506 = vshrl.u32 %v2505, 7
        %v2507 = vsub.s32 0, %v2506
        %v2508 = vrot.slane %v2457, %v2507
        %v2509 = vlaneseq
        %v2510 = vshrl.u32 %v2509, 7
        %v2511 = vsub.s32 0, %v2510
        %v2512 = vrot.slane %v2465, %v2511
        %v2513 = vlaneseq
        %v2514 = vshrl.u32 %v2513, 7
        %v2515 = vsub.s32 0, %v2514
        %v2516 = vrot.slane %v2467, %v2515
        %v2517 = vlaneseq
        %v2518 = vshrl.u32 %v2517, 7
        %v2519 = vsub.s32 0, %v2518
        %v2520 = vrot.slane %v2450, %v2519
        %v2521 = vlaneseq
        %v2522 = vshrl.u32 %v2521, 7
        %v2523 = vsub.s32 0, %v2522
        %v2524 = vrot.slane %v2464, %v2523
        %v2525 = vlaneseq
        %v2526 = vshrl.u32 %v2525, 7
        %v2527 = vsub.s32 0, %v2526
        %v2528 = vrot.slane %v2466, %v2527
        %v2529 = vlaneseq
        %v2530 = vshrl.u32 %v2529, 7
        %v2531 = vsub.s32 0, %v2530
        %v2532 = vrot.slane %v2468, %v2531
        %2533 = vrot.lane.b32.xlu0 %v2472, 64
        %v2534 = vpop.permute.xlu0 %2533
        %2535 = vrot.lane.b32.xlu0 %v2476, 64
        %v2536 = vpop.permute.xlu0 %2535
        %2537 = vrot.lane.b32.xlu0 %v2480, 64
        %v2538 = vpop.permute.xlu0 %2537
        %2539 = vrot.lane.b32.xlu0 %v2484, 64
        %v2540 = vpop.permute.xlu0 %2539
        %2541 = vrot.lane.b32.xlu0 %v2488, 64
        %v2542 = vpop.permute.xlu0 %2541
        %2543 = vrot.lane.b32.xlu0 %v2492, 64
        %v2544 = vpop.permute.xlu0 %2543
        %2545 = vrot.lane.b32.xlu0 %v2496, 64
        %v2546 = vpop.permute.xlu0 %2545
        %2547 = vrot.lane.b32.xlu0 %v2500, 64
        %v2548 = vpop.permute.xlu0 %2547
        %2549 = vrot.lane.b32.xlu0 %v2504, 64
        %v2550 = vpop.permute.xlu0 %2549
        %2551 = vrot.lane.b32.xlu0 %v2508, 64
        %v2552 = vpop.permute.xlu0 %2551
        %2553 = vrot.lane.b32.xlu0 %v2512, 64
        %v2554 = vpop.permute.xlu0 %2553
        %2555 = vrot.lane.b32.xlu0 %v2516, 64
        %v2556 = vpop.permute.xlu0 %2555
        %2557 = vrot.lane.b32.xlu0 %v2520, 64
        %v2558 = vpop.permute.xlu0 %2557
        %2559 = vrot.lane.b32.xlu0 %v2524, 64
        %v2560 = vpop.permute.xlu0 %2559
        %2561 = vrot.lane.b32.xlu0 %v2528, 64
        %v2562 = vpop.permute.xlu0 %2561
        %2563 = vrot.lane.b32.xlu0 %v2532, 64
        %v2564 = vpop.permute.xlu0 %2563
        %v2581 = vadd.f32 %v2243, %v2534
        %v2582 = vadd.f32 %v2246, %v2534
        %v2583 = vadd.f32 %v2251, %v2536
        %v2584 = vadd.f32 %v2254, %v2536
        %v2585 = vadd.f32 %v2259, %v2538
        %v2586 = vadd.f32 %v2262, %v2538
        %v2587 = vadd.f32 %v2267, %v2540
        %v2588 = vadd.f32 %v2270, %v2540
        %v2589 = vadd.f32 %v2275, %v2542
        %v2590 = vadd.f32 %v2278, %v2542
        %v2591 = vadd.f32 %v2283, %v2544
        %v2592 = vadd.f32 %v2286, %v2544
        %v2593 = vadd.f32 %v2291, %v2546
        %v2594 = vadd.f32 %v2294, %v2546
        %v2595 = vadd.f32 %v2299, %v2548
        %v2596 = vadd.f32 %v2302, %v2548
        %v2597 = vadd.f32 %v2307, %v2550
        %v2598 = vadd.f32 %v2310, %v2550
        %v2599 = vadd.f32 %v2315, %v2552
        %v2600 = vadd.f32 %v2318, %v2552
        %v2601 = vadd.f32 %v2323, %v2554
        %v2602 = vadd.f32 %v2326, %v2554
        %v2603 = vadd.f32 %v2331, %v2556
        %v2604 = vadd.f32 %v2334, %v2556
        %v2605 = vadd.f32 %v2339, %v2558
        %v2606 = vadd.f32 %v2342, %v2558
        %v2607 = vadd.f32 %v2347, %v2560
        %v2608 = vadd.f32 %v2350, %v2560
        %v2609 = vadd.f32 %v2355, %v2562
        %v2610 = vadd.f32 %v2358, %v2562
        %v2611 = vadd.f32 %v2363, %v2564
        %v2612 = vadd.f32 %v2366, %v2564
        %2613 = vrot.lane.b32.xlu0 %v2131, 32
        %v2614 = vpop.permute.xlu0 %2613
        %2615 = vrot.lane.b32.xlu0 %v2134, 32
        %v2616 = vpop.permute.xlu0 %2615
        %v2619 = vadd.f32 %v2581, %v2614
        %v2620 = vadd.f32 %v2582, %v2616
        %v2621 = vadd.f32 %v2583, %v2614
        %v2622 = vadd.f32 %v2584, %v2616
        %v2623 = vadd.f32 %v2585, %v2614
        %v2624 = vadd.f32 %v2586, %v2616
        %v2625 = vadd.f32 %v2587, %v2614
        %v2626 = vadd.f32 %v2588, %v2616
        %v2627 = vadd.f32 %v2589, %v2614
        %v2628 = vadd.f32 %v2590, %v2616
        %v2629 = vadd.f32 %v2591, %v2614
        %v2630 = vadd.f32 %v2592, %v2616
        %v2631 = vadd.f32 %v2593, %v2614
        %v2632 = vadd.f32 %v2594, %v2616
        %v2633 = vadd.f32 %v2595, %v2614
        %v2634 = vadd.f32 %v2596, %v2616
        %v2635 = vadd.f32 %v2597, %v2614
        %v2636 = vadd.f32 %v2598, %v2616
        %v2637 = vadd.f32 %v2599, %v2614
        %v2638 = vadd.f32 %v2600, %v2616
        %v2639 = vadd.f32 %v2601, %v2614
        %v2640 = vadd.f32 %v2602, %v2616
        %v2641 = vadd.f32 %v2603, %v2614
        %v2642 = vadd.f32 %v2604, %v2616
        %v2643 = vadd.f32 %v2605, %v2614
        %v2644 = vadd.f32 %v2606, %v2616
        %v2645 = vadd.f32 %v2607, %v2614
        %v2646 = vadd.f32 %v2608, %v2616
        %v2647 = vadd.f32 %v2609, %v2614
        %v2648 = vadd.f32 %v2610, %v2616
        %v2649 = vadd.f32 %v2611, %v2614
        %v2650 = vadd.f32 %v2612, %v2616
        %v2651 = vxor.u32 %v2619, 2147483648
        %v2652 = vxor.u32 %v2620, 2147483648
        %v2653 = vxor.u32 %v2621, 2147483648
        %v2654 = vxor.u32 %v2622, 2147483648
        %v2655 = vxor.u32 %v2623, 2147483648
        %v2656 = vxor.u32 %v2624, 2147483648
        %v2657 = vxor.u32 %v2625, 2147483648
        %v2658 = vxor.u32 %v2626, 2147483648
        %v2659 = vxor.u32 %v2627, 2147483648
        %v2660 = vxor.u32 %v2628, 2147483648
        %v2661 = vxor.u32 %v2629, 2147483648
        %v2662 = vxor.u32 %v2630, 2147483648
        %v2663 = vxor.u32 %v2631, 2147483648
        %v2664 = vxor.u32 %v2632, 2147483648
        %v2665 = vxor.u32 %v2633, 2147483648
        %v2666 = vxor.u32 %v2634, 2147483648
        %v2667 = vxor.u32 %v2635, 2147483648
        %v2668 = vxor.u32 %v2636, 2147483648
        %v2669 = vxor.u32 %v2637, 2147483648
        %v2670 = vxor.u32 %v2638, 2147483648
        %v2671 = vxor.u32 %v2639, 2147483648
        %v2672 = vxor.u32 %v2640, 2147483648
        %v2673 = vxor.u32 %v2641, 2147483648
        %v2674 = vxor.u32 %v2642, 2147483648
        %v2675 = vxor.u32 %v2643, 2147483648
        %v2676 = vxor.u32 %v2644, 2147483648
        %v2677 = vxor.u32 %v2645, 2147483648
        %v2678 = vxor.u32 %v2646, 2147483648
        %v2679 = vxor.u32 %v2647, 2147483648
        %v2680 = vxor.u32 %v2648, 2147483648
        %v2681 = vxor.u32 %v2649, 2147483648
        %v2682 = vxor.u32 %v2650, 2147483648
        %v2683 = vmul.f32 %v2651, 1.442695
        %v2684 = vpow.pop %v2683
        %v2685 = vmul.f32 %v2652, 1.442695
        %v2686 = vpow.pop %v2685
        %v2687 = vmul.f32 %v2653, 1.442695
        %v2688 = vpow.pop %v2687
        %v2689 = vmul.f32 %v2654, 1.442695
        %v2690 = vpow.pop %v2689
        %v2691 = vmul.f32 %v2655, 1.442695
        %v2692 = vpow.pop %v2691
        %v2693 = vmul.f32 %v2656, 1.442695
        %v2694 = vpow.pop %v2693
        %v2695 = vmul.f32 %v2657, 1.442695
        %v2696 = vpow.pop %v2695
        %v2697 = vmul.f32 %v2658, 1.442695
        %v2698 = vpow.pop %v2697
        %v2699 = vmul.f32 %v2659, 1.442695
        %v2700 = vpow.pop %v2699
        %v2701 = vmul.f32 %v2660, 1.442695
        %v2702 = vpow.pop %v2701
        %v2703 = vmul.f32 %v2661, 1.442695
        %v2704 = vpow.pop %v2703
        %v2705 = vmul.f32 %v2662, 1.442695
        %v2706 = vpow.pop %v2705
        %v2707 = vmul.f32 %v2663, 1.442695
        %v2708 = vpow.pop %v2707
        %v2709 = vmul.f32 %v2664, 1.442695
        %v2710 = vpow.pop %v2709
        %v2711 = vmul.f32 %v2665, 1.442695
        %v2712 = vpow.pop %v2711
        %v2713 = vmul.f32 %v2666, 1.442695
        %v2714 = vpow.pop %v2713
        %v2715 = vmul.f32 %v2667, 1.442695
        %v2716 = vpow.pop %v2715
        %v2717 = vmul.f32 %v2668, 1.442695
        %v2718 = vpow.pop %v2717
        %v2719 = vmul.f32 %v2669, 1.442695
        %v2720 = vpow.pop %v2719
        %v2721 = vmul.f32 %v2670, 1.442695
        %v2722 = vpow.pop %v2721
        %v2723 = vmul.f32 %v2671, 1.442695
        %v2724 = vpow.pop %v2723
        %v2725 = vmul.f32 %v2672, 1.442695
        %v2726 = vpow.pop %v2725
        %v2727 = vmul.f32 %v2673, 1.442695
        %v2728 = vpow.pop %v2727
        %v2729 = vmul.f32 %v2674, 1.442695
        %v2730 = vpow.pop %v2729
        %v2731 = vmul.f32 %v2675, 1.442695
        %v2732 = vpow.pop %v2731
        %v2733 = vmul.f32 %v2676, 1.442695
        %v2734 = vpow.pop %v2733
        %v2735 = vmul.f32 %v2677, 1.442695
        %v2736 = vpow.pop %v2735
        %v2737 = vmul.f32 %v2678, 1.442695
        %v2738 = vpow.pop %v2737
        %v2739 = vmul.f32 %v2679, 1.442695
        %v2740 = vpow.pop %v2739
        %v2741 = vmul.f32 %v2680, 1.442695
        %v2742 = vpow.pop %v2741
        %v2743 = vmul.f32 %v2681, 1.442695
        %v2744 = vpow.pop %v2743
        %v2745 = vmul.f32 %v2682, 1.442695
        %v2746 = vpow.pop %v2745
        %v2747 = vadd.f32 %v2684, 1.0
        %v2748 = vadd.f32 %v2686, 1.0
        %v2749 = vadd.f32 %v2688, 1.0
        %v2750 = vadd.f32 %v2690, 1.0
        %v2751 = vadd.f32 %v2692, 1.0
        %v2752 = vadd.f32 %v2694, 1.0
        %v2753 = vadd.f32 %v2696, 1.0
        %v2754 = vadd.f32 %v2698, 1.0
        %v2755 = vadd.f32 %v2700, 1.0
        %v2756 = vadd.f32 %v2702, 1.0
        %v2757 = vadd.f32 %v2704, 1.0
        %v2758 = vadd.f32 %v2706, 1.0
        %v2759 = vadd.f32 %v2708, 1.0
        %v2760 = vadd.f32 %v2710, 1.0
        %v2761 = vadd.f32 %v2712, 1.0
        %v2762 = vadd.f32 %v2714, 1.0
        %v2763 = vadd.f32 %v2716, 1.0
        %v2764 = vadd.f32 %v2718, 1.0
        %v2765 = vadd.f32 %v2720, 1.0
        %v2766 = vadd.f32 %v2722, 1.0
        %v2767 = vadd.f32 %v2724, 1.0
        %v2768 = vadd.f32 %v2726, 1.0
        %v2769 = vadd.f32 %v2728, 1.0
        %v2770 = vadd.f32 %v2730, 1.0
        %v2771 = vadd.f32 %v2732, 1.0
        %v2772 = vadd.f32 %v2734, 1.0
        %v2773 = vadd.f32 %v2736, 1.0
        %v2774 = vadd.f32 %v2738, 1.0
        %v2775 = vadd.f32 %v2740, 1.0
        %v2776 = vadd.f32 %v2742, 1.0
        %v2777 = vadd.f32 %v2744, 1.0
        %v2778 = vadd.f32 %v2746, 1.0
        %v2779 = vrcp.pop %v2747
        %v2780 = vmul.f32 1.0, %v2779
        %v2781 = vrcp.pop %v2748
        %v2782 = vmul.f32 1.0, %v2781
        %v2783 = vrcp.pop %v2749
        %v2784 = vmul.f32 1.0, %v2783
        %v2785 = vrcp.pop %v2750
        %v2786 = vmul.f32 1.0, %v2785
        %v2787 = vrcp.pop %v2751
        %v2788 = vmul.f32 1.0, %v2787
        %v2789 = vrcp.pop %v2752
        %v2790 = vmul.f32 1.0, %v2789
        %v2791 = vrcp.pop %v2753
        %v2792 = vmul.f32 1.0, %v2791
        %v2793 = vrcp.pop %v2754
        %v2794 = vmul.f32 1.0, %v2793
        %v2795 = vrcp.pop %v2755
        %v2796 = vmul.f32 1.0, %v2795
        %v2797 = vrcp.pop %v2756
        %v2798 = vmul.f32 1.0, %v2797
        %v2799 = vrcp.pop %v2757
        %v2800 = vmul.f32 1.0, %v2799
        %v2801 = vrcp.pop %v2758
        %v2802 = vmul.f32 1.0, %v2801
        %v2803 = vrcp.pop %v2759
        %v2804 = vmul.f32 1.0, %v2803
        %v2805 = vrcp.pop %v2760
        %v2806 = vmul.f32 1.0, %v2805
        %v2807 = vrcp.pop %v2761
        %v2808 = vmul.f32 1.0, %v2807
        %v2809 = vrcp.pop %v2762
        %v2810 = vmul.f32 1.0, %v2809
        %v2811 = vrcp.pop %v2763
        %v2812 = vmul.f32 1.0, %v2811
        %v2813 = vrcp.pop %v2764
        %v2814 = vmul.f32 1.0, %v2813
        %v2815 = vrcp.pop %v2765
        %v2816 = vmul.f32 1.0, %v2815
        %v2817 = vrcp.pop %v2766
        %v2818 = vmul.f32 1.0, %v2817
        %v2819 = vrcp.pop %v2767
        %v2820 = vmul.f32 1.0, %v2819
        %v2821 = vrcp.pop %v2768
        %v2822 = vmul.f32 1.0, %v2821
        %v2823 = vrcp.pop %v2769
        %v2824 = vmul.f32 1.0, %v2823
        %v2825 = vrcp.pop %v2770
        %v2826 = vmul.f32 1.0, %v2825
        %v2827 = vrcp.pop %v2771
        %v2828 = vmul.f32 1.0, %v2827
        %v2829 = vrcp.pop %v2772
        %v2830 = vmul.f32 1.0, %v2829
        %v2831 = vrcp.pop %v2773
        %v2832 = vmul.f32 1.0, %v2831
        %v2833 = vrcp.pop %v2774
        %v2834 = vmul.f32 1.0, %v2833
        %v2835 = vrcp.pop %v2775
        %v2836 = vmul.f32 1.0, %v2835
        %v2837 = vrcp.pop %v2776
        %v2838 = vmul.f32 1.0, %v2837
        %v2839 = vrcp.pop %v2777
        %v2840 = vmul.f32 1.0, %v2839
        %v2841 = vrcp.pop %v2778
        %v2842 = vmul.f32 1.0, %v2841
        %v2843 = vmul.f32 %v2780, %v2037
        %v2844 = vmul.f32 %v2782, %v2038
        %v2845 = vmul.f32 %v2784, %v2039
        %v2846 = vmul.f32 %v2786, %v2040
        %v2847 = vmul.f32 %v2788, %v2041
        %v2848 = vmul.f32 %v2790, %v2042
        %v2849 = vmul.f32 %v2792, %v2043
        %v2850 = vmul.f32 %v2794, %v2044
        %v2851 = vmul.f32 %v2796, %v2045
        %v2852 = vmul.f32 %v2798, %v2046
        %v2853 = vmul.f32 %v2800, %v2047
        %v2854 = vmul.f32 %v2802, %v2048
        %v2855 = vmul.f32 %v2804, %v2049
        %v2856 = vmul.f32 %v2806, %v2050
        %v2857 = vmul.f32 %v2808, %v2051
        %v2858 = vmul.f32 %v2810, %v2052
        %v2859 = vmul.f32 %v2812, %v2053
        %v2860 = vmul.f32 %v2814, %v2054
        %v2861 = vmul.f32 %v2816, %v2055
        %v2862 = vmul.f32 %v2818, %v2056
        %v2863 = vmul.f32 %v2820, %v2057
        %v2864 = vmul.f32 %v2822, %v2058
        %v2865 = vmul.f32 %v2824, %v2059
        %v2866 = vmul.f32 %v2826, %v2060
        %v2867 = vmul.f32 %v2828, %v2061
        %v2868 = vmul.f32 %v2830, %v2062
        %v2869 = vmul.f32 %v2832, %v2063
        %v2870 = vmul.f32 %v2834, %v2064
        %v2871 = vmul.f32 %v2836, %v2065
        %v2872 = vmul.f32 %v2838, %v2066
        %v2873 = vmul.f32 %v2840, %v2067
        %v2874 = vmul.f32 %v2842, %v2068
        %2875 = vrot.lane.b32.xlu0 %v2472, 96
        %v2876 = vpop.permute.xlu0 %2875
        %2877 = vrot.lane.b32.xlu0 %v2476, 96
        %v2878 = vpop.permute.xlu0 %2877
        %2879 = vrot.lane.b32.xlu0 %v2480, 96
        %v2880 = vpop.permute.xlu0 %2879
        %2881 = vrot.lane.b32.xlu0 %v2484, 96
        %v2882 = vpop.permute.xlu0 %2881
        %2883 = vrot.lane.b32.xlu0 %v2488, 96
        %v2884 = vpop.permute.xlu0 %2883
        %2885 = vrot.lane.b32.xlu0 %v2492, 96
        %v2886 = vpop.permute.xlu0 %2885
        %2887 = vrot.lane.b32.xlu0 %v2496, 96
        %v2888 = vpop.permute.xlu0 %2887
        %2889 = vrot.lane.b32.xlu0 %v2500, 96
        %v2890 = vpop.permute.xlu0 %2889
        %2891 = vrot.lane.b32.xlu0 %v2504, 96
        %v2892 = vpop.permute.xlu0 %2891
        %2893 = vrot.lane.b32.xlu0 %v2508, 96
        %v2894 = vpop.permute.xlu0 %2893
        %2895 = vrot.lane.b32.xlu0 %v2512, 96
        %v2896 = vpop.permute.xlu0 %2895
        %2897 = vrot.lane.b32.xlu0 %v2516, 96
        %v2898 = vpop.permute.xlu0 %2897
        %2899 = vrot.lane.b32.xlu0 %v2520, 96
        %v2900 = vpop.permute.xlu0 %2899
        %2901 = vrot.lane.b32.xlu0 %v2524, 96
        %v2902 = vpop.permute.xlu0 %2901
        %2903 = vrot.lane.b32.xlu0 %v2528, 96
        %v2904 = vpop.permute.xlu0 %2903
        %2905 = vrot.lane.b32.xlu0 %v2532, 96
        %v2906 = vpop.permute.xlu0 %2905
        %v2923 = vmul.f32 %v2843, %v2876
        %v2924 = vmul.f32 %v2844, %v2876
        %v2925 = vmul.f32 %v2845, %v2878
        %v2926 = vmul.f32 %v2846, %v2878
        %v2927 = vmul.f32 %v2847, %v2880
        %v2928 = vmul.f32 %v2848, %v2880
        %v2929 = vmul.f32 %v2849, %v2882
        %v2930 = vmul.f32 %v2850, %v2882
        %v2931 = vmul.f32 %v2851, %v2884
        %v2932 = vmul.f32 %v2852, %v2884
        %v2933 = vmul.f32 %v2853, %v2886
        %v2934 = vmul.f32 %v2854, %v2886
        %v2935 = vmul.f32 %v2855, %v2888
        %v2936 = vmul.f32 %v2856, %v2888
        %v2937 = vmul.f32 %v2857, %v2890
        %v2938 = vmul.f32 %v2858, %v2890
        %v2939 = vmul.f32 %v2859, %v2892
        %v2940 = vmul.f32 %v2860, %v2892
        %v2941 = vmul.f32 %v2861, %v2894
        %v2942 = vmul.f32 %v2862, %v2894
        %v2943 = vmul.f32 %v2863, %v2896
        %v2944 = vmul.f32 %v2864, %v2896
        %v2945 = vmul.f32 %v2865, %v2898
        %v2946 = vmul.f32 %v2866, %v2898
        %v2947 = vmul.f32 %v2867, %v2900
        %v2948 = vmul.f32 %v2868, %v2900
        %v2949 = vmul.f32 %v2869, %v2902
        %v2950 = vmul.f32 %v2870, %v2902
        %v2951 = vmul.f32 %v2871, %v2904
        %v2952 = vmul.f32 %v2872, %v2904
        %v2953 = vmul.f32 %v2873, %v2906
        %v2954 = vmul.f32 %v2874, %v2906
        %v2955 = vsel %vm2092, %v2923, 0.0
        %v2956 = vsel %vm2092, %v2925, 0.0
        %v2957 = vadd.f32 %v2955, %v2956
        %v2958 = vsel %vm2092, %v2927, 0.0
        %v2959 = vadd.f32 %v2957, %v2958
        %v2960 = vsel %vm2092, %v2929, 0.0
        %v2961 = vadd.f32 %v2959, %v2960
        %v2962 = vsel %vm2092, %v2931, 0.0
        %v2963 = vadd.f32 %v2961, %v2962
        %v2964 = vsel %vm2092, %v2933, 0.0
        %v2965 = vadd.f32 %v2963, %v2964
        %v2966 = vsel %vm2092, %v2935, 0.0
        %v2967 = vadd.f32 %v2965, %v2966
        %v2968 = vsel %vm2092, %v2937, 0.0
        %v2969 = vadd.f32 %v2967, %v2968
        %v2970 = vsel %vm2092, %v2939, 0.0
        %v2971 = vadd.f32 %v2969, %v2970
        %v2972 = vsel %vm2092, %v2941, 0.0
        %v2973 = vadd.f32 %v2971, %v2972
        %v2974 = vsel %vm2092, %v2943, 0.0
        %v2975 = vadd.f32 %v2973, %v2974
        %v2976 = vsel %vm2092, %v2945, 0.0
        %v2977 = vadd.f32 %v2975, %v2976
        %v2978 = vsel %vm2092, %v2947, 0.0
        %v2979 = vadd.f32 %v2977, %v2978
        %v2980 = vsel %vm2092, %v2949, 0.0
        %v2981 = vadd.f32 %v2979, %v2980
        %v2982 = vsel %vm2092, %v2951, 0.0
        %v2983 = vadd.f32 %v2981, %v2982
        %v2984 = vsel %vm2092, %v2953, 0.0
        %v2985 = vadd.f32 %v2983, %v2984
        %v2986 = vsel %vm2092, %v2924, 0.0
        %v2987 = vsel %vm2092, %v2926, 0.0
        %v2988 = vadd.f32 %v2986, %v2987
        %v2989 = vsel %vm2092, %v2928, 0.0
        %v2990 = vadd.f32 %v2988, %v2989
        %v2991 = vsel %vm2092, %v2930, 0.0
        %v2992 = vadd.f32 %v2990, %v2991
        %v2993 = vsel %vm2092, %v2932, 0.0
        %v2994 = vadd.f32 %v2992, %v2993
        %v2995 = vsel %vm2092, %v2934, 0.0
        %v2996 = vadd.f32 %v2994, %v2995
        %v2997 = vsel %vm2092, %v2936, 0.0
        %v2998 = vadd.f32 %v2996, %v2997
        %v2999 = vsel %vm2092, %v2938, 0.0
        %v3000 = vadd.f32 %v2998, %v2999
        %v3001 = vsel %vm2092, %v2940, 0.0
        %v3002 = vadd.f32 %v3000, %v3001
        %v3003 = vsel %vm2092, %v2942, 0.0
        %v3004 = vadd.f32 %v3002, %v3003
        %v3005 = vsel %vm2092, %v2944, 0.0
        %v3006 = vadd.f32 %v3004, %v3005
        %v3007 = vsel %vm2092, %v2946, 0.0
        %v3008 = vadd.f32 %v3006, %v3007
        %v3009 = vsel %vm2092, %v2948, 0.0
        %v3010 = vadd.f32 %v3008, %v3009
        %v3011 = vsel %vm2092, %v2950, 0.0
        %v3012 = vadd.f32 %v3010, %v3011
        %v3013 = vsel %vm2092, %v2952, 0.0
        %v3014 = vadd.f32 %v3012, %v3013
        %v3015 = vsel %vm2092, %v2954, 0.0
        %v3016 = vadd.f32 %v3014, %v3015
        %v3017 = vsel %vm2092, %v2843, 0.0
        %v3018 = vsel %vm2092, %v2845, 0.0
        %v3019 = vadd.f32 %v3017, %v3018
        %v3020 = vsel %vm2092, %v2847, 0.0
        %v3021 = vadd.f32 %v3019, %v3020
        %v3022 = vsel %vm2092, %v2849, 0.0
        %v3023 = vadd.f32 %v3021, %v3022
        %v3024 = vsel %vm2092, %v2851, 0.0
        %v3025 = vadd.f32 %v3023, %v3024
        %v3026 = vsel %vm2092, %v2853, 0.0
        %v3027 = vadd.f32 %v3025, %v3026
        %v3028 = vsel %vm2092, %v2855, 0.0
        %v3029 = vadd.f32 %v3027, %v3028
        %v3030 = vsel %vm2092, %v2857, 0.0
        %v3031 = vadd.f32 %v3029, %v3030
        %v3032 = vsel %vm2092, %v2859, 0.0
        %v3033 = vadd.f32 %v3031, %v3032
        %v3034 = vsel %vm2092, %v2861, 0.0
        %v3035 = vadd.f32 %v3033, %v3034
        %v3036 = vsel %vm2092, %v2863, 0.0
        %v3037 = vadd.f32 %v3035, %v3036
        %v3038 = vsel %vm2092, %v2865, 0.0
        %v3039 = vadd.f32 %v3037, %v3038
        %v3040 = vsel %vm2092, %v2867, 0.0
        %v3041 = vadd.f32 %v3039, %v3040
        %v3042 = vsel %vm2092, %v2869, 0.0
        %v3043 = vadd.f32 %v3041, %v3042
        %v3044 = vsel %vm2092, %v2871, 0.0
        %v3045 = vadd.f32 %v3043, %v3044
        %v3046 = vsel %vm2092, %v2873, 0.0
        %v3047 = vadd.f32 %v3045, %v3046
        %v3048 = vsel %vm2092, %v2844, 0.0
        %v3049 = vsel %vm2092, %v2846, 0.0
        %v3050 = vadd.f32 %v3048, %v3049
        %v3051 = vsel %vm2092, %v2848, 0.0
        %v3052 = vadd.f32 %v3050, %v3051
        %v3053 = vsel %vm2092, %v2850, 0.0
        %v3054 = vadd.f32 %v3052, %v3053
        %v3055 = vsel %vm2092, %v2852, 0.0
        %v3056 = vadd.f32 %v3054, %v3055
        %v3057 = vsel %vm2092, %v2854, 0.0
        %v3058 = vadd.f32 %v3056, %v3057
        %v3059 = vsel %vm2092, %v2856, 0.0
        %v3060 = vadd.f32 %v3058, %v3059
        %v3061 = vsel %vm2092, %v2858, 0.0
        %v3062 = vadd.f32 %v3060, %v3061
        %v3063 = vsel %vm2092, %v2860, 0.0
        %v3064 = vadd.f32 %v3062, %v3063
        %v3065 = vsel %vm2092, %v2862, 0.0
        %v3066 = vadd.f32 %v3064, %v3065
        %v3067 = vsel %vm2092, %v2864, 0.0
        %v3068 = vadd.f32 %v3066, %v3067
        %v3069 = vsel %vm2092, %v2866, 0.0
        %v3070 = vadd.f32 %v3068, %v3069
        %v3071 = vsel %vm2092, %v2868, 0.0
        %v3072 = vadd.f32 %v3070, %v3071
        %v3073 = vsel %vm2092, %v2870, 0.0
        %v3074 = vadd.f32 %v3072, %v3073
        %v3075 = vsel %vm2092, %v2872, 0.0
        %v3076 = vadd.f32 %v3074, %v3075
        %v3077 = vsel %vm2092, %v2874, 0.0
        %v3078 = vadd.f32 %v3076, %v3077
        %v3079 = vadd.f32 %v3047, 1e-06
        %v3080 = vadd.f32 %v3078, 1e-06
        %v3081 = vrcp.pop %v3079
        %v3082 = vmul.f32 %v2985, %v3081
        %v3083 = vrcp.pop %v3080
        %v3084 = vmul.f32 %v3016, %v3083
        %v3085 = vadd.f32 %v2131, %v3082
        %v3086 = vadd.f32 %v2134, %v3084
        %v3087 = vsel %vm2092, %v3085, 0.0
        %v3088 = vsel %vm2092, %v3086, 0.0
        %v3089 = vadd.f32 %v3087, %v3088
        %v3090 = vrot.slane %v3089, 4
        %v3091 = vadd.f32 %v3089, %v3090
        %v3092 = vrot.slane %v3091, 2
        %v3093 = vadd.f32 %v3091, %v3092
        %v3094 = vrot.slane %v3093, 1
        %v3095 = vadd.f32 %v3093, %v3094
        %v3096 = vrcp.pop 16.0
        %v3097 = vmul.f32 %v3095, %v3096
        %v3098 = vmul.f32 %v3085, %v3085
        %v3099 = vmul.f32 %v3086, %v3086
        %v3100 = vsel %vm2092, %v3098, 0.0
        %v3101 = vsel %vm2092, %v3099, 0.0
        %v3102 = vadd.f32 %v3100, %v3101
        %v3103 = vrot.slane %v3102, 4
        %v3104 = vadd.f32 %v3102, %v3103
        %v3105 = vrot.slane %v3104, 2
        %v3106 = vadd.f32 %v3104, %v3105
        %v3107 = vrot.slane %v3106, 1
        %v3108 = vadd.f32 %v3106, %v3107
        %v3109 = vmul.f32 %v3108, %v3096
        %v3110 = vmul.f32 %v3097, %v3097
        %v3111 = vsub.f32 %v3109, %v3110
        %v3112 = vmax.f32 %v3111, 0.0
        %v3113 = vmul.f32 %v2619, %v2037
        %v3114 = vmul.f32 %v2620, %v2038
        %v3115 = vmul.f32 %v2621, %v2039
        %v3116 = vmul.f32 %v2622, %v2040
        %v3117 = vmul.f32 %v2623, %v2041
        %v3118 = vmul.f32 %v2624, %v2042
        %v3119 = vmul.f32 %v2625, %v2043
        %v3120 = vmul.f32 %v2626, %v2044
        %v3121 = vmul.f32 %v2627, %v2045
        %v3122 = vmul.f32 %v2628, %v2046
        %v3123 = vmul.f32 %v2629, %v2047
        %v3124 = vmul.f32 %v2630, %v2048
        %v3125 = vmul.f32 %v2631, %v2049
        %v3126 = vmul.f32 %v2632, %v2050
        %v3127 = vmul.f32 %v2633, %v2051
        %v3128 = vmul.f32 %v2634, %v2052
        %v3129 = vmul.f32 %v2635, %v2053
        %v3130 = vmul.f32 %v2636, %v2054
        %v3131 = vmul.f32 %v2637, %v2055
        %v3132 = vmul.f32 %v2638, %v2056
        %v3133 = vmul.f32 %v2639, %v2057
        %v3134 = vmul.f32 %v2640, %v2058
        %v3135 = vmul.f32 %v2641, %v2059
        %v3136 = vmul.f32 %v2642, %v2060
        %v3137 = vmul.f32 %v2643, %v2061
        %v3138 = vmul.f32 %v2644, %v2062
        %v3139 = vmul.f32 %v2645, %v2063
        %v3140 = vmul.f32 %v2646, %v2064
        %v3141 = vmul.f32 %v2647, %v2065
        %v3142 = vmul.f32 %v2648, %v2066
        %v3143 = vmul.f32 %v2649, %v2067
        %v3144 = vmul.f32 %v2650, %v2068
        %v3145 = vsel %vm2092, %v3113, 0.0
        %v3146 = vsel %vm2092, %v3115, 0.0
        %v3147 = vadd.f32 %v3145, %v3146
        %v3148 = vsel %vm2092, %v3117, 0.0
        %v3149 = vadd.f32 %v3147, %v3148
        %v3150 = vsel %vm2092, %v3119, 0.0
        %v3151 = vadd.f32 %v3149, %v3150
        %v3152 = vsel %vm2092, %v3121, 0.0
        %v3153 = vadd.f32 %v3151, %v3152
        %v3154 = vsel %vm2092, %v3123, 0.0
        %v3155 = vadd.f32 %v3153, %v3154
        %v3156 = vsel %vm2092, %v3125, 0.0
        %v3157 = vadd.f32 %v3155, %v3156
        %v3158 = vsel %vm2092, %v3127, 0.0
        %v3159 = vadd.f32 %v3157, %v3158
        %v3160 = vsel %vm2092, %v3129, 0.0
        %v3161 = vadd.f32 %v3159, %v3160
        %v3162 = vsel %vm2092, %v3131, 0.0
        %v3163 = vadd.f32 %v3161, %v3162
        %v3164 = vsel %vm2092, %v3133, 0.0
        %v3165 = vadd.f32 %v3163, %v3164
        %v3166 = vsel %vm2092, %v3135, 0.0
        %v3167 = vadd.f32 %v3165, %v3166
        %v3168 = vsel %vm2092, %v3137, 0.0
        %v3169 = vadd.f32 %v3167, %v3168
        %v3170 = vsel %vm2092, %v3139, 0.0
        %v3171 = vadd.f32 %v3169, %v3170
        %v3172 = vsel %vm2092, %v3141, 0.0
        %v3173 = vadd.f32 %v3171, %v3172
        %v3174 = vsel %vm2092, %v3143, 0.0
        %v3175 = vadd.f32 %v3173, %v3174
        %v3176 = vsel %vm2092, %v3114, 0.0
        %v3177 = vsel %vm2092, %v3116, 0.0
        %v3178 = vadd.f32 %v3176, %v3177
        %v3179 = vsel %vm2092, %v3118, 0.0
        %v3180 = vadd.f32 %v3178, %v3179
        %v3181 = vsel %vm2092, %v3120, 0.0
        %v3182 = vadd.f32 %v3180, %v3181
        %v3183 = vsel %vm2092, %v3122, 0.0
        %v3184 = vadd.f32 %v3182, %v3183
        %v3185 = vsel %vm2092, %v3124, 0.0
        %v3186 = vadd.f32 %v3184, %v3185
        %v3187 = vsel %vm2092, %v3126, 0.0
        %v3188 = vadd.f32 %v3186, %v3187
        %v3189 = vsel %vm2092, %v3128, 0.0
        %v3190 = vadd.f32 %v3188, %v3189
        %v3191 = vsel %vm2092, %v3130, 0.0
        %v3192 = vadd.f32 %v3190, %v3191
        %v3193 = vsel %vm2092, %v3132, 0.0
        %v3194 = vadd.f32 %v3192, %v3193
        %v3195 = vsel %vm2092, %v3134, 0.0
        %v3196 = vadd.f32 %v3194, %v3195
        %v3197 = vsel %vm2092, %v3136, 0.0
        %v3198 = vadd.f32 %v3196, %v3197
        %v3199 = vsel %vm2092, %v3138, 0.0
        %v3200 = vadd.f32 %v3198, %v3199
        %v3201 = vsel %vm2092, %v3140, 0.0
        %v3202 = vadd.f32 %v3200, %v3201
        %v3203 = vsel %vm2092, %v3142, 0.0
        %v3204 = vadd.f32 %v3202, %v3203
        %v3205 = vsel %vm2092, %v3144, 0.0
        %v3206 = vadd.f32 %v3204, %v3205
        %v3207 = vsel %vm2092, %v3175, 0.0
        %v3208 = vsel %vm2092, %v3206, 0.0
        %v3209 = vadd.f32 %v3207, %v3208
        %v3210 = vrot.slane %v3209, 4
        %v3211 = vadd.f32 %v3209, %v3210
        %v3212 = vrot.slane %v3211, 2
        %v3213 = vadd.f32 %v3211, %v3212
        %v3214 = vrot.slane %v3213, 1
        %v3215 = vadd.f32 %v3213, %v3214
        %v3216 = vmul.f32 %v2619, %v3113
        %v3217 = vmul.f32 %v2620, %v3114
        %v3218 = vmul.f32 %v2621, %v3115
        %v3219 = vmul.f32 %v2622, %v3116
        %v3220 = vmul.f32 %v2623, %v3117
        %v3221 = vmul.f32 %v2624, %v3118
        %v3222 = vmul.f32 %v2625, %v3119
        %v3223 = vmul.f32 %v2626, %v3120
        %v3224 = vmul.f32 %v2627, %v3121
        %v3225 = vmul.f32 %v2628, %v3122
        %v3226 = vmul.f32 %v2629, %v3123
        %v3227 = vmul.f32 %v2630, %v3124
        %v3228 = vmul.f32 %v2631, %v3125
        %v3229 = vmul.f32 %v2632, %v3126
        %v3230 = vmul.f32 %v2633, %v3127
        %v3231 = vmul.f32 %v2634, %v3128
        %v3232 = vmul.f32 %v2635, %v3129
        %v3233 = vmul.f32 %v2636, %v3130
        %v3234 = vmul.f32 %v2637, %v3131
        %v3235 = vmul.f32 %v2638, %v3132
        %v3236 = vmul.f32 %v2639, %v3133
        %v3237 = vmul.f32 %v2640, %v3134
        %v3238 = vmul.f32 %v2641, %v3135
        %v3239 = vmul.f32 %v2642, %v3136
        %v3240 = vmul.f32 %v2643, %v3137
        %v3241 = vmul.f32 %v2644, %v3138
        %v3242 = vmul.f32 %v2645, %v3139
        %v3243 = vmul.f32 %v2646, %v3140
        %v3244 = vmul.f32 %v2647, %v3141
        %v3245 = vmul.f32 %v2648, %v3142
        %v3246 = vmul.f32 %v2649, %v3143
        %v3247 = vmul.f32 %v2650, %v3144
        %v3248 = vsel %vm2092, %v3216, 0.0
        %v3249 = vsel %vm2092, %v3218, 0.0
        %v3250 = vadd.f32 %v3248, %v3249
        %v3251 = vsel %vm2092, %v3220, 0.0
        %v3252 = vadd.f32 %v3250, %v3251
        %v3253 = vsel %vm2092, %v3222, 0.0
        %v3254 = vadd.f32 %v3252, %v3253
        %v3255 = vsel %vm2092, %v3224, 0.0
        %v3256 = vadd.f32 %v3254, %v3255
        %v3257 = vsel %vm2092, %v3226, 0.0
        %v3258 = vadd.f32 %v3256, %v3257
        %v3259 = vsel %vm2092, %v3228, 0.0
        %v3260 = vadd.f32 %v3258, %v3259
        %v3261 = vsel %vm2092, %v3230, 0.0
        %v3262 = vadd.f32 %v3260, %v3261
        %v3263 = vsel %vm2092, %v3232, 0.0
        %v3264 = vadd.f32 %v3262, %v3263
        %v3265 = vsel %vm2092, %v3234, 0.0
        %v3266 = vadd.f32 %v3264, %v3265
        %v3267 = vsel %vm2092, %v3236, 0.0
        %v3268 = vadd.f32 %v3266, %v3267
        %v3269 = vsel %vm2092, %v3238, 0.0
        %v3270 = vadd.f32 %v3268, %v3269
        %v3271 = vsel %vm2092, %v3240, 0.0
        %v3272 = vadd.f32 %v3270, %v3271
        %v3273 = vsel %vm2092, %v3242, 0.0
        %v3274 = vadd.f32 %v3272, %v3273
        %v3275 = vsel %vm2092, %v3244, 0.0
        %v3276 = vadd.f32 %v3274, %v3275
        %v3277 = vsel %vm2092, %v3246, 0.0
        %v3278 = vadd.f32 %v3276, %v3277
        %v3279 = vsel %vm2092, %v3217, 0.0
        %v3280 = vsel %vm2092, %v3219, 0.0
        %v3281 = vadd.f32 %v3279, %v3280
        %v3282 = vsel %vm2092, %v3221, 0.0
        %v3283 = vadd.f32 %v3281, %v3282
        %v3284 = vsel %vm2092, %v3223, 0.0
        %v3285 = vadd.f32 %v3283, %v3284
        %v3286 = vsel %vm2092, %v3225, 0.0
        %v3287 = vadd.f32 %v3285, %v3286
        %v3288 = vsel %vm2092, %v3227, 0.0
        %v3289 = vadd.f32 %v3287, %v3288
        %v3290 = vsel %vm2092, %v3229, 0.0
        %v3291 = vadd.f32 %v3289, %v3290
        %v3292 = vsel %vm2092, %v3231, 0.0
        %v3293 = vadd.f32 %v3291, %v3292
        %v3294 = vsel %vm2092, %v3233, 0.0
        %v3295 = vadd.f32 %v3293, %v3294
        %v3296 = vsel %vm2092, %v3235, 0.0
        %v3297 = vadd.f32 %v3295, %v3296
        %v3298 = vsel %vm2092, %v3237, 0.0
        %v3299 = vadd.f32 %v3297, %v3298
        %v3300 = vsel %vm2092, %v3239, 0.0
        %v3301 = vadd.f32 %v3299, %v3300
        %v3302 = vsel %vm2092, %v3241, 0.0
        %v3303 = vadd.f32 %v3301, %v3302
        %v3304 = vsel %vm2092, %v3243, 0.0
        %v3305 = vadd.f32 %v3303, %v3304
        %v3306 = vsel %vm2092, %v3245, 0.0
        %v3307 = vadd.f32 %v3305, %v3306
        %v3308 = vsel %vm2092, %v3247, 0.0
        %v3309 = vadd.f32 %v3307, %v3308
        %v3310 = vsel %vm2092, %v3278, 0.0
        %v3311 = vsel %vm2092, %v3309, 0.0
        %v3312 = vadd.f32 %v3310, %v3311
        %v3313 = vrot.slane %v3312, 4
        %v3314 = vadd.f32 %v3312, %v3313
        %v3315 = vrot.slane %v3314, 2
        %v3316 = vadd.f32 %v3314, %v3315
        %v3317 = vrot.slane %v3316, 1
        %v3318 = vadd.f32 %v3316, %v3317
        %v3319 = vmul.f32 %v3215, 0.004166667
        %v3320 = vmul.f32 %v3318, 0.004166667
        %v3321 = vmul.f32 %v3319, %v3319
        %v3322 = vsub.f32 %v3320, %v3321
        %v3323 = vmax.f32 %v3322, 0.0
        %v3324 = vsub.f32 %v3085, %v3097
        %v3325 = vsub.f32 %v3086, %v3097
        %v3326 = vadd.f32 %v3112, 1e-05
        %v3327 = vrsqrt.pop %v3326
        %v3328 = vmul.f32 %v3324, %v3327
        %v3329 = vmul.f32 %v3325, %v3327
        %v3330 = vld [vmem:[#allocation19] sm:$0x1]
        %v3332 = vlaneseq
        %v3333 = vshrl.u32 %v3332, 7
        %v3334 = vsub.s32 0, %v3333
        %v3335 = vrot.slane %v3330, %v3334
        %v3337 = vmul.f32 %v3328, %v3335
        %v3338 = vmul.f32 %v3329, %v3335
        %v3339 = vld [vmem:[#allocation20] sm:$0x1]
        %v3341 = vlaneseq
        %v3342 = vshrl.u32 %v3341, 7
        %v3343 = vsub.s32 0, %v3342
        %v3344 = vrot.slane %v3339, %v3343
        %v3346 = vadd.f32 %v3337, %v3344
        %v3347 = vadd.f32 %v3338, %v3344
        %v3348 = vsub.f32 %v2619, %v3319
        %v3349 = vsub.f32 %v2620, %v3319
        %v3350 = vsub.f32 %v2621, %v3319
        %v3351 = vsub.f32 %v2622, %v3319
        %v3352 = vsub.f32 %v2623, %v3319
        %v3353 = vsub.f32 %v2624, %v3319
        %v3354 = vsub.f32 %v2625, %v3319
        %v3355 = vsub.f32 %v2626, %v3319
        %v3356 = vsub.f32 %v2627, %v3319
        %v3357 = vsub.f32 %v2628, %v3319
        %v3358 = vsub.f32 %v2629, %v3319
        %v3359 = vsub.f32 %v2630, %v3319
        %v3360 = vsub.f32 %v2631, %v3319
        %v3361 = vsub.f32 %v2632, %v3319
        %v3362 = vsub.f32 %v2633, %v3319
        %v3363 = vsub.f32 %v2634, %v3319
        %v3364 = vsub.f32 %v2635, %v3319
        %v3365 = vsub.f32 %v2636, %v3319
        %v3366 = vsub.f32 %v2637, %v3319
        %v3367 = vsub.f32 %v2638, %v3319
        %v3368 = vsub.f32 %v2639, %v3319
        %v3369 = vsub.f32 %v2640, %v3319
        %v3370 = vsub.f32 %v2641, %v3319
        %v3371 = vsub.f32 %v2642, %v3319
        %v3372 = vsub.f32 %v2643, %v3319
        %v3373 = vsub.f32 %v2644, %v3319
        %v3374 = vsub.f32 %v2645, %v3319
        %v3375 = vsub.f32 %v2646, %v3319
        %v3376 = vsub.f32 %v2647, %v3319
        %v3377 = vsub.f32 %v2648, %v3319
        %v3378 = vsub.f32 %v2649, %v3319
        %v3379 = vsub.f32 %v2650, %v3319
        %v3380 = vadd.f32 %v3323, 1e-05
        %v3381 = vrsqrt.pop %v3380
        %v3382 = vmul.f32 %v3348, %v3381
        %v3383 = vmul.f32 %v3349, %v3381
        %v3384 = vmul.f32 %v3350, %v3381
        %v3385 = vmul.f32 %v3351, %v3381
        %v3386 = vmul.f32 %v3352, %v3381
        %v3387 = vmul.f32 %v3353, %v3381
        %v3388 = vmul.f32 %v3354, %v3381
        %v3389 = vmul.f32 %v3355, %v3381
        %v3390 = vmul.f32 %v3356, %v3381
        %v3391 = vmul.f32 %v3357, %v3381
        %v3392 = vmul.f32 %v3358, %v3381
        %v3393 = vmul.f32 %v3359, %v3381
        %v3394 = vmul.f32 %v3360, %v3381
        %v3395 = vmul.f32 %v3361, %v3381
        %v3396 = vmul.f32 %v3362, %v3381
        %v3397 = vmul.f32 %v3363, %v3381
        %v3398 = vmul.f32 %v3364, %v3381
        %v3399 = vmul.f32 %v3365, %v3381
        %v3400 = vmul.f32 %v3366, %v3381
        %v3401 = vmul.f32 %v3367, %v3381
        %v3402 = vmul.f32 %v3368, %v3381
        %v3403 = vmul.f32 %v3369, %v3381
        %v3404 = vmul.f32 %v3370, %v3381
        %v3405 = vmul.f32 %v3371, %v3381
        %v3406 = vmul.f32 %v3372, %v3381
        %v3407 = vmul.f32 %v3373, %v3381
        %v3408 = vmul.f32 %v3374, %v3381
        %v3409 = vmul.f32 %v3375, %v3381
        %v3410 = vmul.f32 %v3376, %v3381
        %v3411 = vmul.f32 %v3377, %v3381
        %v3412 = vmul.f32 %v3378, %v3381
        %v3413 = vmul.f32 %v3379, %v3381
        %v3414 = vld [vmem:[#allocation25] sm:$0x1]
        %v3416 = vlaneseq
        %v3417 = vshrl.u32 %v3416, 7
        %v3418 = vsub.s32 0, %v3417
        %v3419 = vrot.slane %v3414, %v3418
        %v3421 = vmul.f32 %v3382, %v3419
        %v3422 = vmul.f32 %v3383, %v3419
        %v3423 = vmul.f32 %v3384, %v3419
        %v3424 = vmul.f32 %v3385, %v3419
        %v3425 = vmul.f32 %v3386, %v3419
        %v3426 = vmul.f32 %v3387, %v3419
        %v3427 = vmul.f32 %v3388, %v3419
        %v3428 = vmul.f32 %v3389, %v3419
        %v3429 = vmul.f32 %v3390, %v3419
        %v3430 = vmul.f32 %v3391, %v3419
        %v3431 = vmul.f32 %v3392, %v3419
        %v3432 = vmul.f32 %v3393, %v3419
        %v3433 = vmul.f32 %v3394, %v3419
        %v3434 = vmul.f32 %v3395, %v3419
        %v3435 = vmul.f32 %v3396, %v3419
        %v3436 = vmul.f32 %v3397, %v3419
        %v3437 = vmul.f32 %v3398, %v3419
        %v3438 = vmul.f32 %v3399, %v3419
        %v3439 = vmul.f32 %v3400, %v3419
        %v3440 = vmul.f32 %v3401, %v3419
        %v3441 = vmul.f32 %v3402, %v3419
        %v3442 = vmul.f32 %v3403, %v3419
        %v3443 = vmul.f32 %v3404, %v3419
        %v3444 = vmul.f32 %v3405, %v3419
        %v3445 = vmul.f32 %v3406, %v3419
        %v3446 = vmul.f32 %v3407, %v3419
        %v3447 = vmul.f32 %v3408, %v3419
        %v3448 = vmul.f32 %v3409, %v3419
        %v3449 = vmul.f32 %v3410, %v3419
        %v3450 = vmul.f32 %v3411, %v3419
        %v3451 = vmul.f32 %v3412, %v3419
        %v3452 = vmul.f32 %v3413, %v3419
        %v3453 = vld [vmem:[#allocation26] sm:$0x1]
        %v3455 = vlaneseq
        %v3456 = vshrl.u32 %v3455, 7
        %v3457 = vsub.s32 0, %v3456
        %v3458 = vrot.slane %v3453, %v3457
        %v3460 = vadd.f32 %v3421, %v3458
        %v3461 = vadd.f32 %v3422, %v3458
        %v3462 = vadd.f32 %v3423, %v3458
        %v3463 = vadd.f32 %v3424, %v3458
        %v3464 = vadd.f32 %v3425, %v3458
        %v3465 = vadd.f32 %v3426, %v3458
        %v3466 = vadd.f32 %v3427, %v3458
        %v3467 = vadd.f32 %v3428, %v3458
        %v3468 = vadd.f32 %v3429, %v3458
        %v3469 = vadd.f32 %v3430, %v3458
        %v3470 = vadd.f32 %v3431, %v3458
        %v3471 = vadd.f32 %v3432, %v3458
        %v3472 = vadd.f32 %v3433, %v3458
        %v3473 = vadd.f32 %v3434, %v3458
        %v3474 = vadd.f32 %v3435, %v3458
        %v3475 = vadd.f32 %v3436, %v3458
        %v3476 = vadd.f32 %v3437, %v3458
        %v3477 = vadd.f32 %v3438, %v3458
        %v3478 = vadd.f32 %v3439, %v3458
        %v3479 = vadd.f32 %v3440, %v3458
        %v3480 = vadd.f32 %v3441, %v3458
        %v3481 = vadd.f32 %v3442, %v3458
        %v3482 = vadd.f32 %v3443, %v3458
        %v3483 = vadd.f32 %v3444, %v3458
        %v3484 = vadd.f32 %v3445, %v3458
        %v3485 = vadd.f32 %v3446, %v3458
        %v3486 = vadd.f32 %v3447, %v3458
        %v3487 = vadd.f32 %v3448, %v3458
        %v3488 = vadd.f32 %v3449, %v3458
        %v3489 = vadd.f32 %v3450, %v3458
        %v3490 = vadd.f32 %v3451, %v3458
        %v3491 = vadd.f32 %v3452, %v3458
        %v3492 = vmax.f32 %v3346, 0.0
        %v3493 = vmax.f32 %v3347, 0.0
        %v3494 = vmax.f32 %v3460, 0.0
        %v3495 = vmax.f32 %v3461, 0.0
        %v3496 = vmax.f32 %v3462, 0.0
        %v3497 = vmax.f32 %v3463, 0.0
        %v3498 = vmax.f32 %v3464, 0.0
        %v3499 = vmax.f32 %v3465, 0.0
        %v3500 = vmax.f32 %v3466, 0.0
        %v3501 = vmax.f32 %v3467, 0.0
        %v3502 = vmax.f32 %v3468, 0.0
        %v3503 = vmax.f32 %v3469, 0.0
        %v3504 = vmax.f32 %v3470, 0.0
        %v3505 = vmax.f32 %v3471, 0.0
        %v3506 = vmax.f32 %v3472, 0.0
        %v3507 = vmax.f32 %v3473, 0.0
        %v3508 = vmax.f32 %v3474, 0.0
        %v3509 = vmax.f32 %v3475, 0.0
        %v3510 = vmax.f32 %v3476, 0.0
        %v3511 = vmax.f32 %v3477, 0.0
        %v3512 = vmax.f32 %v3478, 0.0
        %v3513 = vmax.f32 %v3479, 0.0
        %v3514 = vmax.f32 %v3480, 0.0
        %v3515 = vmax.f32 %v3481, 0.0
        %v3516 = vmax.f32 %v3482, 0.0
        %v3517 = vmax.f32 %v3483, 0.0
        %v3518 = vmax.f32 %v3484, 0.0
        %v3519 = vmax.f32 %v3485, 0.0
        %v3520 = vmax.f32 %v3486, 0.0
        %v3521 = vmax.f32 %v3487, 0.0
        %v3522 = vmax.f32 %v3488, 0.0
        %v3523 = vmax.f32 %v3489, 0.0
        %v3524 = vmax.f32 %v3490, 0.0
        %v3525 = vmax.f32 %v3491, 0.0
        %v3526 = vunpack.c.l.bf16 %v1697
        %v3527 = vunpack.c.h.bf16 %v1697
        %v3528 = vadd.f32 %v3526, %v3492
        %v3529 = vadd.f32 %v3527, %v3493
        %v3530 = vunpack.c.l.bf16 %v1954
        %v3531 = vunpack.c.h.bf16 %v1954
        %v3532 = vunpack.c.l.bf16 %v1955
        %v3533 = vunpack.c.h.bf16 %v1955
        %v3534 = vunpack.c.l.bf16 %v1956
        %v3535 = vunpack.c.h.bf16 %v1956
        %v3536 = vunpack.c.l.bf16 %v1957
        %v3537 = vunpack.c.h.bf16 %v1957
        %v3538 = vunpack.c.l.bf16 %v1958
        %v3539 = vunpack.c.h.bf16 %v1958
        %v3540 = vunpack.c.l.bf16 %v1959
        %v3541 = vunpack.c.h.bf16 %v1959
        %v3542 = vunpack.c.l.bf16 %v1960
        %v3543 = vunpack.c.h.bf16 %v1960
        %v3544 = vunpack.c.l.bf16 %v1961
        %v3545 = vunpack.c.h.bf16 %v1961
        %v3546 = vunpack.c.l.bf16 %v1962
        %v3547 = vunpack.c.h.bf16 %v1962
        %v3548 = vunpack.c.l.bf16 %v1963
        %v3549 = vunpack.c.h.bf16 %v1963
        %v3550 = vunpack.c.l.bf16 %v1964
        %v3551 = vunpack.c.h.bf16 %v1964
        %v3552 = vunpack.c.l.bf16 %v1965
        %v3553 = vunpack.c.h.bf16 %v1965
        %v3554 = vunpack.c.l.bf16 %v1966
        %v3555 = vunpack.c.h.bf16 %v1966
        %v3556 = vunpack.c.l.bf16 %v1967
        %v3557 = vunpack.c.h.bf16 %v1967
        %v3558 = vunpack.c.l.bf16 %v1968
        %v3559 = vunpack.c.h.bf16 %v1968
        %v3560 = vunpack.c.l.bf16 %v1969
        %v3561 = vunpack.c.h.bf16 %v1969
        %v3562 = vadd.f32 %v3530, %v3494
        %v3563 = vadd.f32 %v3531, %v3495
        %v3564 = vadd.f32 %v3532, %v3496
        %v3565 = vadd.f32 %v3533, %v3497
        %v3566 = vadd.f32 %v3534, %v3498
        %v3567 = vadd.f32 %v3535, %v3499
        %v3568 = vadd.f32 %v3536, %v3500
        %v3569 = vadd.f32 %v3537, %v3501
        %v3570 = vadd.f32 %v3538, %v3502
        %v3571 = vadd.f32 %v3539, %v3503
        %v3572 = vadd.f32 %v3540, %v3504
        %v3573 = vadd.f32 %v3541, %v3505
        %v3574 = vadd.f32 %v3542, %v3506
        %v3575 = vadd.f32 %v3543, %v3507
        %v3576 = vadd.f32 %v3544, %v3508
        %v3577 = vadd.f32 %v3545, %v3509
        %v3578 = vadd.f32 %v3546, %v3510
        %v3579 = vadd.f32 %v3547, %v3511
        %v3580 = vadd.f32 %v3548, %v3512
        %v3581 = vadd.f32 %v3549, %v3513
        %v3582 = vadd.f32 %v3550, %v3514
        %v3583 = vadd.f32 %v3551, %v3515
        %v3584 = vadd.f32 %v3552, %v3516
        %v3585 = vadd.f32 %v3553, %v3517
        %v3586 = vadd.f32 %v3554, %v3518
        %v3587 = vadd.f32 %v3555, %v3519
        %v3588 = vadd.f32 %v3556, %v3520
        %v3589 = vadd.f32 %v3557, %v3521
        %v3590 = vadd.f32 %v3558, %v3522
        %v3591 = vadd.f32 %v3559, %v3523
        %v3592 = vadd.f32 %v3560, %v3524
        %v3593 = vadd.f32 %v3561, %v3525
        %v3594 = vpack.c.bf16 %v3529, %v3528
        %v3595 = vpack.c.bf16 %v3563, %v3562
        %v3596 = vpack.c.bf16 %v3565, %v3564
        %v3597 = vpack.c.bf16 %v3567, %v3566
        %v3598 = vpack.c.bf16 %v3569, %v3568
        %v3599 = vpack.c.bf16 %v3571, %v3570
        %v3600 = vpack.c.bf16 %v3573, %v3572
        %v3601 = vpack.c.bf16 %v3575, %v3574
        %v3602 = vpack.c.bf16 %v3577, %v3576
        %v3603 = vpack.c.bf16 %v3579, %v3578
        %v3604 = vpack.c.bf16 %v3581, %v3580
        %v3605 = vpack.c.bf16 %v3583, %v3582
        %v3606 = vpack.c.bf16 %v3585, %v3584
        %v3607 = vpack.c.bf16 %v3587, %v3586
        %v3608 = vpack.c.bf16 %v3589, %v3588
        %v3609 = vpack.c.bf16 %v3591, %v3590
        %v3610 = vpack.c.bf16 %v3593, %v3592
        %v3611 = vld [vmem:[#allocation31] sm:$0xf]
        %v3612 = vld [vmem:[#allocation31 + $0x4] sm:$0xf]
        %v3613 = vld [vmem:[#allocation31 + $0x8] sm:$0xf]
        %v3614 = vld [vmem:[#allocation31 + $0xc] sm:$0xf]
        %v3615 = vld [vmem:[#allocation32] sm:$0x1]
        %v3617 = vlaneseq
        %v3618 = vshrl.u32 %v3617, 7
        %v3619 = vsub.s32 0, %v3618
        %v3620 = vrot.slane %v3615, %v3619
        %v3626 = vunpack.c.l.b16 %v3611
        %v3627 = vunpack.c.l.b16 %v3612
        %v3628 = vunpack.c.l.b16 %v3613
        %v3629 = vunpack.c.l.b16 %v3614
        %v3630 = vpack.c.b16 %v3627, %v3626
        %v3631 = vpack.c.b16 %v3629, %v3628
        %v3635 = vsel %vm2092, %v3594, 0
        %3637 = vmatprep.subr.bf16.mxu0 0
        %3638 = vmatpush1.bf16.msra.mxu0 %v3630
        %3639 = vmatprep.subr.bf16.mxu0 0
        %3640 = vmatpush1.bf16.msra.mxu0 %v3631
        %3641 = vmatprep.subr.bf16.mxu0 0
        %3642 = vmatpush1.bf16.msra.mxu0 0
        %3643 = vmatprep.subr.bf16.mxu0 0
        %3644 = vmatpush1.bf16.msra.mxu0 0
        %3645 = vmatprep.subr.bf16.mxu0 0
        %3646 = vmatpush1.bf16.msra.mxu0 0
        %3647 = vmatprep.subr.bf16.mxu0 0
        %3648 = vmatpush1.bf16.msra.mxu0 0
        %3649 = vmatprep.subr.bf16.mxu0 0
        %3650 = vmatpush1.bf16.msra.mxu0 0
        %3651 = vmatprep.subr.bf16.mxu0 0
        %3652 = vmatpush1.bf16.msra.mxu0 0
        %3653 = vmatprep.subr.bf16.mxu0 0
        %3654 = vmatpush1.bf16.msra.mxu0 0
        %3655 = vmatprep.subr.bf16.mxu0 0
        %3656 = vmatpush1.bf16.msra.mxu0 0
        %3657 = vmatprep.subr.bf16.mxu0 0
        %3658 = vmatpush1.bf16.msra.mxu0 0
        %3659 = vmatprep.subr.bf16.mxu0 0
        %3660 = vmatpush1.bf16.msra.mxu0 0
        %3661 = vmatprep.subr.bf16.mxu0 0
        %3662 = vmatpush1.bf16.msra.mxu0 0
        %3663 = vmatprep.subr.bf16.mxu0 0
        %3664 = vmatpush1.bf16.msra.mxu0 0
        %3665 = vmatprep.subr.bf16.mxu0 0
        %3666 = vmatpush1.bf16.msra.mxu0 0
        %3667 = vmatprep.subr.bf16.mxu0 0
        %3668 = vmatpush1.bf16.msra.mxu0 0
        %3669 = vmatprep.mubr.bf16.mxu0 0
        %3670 = vmatmul.mubr.bf16.gmra.mrb[0].mxu0 %v3635
        %v3671 = vpop.f32.mrb[0].mxu0
        %v3672 = vadd.f32 %v3620, %v3671
        %v3673 = vpop.f32.mrb[0].mxu0
        %v3674 = vpop.f32.mrb[0].mxu0
        %v3675 = vadd.f32 %v3620, %v3674
        %v3676 = vpop.f32.mrb[0].mxu0
        %3677 = vdwg.mxu0
        %v3678 = vld [vmem:[#allocation34] sm:$0xf]
        %v3679 = vld [vmem:[#allocation34 + $0x4] sm:$0xf]
        %v3680 = vld [vmem:[#allocation34 + $0x8] sm:$0xf]
        %v3681 = vld [vmem:[#allocation34 + $0xc] sm:$0xf]
        %v3682 = vld [vmem:[#allocation35] sm:$0x1]
        %v3684 = vlaneseq
        %v3685 = vshrl.u32 %v3684, 7
        %v3686 = vsub.s32 0, %v3685
        %v3687 = vrot.slane %v3682, %v3686
        %v3693 = vunpack.c.l.b16 %v3678
        %v3694 = vunpack.c.l.b16 %v3679
        %v3695 = vunpack.c.l.b16 %v3680
        %v3696 = vunpack.c.l.b16 %v3681
        %v3697 = vpack.c.b16 %v3694, %v3693
        %v3698 = vpack.c.b16 %v3696, %v3695
        %v3702 = vsel %vm2092, %v3595, 0
        %v3705 = vsel %vm2092, %v3596, 0
        %v3708 = vsel %vm2092, %v3597, 0
        %v3711 = vsel %vm2092, %v3598, 0
        %v3714 = vsel %vm2092, %v3599, 0
        %v3717 = vsel %vm2092, %v3600, 0
        %v3720 = vsel %vm2092, %v3601, 0
        %v3723 = vsel %vm2092, %v3602, 0
        %v3726 = vsel %vm2092, %v3603, 0
        %v3729 = vsel %vm2092, %v3604, 0
        %v3732 = vsel %vm2092, %v3605, 0
        %v3735 = vsel %vm2092, %v3606, 0
        %v3738 = vsel %vm2092, %v3607, 0
        %v3741 = vsel %vm2092, %v3608, 0
        %v3744 = vsel %vm2092, %v3609, 0
        %v3747 = vsel %vm2092, %v3610, 0
        %3749 = vmatprep.subr.bf16.mxu0 0
        %3750 = vmatpush1.bf16.msra.mxu0 %v3697
        %3751 = vmatprep.subr.bf16.mxu0 0
        %3752 = vmatpush1.bf16.msra.mxu0 %v3698
        %3753 = vmatprep.subr.bf16.mxu0 0
        %3754 = vmatpush1.bf16.msra.mxu0 0
        %3755 = vmatprep.subr.bf16.mxu0 0
        %3756 = vmatpush1.bf16.msra.mxu0 0
        %3757 = vmatprep.subr.bf16.mxu0 0
        %3758 = vmatpush1.bf16.msra.mxu0 0
        %3759 = vmatprep.subr.bf16.mxu0 0
        %3760 = vmatpush1.bf16.msra.mxu0 0
        %3761 = vmatprep.subr.bf16.mxu0 0
        %3762 = vmatpush1.bf16.msra.mxu0 0
        %3763 = vmatprep.subr.bf16.mxu0 0
        %3764 = vmatpush1.bf16.msra.mxu0 0
        %3765 = vmatprep.subr.bf16.mxu0 0
        %3766 = vmatpush1.bf16.msra.mxu0 0
        %3767 = vmatprep.subr.bf16.mxu0 0
        %3768 = vmatpush1.bf16.msra.mxu0 0
        %3769 = vmatprep.subr.bf16.mxu0 0
        %3770 = vmatpush1.bf16.msra.mxu0 0
        %3771 = vmatprep.subr.bf16.mxu0 0
        %3772 = vmatpush1.bf16.msra.mxu0 0
        %3773 = vmatprep.subr.bf16.mxu0 0
        %3774 = vmatpush1.bf16.msra.mxu0 0
        %3775 = vmatprep.subr.bf16.mxu0 0
        %3776 = vmatpush1.bf16.msra.mxu0 0
        %3777 = vmatprep.subr.bf16.mxu0 0
        %3778 = vmatpush1.bf16.msra.mxu0 0
        %3779 = vmatprep.subr.bf16.mxu0 0
        %3780 = vmatpush1.bf16.msra.mxu0 0
        %3781 = vmatprep.mubr.bf16.mxu0 0
        %3782 = vmatmul.mubr.bf16.gmra.mrb[0].mxu0 %v3702
        %v3783 = vpop.f32.mrb[0].mxu0
        %v3784 = vadd.f32 %v3687, %v3783
        %v3785 = vpop.f32.mrb[0].mxu0
        %v3786 = vpop.f32.mrb[0].mxu0
        %v3787 = vadd.f32 %v3687, %v3786
        %v3788 = vpop.f32.mrb[0].mxu0
        %3789 = vmatprep.mubr.bf16.mxu0 0
        %3790 = vmatmul.mubr.bf16.gmra.mrb[0].mxu0 %v3705
        %v3791 = vpop.f32.mrb[0].mxu0
        %v3792 = vadd.f32 %v3687, %v3791
        %v3793 = vpop.f32.mrb[0].mxu0
        %v3794 = vpop.f32.mrb[0].mxu0
        %v3795 = vadd.f32 %v3687, %v3794
        %v3796 = vpop.f32.mrb[0].mxu0
        %3797 = vmatprep.mubr.bf16.mxu0 0
        %3798 = vmatmul.mubr.bf16.gmra.mrb[0].mxu0 %v3708
        %v3799 = vpop.f32.mrb[0].mxu0
        %v3800 = vadd.f32 %v3687, %v3799
        %v3801 = vpop.f32.mrb[0].mxu0
        %v3802 = vpop.f32.mrb[0].mxu0
        %v3803 = vadd.f32 %v3687, %v3802
        %v3804 = vpop.f32.mrb[0].mxu0
        %3805 = vmatprep.mubr.bf16.mxu0 0
        %3806 = vmatmul.mubr.bf16.gmra.mrb[0].mxu0 %v3711
        %v3807 = vpop.f32.mrb[0].mxu0
        %v3808 = vadd.f32 %v3687, %v3807
        %v3809 = vpop.f32.mrb[0].mxu0
        %v3810 = vpop.f32.mrb[0].mxu0
        %v3811 = vadd.f32 %v3687, %v3810
        %v3812 = vpop.f32.mrb[0].mxu0
        %3813 = vmatprep.mubr.bf16.mxu0 0
        %3814 = vmatmul.mubr.bf16.gmra.mrb[0].mxu0 %v3714
        %v3815 = vpop.f32.mrb[0].mxu0
        %v3816 = vadd.f32 %v3687, %v3815
        %v3817 = vpop.f32.mrb[0].mxu0
        %v3818 = vpop.f32.mrb[0].mxu0
        %v3819 = vadd.f32 %v3687, %v3818
        %v3820 = vpop.f32.mrb[0].mxu0
        %3821 = vmatprep.mubr.bf16.mxu0 0
        %3822 = vmatmul.mubr.bf16.gmra.mrb[0].mxu0 %v3717
        %v3823 = vpop.f32.mrb[0].mxu0
        %v3824 = vadd.f32 %v3687, %v3823
        %v3825 = vpop.f32.mrb[0].mxu0
        %v3826 = vpop.f32.mrb[0].mxu0
        %v3827 = vadd.f32 %v3687, %v3826
        %v3828 = vpop.f32.mrb[0].mxu0
        %3829 = vmatprep.mubr.bf16.mxu0 0
        %3830 = vmatmul.mubr.bf16.gmra.mrb[0].mxu0 %v3720
        %v3831 = vpop.f32.mrb[0].mxu0
        %v3832 = vadd.f32 %v3687, %v3831
        %v3833 = vpop.f32.mrb[0].mxu0
        %v3834 = vpop.f32.mrb[0].mxu0
        %v3835 = vadd.f32 %v3687, %v3834
        %v3836 = vpop.f32.mrb[0].mxu0
        %3837 = vmatprep.mubr.bf16.mxu0 0
        %3838 = vmatmul.mubr.bf16.gmra.mrb[0].mxu0 %v3723
        %v3839 = vpop.f32.mrb[0].mxu0
        %v3840 = vadd.f32 %v3687, %v3839
        %v3841 = vpop.f32.mrb[0].mxu0
        %v3842 = vpop.f32.mrb[0].mxu0
        %v3843 = vadd.f32 %v3687, %v3842
        %v3844 = vpop.f32.mrb[0].mxu0
        %3845 = vmatprep.mubr.bf16.mxu0 0
        %3846 = vmatmul.mubr.bf16.gmra.mrb[0].mxu0 %v3726
        %v3847 = vpop.f32.mrb[0].mxu0
        %v3848 = vadd.f32 %v3687, %v3847
        %v3849 = vpop.f32.mrb[0].mxu0
        %v3850 = vpop.f32.mrb[0].mxu0
        %v3851 = vadd.f32 %v3687, %v3850
        %v3852 = vpop.f32.mrb[0].mxu0
        %3853 = vmatprep.mubr.bf16.mxu0 0
        %3854 = vmatmul.mubr.bf16.gmra.mrb[0].mxu0 %v3729
        %v3855 = vpop.f32.mrb[0].mxu0
        %v3856 = vadd.f32 %v3687, %v3855
        %v3857 = vpop.f32.mrb[0].mxu0
        %v3858 = vpop.f32.mrb[0].mxu0
        %v3859 = vadd.f32 %v3687, %v3858
        %v3860 = vpop.f32.mrb[0].mxu0
        %3861 = vmatprep.mubr.bf16.mxu0 0
        %3862 = vmatmul.mubr.bf16.gmra.mrb[0].mxu0 %v3732
        %v3863 = vpop.f32.mrb[0].mxu0
        %v3864 = vadd.f32 %v3687, %v3863
        %v3865 = vpop.f32.mrb[0].mxu0
        %v3866 = vpop.f32.mrb[0].mxu0
        %v3867 = vadd.f32 %v3687, %v3866
        %v3868 = vpop.f32.mrb[0].mxu0
        %3869 = vmatprep.mubr.bf16.mxu0 0
        %3870 = vmatmul.mubr.bf16.gmra.mrb[0].mxu0 %v3735
        %v3871 = vpop.f32.mrb[0].mxu0
        %v3872 = vadd.f32 %v3687, %v3871
        %v3873 = vpop.f32.mrb[0].mxu0
        %v3874 = vpop.f32.mrb[0].mxu0
        %v3875 = vadd.f32 %v3687, %v3874
        %v3876 = vpop.f32.mrb[0].mxu0
        %3877 = vmatprep.mubr.bf16.mxu0 0
        %3878 = vmatmul.mubr.bf16.gmra.mrb[0].mxu0 %v3738
        %v3879 = vpop.f32.mrb[0].mxu0
        %v3880 = vadd.f32 %v3687, %v3879
        %v3881 = vpop.f32.mrb[0].mxu0
        %v3882 = vpop.f32.mrb[0].mxu0
        %v3883 = vadd.f32 %v3687, %v3882
        %v3884 = vpop.f32.mrb[0].mxu0
        %3885 = vmatprep.mubr.bf16.mxu0 0
        %3886 = vmatmul.mubr.bf16.gmra.mrb[0].mxu0 %v3741
        %v3887 = vpop.f32.mrb[0].mxu0
        %v3888 = vadd.f32 %v3687, %v3887
        %v3889 = vpop.f32.mrb[0].mxu0
        %v3890 = vpop.f32.mrb[0].mxu0
        %v3891 = vadd.f32 %v3687, %v3890
        %v3892 = vpop.f32.mrb[0].mxu0
        %3893 = vmatprep.mubr.bf16.mxu0 0
        %3894 = vmatmul.mubr.bf16.gmra.mrb[0].mxu0 %v3744
        %v3895 = vpop.f32.mrb[0].mxu0
        %v3896 = vadd.f32 %v3687, %v3895
        %v3897 = vpop.f32.mrb[0].mxu0
        %v3898 = vpop.f32.mrb[0].mxu0
        %v3899 = vadd.f32 %v3687, %v3898
        %v3900 = vpop.f32.mrb[0].mxu0
        %3901 = vmatprep.mubr.bf16.mxu0 0
        %3902 = vmatmul.mubr.bf16.gmra.mrb[0].mxu0 %v3747
        %v3903 = vpop.f32.mrb[0].mxu0
        %v3904 = vadd.f32 %v3687, %v3903
        %v3905 = vpop.f32.mrb[0].mxu0
        %v3906 = vpop.f32.mrb[0].mxu0
        %v3907 = vadd.f32 %v3687, %v3906
        %v3908 = vpop.f32.mrb[0].mxu0
        %3909 = vdwg.mxu0
        %v3912 = vcombine.high %v3672, %v3672
        %v3914 = vunpack.c.l.s4 1966171168
        %v3915 = vunpack.c.0.s8 %v3914
        %v3916 = vlaneseq
        %v3917 = vshrl.u32 %v3916, 7
        %v3918 = vsub.s32 %v3915, %v3917
        %v3919 = vrot.slane %v3672, %v3918
        %v3921 = vunpack.c.l.s4 1966171168
        %v3922 = vunpack.c.0.s8 %v3921
        %v3923 = vlaneseq
        %v3924 = vshrl.u32 %v3923, 7
        %v3925 = vsub.s32 %v3922, %v3924
        %v3926 = vrot.slane %v3912, %v3925
        %v3927 = vcombine.high %v3919, %v3919
        %v3928 = vcombine.high %v3926, %v3926
        %v3930 = vunpack.c.l.s4 1966171168
        %v3931 = vunpack.c.0.s8 %v3930
        %v3932 = vlaneseq
        %v3933 = vshrl.u32 %v3932, 7
        %v3934 = vsub.s32 %v3931, %v3933
        %v3935 = vrot.slane %v3919, %v3934
        %v3937 = vunpack.c.l.s4 1966171168
        %v3938 = vunpack.c.0.s8 %v3937
        %v3939 = vlaneseq
        %v3940 = vshrl.u32 %v3939, 7
        %v3941 = vsub.s32 %v3938, %v3940
        %v3942 = vrot.slane %v3926, %v3941
        %v3944 = vunpack.c.l.s4 1966171168
        %v3945 = vunpack.c.0.s8 %v3944
        %v3946 = vlaneseq
        %v3947 = vshrl.u32 %v3946, 7
        %v3948 = vsub.s32 %v3945, %v3947
        %v3949 = vrot.slane %v3927, %v3948
        %v3951 = vunpack.c.l.s4 1966171168
        %v3952 = vunpack.c.0.s8 %v3951
        %v3953 = vlaneseq
        %v3954 = vshrl.u32 %v3953, 7
        %v3955 = vsub.s32 %v3952, %v3954
        %v3956 = vrot.slane %v3928, %v3955
        %v3957 = vcombine.high %v3935, %v3935
        %v3958 = vcombine.high %v3942, %v3942
        %v3959 = vcombine.high %v3949, %v3949
        %v3960 = vcombine.high %v3956, %v3956
        %v3961 = vcombine.high %v3675, %v3675
        %v3963 = vunpack.c.l.s4 1966171168
        %v3964 = vunpack.c.0.s8 %v3963
        %v3965 = vlaneseq
        %v3966 = vshrl.u32 %v3965, 7
        %v3967 = vsub.s32 %v3964, %v3966
        %v3968 = vrot.slane %v3675, %v3967
        %v3970 = vunpack.c.l.s4 1966171168
        %v3971 = vunpack.c.0.s8 %v3970
        %v3972 = vlaneseq
        %v3973 = vshrl.u32 %v3972, 7
        %v3974 = vsub.s32 %v3971, %v3973
        %v3975 = vrot.slane %v3961, %v3974
        %v3976 = vcombine.high %v3968, %v3968
        %v3977 = vcombine.high %v3975, %v3975
        %v3979 = vunpack.c.l.s4 1966171168
        %v3980 = vunpack.c.0.s8 %v3979
        %v3981 = vlaneseq
        %v3982 = vshrl.u32 %v3981, 7
        %v3983 = vsub.s32 %v3980, %v3982
        %v3984 = vrot.slane %v3968, %v3983
        %v3986 = vunpack.c.l.s4 1966171168
        %v3987 = vunpack.c.0.s8 %v3986
        %v3988 = vlaneseq
        %v3989 = vshrl.u32 %v3988, 7
        %v3990 = vsub.s32 %v3987, %v3989
        %v3991 = vrot.slane %v3975, %v3990
        %v3993 = vunpack.c.l.s4 1966171168
        %v3994 = vunpack.c.0.s8 %v3993
        %v3995 = vlaneseq
        %v3996 = vshrl.u32 %v3995, 7
        %v3997 = vsub.s32 %v3994, %v3996
        %v3998 = vrot.slane %v3976, %v3997
        %v4000 = vunpack.c.l.s4 1966171168
        %v4001 = vunpack.c.0.s8 %v4000
        %v4002 = vlaneseq
        %v4003 = vshrl.u32 %v4002, 7
        %v4004 = vsub.s32 %v4001, %v4003
        %v4005 = vrot.slane %v3977, %v4004
        %v4006 = vcombine.high %v3984, %v3984
        %v4007 = vcombine.high %v3991, %v3991
        %v4008 = vcombine.high %v3998, %v3998
        %v4009 = vcombine.high %v4005, %v4005
        %v4010 = vlaneseq
        %v4011 = vshrl.u32 %v4010, 7
        %v4012 = vsub.s32 0, %v4011
        %v4013 = vrot.slane %v3935, %v4012
        %v4014 = vlaneseq
        %v4015 = vshrl.u32 %v4014, 7
        %v4016 = vsub.s32 0, %v4015
        %v4017 = vrot.slane %v3949, %v4016
        %v4018 = vlaneseq
        %v4019 = vshrl.u32 %v4018, 7
        %v4020 = vsub.s32 0, %v4019
        %v4021 = vrot.slane %v3957, %v4020
        %v4022 = vlaneseq
        %v4023 = vshrl.u32 %v4022, 7
        %v4024 = vsub.s32 0, %v4023
        %v4025 = vrot.slane %v3959, %v4024
        %v4026 = vlaneseq
        %v4027 = vshrl.u32 %v4026, 7
        %v4028 = vsub.s32 0, %v4027
        %v4029 = vrot.slane %v3942, %v4028
        %v4030 = vlaneseq
        %v4031 = vshrl.u32 %v4030, 7
        %v4032 = vsub.s32 0, %v4031
        %v4033 = vrot.slane %v3956, %v4032
        %v4034 = vlaneseq
        %v4035 = vshrl.u32 %v4034, 7
        %v4036 = vsub.s32 0, %v4035
        %v4037 = vrot.slane %v3958, %v4036
        %v4038 = vlaneseq
        %v4039 = vshrl.u32 %v4038, 7
        %v4040 = vsub.s32 0, %v4039
        %v4041 = vrot.slane %v3960, %v4040
        %v4042 = vlaneseq
        %v4043 = vshrl.u32 %v4042, 7
        %v4044 = vsub.s32 0, %v4043
        %v4045 = vrot.slane %v3984, %v4044
        %v4046 = vlaneseq
        %v4047 = vshrl.u32 %v4046, 7
        %v4048 = vsub.s32 0, %v4047
        %v4049 = vrot.slane %v3998, %v4048
        %v4050 = vlaneseq
        %v4051 = vshrl.u32 %v4050, 7
        %v4052 = vsub.s32 0, %v4051
        %v4053 = vrot.slane %v4006, %v4052
        %v4054 = vlaneseq
        %v4055 = vshrl.u32 %v4054, 7
        %v4056 = vsub.s32 0, %v4055
        %v4057 = vrot.slane %v4008, %v4056
        %v4058 = vlaneseq
        %v4059 = vshrl.u32 %v4058, 7
        %v4060 = vsub.s32 0, %v4059
        %v4061 = vrot.slane %v3991, %v4060
        %v4062 = vlaneseq
        %v4063 = vshrl.u32 %v4062, 7
        %v4064 = vsub.s32 0, %v4063
        %v4065 = vrot.slane %v4005, %v4064
        %v4066 = vlaneseq
        %v4067 = vshrl.u32 %v4066, 7
        %v4068 = vsub.s32 0, %v4067
        %v4069 = vrot.slane %v4007, %v4068
        %v4070 = vlaneseq
        %v4071 = vshrl.u32 %v4070, 7
        %v4072 = vsub.s32 0, %v4071
        %v4073 = vrot.slane %v4009, %v4072
        %4074 = vrot.lane.b32.xlu0 %v4013, 64
        %v4075 = vpop.permute.xlu0 %4074
        %4076 = vrot.lane.b32.xlu0 %v4017, 64
        %v4077 = vpop.permute.xlu0 %4076
        %4078 = vrot.lane.b32.xlu0 %v4021, 64
        %v4079 = vpop.permute.xlu0 %4078
        %4080 = vrot.lane.b32.xlu0 %v4025, 64
        %v4081 = vpop.permute.xlu0 %4080
        %4082 = vrot.lane.b32.xlu0 %v4029, 64
        %v4083 = vpop.permute.xlu0 %4082
        %4084 = vrot.lane.b32.xlu0 %v4033, 64
        %v4085 = vpop.permute.xlu0 %4084
        %4086 = vrot.lane.b32.xlu0 %v4037, 64
        %v4087 = vpop.permute.xlu0 %4086
        %4088 = vrot.lane.b32.xlu0 %v4041, 64
        %v4089 = vpop.permute.xlu0 %4088
        %4090 = vrot.lane.b32.xlu0 %v4045, 64
        %v4091 = vpop.permute.xlu0 %4090
        %4092 = vrot.lane.b32.xlu0 %v4049, 64
        %v4093 = vpop.permute.xlu0 %4092
        %4094 = vrot.lane.b32.xlu0 %v4053, 64
        %v4095 = vpop.permute.xlu0 %4094
        %4096 = vrot.lane.b32.xlu0 %v4057, 64
        %v4097 = vpop.permute.xlu0 %4096
        %4098 = vrot.lane.b32.xlu0 %v4061, 64
        %v4099 = vpop.permute.xlu0 %4098
        %4100 = vrot.lane.b32.xlu0 %v4065, 64
        %v4101 = vpop.permute.xlu0 %4100
        %4102 = vrot.lane.b32.xlu0 %v4069, 64
        %v4103 = vpop.permute.xlu0 %4102
        %4104 = vrot.lane.b32.xlu0 %v4073, 64
        %v4105 = vpop.permute.xlu0 %4104
        %v4122 = vadd.f32 %v3784, %v4075
        %v4123 = vadd.f32 %v3787, %v4075
        %v4124 = vadd.f32 %v3792, %v4077
        %v4125 = vadd.f32 %v3795, %v4077
        %v4126 = vadd.f32 %v3800, %v4079
        %v4127 = vadd.f32 %v3803, %v4079
        %v4128 = vadd.f32 %v3808, %v4081
        %v4129 = vadd.f32 %v3811, %v4081
        %v4130 = vadd.f32 %v3816, %v4083
        %v4131 = vadd.f32 %v3819, %v4083
        %v4132 = vadd.f32 %v3824, %v4085
        %v4133 = vadd.f32 %v3827, %v4085
        %v4134 = vadd.f32 %v3832, %v4087
        %v4135 = vadd.f32 %v3835, %v4087
        %v4136 = vadd.f32 %v3840, %v4089
        %v4137 = vadd.f32 %v3843, %v4089
        %v4138 = vadd.f32 %v3848, %v4091
        %v4139 = vadd.f32 %v3851, %v4091
        %v4140 = vadd.f32 %v3856, %v4093
        %v4141 = vadd.f32 %v3859, %v4093
        %v4142 = vadd.f32 %v3864, %v4095
        %v4143 = vadd.f32 %v3867, %v4095
        %v4144 = vadd.f32 %v3872, %v4097
        %v4145 = vadd.f32 %v3875, %v4097
        %v4146 = vadd.f32 %v3880, %v4099
        %v4147 = vadd.f32 %v3883, %v4099
        %v4148 = vadd.f32 %v3888, %v4101
        %v4149 = vadd.f32 %v3891, %v4101
        %v4150 = vadd.f32 %v3896, %v4103
        %v4151 = vadd.f32 %v3899, %v4103
        %v4152 = vadd.f32 %v3904, %v4105
        %v4153 = vadd.f32 %v3907, %v4105
        %4154 = vrot.lane.b32.xlu0 %v3672, 32
        %v4155 = vpop.permute.xlu0 %4154
        %4156 = vrot.lane.b32.xlu0 %v3675, 32
        %v4157 = vpop.permute.xlu0 %4156
        %v4160 = vadd.f32 %v4122, %v4155
        %v4161 = vadd.f32 %v4123, %v4157
        %v4162 = vadd.f32 %v4124, %v4155
        %v4163 = vadd.f32 %v4125, %v4157
        %v4164 = vadd.f32 %v4126, %v4155
        %v4165 = vadd.f32 %v4127, %v4157
        %v4166 = vadd.f32 %v4128, %v4155
        %v4167 = vadd.f32 %v4129, %v4157
        %v4168 = vadd.f32 %v4130, %v4155
        %v4169 = vadd.f32 %v4131, %v4157
        %v4170 = vadd.f32 %v4132, %v4155
        %v4171 = vadd.f32 %v4133, %v4157
        %v4172 = vadd.f32 %v4134, %v4155
        %v4173 = vadd.f32 %v4135, %v4157
        %v4174 = vadd.f32 %v4136, %v4155
        %v4175 = vadd.f32 %v4137, %v4157
        %v4176 = vadd.f32 %v4138, %v4155
        %v4177 = vadd.f32 %v4139, %v4157
        %v4178 = vadd.f32 %v4140, %v4155
        %v4179 = vadd.f32 %v4141, %v4157
        %v4180 = vadd.f32 %v4142, %v4155
        %v4181 = vadd.f32 %v4143, %v4157
        %v4182 = vadd.f32 %v4144, %v4155
        %v4183 = vadd.f32 %v4145, %v4157
        %v4184 = vadd.f32 %v4146, %v4155
        %v4185 = vadd.f32 %v4147, %v4157
        %v4186 = vadd.f32 %v4148, %v4155
        %v4187 = vadd.f32 %v4149, %v4157
        %v4188 = vadd.f32 %v4150, %v4155
        %v4189 = vadd.f32 %v4151, %v4157
        %v4190 = vadd.f32 %v4152, %v4155
        %v4191 = vadd.f32 %v4153, %v4157
        %v4192 = vxor.u32 %v4160, 2147483648
        %v4193 = vxor.u32 %v4161, 2147483648
        %v4194 = vxor.u32 %v4162, 2147483648
        %v4195 = vxor.u32 %v4163, 2147483648
        %v4196 = vxor.u32 %v4164, 2147483648
        %v4197 = vxor.u32 %v4165, 2147483648
        %v4198 = vxor.u32 %v4166, 2147483648
        %v4199 = vxor.u32 %v4167, 2147483648
        %v4200 = vxor.u32 %v4168, 2147483648
        %v4201 = vxor.u32 %v4169, 2147483648
        %v4202 = vxor.u32 %v4170, 2147483648
        %v4203 = vxor.u32 %v4171, 2147483648
        %v4204 = vxor.u32 %v4172, 2147483648
        %v4205 = vxor.u32 %v4173, 2147483648
        %v4206 = vxor.u32 %v4174, 2147483648
        %v4207 = vxor.u32 %v4175, 2147483648
        %v4208 = vxor.u32 %v4176, 2147483648
        %v4209 = vxor.u32 %v4177, 2147483648
        %v4210 = vxor.u32 %v4178, 2147483648
        %v4211 = vxor.u32 %v4179, 2147483648
        %v4212 = vxor.u32 %v4180, 2147483648
        %v4213 = vxor.u32 %v4181, 2147483648
        %v4214 = vxor.u32 %v4182, 2147483648
        %v4215 = vxor.u32 %v4183, 2147483648
        %v4216 = vxor.u32 %v4184, 2147483648
        %v4217 = vxor.u32 %v4185, 2147483648
        %v4218 = vxor.u32 %v4186, 2147483648
        %v4219 = vxor.u32 %v4187, 2147483648
        %v4220 = vxor.u32 %v4188, 2147483648
        %v4221 = vxor.u32 %v4189, 2147483648
        %v4222 = vxor.u32 %v4190, 2147483648
        %v4223 = vxor.u32 %v4191, 2147483648
        %v4224 = vmul.f32 %v4192, 1.442695
        %v4225 = vpow.pop %v4224
        %v4226 = vmul.f32 %v4193, 1.442695
        %v4227 = vpow.pop %v4226
        %v4228 = vmul.f32 %v4194, 1.442695
        %v4229 = vpow.pop %v4228
        %v4230 = vmul.f32 %v4195, 1.442695
        %v4231 = vpow.pop %v4230
        %v4232 = vmul.f32 %v4196, 1.442695
        %v4233 = vpow.pop %v4232
        %v4234 = vmul.f32 %v4197, 1.442695
        %v4235 = vpow.pop %v4234
        %v4236 = vmul.f32 %v4198, 1.442695
        %v4237 = vpow.pop %v4236
        %v4238 = vmul.f32 %v4199, 1.442695
        %v4239 = vpow.pop %v4238
        %v4240 = vmul.f32 %v4200, 1.442695
        %v4241 = vpow.pop %v4240
        %v4242 = vmul.f32 %v4201, 1.442695
        %v4243 = vpow.pop %v4242
        %v4244 = vmul.f32 %v4202, 1.442695
        %v4245 = vpow.pop %v4244
        %v4246 = vmul.f32 %v4203, 1.442695
        %v4247 = vpow.pop %v4246
        %v4248 = vmul.f32 %v4204, 1.442695
        %v4249 = vpow.pop %v4248
        %v4250 = vmul.f32 %v4205, 1.442695
        %v4251 = vpow.pop %v4250
        %v4252 = vmul.f32 %v4206, 1.442695
        %v4253 = vpow.pop %v4252
        %v4254 = vmul.f32 %v4207, 1.442695
        %v4255 = vpow.pop %v4254
        %v4256 = vmul.f32 %v4208, 1.442695
        %v4257 = vpow.pop %v4256
        %v4258 = vmul.f32 %v4209, 1.442695
        %v4259 = vpow.pop %v4258
        %v4260 = vmul.f32 %v4210, 1.442695
        %v4261 = vpow.pop %v4260
        %v4262 = vmul.f32 %v4211, 1.442695
        %v4263 = vpow.pop %v4262
        %v4264 = vmul.f32 %v4212, 1.442695
        %v4265 = vpow.pop %v4264
        %v4266 = vmul.f32 %v4213, 1.442695
        %v4267 = vpow.pop %v4266
        %v4268 = vmul.f32 %v4214, 1.442695
        %v4269 = vpow.pop %v4268
        %v4270 = vmul.f32 %v4215, 1.442695
        %v4271 = vpow.pop %v4270
        %v4272 = vmul.f32 %v4216, 1.442695
        %v4273 = vpow.pop %v4272
        %v4274 = vmul.f32 %v4217, 1.442695
        %v4275 = vpow.pop %v4274
        %v4276 = vmul.f32 %v4218, 1.442695
        %v4277 = vpow.pop %v4276
        %v4278 = vmul.f32 %v4219, 1.442695
        %v4279 = vpow.pop %v4278
        %v4280 = vmul.f32 %v4220, 1.442695
        %v4281 = vpow.pop %v4280
        %v4282 = vmul.f32 %v4221, 1.442695
        %v4283 = vpow.pop %v4282
        %v4284 = vmul.f32 %v4222, 1.442695
        %v4285 = vpow.pop %v4284
        %v4286 = vmul.f32 %v4223, 1.442695
        %v4287 = vpow.pop %v4286
        %v4288 = vadd.f32 %v4225, 1.0
        %v4289 = vadd.f32 %v4227, 1.0
        %v4290 = vadd.f32 %v4229, 1.0
        %v4291 = vadd.f32 %v4231, 1.0
        %v4292 = vadd.f32 %v4233, 1.0
        %v4293 = vadd.f32 %v4235, 1.0
        %v4294 = vadd.f32 %v4237, 1.0
        %v4295 = vadd.f32 %v4239, 1.0
        %v4296 = vadd.f32 %v4241, 1.0
        %v4297 = vadd.f32 %v4243, 1.0
        %v4298 = vadd.f32 %v4245, 1.0
        %v4299 = vadd.f32 %v4247, 1.0
        %v4300 = vadd.f32 %v4249, 1.0
        %v4301 = vadd.f32 %v4251, 1.0
        %v4302 = vadd.f32 %v4253, 1.0
        %v4303 = vadd.f32 %v4255, 1.0
        %v4304 = vadd.f32 %v4257, 1.0
        %v4305 = vadd.f32 %v4259, 1.0
        %v4306 = vadd.f32 %v4261, 1.0
        %v4307 = vadd.f32 %v4263, 1.0
        %v4308 = vadd.f32 %v4265, 1.0
        %v4309 = vadd.f32 %v4267, 1.0
        %v4310 = vadd.f32 %v4269, 1.0
        %v4311 = vadd.f32 %v4271, 1.0
        %v4312 = vadd.f32 %v4273, 1.0
        %v4313 = vadd.f32 %v4275, 1.0
        %v4314 = vadd.f32 %v4277, 1.0
        %v4315 = vadd.f32 %v4279, 1.0
        %v4316 = vadd.f32 %v4281, 1.0
        %v4317 = vadd.f32 %v4283, 1.0
        %v4318 = vadd.f32 %v4285, 1.0
        %v4319 = vadd.f32 %v4287, 1.0
        %v4320 = vrcp.pop %v4288
        %v4321 = vmul.f32 1.0, %v4320
        %v4322 = vrcp.pop %v4289
        %v4323 = vmul.f32 1.0, %v4322
        %v4324 = vrcp.pop %v4290
        %v4325 = vmul.f32 1.0, %v4324
        %v4326 = vrcp.pop %v4291
        %v4327 = vmul.f32 1.0, %v4326
        %v4328 = vrcp.pop %v4292
        %v4329 = vmul.f32 1.0, %v4328
        %v4330 = vrcp.pop %v4293
        %v4331 = vmul.f32 1.0, %v4330
        %v4332 = vrcp.pop %v4294
        %v4333 = vmul.f32 1.0, %v4332
        %v4334 = vrcp.pop %v4295
        %v4335 = vmul.f32 1.0, %v4334
        %v4336 = vrcp.pop %v4296
        %v4337 = vmul.f32 1.0, %v4336
        %v4338 = vrcp.pop %v4297
        %v4339 = vmul.f32 1.0, %v4338
        %v4340 = vrcp.pop %v4298
        %v4341 = vmul.f32 1.0, %v4340
        %v4342 = vrcp.pop %v4299
        %v4343 = vmul.f32 1.0, %v4342
        %v4344 = vrcp.pop %v4300
        %v4345 = vmul.f32 1.0, %v4344
        %v4346 = vrcp.pop %v4301
        %v4347 = vmul.f32 1.0, %v4346
        %v4348 = vrcp.pop %v4302
        %v4349 = vmul.f32 1.0, %v4348
        %v4350 = vrcp.pop %v4303
        %v4351 = vmul.f32 1.0, %v4350
        %v4352 = vrcp.pop %v4304
        %v4353 = vmul.f32 1.0, %v4352
        %v4354 = vrcp.pop %v4305
        %v4355 = vmul.f32 1.0, %v4354
        %v4356 = vrcp.pop %v4306
        %v4357 = vmul.f32 1.0, %v4356
        %v4358 = vrcp.pop %v4307
        %v4359 = vmul.f32 1.0, %v4358
        %v4360 = vrcp.pop %v4308
        %v4361 = vmul.f32 1.0, %v4360
        %v4362 = vrcp.pop %v4309
        %v4363 = vmul.f32 1.0, %v4362
        %v4364 = vrcp.pop %v4310
        %v4365 = vmul.f32 1.0, %v4364
        %v4366 = vrcp.pop %v4311
        %v4367 = vmul.f32 1.0, %v4366
        %v4368 = vrcp.pop %v4312
        %v4369 = vmul.f32 1.0, %v4368
        %v4370 = vrcp.pop %v4313
        %v4371 = vmul.f32 1.0, %v4370
        %v4372 = vrcp.pop %v4314
        %v4373 = vmul.f32 1.0, %v4372
        %v4374 = vrcp.pop %v4315
        %v4375 = vmul.f32 1.0, %v4374
        %v4376 = vrcp.pop %v4316
        %v4377 = vmul.f32 1.0, %v4376
        %v4378 = vrcp.pop %v4317
        %v4379 = vmul.f32 1.0, %v4378
        %v4380 = vrcp.pop %v4318
        %v4381 = vmul.f32 1.0, %v4380
        %v4382 = vrcp.pop %v4319
        %v4383 = vmul.f32 1.0, %v4382
        %v4384 = vmul.f32 %v4321, %v2037
        %v4385 = vmul.f32 %v4323, %v2038
        %v4386 = vmul.f32 %v4325, %v2039
        %v4387 = vmul.f32 %v4327, %v2040
        %v4388 = vmul.f32 %v4329, %v2041
        %v4389 = vmul.f32 %v4331, %v2042
        %v4390 = vmul.f32 %v4333, %v2043
        %v4391 = vmul.f32 %v4335, %v2044
        %v4392 = vmul.f32 %v4337, %v2045
        %v4393 = vmul.f32 %v4339, %v2046
        %v4394 = vmul.f32 %v4341, %v2047
        %v4395 = vmul.f32 %v4343, %v2048
        %v4396 = vmul.f32 %v4345, %v2049
        %v4397 = vmul.f32 %v4347, %v2050
        %v4398 = vmul.f32 %v4349, %v2051
        %v4399 = vmul.f32 %v4351, %v2052
        %v4400 = vmul.f32 %v4353, %v2053
        %v4401 = vmul.f32 %v4355, %v2054
        %v4402 = vmul.f32 %v4357, %v2055
        %v4403 = vmul.f32 %v4359, %v2056
        %v4404 = vmul.f32 %v4361, %v2057
        %v4405 = vmul.f32 %v4363, %v2058
        %v4406 = vmul.f32 %v4365, %v2059
        %v4407 = vmul.f32 %v4367, %v2060
        %v4408 = vmul.f32 %v4369, %v2061
        %v4409 = vmul.f32 %v4371, %v2062
        %v4410 = vmul.f32 %v4373, %v2063
        %v4411 = vmul.f32 %v4375, %v2064
        %v4412 = vmul.f32 %v4377, %v2065
        %v4413 = vmul.f32 %v4379, %v2066
        %v4414 = vmul.f32 %v4381, %v2067
        %v4415 = vmul.f32 %v4383, %v2068
        %4416 = vrot.lane.b32.xlu0 %v4013, 96
        %v4417 = vpop.permute.xlu0 %4416
        %4418 = vrot.lane.b32.xlu0 %v4017, 96
        %v4419 = vpop.permute.xlu0 %4418
        %4420 = vrot.lane.b32.xlu0 %v4021, 96
        %v4421 = vpop.permute.xlu0 %4420
        %4422 = vrot.lane.b32.xlu0 %v4025, 96
        %v4423 = vpop.permute.xlu0 %4422
        %4424 = vrot.lane.b32.xlu0 %v4029, 96
        %v4425 = vpop.permute.xlu0 %4424
        %4426 = vrot.lane.b32.xlu0 %v4033, 96
        %v4427 = vpop.permute.xlu0 %4426
        %4428 = vrot.lane.b32.xlu0 %v4037, 96
        %v4429 = vpop.permute.xlu0 %4428
        %4430 = vrot.lane.b32.xlu0 %v4041, 96
        %v4431 = vpop.permute.xlu0 %4430
        %4432 = vrot.lane.b32.xlu0 %v4045, 96
        %v4433 = vpop.permute.xlu0 %4432
        %4434 = vrot.lane.b32.xlu0 %v4049, 96
        %v4435 = vpop.permute.xlu0 %4434
        %4436 = vrot.lane.b32.xlu0 %v4053, 96
        %v4437 = vpop.permute.xlu0 %4436
        %4438 = vrot.lane.b32.xlu0 %v4057, 96
        %v4439 = vpop.permute.xlu0 %4438
        %4440 = vrot.lane.b32.xlu0 %v4061, 96
        %v4441 = vpop.permute.xlu0 %4440
        %4442 = vrot.lane.b32.xlu0 %v4065, 96
        %v4443 = vpop.permute.xlu0 %4442
        %4444 = vrot.lane.b32.xlu0 %v4069, 96
        %v4445 = vpop.permute.xlu0 %4444
        %4446 = vrot.lane.b32.xlu0 %v4073, 96
        %v4447 = vpop.permute.xlu0 %4446
        %v4464 = vmul.f32 %v4384, %v4417
        %v4465 = vmul.f32 %v4385, %v4417
        %v4466 = vmul.f32 %v4386, %v4419
        %v4467 = vmul.f32 %v4387, %v4419
        %v4468 = vmul.f32 %v4388, %v4421
        %v4469 = vmul.f32 %v4389, %v4421
        %v4470 = vmul.f32 %v4390, %v4423
        %v4471 = vmul.f32 %v4391, %v4423
        %v4472 = vmul.f32 %v4392, %v4425
        %v4473 = vmul.f32 %v4393, %v4425
        %v4474 = vmul.f32 %v4394, %v4427
        %v4475 = vmul.f32 %v4395, %v4427
        %v4476 = vmul.f32 %v4396, %v4429
        %v4477 = vmul.f32 %v4397, %v4429
        %v4478 = vmul.f32 %v4398, %v4431
        %v4479 = vmul.f32 %v4399, %v4431
        %v4480 = vmul.f32 %v4400, %v4433
        %v4481 = vmul.f32 %v4401, %v4433
        %v4482 = vmul.f32 %v4402, %v4435
        %v4483 = vmul.f32 %v4403, %v4435
        %v4484 = vmul.f32 %v4404, %v4437
        %v4485 = vmul.f32 %v4405, %v4437
        %v4486 = vmul.f32 %v4406, %v4439
        %v4487 = vmul.f32 %v4407, %v4439
        %v4488 = vmul.f32 %v4408, %v4441
        %v4489 = vmul.f32 %v4409, %v4441
        %v4490 = vmul.f32 %v4410, %v4443
        %v4491 = vmul.f32 %v4411, %v4443
        %v4492 = vmul.f32 %v4412, %v4445
        %v4493 = vmul.f32 %v4413, %v4445
        %v4494 = vmul.f32 %v4414, %v4447
        %v4495 = vmul.f32 %v4415, %v4447
        %v4496 = vsel %vm2092, %v4464, 0.0
        %v4497 = vsel %vm2092, %v4466, 0.0
        %v4498 = vadd.f32 %v4496, %v4497
        %v4499 = vsel %vm2092, %v4468, 0.0
        %v4500 = vadd.f32 %v4498, %v4499
        %v4501 = vsel %vm2092, %v4470, 0.0
        %v4502 = vadd.f32 %v4500, %v4501
        %v4503 = vsel %vm2092, %v4472, 0.0
        %v4504 = vadd.f32 %v4502, %v4503
        %v4505 = vsel %vm2092, %v4474, 0.0
        %v4506 = vadd.f32 %v4504, %v4505
        %v4507 = vsel %vm2092, %v4476, 0.0
        %v4508 = vadd.f32 %v4506, %v4507
        %v4509 = vsel %vm2092, %v4478, 0.0
        %v4510 = vadd.f32 %v4508, %v4509
        %v4511 = vsel %vm2092, %v4480, 0.0
        %v4512 = vadd.f32 %v4510, %v4511
        %v4513 = vsel %vm2092, %v4482, 0.0
        %v4514 = vadd.f32 %v4512, %v4513
        %v4515 = vsel %vm2092, %v4484, 0.0
        %v4516 = vadd.f32 %v4514, %v4515
        %v4517 = vsel %vm2092, %v4486, 0.0
        %v4518 = vadd.f32 %v4516, %v4517
        %v4519 = vsel %vm2092, %v4488, 0.0
        %v4520 = vadd.f32 %v4518, %v4519
        %v4521 = vsel %vm2092, %v4490, 0.0
        %v4522 = vadd.f32 %v4520, %v4521
        %v4523 = vsel %vm2092, %v4492, 0.0
        %v4524 = vadd.f32 %v4522, %v4523
        %v4525 = vsel %vm2092, %v4494, 0.0
        %v4526 = vadd.f32 %v4524, %v4525
        %v4527 = vsel %vm2092, %v4465, 0.0
        %v4528 = vsel %vm2092, %v4467, 0.0
        %v4529 = vadd.f32 %v4527, %v4528
        %v4530 = vsel %vm2092, %v4469, 0.0
        %v4531 = vadd.f32 %v4529, %v4530
        %v4532 = vsel %vm2092, %v4471, 0.0
        %v4533 = vadd.f32 %v4531, %v4532
        %v4534 = vsel %vm2092, %v4473, 0.0
        %v4535 = vadd.f32 %v4533, %v4534
        %v4536 = vsel %vm2092, %v4475, 0.0
        %v4537 = vadd.f32 %v4535, %v4536
        %v4538 = vsel %vm2092, %v4477, 0.0
        %v4539 = vadd.f32 %v4537, %v4538
        %v4540 = vsel %vm2092, %v4479, 0.0
        %v4541 = vadd.f32 %v4539, %v4540
        %v4542 = vsel %vm2092, %v4481, 0.0
        %v4543 = vadd.f32 %v4541, %v4542
        %v4544 = vsel %vm2092, %v4483, 0.0
        %v4545 = vadd.f32 %v4543, %v4544
        %v4546 = vsel %vm2092, %v4485, 0.0
        %v4547 = vadd.f32 %v4545, %v4546
        %v4548 = vsel %vm2092, %v4487, 0.0
        %v4549 = vadd.f32 %v4547, %v4548
        %v4550 = vsel %vm2092, %v4489, 0.0
        %v4551 = vadd.f32 %v4549, %v4550
        %v4552 = vsel %vm2092, %v4491, 0.0
        %v4553 = vadd.f32 %v4551, %v4552
        %v4554 = vsel %vm2092, %v4493, 0.0
        %v4555 = vadd.f32 %v4553, %v4554
        %v4556 = vsel %vm2092, %v4495, 0.0
        %v4557 = vadd.f32 %v4555, %v4556
        %v4558 = vsel %vm2092, %v4384, 0.0
        %v4559 = vsel %vm2092, %v4386, 0.0
        %v4560 = vadd.f32 %v4558, %v4559
        %v4561 = vsel %vm2092, %v4388, 0.0
        %v4562 = vadd.f32 %v4560, %v4561
        %v4563 = vsel %vm2092, %v4390, 0.0
        %v4564 = vadd.f32 %v4562, %v4563
        %v4565 = vsel %vm2092, %v4392, 0.0
        %v4566 = vadd.f32 %v4564, %v4565
        %v4567 = vsel %vm2092, %v4394, 0.0
        %v4568 = vadd.f32 %v4566, %v4567
        %v4569 = vsel %vm2092, %v4396, 0.0
        %v4570 = vadd.f32 %v4568, %v4569
        %v4571 = vsel %vm2092, %v4398, 0.0
        %v4572 = vadd.f32 %v4570, %v4571
        %v4573 = vsel %vm2092, %v4400, 0.0
        %v4574 = vadd.f32 %v4572, %v4573
        %v4575 = vsel %vm2092, %v4402, 0.0
        %v4576 = vadd.f32 %v4574, %v4575
        %v4577 = vsel %vm2092, %v4404, 0.0
        %v4578 = vadd.f32 %v4576, %v4577
        %v4579 = vsel %vm2092, %v4406, 0.0
        %v4580 = vadd.f32 %v4578, %v4579
        %v4581 = vsel %vm2092, %v4408, 0.0
        %v4582 = vadd.f32 %v4580, %v4581
        %v4583 = vsel %vm2092, %v4410, 0.0
        %v4584 = vadd.f32 %v4582, %v4583
        %v4585 = vsel %vm2092, %v4412, 0.0
        %v4586 = vadd.f32 %v4584, %v4585
        %v4587 = vsel %vm2092, %v4414, 0.0
        %v4588 = vadd.f32 %v4586, %v4587
        %v4589 = vsel %vm2092, %v4385, 0.0
        %v4590 = vsel %vm2092, %v4387, 0.0
        %v4591 = vadd.f32 %v4589, %v4590
        %v4592 = vsel %vm2092, %v4389, 0.0
        %v4593 = vadd.f32 %v4591, %v4592
        %v4594 = vsel %vm2092, %v4391, 0.0
        %v4595 = vadd.f32 %v4593, %v4594
        %v4596 = vsel %vm2092, %v4393, 0.0
        %v4597 = vadd.f32 %v4595, %v4596
        %v4598 = vsel %vm2092, %v4395, 0.0
        %v4599 = vadd.f32 %v4597, %v4598
        %v4600 = vsel %vm2092, %v4397, 0.0
        %v4601 = vadd.f32 %v4599, %v4600
        %v4602 = vsel %vm2092, %v4399, 0.0
        %v4603 = vadd.f32 %v4601, %v4602
        %v4604 = vsel %vm2092, %v4401, 0.0
        %v4605 = vadd.f32 %v4603, %v4604
        %v4606 = vsel %vm2092, %v4403, 0.0
        %v4607 = vadd.f32 %v4605, %v4606
        %v4608 = vsel %vm2092, %v4405, 0.0
        %v4609 = vadd.f32 %v4607, %v4608
        %v4610 = vsel %vm2092, %v4407, 0.0
        %v4611 = vadd.f32 %v4609, %v4610
        %v4612 = vsel %vm2092, %v4409, 0.0
        %v4613 = vadd.f32 %v4611, %v4612
        %v4614 = vsel %vm2092, %v4411, 0.0
        %v4615 = vadd.f32 %v4613, %v4614
        %v4616 = vsel %vm2092, %v4413, 0.0
        %v4617 = vadd.f32 %v4615, %v4616
        %v4618 = vsel %vm2092, %v4415, 0.0
        %v4619 = vadd.f32 %v4617, %v4618
        %v4620 = vadd.f32 %v4588, 1e-06
        %v4621 = vadd.f32 %v4619, 1e-06
        %v4622 = vrcp.pop %v4620
        %v4623 = vmul.f32 %v4526, %v4622
        %v4624 = vrcp.pop %v4621
        %v4625 = vmul.f32 %v4557, %v4624
        %v4626 = vadd.f32 %v3672, %v4623
        %v4627 = vadd.f32 %v3675, %v4625
        %v4628 = vsel %vm2092, %v4626, 0.0
        %v4629 = vsel %vm2092, %v4627, 0.0
        %v4630 = vadd.f32 %v4628, %v4629
        %v4631 = vrot.slane %v4630, 4
        %v4632 = vadd.f32 %v4630, %v4631
        %v4633 = vrot.slane %v4632, 2
        %v4634 = vadd.f32 %v4632, %v4633
        %v4635 = vrot.slane %v4634, 1
        %v4636 = vadd.f32 %v4634, %v4635
        %v4637 = vmul.f32 %v4636, %v3096
        %v4638 = vmul.f32 %v4626, %v4626
        %v4639 = vmul.f32 %v4627, %v4627
        %v4640 = vsel %vm2092, %v4638, 0.0
        %v4641 = vsel %vm2092, %v4639, 0.0
        %v4642 = vadd.f32 %v4640, %v4641
        %v4643 = vrot.slane %v4642, 4
        %v4644 = vadd.f32 %v4642, %v4643
        %v4645 = vrot.slane %v4644, 2
        %v4646 = vadd.f32 %v4644, %v4645
        %v4647 = vrot.slane %v4646, 1
        %v4648 = vadd.f32 %v4646, %v4647
        %v4649 = vmul.f32 %v4648, %v3096
        %v4650 = vmul.f32 %v4637, %v4637
        %v4651 = vsub.f32 %v4649, %v4650
        %v4652 = vmax.f32 %v4651, 0.0
        %v4653 = vsub.f32 %v4626, %v4637
        %v4654 = vsub.f32 %v4627, %v4637
        %v4655 = vadd.f32 %v4652, 1e-05
        %v4656 = vrsqrt.pop %v4655
        %v4657 = vmul.f32 %v4653, %v4656
        %v4658 = vmul.f32 %v4654, %v4656
        %v4659 = vld [vmem:[#allocation37] sm:$0x1]
        %v4661 = vlaneseq
        %v4662 = vshrl.u32 %v4661, 7
        %v4663 = vsub.s32 0, %v4662
        %v4664 = vrot.slane %v4659, %v4663
        %v4666 = vmul.f32 %v4657, %v4664
        %v4667 = vmul.f32 %v4658, %v4664
        %v4668 = vld [vmem:[#allocation38] sm:$0x1]
        %v4670 = vlaneseq
        %v4671 = vshrl.u32 %v4670, 7
        %v4672 = vsub.s32 0, %v4671
        %v4673 = vrot.slane %v4668, %v4672
        %v4675 = vadd.f32 %v4666, %v4673
        %v4676 = vadd.f32 %v4667, %v4673
        %v4677 = vmax.f32 %v4675, 0.0
        %v4678 = vmax.f32 %v4676, 0.0
        %v4679 = vunpack.c.l.bf16 %v3594
        %v4680 = vunpack.c.h.bf16 %v3594
        %v4681 = vadd.f32 %v4679, %v4677
        %v4682 = vadd.f32 %v4680, %v4678
        %v4683 = vpack.c.bf16 %v4682, %v4681
        %v4684 = vld [vmem:[#allocation49] sm:$0xf]
        %v4685 = vld [vmem:[#allocation49 + $0x4] sm:$0xf]
        %v4686 = vld [vmem:[#allocation49 + $0x8] sm:$0xf]
        %v4687 = vld [vmem:[#allocation49 + $0xc] sm:$0xf]
        %v4692 = vunpack.c.l.b16 %v4684
        %v4693 = vunpack.c.l.b16 %v4685
        %v4694 = vunpack.c.l.b16 %v4686
        %v4695 = vunpack.c.l.b16 %v4687
        %v4696 = vpack.c.b16 %v4693, %v4692
        %v4697 = vpack.c.b16 %v4695, %v4694
        %v4701 = vsel %vm2092, %v4683, 0
        %4703 = vmatprep.subr.bf16.mxu0 0
        %4704 = vmatpush1.bf16.msra.mxu0 %v4696
        %4705 = vmatprep.subr.bf16.mxu0 0
        %4706 = vmatpush1.bf16.msra.mxu0 %v4697
        %4707 = vmatprep.subr.bf16.mxu0 0
        %4708 = vmatpush1.bf16.msra.mxu0 0
        %4709 = vmatprep.subr.bf16.mxu0 0
        %4710 = vmatpush1.bf16.msra.mxu0 0
        %4711 = vmatprep.subr.bf16.mxu0 0
        %4712 = vmatpush1.bf16.msra.mxu0 0
        %4713 = vmatprep.subr.bf16.mxu0 0
        %4714 = vmatpush1.bf16.msra.mxu0 0
        %4715 = vmatprep.subr.bf16.mxu0 0
        %4716 = vmatpush1.bf16.msra.mxu0 0
        %4717 = vmatprep.subr.bf16.mxu0 0
        %4718 = vmatpush1.bf16.msra.mxu0 0
        %4719 = vmatprep.subr.bf16.mxu0 0
        %4720 = vmatpush1.bf16.msra.mxu0 0
        %4721 = vmatprep.subr.bf16.mxu0 0
        %4722 = vmatpush1.bf16.msra.mxu0 0
        %4723 = vmatprep.subr.bf16.mxu0 0
        %4724 = vmatpush1.bf16.msra.mxu0 0
        %4725 = vmatprep.subr.bf16.mxu0 0
        %4726 = vmatpush1.bf16.msra.mxu0 0
        %4727 = vmatprep.subr.bf16.mxu0 0
        %4728 = vmatpush1.bf16.msra.mxu0 0
        %4729 = vmatprep.subr.bf16.mxu0 0
        %4730 = vmatpush1.bf16.msra.mxu0 0
        %4731 = vmatprep.subr.bf16.mxu0 0
        %4732 = vmatpush1.bf16.msra.mxu0 0
        %4733 = vmatprep.subr.bf16.mxu0 0
        %4734 = vmatpush1.bf16.msra.mxu0 0
        %4735 = vmatprep.mubr.bf16.mxu0 0
        %4736 = vmatmul.mubr.bf16.gmra.mrb[0].mxu0 %v4701
        %v4737 = vpop.f32.mrb[0].mxu0
        %v4738 = vadd.f32 0.0, %v4737
        %v4739 = vpop.f32.mrb[0].mxu0
        %v4740 = vpop.f32.mrb[0].mxu0
        %v4741 = vadd.f32 0.0, %v4740
        %v4742 = vpop.f32.mrb[0].mxu0
        %4743 = vdwg.mxu0
        %v4744 = vld [vmem:[#allocation50] sm:$0xf]
        %v4745 = vld [vmem:[#allocation50 + $0x4] sm:$0xf]
        %v4746 = vld [vmem:[#allocation50 + $0x8] sm:$0xf]
        %v4747 = vld [vmem:[#allocation50 + $0xc] sm:$0xf]
        %v4752 = vunpack.c.l.b16 %v4744
        %v4753 = vunpack.c.l.b16 %v4745
        %v4754 = vunpack.c.l.b16 %v4746
        %v4755 = vunpack.c.l.b16 %v4747
        %v4756 = vpack.c.b16 %v4753, %v4752
        %v4757 = vpack.c.b16 %v4755, %v4754
        %4760 = vmatprep.subr.bf16.mxu0 0
        %4761 = vmatpush1.bf16.msra.mxu0 %v4756
        %4762 = vmatprep.subr.bf16.mxu0 0
        %4763 = vmatpush1.bf16.msra.mxu0 %v4757
        %4764 = vmatprep.subr.bf16.mxu0 0
        %4765 = vmatpush1.bf16.msra.mxu0 0
        %4766 = vmatprep.subr.bf16.mxu0 0
        %4767 = vmatpush1.bf16.msra.mxu0 0
        %4768 = vmatprep.subr.bf16.mxu0 0
        %4769 = vmatpush1.bf16.msra.mxu0 0
        %4770 = vmatprep.subr.bf16.mxu0 0
        %4771 = vmatpush1.bf16.msra.mxu0 0
        %4772 = vmatprep.subr.bf16.mxu0 0
        %4773 = vmatpush1.bf16.msra.mxu0 0
        %4774 = vmatprep.subr.bf16.mxu0 0
        %4775 = vmatpush1.bf16.msra.mxu0 0
        %4776 = vmatprep.subr.bf16.mxu0 0
        %4777 = vmatpush1.bf16.msra.mxu0 0
        %4778 = vmatprep.subr.bf16.mxu0 0
        %4779 = vmatpush1.bf16.msra.mxu0 0
        %4780 = vmatprep.subr.bf16.mxu0 0
        %4781 = vmatpush1.bf16.msra.mxu0 0
        %4782 = vmatprep.subr.bf16.mxu0 0
        %4783 = vmatpush1.bf16.msra.mxu0 0
        %4784 = vmatprep.subr.bf16.mxu0 0
        %4785 = vmatpush1.bf16.msra.mxu0 0
        %4786 = vmatprep.subr.bf16.mxu0 0
        %4787 = vmatpush1.bf16.msra.mxu0 0
        %4788 = vmatprep.subr.bf16.mxu0 0
        %4789 = vmatpush1.bf16.msra.mxu0 0
        %4790 = vmatprep.subr.bf16.mxu0 0
        %4791 = vmatpush1.bf16.msra.mxu0 0
        %4792 = vmatprep.mubr.bf16.mxu0 0
        %4793 = vmatmul.mubr.bf16.gmra.mrb[0].mxu0 %v4701
        %v4794 = vpop.f32.mrb[0].mxu0
        %v4795 = vadd.f32 0.0, %v4794
        %v4796 = vpop.f32.mrb[0].mxu0
        %v4797 = vpop.f32.mrb[0].mxu0
        %v4798 = vadd.f32 0.0, %v4797
        %v4799 = vpop.f32.mrb[0].mxu0
        %4800 = vdwg.mxu0
        %v4803 = vcombine.high %v4738, %v4738
        %v4805 = vunpack.c.l.s4 1966171168
        %v4806 = vunpack.c.0.s8 %v4805
        %v4807 = vlaneseq
        %v4808 = vshrl.u32 %v4807, 7
        %v4809 = vsub.s32 %v4806, %v4808
        %v4810 = vrot.slane %v4738, %v4809
        %v4812 = vunpack.c.l.s4 1966171168
        %v4813 = vunpack.c.0.s8 %v4812
        %v4814 = vlaneseq
        %v4815 = vshrl.u32 %v4814, 7
        %v4816 = vsub.s32 %v4813, %v4815
        %v4817 = vrot.slane %v4803, %v4816
        %v4818 = vcombine.high %v4810, %v4810
        %v4819 = vcombine.high %v4817, %v4817
        %v4821 = vunpack.c.l.s4 1966171168
        %v4822 = vunpack.c.0.s8 %v4821
        %v4823 = vlaneseq
        %v4824 = vshrl.u32 %v4823, 7
        %v4825 = vsub.s32 %v4822, %v4824
        %v4826 = vrot.slane %v4810, %v4825
        %v4828 = vunpack.c.l.s4 1966171168
        %v4829 = vunpack.c.0.s8 %v4828
        %v4830 = vlaneseq
        %v4831 = vshrl.u32 %v4830, 7
        %v4832 = vsub.s32 %v4829, %v4831
        %v4833 = vrot.slane %v4817, %v4832
        %v4835 = vunpack.c.l.s4 1966171168
        %v4836 = vunpack.c.0.s8 %v4835
        %v4837 = vlaneseq
        %v4838 = vshrl.u32 %v4837, 7
        %v4839 = vsub.s32 %v4836, %v4838
        %v4840 = vrot.slane %v4818, %v4839
        %v4842 = vunpack.c.l.s4 1966171168
        %v4843 = vunpack.c.0.s8 %v4842
        %v4844 = vlaneseq
        %v4845 = vshrl.u32 %v4844, 7
        %v4846 = vsub.s32 %v4843, %v4845
        %v4847 = vrot.slane %v4819, %v4846
        %v4848 = vcombine.high %v4826, %v4826
        %v4849 = vcombine.high %v4833, %v4833
        %v4850 = vcombine.high %v4840, %v4840
        %v4851 = vcombine.high %v4847, %v4847
        %v4852 = vcombine.high %v4741, %v4741
        %v4854 = vunpack.c.l.s4 1966171168
        %v4855 = vunpack.c.0.s8 %v4854
        %v4856 = vlaneseq
        %v4857 = vshrl.u32 %v4856, 7
        %v4858 = vsub.s32 %v4855, %v4857
        %v4859 = vrot.slane %v4741, %v4858
        %v4861 = vunpack.c.l.s4 1966171168
        %v4862 = vunpack.c.0.s8 %v4861
        %v4863 = vlaneseq
        %v4864 = vshrl.u32 %v4863, 7
        %v4865 = vsub.s32 %v4862, %v4864
        %v4866 = vrot.slane %v4852, %v4865
        %v4867 = vcombine.high %v4859, %v4859
        %v4868 = vcombine.high %v4866, %v4866
        %v4870 = vunpack.c.l.s4 1966171168
        %v4871 = vunpack.c.0.s8 %v4870
        %v4872 = vlaneseq
        %v4873 = vshrl.u32 %v4872, 7
        %v4874 = vsub.s32 %v4871, %v4873
        %v4875 = vrot.slane %v4859, %v4874
        %v4877 = vunpack.c.l.s4 1966171168
        %v4878 = vunpack.c.0.s8 %v4877
        %v4879 = vlaneseq
        %v4880 = vshrl.u32 %v4879, 7
        %v4881 = vsub.s32 %v4878, %v4880
        %v4882 = vrot.slane %v4866, %v4881
        %v4884 = vunpack.c.l.s4 1966171168
        %v4885 = vunpack.c.0.s8 %v4884
        %v4886 = vlaneseq
        %v4887 = vshrl.u32 %v4886, 7
        %v4888 = vsub.s32 %v4885, %v4887
        %v4889 = vrot.slane %v4867, %v4888
        %v4891 = vunpack.c.l.s4 1966171168
        %v4892 = vunpack.c.0.s8 %v4891
        %v4893 = vlaneseq
        %v4894 = vshrl.u32 %v4893, 7
        %v4895 = vsub.s32 %v4892, %v4894
        %v4896 = vrot.slane %v4868, %v4895
        %v4897 = vcombine.high %v4875, %v4875
        %v4898 = vcombine.high %v4882, %v4882
        %v4899 = vcombine.high %v4889, %v4889
        %v4900 = vcombine.high %v4896, %v4896
        %v4901 = vlaneseq
        %v4902 = vshrl.u32 %v4901, 7
        %v4903 = vsub.s32 0, %v4902
        %v4904 = vrot.slane %v4826, %v4903
        %v4905 = vlaneseq
        %v4906 = vshrl.u32 %v4905, 7
        %v4907 = vsub.s32 0, %v4906
        %v4908 = vrot.slane %v4840, %v4907
        %v4909 = vlaneseq
        %v4910 = vshrl.u32 %v4909, 7
        %v4911 = vsub.s32 0, %v4910
        %v4912 = vrot.slane %v4848, %v4911
        %v4913 = vlaneseq
        %v4914 = vshrl.u32 %v4913, 7
        %v4915 = vsub.s32 0, %v4914
        %v4916 = vrot.slane %v4850, %v4915
        %v4917 = vlaneseq
        %v4918 = vshrl.u32 %v4917, 7
        %v4919 = vsub.s32 0, %v4918
        %v4920 = vrot.slane %v4833, %v4919
        %v4921 = vlaneseq
        %v4922 = vshrl.u32 %v4921, 7
        %v4923 = vsub.s32 0, %v4922
        %v4924 = vrot.slane %v4847, %v4923
        %v4925 = vlaneseq
        %v4926 = vshrl.u32 %v4925, 7
        %v4927 = vsub.s32 0, %v4926
        %v4928 = vrot.slane %v4849, %v4927
        %v4929 = vlaneseq
        %v4930 = vshrl.u32 %v4929, 7
        %v4931 = vsub.s32 0, %v4930
        %v4932 = vrot.slane %v4851, %v4931
        %v4933 = vlaneseq
        %v4934 = vshrl.u32 %v4933, 7
        %v4935 = vsub.s32 0, %v4934
        %v4936 = vrot.slane %v4875, %v4935
        %v4937 = vlaneseq
        %v4938 = vshrl.u32 %v4937, 7
        %v4939 = vsub.s32 0, %v4938
        %v4940 = vrot.slane %v4889, %v4939
        %v4941 = vlaneseq
        %v4942 = vshrl.u32 %v4941, 7
        %v4943 = vsub.s32 0, %v4942
        %v4944 = vrot.slane %v4897, %v4943
        %v4945 = vlaneseq
        %v4946 = vshrl.u32 %v4945, 7
        %v4947 = vsub.s32 0, %v4946
        %v4948 = vrot.slane %v4899, %v4947
        %v4949 = vlaneseq
        %v4950 = vshrl.u32 %v4949, 7
        %v4951 = vsub.s32 0, %v4950
        %v4952 = vrot.slane %v4882, %v4951
        %v4953 = vlaneseq
        %v4954 = vshrl.u32 %v4953, 7
        %v4955 = vsub.s32 0, %v4954
        %v4956 = vrot.slane %v4896, %v4955
        %v4957 = vlaneseq
        %v4958 = vshrl.u32 %v4957, 7
        %v4959 = vsub.s32 0, %v4958
        %v4960 = vrot.slane %v4898, %v4959
        %v4961 = vlaneseq
        %v4962 = vshrl.u32 %v4961, 7
        %v4963 = vsub.s32 0, %v4962
        %v4964 = vrot.slane %v4900, %v4963
        %v4981 = vadd.f32 %v4904, %v4795
        %v4982 = vadd.f32 %v4904, %v4798
        %v4983 = vadd.f32 %v4908, %v4795
        %v4984 = vadd.f32 %v4908, %v4798
        %v4985 = vadd.f32 %v4912, %v4795
        %v4986 = vadd.f32 %v4912, %v4798
        %v4987 = vadd.f32 %v4916, %v4795
        %v4988 = vadd.f32 %v4916, %v4798
        %v4989 = vadd.f32 %v4920, %v4795
        %v4990 = vadd.f32 %v4920, %v4798
        %v4991 = vadd.f32 %v4924, %v4795
        %v4992 = vadd.f32 %v4924, %v4798
        %v4993 = vadd.f32 %v4928, %v4795
        %v4994 = vadd.f32 %v4928, %v4798
        %v4995 = vadd.f32 %v4932, %v4795
        %v4996 = vadd.f32 %v4932, %v4798
        %v4997 = vadd.f32 %v4936, %v4795
        %v4998 = vadd.f32 %v4936, %v4798
        %v4999 = vadd.f32 %v4940, %v4795
        %v5000 = vadd.f32 %v4940, %v4798
        %v5001 = vadd.f32 %v4944, %v4795
        %v5002 = vadd.f32 %v4944, %v4798
        %v5003 = vadd.f32 %v4948, %v4795
        %v5004 = vadd.f32 %v4948, %v4798
        %v5005 = vadd.f32 %v4952, %v4795
        %v5006 = vadd.f32 %v4952, %v4798
        %v5007 = vadd.f32 %v4956, %v4795
        %v5008 = vadd.f32 %v4956, %v4798
        %v5009 = vadd.f32 %v4960, %v4795
        %v5010 = vadd.f32 %v4960, %v4798
        %v5011 = vadd.f32 %v4964, %v4795
        %v5012 = vadd.f32 %v4964, %v4798
        %v5013 = vld [vmem:[#allocation52] sm:$0x1]
        %v5015 = vlaneseq
        %v5016 = vshrl.u32 %v5015, 7
        %v5017 = vsub.s32 0, %v5016
        %v5018 = vrot.slane %v5013, %v5017
        %v5020 = vadd.f32 %v4981, %v5018
        %v5021 = vadd.f32 %v4982, %v5018
        %v5022 = vadd.f32 %v4983, %v5018
        %v5023 = vadd.f32 %v4984, %v5018
        %v5024 = vadd.f32 %v4985, %v5018
        %v5025 = vadd.f32 %v4986, %v5018
        %v5026 = vadd.f32 %v4987, %v5018
        %v5027 = vadd.f32 %v4988, %v5018
        %v5028 = vadd.f32 %v4989, %v5018
        %v5029 = vadd.f32 %v4990, %v5018
        %v5030 = vadd.f32 %v4991, %v5018
        %v5031 = vadd.f32 %v4992, %v5018
        %v5032 = vadd.f32 %v4993, %v5018
        %v5033 = vadd.f32 %v4994, %v5018
        %v5034 = vadd.f32 %v4995, %v5018
        %v5035 = vadd.f32 %v4996, %v5018
        %v5036 = vadd.f32 %v4997, %v5018
        %v5037 = vadd.f32 %v4998, %v5018
        %v5038 = vadd.f32 %v4999, %v5018
        %v5039 = vadd.f32 %v5000, %v5018
        %v5040 = vadd.f32 %v5001, %v5018
        %v5041 = vadd.f32 %v5002, %v5018
        %v5042 = vadd.f32 %v5003, %v5018
        %v5043 = vadd.f32 %v5004, %v5018
        %v5044 = vadd.f32 %v5005, %v5018
        %v5045 = vadd.f32 %v5006, %v5018
        %v5046 = vadd.f32 %v5007, %v5018
        %v5047 = vadd.f32 %v5008, %v5018
        %v5048 = vadd.f32 %v5009, %v5018
        %v5049 = vadd.f32 %v5010, %v5018
        %v5050 = vadd.f32 %v5011, %v5018
        %v5051 = vadd.f32 %v5012, %v5018
        %v5052 = vmax.f32 %v5020, 0.0
        %v5053 = vmax.f32 %v5021, 0.0
        %v5054 = vmax.f32 %v5022, 0.0
        %v5055 = vmax.f32 %v5023, 0.0
        %v5056 = vmax.f32 %v5024, 0.0
        %v5057 = vmax.f32 %v5025, 0.0
        %v5058 = vmax.f32 %v5026, 0.0
        %v5059 = vmax.f32 %v5027, 0.0
        %v5060 = vmax.f32 %v5028, 0.0
        %v5061 = vmax.f32 %v5029, 0.0
        %v5062 = vmax.f32 %v5030, 0.0
        %v5063 = vmax.f32 %v5031, 0.0
        %v5064 = vmax.f32 %v5032, 0.0
        %v5065 = vmax.f32 %v5033, 0.0
        %v5066 = vmax.f32 %v5034, 0.0
        %v5067 = vmax.f32 %v5035, 0.0
        %v5068 = vmax.f32 %v5036, 0.0
        %v5069 = vmax.f32 %v5037, 0.0
        %v5070 = vmax.f32 %v5038, 0.0
        %v5071 = vmax.f32 %v5039, 0.0
        %v5072 = vmax.f32 %v5040, 0.0
        %v5073 = vmax.f32 %v5041, 0.0
        %v5074 = vmax.f32 %v5042, 0.0
        %v5075 = vmax.f32 %v5043, 0.0
        %v5076 = vmax.f32 %v5044, 0.0
        %v5077 = vmax.f32 %v5045, 0.0
        %v5078 = vmax.f32 %v5046, 0.0
        %v5079 = vmax.f32 %v5047, 0.0
        %v5080 = vmax.f32 %v5048, 0.0
        %v5081 = vmax.f32 %v5049, 0.0
        %v5082 = vmax.f32 %v5050, 0.0
        %v5083 = vmax.f32 %v5051, 0.0
        %v5084 = vpack.c.bf16 %v5053, %v5052
        %v5085 = vpack.c.bf16 %v5055, %v5054
        %v5086 = vpack.c.bf16 %v5057, %v5056
        %v5087 = vpack.c.bf16 %v5059, %v5058
        %v5088 = vpack.c.bf16 %v5061, %v5060
        %v5089 = vpack.c.bf16 %v5063, %v5062
        %v5090 = vpack.c.bf16 %v5065, %v5064
        %v5091 = vpack.c.bf16 %v5067, %v5066
        %v5092 = vpack.c.bf16 %v5069, %v5068
        %v5093 = vpack.c.bf16 %v5071, %v5070
        %v5094 = vpack.c.bf16 %v5073, %v5072
        %v5095 = vpack.c.bf16 %v5075, %v5074
        %v5096 = vpack.c.bf16 %v5077, %v5076
        %v5097 = vpack.c.bf16 %v5079, %v5078
        %v5098 = vpack.c.bf16 %v5081, %v5080
        %v5099 = vpack.c.bf16 %v5083, %v5082
        %v5100 = vld [vmem:[#allocation53] sm:$0xf]
        %v5101 = vld [vmem:[#allocation53 + $0x4] sm:$0xf]
        %v5102 = vld [vmem:[#allocation53 + $0x8] sm:$0xf]
        %v5103 = vld [vmem:[#allocation53 + $0xc] sm:$0xf]
        %v5104 = vld [vmem:[#allocation55] sm:$0x1]
        %v5106 = vlaneseq
        %v5107 = vshrl.u32 %v5106, 7
        %v5108 = vsub.s32 0, %v5107
        %v5109 = vrot.slane %v5104, %v5108
        %v5115 = vunpack.c.l.b16 %v5100
        %v5116 = vunpack.c.l.b16 %v5101
        %v5117 = vunpack.c.l.b16 %v5102
        %v5118 = vunpack.c.l.b16 %v5103
        %v5119 = vpack.c.b16 %v5116, %v5115
        %v5120 = vpack.c.b16 %v5118, %v5117
        %v5124 = vsel %vm2092, %v5084, 0
        %v5127 = vsel %vm2092, %v5085, 0
        %v5130 = vsel %vm2092, %v5086, 0
        %v5133 = vsel %vm2092, %v5087, 0
        %v5136 = vsel %vm2092, %v5088, 0
        %v5139 = vsel %vm2092, %v5089, 0
        %v5142 = vsel %vm2092, %v5090, 0
        %v5145 = vsel %vm2092, %v5091, 0
        %v5148 = vsel %vm2092, %v5092, 0
        %v5151 = vsel %vm2092, %v5093, 0
        %v5154 = vsel %vm2092, %v5094, 0
        %v5157 = vsel %vm2092, %v5095, 0
        %v5160 = vsel %vm2092, %v5096, 0
        %v5163 = vsel %vm2092, %v5097, 0
        %v5166 = vsel %vm2092, %v5098, 0
        %v5169 = vsel %vm2092, %v5099, 0
        %5171 = vmatprep.subr.bf16.mxu0 0
        %5172 = vmatpush1.bf16.msra.mxu0 %v5119
        %5173 = vmatprep.subr.bf16.mxu0 0
        %5174 = vmatpush1.bf16.msra.mxu0 %v5120
        %5175 = vmatprep.subr.bf16.mxu0 0
        %5176 = vmatpush1.bf16.msra.mxu0 0
        %5177 = vmatprep.subr.bf16.mxu0 0
        %5178 = vmatpush1.bf16.msra.mxu0 0
        %5179 = vmatprep.subr.bf16.mxu0 0
        %5180 = vmatpush1.bf16.msra.mxu0 0
        %5181 = vmatprep.subr.bf16.mxu0 0
        %5182 = vmatpush1.bf16.msra.mxu0 0
        %5183 = vmatprep.subr.bf16.mxu0 0
        %5184 = vmatpush1.bf16.msra.mxu0 0
        %5185 = vmatprep.subr.bf16.mxu0 0
        %5186 = vmatpush1.bf16.msra.mxu0 0
        %5187 = vmatprep.subr.bf16.mxu0 0
        %5188 = vmatpush1.bf16.msra.mxu0 0
        %5189 = vmatprep.subr.bf16.mxu0 0
        %5190 = vmatpush1.bf16.msra.mxu0 0
        %5191 = vmatprep.subr.bf16.mxu0 0
        %5192 = vmatpush1.bf16.msra.mxu0 0
        %5193 = vmatprep.subr.bf16.mxu0 0
        %5194 = vmatpush1.bf16.msra.mxu0 0
        %5195 = vmatprep.subr.bf16.mxu0 0
        %5196 = vmatpush1.bf16.msra.mxu0 0
        %5197 = vmatprep.subr.bf16.mxu0 0
        %5198 = vmatpush1.bf16.msra.mxu0 0
        %5199 = vmatprep.subr.bf16.mxu0 0
        %5200 = vmatpush1.bf16.msra.mxu0 0
        %5201 = vmatprep.subr.bf16.mxu0 0
        %5202 = vmatpush1.bf16.msra.mxu0 0
        %5203 = vmatprep.mubr.bf16.mxu0 0
        %5204 = vmatmul.mubr.bf16.gmra.mrb[0].mxu0 %v5124
        %v5205 = vpop.f32.mrb[0].mxu0
        %v5206 = vadd.f32 %v5109, %v5205
        %v5207 = vpop.f32.mrb[0].mxu0
        %v5208 = vpop.f32.mrb[0].mxu0
        %v5209 = vadd.f32 %v5109, %v5208
        %v5210 = vpop.f32.mrb[0].mxu0
        %5211 = vmatprep.mubr.bf16.mxu0 0
        %5212 = vmatmul.mubr.bf16.gmra.mrb[0].mxu0 %v5127
        %v5213 = vpop.f32.mrb[0].mxu0
        %v5214 = vadd.f32 %v5109, %v5213
        %v5215 = vpop.f32.mrb[0].mxu0
        %v5216 = vpop.f32.mrb[0].mxu0
        %v5217 = vadd.f32 %v5109, %v5216
        %v5218 = vpop.f32.mrb[0].mxu0
        %5219 = vmatprep.mubr.bf16.mxu0 0
        %5220 = vmatmul.mubr.bf16.gmra.mrb[0].mxu0 %v5130
        %v5221 = vpop.f32.mrb[0].mxu0
        %v5222 = vadd.f32 %v5109, %v5221
        %v5223 = vpop.f32.mrb[0].mxu0
        %v5224 = vpop.f32.mrb[0].mxu0
        %v5225 = vadd.f32 %v5109, %v5224
        %v5226 = vpop.f32.mrb[0].mxu0
        %5227 = vmatprep.mubr.bf16.mxu0 0
        %5228 = vmatmul.mubr.bf16.gmra.mrb[0].mxu0 %v5133
        %v5229 = vpop.f32.mrb[0].mxu0
        %v5230 = vadd.f32 %v5109, %v5229
        %v5231 = vpop.f32.mrb[0].mxu0
        %v5232 = vpop.f32.mrb[0].mxu0
        %v5233 = vadd.f32 %v5109, %v5232
        %v5234 = vpop.f32.mrb[0].mxu0
        %5235 = vmatprep.mubr.bf16.mxu0 0
        %5236 = vmatmul.mubr.bf16.gmra.mrb[0].mxu0 %v5136
        %v5237 = vpop.f32.mrb[0].mxu0
        %v5238 = vadd.f32 %v5109, %v5237
        %v5239 = vpop.f32.mrb[0].mxu0
        %v5240 = vpop.f32.mrb[0].mxu0
        %v5241 = vadd.f32 %v5109, %v5240
        %v5242 = vpop.f32.mrb[0].mxu0
        %5243 = vmatprep.mubr.bf16.mxu0 0
        %5244 = vmatmul.mubr.bf16.gmra.mrb[0].mxu0 %v5139
        %v5245 = vpop.f32.mrb[0].mxu0
        %v5246 = vadd.f32 %v5109, %v5245
        %v5247 = vpop.f32.mrb[0].mxu0
        %v5248 = vpop.f32.mrb[0].mxu0
        %v5249 = vadd.f32 %v5109, %v5248
        %v5250 = vpop.f32.mrb[0].mxu0
        %5251 = vmatprep.mubr.bf16.mxu0 0
        %5252 = vmatmul.mubr.bf16.gmra.mrb[0].mxu0 %v5142
        %v5253 = vpop.f32.mrb[0].mxu0
        %v5254 = vadd.f32 %v5109, %v5253
        %v5255 = vpop.f32.mrb[0].mxu0
        %v5256 = vpop.f32.mrb[0].mxu0
        %v5257 = vadd.f32 %v5109, %v5256
        %v5258 = vpop.f32.mrb[0].mxu0
        %5259 = vmatprep.mubr.bf16.mxu0 0
        %5260 = vmatmul.mubr.bf16.gmra.mrb[0].mxu0 %v5145
        %v5261 = vpop.f32.mrb[0].mxu0
        %v5262 = vadd.f32 %v5109, %v5261
        %v5263 = vpop.f32.mrb[0].mxu0
        %v5264 = vpop.f32.mrb[0].mxu0
        %v5265 = vadd.f32 %v5109, %v5264
        %v5266 = vpop.f32.mrb[0].mxu0
        %5267 = vmatprep.mubr.bf16.mxu0 0
        %5268 = vmatmul.mubr.bf16.gmra.mrb[0].mxu0 %v5148
        %v5269 = vpop.f32.mrb[0].mxu0
        %v5270 = vadd.f32 %v5109, %v5269
        %v5271 = vpop.f32.mrb[0].mxu0
        %v5272 = vpop.f32.mrb[0].mxu0
        %v5273 = vadd.f32 %v5109, %v5272
        %v5274 = vpop.f32.mrb[0].mxu0
        %5275 = vmatprep.mubr.bf16.mxu0 0
        %5276 = vmatmul.mubr.bf16.gmra.mrb[0].mxu0 %v5151
        %v5277 = vpop.f32.mrb[0].mxu0
        %v5278 = vadd.f32 %v5109, %v5277
        %v5279 = vpop.f32.mrb[0].mxu0
        %v5280 = vpop.f32.mrb[0].mxu0
        %v5281 = vadd.f32 %v5109, %v5280
        %v5282 = vpop.f32.mrb[0].mxu0
        %5283 = vmatprep.mubr.bf16.mxu0 0
        %5284 = vmatmul.mubr.bf16.gmra.mrb[0].mxu0 %v5154
        %v5285 = vpop.f32.mrb[0].mxu0
        %v5286 = vadd.f32 %v5109, %v5285
        %v5287 = vpop.f32.mrb[0].mxu0
        %v5288 = vpop.f32.mrb[0].mxu0
        %v5289 = vadd.f32 %v5109, %v5288
        %v5290 = vpop.f32.mrb[0].mxu0
        %5291 = vmatprep.mubr.bf16.mxu0 0
        %5292 = vmatmul.mubr.bf16.gmra.mrb[0].mxu0 %v5157
        %v5293 = vpop.f32.mrb[0].mxu0
        %v5294 = vadd.f32 %v5109, %v5293
        %v5295 = vpop.f32.mrb[0].mxu0
        %v5296 = vpop.f32.mrb[0].mxu0
        %v5297 = vadd.f32 %v5109, %v5296
        %v5298 = vpop.f32.mrb[0].mxu0
        %5299 = vmatprep.mubr.bf16.mxu0 0
        %5300 = vmatmul.mubr.bf16.gmra.mrb[0].mxu0 %v5160
        %v5301 = vpop.f32.mrb[0].mxu0
        %v5302 = vadd.f32 %v5109, %v5301
        %v5303 = vpop.f32.mrb[0].mxu0
        %v5304 = vpop.f32.mrb[0].mxu0
        %v5305 = vadd.f32 %v5109, %v5304
        %v5306 = vpop.f32.mrb[0].mxu0
        %5307 = vmatprep.mubr.bf16.mxu0 0
        %5308 = vmatmul.mubr.bf16.gmra.mrb[0].mxu0 %v5163
        %v5309 = vpop.f32.mrb[0].mxu0
        %v5310 = vadd.f32 %v5109, %v5309
        %v5311 = vpop.f32.mrb[0].mxu0
        %v5312 = vpop.f32.mrb[0].mxu0
        %v5313 = vadd.f32 %v5109, %v5312
        %v5314 = vpop.f32.mrb[0].mxu0
        %5315 = vmatprep.mubr.bf16.mxu0 0
        %5316 = vmatmul.mubr.bf16.gmra.mrb[0].mxu0 %v5166
        %v5317 = vpop.f32.mrb[0].mxu0
        %v5318 = vadd.f32 %v5109, %v5317
        %v5319 = vpop.f32.mrb[0].mxu0
        %v5320 = vpop.f32.mrb[0].mxu0
        %v5321 = vadd.f32 %v5109, %v5320
        %v5322 = vpop.f32.mrb[0].mxu0
        %5323 = vmatprep.mubr.bf16.mxu0 0
        %5324 = vmatmul.mubr.bf16.gmra.mrb[0].mxu0 %v5169
        %v5325 = vpop.f32.mrb[0].mxu0
        %v5326 = vadd.f32 %v5109, %v5325
        %v5327 = vpop.f32.mrb[0].mxu0
        %v5328 = vpop.f32.mrb[0].mxu0
        %v5329 = vadd.f32 %v5109, %v5328
        %v5330 = vpop.f32.mrb[0].mxu0
        %5331 = vdwg.mxu0
        %v5332 = vmax.f32 %v5206, 0.0
        %v5333 = vmax.f32 %v5209, 0.0
        %v5334 = vmax.f32 %v5214, 0.0
        %v5335 = vmax.f32 %v5217, 0.0
        %v5336 = vmax.f32 %v5222, 0.0
        %v5337 = vmax.f32 %v5225, 0.0
        %v5338 = vmax.f32 %v5230, 0.0
        %v5339 = vmax.f32 %v5233, 0.0
        %v5340 = vmax.f32 %v5238, 0.0
        %v5341 = vmax.f32 %v5241, 0.0
        %v5342 = vmax.f32 %v5246, 0.0
        %v5343 = vmax.f32 %v5249, 0.0
        %v5344 = vmax.f32 %v5254, 0.0
        %v5345 = vmax.f32 %v5257, 0.0
        %v5346 = vmax.f32 %v5262, 0.0
        %v5347 = vmax.f32 %v5265, 0.0
        %v5348 = vmax.f32 %v5270, 0.0
        %v5349 = vmax.f32 %v5273, 0.0
        %v5350 = vmax.f32 %v5278, 0.0
        %v5351 = vmax.f32 %v5281, 0.0
        %v5352 = vmax.f32 %v5286, 0.0
        %v5353 = vmax.f32 %v5289, 0.0
        %v5354 = vmax.f32 %v5294, 0.0
        %v5355 = vmax.f32 %v5297, 0.0
        %v5356 = vmax.f32 %v5302, 0.0
        %v5357 = vmax.f32 %v5305, 0.0
        %v5358 = vmax.f32 %v5310, 0.0
        %v5359 = vmax.f32 %v5313, 0.0
        %v5360 = vmax.f32 %v5318, 0.0
        %v5361 = vmax.f32 %v5321, 0.0
        %v5362 = vmax.f32 %v5326, 0.0
        %v5363 = vmax.f32 %v5329, 0.0
        %v5364 = vld [vmem:[#allocation56] sm:$0x3]
        %v5365 = vld [vmem:[#allocation58] sm:$0x1]
        %v5366 = vlaneseq
        %v5367 = vshrl.u32 %v5366, 7
        %v5368 = vsub.s32 0, %v5367
        %v5369 = vrot.slane %v5364, %v5368
        %v5370 = vmul.f32 %v5332, %v5369
        %v5371 = vmul.f32 %v5333, %v5369
        %v5372 = vmul.f32 %v5334, %v5369
        %v5373 = vmul.f32 %v5335, %v5369
        %v5374 = vmul.f32 %v5336, %v5369
        %v5375 = vmul.f32 %v5337, %v5369
        %v5376 = vmul.f32 %v5338, %v5369
        %v5377 = vmul.f32 %v5339, %v5369
        %v5378 = vmul.f32 %v5340, %v5369
        %v5379 = vmul.f32 %v5341, %v5369
        %v5380 = vmul.f32 %v5342, %v5369
        %v5381 = vmul.f32 %v5343, %v5369
        %v5382 = vmul.f32 %v5344, %v5369
        %v5383 = vmul.f32 %v5345, %v5369
        %v5384 = vmul.f32 %v5346, %v5369
        %v5385 = vmul.f32 %v5347, %v5369
        %v5386 = vmul.f32 %v5348, %v5369
        %v5387 = vmul.f32 %v5349, %v5369
        %v5388 = vmul.f32 %v5350, %v5369
        %v5389 = vmul.f32 %v5351, %v5369
        %v5390 = vmul.f32 %v5352, %v5369
        %v5391 = vmul.f32 %v5353, %v5369
        %v5392 = vmul.f32 %v5354, %v5369
        %v5393 = vmul.f32 %v5355, %v5369
        %v5394 = vmul.f32 %v5356, %v5369
        %v5395 = vmul.f32 %v5357, %v5369
        %v5396 = vmul.f32 %v5358, %v5369
        %v5397 = vmul.f32 %v5359, %v5369
        %v5398 = vmul.f32 %v5360, %v5369
        %v5399 = vmul.f32 %v5361, %v5369
        %v5400 = vmul.f32 %v5362, %v5369
        %v5401 = vmul.f32 %v5363, %v5369
        %vm5402 = vcmask 130048
        %v5403 = vsel %vm5402, %v5370, 0.0
        %5404 = vadd.xlane.f32.xlu0 %v5403
        %v5405 = vpop.xlane.xlu0 %5404
        %v5406 = vsel %vm5402, %v5371, 0.0
        %5407 = vadd.xlane.f32.xlu0 %v5406
        %v5408 = vpop.xlane.xlu0 %5407
        %v5409 = vsel %vm5402, %v5372, 0.0
        %5410 = vadd.xlane.f32.xlu0 %v5409
        %v5411 = vpop.xlane.xlu0 %5410
        %v5412 = vsel %vm5402, %v5373, 0.0
        %5413 = vadd.xlane.f32.xlu0 %v5412
        %v5414 = vpop.xlane.xlu0 %5413
        %v5415 = vsel %vm5402, %v5374, 0.0
        %5416 = vadd.xlane.f32.xlu0 %v5415
        %v5417 = vpop.xlane.xlu0 %5416
        %v5418 = vsel %vm5402, %v5375, 0.0
        %5419 = vadd.xlane.f32.xlu0 %v5418
        %v5420 = vpop.xlane.xlu0 %5419
        %v5421 = vsel %vm5402, %v5376, 0.0
        %5422 = vadd.xlane.f32.xlu0 %v5421
        %v5423 = vpop.xlane.xlu0 %5422
        %v5424 = vsel %vm5402, %v5377, 0.0
        %5425 = vadd.xlane.f32.xlu0 %v5424
        %v5426 = vpop.xlane.xlu0 %5425
        %v5427 = vsel %vm5402, %v5378, 0.0
        %5428 = vadd.xlane.f32.xlu0 %v5427
        %v5429 = vpop.xlane.xlu0 %5428
        %v5430 = vsel %vm5402, %v5379, 0.0
        %5431 = vadd.xlane.f32.xlu0 %v5430
        %v5432 = vpop.xlane.xlu0 %5431
        %v5433 = vsel %vm5402, %v5380, 0.0
        %5434 = vadd.xlane.f32.xlu0 %v5433
        %v5435 = vpop.xlane.xlu0 %5434
        %v5436 = vsel %vm5402, %v5381, 0.0
        %5437 = vadd.xlane.f32.xlu0 %v5436
        %v5438 = vpop.xlane.xlu0 %5437
        %v5439 = vsel %vm5402, %v5382, 0.0
        %5440 = vadd.xlane.f32.xlu0 %v5439
        %v5441 = vpop.xlane.xlu0 %5440
        %v5442 = vsel %vm5402, %v5383, 0.0
        %5443 = vadd.xlane.f32.xlu0 %v5442
        %v5444 = vpop.xlane.xlu0 %5443
        %v5445 = vsel %vm5402, %v5384, 0.0
        %5446 = vadd.xlane.f32.xlu0 %v5445
        %v5447 = vpop.xlane.xlu0 %5446
        %v5448 = vsel %vm5402, %v5385, 0.0
        %5449 = vadd.xlane.f32.xlu0 %v5448
        %v5450 = vpop.xlane.xlu0 %5449
        %v5451 = vsel %vm5402, %v5386, 0.0
        %5452 = vadd.xlane.f32.xlu0 %v5451
        %v5453 = vpop.xlane.xlu0 %5452
        %v5454 = vsel %vm5402, %v5387, 0.0
        %5455 = vadd.xlane.f32.xlu0 %v5454
        %v5456 = vpop.xlane.xlu0 %5455
        %v5457 = vsel %vm5402, %v5388, 0.0
        %5458 = vadd.xlane.f32.xlu0 %v5457
        %v5459 = vpop.xlane.xlu0 %5458
        %v5460 = vsel %vm5402, %v5389, 0.0
        %5461 = vadd.xlane.f32.xlu0 %v5460
        %v5462 = vpop.xlane.xlu0 %5461
        %v5463 = vsel %vm5402, %v5390, 0.0
        %5464 = vadd.xlane.f32.xlu0 %v5463
        %v5465 = vpop.xlane.xlu0 %5464
        %v5466 = vsel %vm5402, %v5391, 0.0
        %5467 = vadd.xlane.f32.xlu0 %v5466
        %v5468 = vpop.xlane.xlu0 %5467
        %v5469 = vsel %vm5402, %v5392, 0.0
        %5470 = vadd.xlane.f32.xlu0 %v5469
        %v5471 = vpop.xlane.xlu0 %5470
        %v5472 = vsel %vm5402, %v5393, 0.0
        %5473 = vadd.xlane.f32.xlu0 %v5472
        %v5474 = vpop.xlane.xlu0 %5473
        %v5475 = vsel %vm5402, %v5394, 0.0
        %5476 = vadd.xlane.f32.xlu0 %v5475
        %v5477 = vpop.xlane.xlu0 %5476
        %v5478 = vsel %vm5402, %v5395, 0.0
        %5479 = vadd.xlane.f32.xlu0 %v5478
        %v5480 = vpop.xlane.xlu0 %5479
        %v5481 = vsel %vm5402, %v5396, 0.0
        %5482 = vadd.xlane.f32.xlu0 %v5481
        %v5483 = vpop.xlane.xlu0 %5482
        %v5484 = vsel %vm5402, %v5397, 0.0
        %5485 = vadd.xlane.f32.xlu0 %v5484
        %v5486 = vpop.xlane.xlu0 %5485
        %v5487 = vsel %vm5402, %v5398, 0.0
        %5488 = vadd.xlane.f32.xlu0 %v5487
        %v5489 = vpop.xlane.xlu0 %5488
        %v5490 = vsel %vm5402, %v5399, 0.0
        %5491 = vadd.xlane.f32.xlu0 %v5490
        %v5492 = vpop.xlane.xlu0 %5491
        %v5493 = vsel %vm5402, %v5400, 0.0
        %5494 = vadd.xlane.f32.xlu0 %v5493
        %v5495 = vpop.xlane.xlu0 %5494
        %v5496 = vsel %vm5402, %v5401, 0.0
        %5497 = vadd.xlane.f32.xlu0 %v5496
        %v5498 = vpop.xlane.xlu0 %5497
        %v5500 = vlaneseq
        %v5501 = vshrl.u32 %v5500, 7
        %v5502 = vsub.s32 0, %v5501
        %v5503 = vrot.slane %v5365, %v5502
        %5504 = vset.pattern.permute.xlu0 0
        %5505 = vperm.xlu0 %5504, %v5503
        %v5506 = vpop.permute.xlu0 %5505
        %v5508 = vadd.f32 %v5405, %v5506
        %v5509 = vadd.f32 %v5408, %v5506
        %v5510 = vadd.f32 %v5411, %v5506
        %v5511 = vadd.f32 %v5414, %v5506
        %v5512 = vadd.f32 %v5417, %v5506
        %v5513 = vadd.f32 %v5420, %v5506
        %v5514 = vadd.f32 %v5423, %v5506
        %v5515 = vadd.f32 %v5426, %v5506
        %v5516 = vadd.f32 %v5429, %v5506
        %v5517 = vadd.f32 %v5432, %v5506
        %v5518 = vadd.f32 %v5435, %v5506
        %v5519 = vadd.f32 %v5438, %v5506
        %v5520 = vadd.f32 %v5441, %v5506
        %v5521 = vadd.f32 %v5444, %v5506
        %v5522 = vadd.f32 %v5447, %v5506
        %v5523 = vadd.f32 %v5450, %v5506
        %v5524 = vadd.f32 %v5453, %v5506
        %v5525 = vadd.f32 %v5456, %v5506
        %v5526 = vadd.f32 %v5459, %v5506
        %v5527 = vadd.f32 %v5462, %v5506
        %v5528 = vadd.f32 %v5465, %v5506
        %v5529 = vadd.f32 %v5468, %v5506
        %v5530 = vadd.f32 %v5471, %v5506
        %v5531 = vadd.f32 %v5474, %v5506
        %v5532 = vadd.f32 %v5477, %v5506
        %v5533 = vadd.f32 %v5480, %v5506
        %v5534 = vadd.f32 %v5483, %v5506
        %v5535 = vadd.f32 %v5486, %v5506
        %v5536 = vadd.f32 %v5489, %v5506
        %v5537 = vadd.f32 %v5492, %v5506
        %v5538 = vadd.f32 %v5495, %v5506
        %v5539 = vadd.f32 %v5498, %v5506
        %v5572 = vlaneseq
        %v5573 = vand.u32 %v5572, 127
        %v5574 = vlaneseq
        %v5575 = vshrl.u32 %v5574, 7
        %v5576 = vsub.s32 %v5573, %v5575
        %v5577 = vrot.slane %v5508, %v5576
        %v5578 = vadd.s32 %v5573, 4294967288
        %v5579 = vlaneseq
        %v5580 = vshrl.u32 %v5579, 7
        %v5581 = vsub.s32 %v5578, %v5580
        %v5582 = vrot.slane %v5509, %v5581
        %vm5583 = vcmask 130112
        %v5584 = vsel %vm5583, %v5582, %v5577
        %v5585 = vlaneseq
        %v5586 = vshrl.u32 %v5585, 7
        %v5587 = vsub.s32 %v5573, %v5586
        %v5588 = vrot.slane %v5510, %v5587
        %v5589 = vlaneseq
        %v5590 = vshrl.u32 %v5589, 7
        %v5591 = vsub.s32 %v5578, %v5590
        %v5592 = vrot.slane %v5511, %v5591
        %v5593 = vsel %vm5583, %v5592, %v5588
        %v5594 = vlaneseq
        %v5595 = vshrl.u32 %v5594, 7
        %v5596 = vsub.s32 %v5573, %v5595
        %v5597 = vrot.slane %v5512, %v5596
        %v5598 = vlaneseq
        %v5599 = vshrl.u32 %v5598, 7
        %v5600 = vsub.s32 %v5578, %v5599
        %v5601 = vrot.slane %v5513, %v5600
        %v5602 = vsel %vm5583, %v5601, %v5597
        %v5603 = vlaneseq
        %v5604 = vshrl.u32 %v5603, 7
        %v5605 = vsub.s32 %v5573, %v5604
        %v5606 = vrot.slane %v5514, %v5605
        %v5607 = vlaneseq
        %v5608 = vshrl.u32 %v5607, 7
        %v5609 = vsub.s32 %v5578, %v5608
        %v5610 = vrot.slane %v5515, %v5609
        %v5611 = vsel %vm5583, %v5610, %v5606
        %v5612 = vlaneseq
        %v5613 = vshrl.u32 %v5612, 7
        %v5614 = vsub.s32 %v5573, %v5613
        %v5615 = vrot.slane %v5516, %v5614
        %v5616 = vlaneseq
        %v5617 = vshrl.u32 %v5616, 7
        %v5618 = vsub.s32 %v5578, %v5617
        %v5619 = vrot.slane %v5517, %v5618
        %v5620 = vsel %vm5583, %v5619, %v5615
        %v5621 = vlaneseq
        %v5622 = vshrl.u32 %v5621, 7
        %v5623 = vsub.s32 %v5573, %v5622
        %v5624 = vrot.slane %v5518, %v5623
        %v5625 = vlaneseq
        %v5626 = vshrl.u32 %v5625, 7
        %v5627 = vsub.s32 %v5578, %v5626
        %v5628 = vrot.slane %v5519, %v5627
        %v5629 = vsel %vm5583, %v5628, %v5624
        %v5630 = vlaneseq
        %v5631 = vshrl.u32 %v5630, 7
        %v5632 = vsub.s32 %v5573, %v5631
        %v5633 = vrot.slane %v5520, %v5632
        %v5634 = vlaneseq
        %v5635 = vshrl.u32 %v5634, 7
        %v5636 = vsub.s32 %v5578, %v5635
        %v5637 = vrot.slane %v5521, %v5636
        %v5638 = vsel %vm5583, %v5637, %v5633
        %v5639 = vlaneseq
        %v5640 = vshrl.u32 %v5639, 7
        %v5641 = vsub.s32 %v5573, %v5640
        %v5642 = vrot.slane %v5522, %v5641
        %v5643 = vlaneseq
        %v5644 = vshrl.u32 %v5643, 7
        %v5645 = vsub.s32 %v5578, %v5644
        %v5646 = vrot.slane %v5523, %v5645
        %v5647 = vsel %vm5583, %v5646, %v5642
        %v5648 = vlaneseq
        %v5649 = vshrl.u32 %v5648, 7
        %v5650 = vsub.s32 %v5573, %v5649
        %v5651 = vrot.slane %v5524, %v5650
        %v5652 = vlaneseq
        %v5653 = vshrl.u32 %v5652, 7
        %v5654 = vsub.s32 %v5578, %v5653
        %v5655 = vrot.slane %v5525, %v5654
        %v5656 = vsel %vm5583, %v5655, %v5651
        %v5657 = vlaneseq
        %v5658 = vshrl.u32 %v5657, 7
        %v5659 = vsub.s32 %v5573, %v5658
        %v5660 = vrot.slane %v5526, %v5659
        %v5661 = vlaneseq
        %v5662 = vshrl.u32 %v5661, 7
        %v5663 = vsub.s32 %v5578, %v5662
        %v5664 = vrot.slane %v5527, %v5663
        %v5665 = vsel %vm5583, %v5664, %v5660
        %v5666 = vlaneseq
        %v5667 = vshrl.u32 %v5666, 7
        %v5668 = vsub.s32 %v5573, %v5667
        %v5669 = vrot.slane %v5528, %v5668
        %v5670 = vlaneseq
        %v5671 = vshrl.u32 %v5670, 7
        %v5672 = vsub.s32 %v5578, %v5671
        %v5673 = vrot.slane %v5529, %v5672
        %v5674 = vsel %vm5583, %v5673, %v5669
        %v5675 = vlaneseq
        %v5676 = vshrl.u32 %v5675, 7
        %v5677 = vsub.s32 %v5573, %v5676
        %v5678 = vrot.slane %v5530, %v5677
        %v5679 = vlaneseq
        %v5680 = vshrl.u32 %v5679, 7
        %v5681 = vsub.s32 %v5578, %v5680
        %v5682 = vrot.slane %v5531, %v5681
        %v5683 = vsel %vm5583, %v5682, %v5678
        %v5684 = vlaneseq
        %v5685 = vshrl.u32 %v5684, 7
        %v5686 = vsub.s32 %v5573, %v5685
        %v5687 = vrot.slane %v5532, %v5686
        %v5688 = vlaneseq
        %v5689 = vshrl.u32 %v5688, 7
        %v5690 = vsub.s32 %v5578, %v5689
        %v5691 = vrot.slane %v5533, %v5690
        %v5692 = vsel %vm5583, %v5691, %v5687
        %v5693 = vlaneseq
        %v5694 = vshrl.u32 %v5693, 7
        %v5695 = vsub.s32 %v5573, %v5694
        %v5696 = vrot.slane %v5534, %v5695
        %v5697 = vlaneseq
        %v5698 = vshrl.u32 %v5697, 7
        %v5699 = vsub.s32 %v5578, %v5698
        %v5700 = vrot.slane %v5535, %v5699
        %v5701 = vsel %vm5583, %v5700, %v5696
        %v5702 = vlaneseq
        %v5703 = vshrl.u32 %v5702, 7
        %v5704 = vsub.s32 %v5573, %v5703
        %v5705 = vrot.slane %v5536, %v5704
        %v5706 = vlaneseq
        %v5707 = vshrl.u32 %v5706, 7
        %v5708 = vsub.s32 %v5578, %v5707
        %v5709 = vrot.slane %v5537, %v5708
        %v5710 = vsel %vm5583, %v5709, %v5705
        %v5711 = vlaneseq
        %v5712 = vshrl.u32 %v5711, 7
        %v5713 = vsub.s32 %v5573, %v5712
        %v5714 = vrot.slane %v5538, %v5713
        %v5715 = vlaneseq
        %v5716 = vshrl.u32 %v5715, 7
        %v5717 = vsub.s32 %v5578, %v5716
        %v5718 = vrot.slane %v5539, %v5717
        %v5719 = vsel %vm5583, %v5718, %v5714
        %vm5720 = vcmask 1041409
        %v5721 = vsel %vm5720, %v5593, %v5584
        %vm5722 = vcmask 1042434
        %v5723 = vsel %vm5722, %v5602, %v5721
        %vm5724 = vcmask 1043459
        %v5725 = vsel %vm5724, %v5611, %v5723
        %vm5726 = vcmask 1044484
        %v5727 = vsel %vm5726, %v5620, %v5725
        %vm5728 = vcmask 1045509
        %v5729 = vsel %vm5728, %v5629, %v5727
        %vm5730 = vcmask 1046534
        %v5731 = vsel %vm5730, %v5638, %v5729
        %vm5732 = vcmask 1047559
        %v5733 = vsel %vm5732, %v5647, %v5731
        %v5734 = vsel %vm5720, %v5665, %v5656
        %v5735 = vsel %vm5722, %v5674, %v5734
        %v5736 = vsel %vm5724, %v5683, %v5735
        %v5737 = vsel %vm5726, %v5692, %v5736
        %v5738 = vsel %vm5728, %v5701, %v5737
        %v5739 = vsel %vm5730, %v5710, %v5738
        %v5740 = vsel %vm5732, %v5719, %v5739
        %5743 = vst.msk [vmem:[%s1635] sm:$0xff] %vm5402, %v5733
        %5744 = vst.msk [vmem:[%s1635 + $0x8] sm:$0xff] %vm5402, %v5740
        %v5745 = vlaneseq
        %v5746 = vshrl.u32 %v5745, 7
        %v5747 = vsub.s32 1, %v5746
        %v5748 = vrot.slane %v5364, %v5747
        %v5749 = vmul.f32 %v5332, %v5748
        %v5750 = vmul.f32 %v5333, %v5748
        %v5751 = vmul.f32 %v5334, %v5748
        %v5752 = vmul.f32 %v5335, %v5748
        %v5753 = vmul.f32 %v5336, %v5748
        %v5754 = vmul.f32 %v5337, %v5748
        %v5755 = vmul.f32 %v5338, %v5748
        %v5756 = vmul.f32 %v5339, %v5748
        %v5757 = vmul.f32 %v5340, %v5748
        %v5758 = vmul.f32 %v5341, %v5748
        %v5759 = vmul.f32 %v5342, %v5748
        %v5760 = vmul.f32 %v5343, %v5748
        %v5761 = vmul.f32 %v5344, %v5748
        %v5762 = vmul.f32 %v5345, %v5748
        %v5763 = vmul.f32 %v5346, %v5748
        %v5764 = vmul.f32 %v5347, %v5748
        %v5765 = vmul.f32 %v5348, %v5748
        %v5766 = vmul.f32 %v5349, %v5748
        %v5767 = vmul.f32 %v5350, %v5748
        %v5768 = vmul.f32 %v5351, %v5748
        %v5769 = vmul.f32 %v5352, %v5748
        %v5770 = vmul.f32 %v5353, %v5748
        %v5771 = vmul.f32 %v5354, %v5748
        %v5772 = vmul.f32 %v5355, %v5748
        %v5773 = vmul.f32 %v5356, %v5748
        %v5774 = vmul.f32 %v5357, %v5748
        %v5775 = vmul.f32 %v5358, %v5748
        %v5776 = vmul.f32 %v5359, %v5748
        %v5777 = vmul.f32 %v5360, %v5748
        %v5778 = vmul.f32 %v5361, %v5748
        %v5779 = vmul.f32 %v5362, %v5748
        %v5780 = vmul.f32 %v5363, %v5748
        %v5781 = vsel %vm5402, %v5749, 0.0
        %5782 = vadd.xlane.f32.xlu0 %v5781
        %v5783 = vpop.xlane.xlu0 %5782
        %v5784 = vsel %vm5402, %v5750, 0.0
        %5785 = vadd.xlane.f32.xlu0 %v5784
        %v5786 = vpop.xlane.xlu0 %5785
        %v5787 = vsel %vm5402, %v5751, 0.0
        %5788 = vadd.xlane.f32.xlu0 %v5787
        %v5789 = vpop.xlane.xlu0 %5788
        %v5790 = vsel %vm5402, %v5752, 0.0
        %5791 = vadd.xlane.f32.xlu0 %v5790
        %v5792 = vpop.xlane.xlu0 %5791
        %v5793 = vsel %vm5402, %v5753, 0.0
        %5794 = vadd.xlane.f32.xlu0 %v5793
        %v5795 = vpop.xlane.xlu0 %5794
        %v5796 = vsel %vm5402, %v5754, 0.0
        %5797 = vadd.xlane.f32.xlu0 %v5796
        %v5798 = vpop.xlane.xlu0 %5797
        %v5799 = vsel %vm5402, %v5755, 0.0
        %5800 = vadd.xlane.f32.xlu0 %v5799
        %v5801 = vpop.xlane.xlu0 %5800
        %v5802 = vsel %vm5402, %v5756, 0.0
        %5803 = vadd.xlane.f32.xlu0 %v5802
        %v5804 = vpop.xlane.xlu0 %5803
        %v5805 = vsel %vm5402, %v5757, 0.0
        %5806 = vadd.xlane.f32.xlu0 %v5805
        %v5807 = vpop.xlane.xlu0 %5806
        %v5808 = vsel %vm5402, %v5758, 0.0
        %5809 = vadd.xlane.f32.xlu0 %v5808
        %v5810 = vpop.xlane.xlu0 %5809
        %v5811 = vsel %vm5402, %v5759, 0.0
        %5812 = vadd.xlane.f32.xlu0 %v5811
        %v5813 = vpop.xlane.xlu0 %5812
        %v5814 = vsel %vm5402, %v5760, 0.0
        %5815 = vadd.xlane.f32.xlu0 %v5814
        %v5816 = vpop.xlane.xlu0 %5815
        %v5817 = vsel %vm5402, %v5761, 0.0
        %5818 = vadd.xlane.f32.xlu0 %v5817
        %v5819 = vpop.xlane.xlu0 %5818
        %v5820 = vsel %vm5402, %v5762, 0.0
        %5821 = vadd.xlane.f32.xlu0 %v5820
        %v5822 = vpop.xlane.xlu0 %5821
        %v5823 = vsel %vm5402, %v5763, 0.0
        %5824 = vadd.xlane.f32.xlu0 %v5823
        %v5825 = vpop.xlane.xlu0 %5824
        %v5826 = vsel %vm5402, %v5764, 0.0
        %5827 = vadd.xlane.f32.xlu0 %v5826
        %v5828 = vpop.xlane.xlu0 %5827
        %v5829 = vsel %vm5402, %v5765, 0.0
        %5830 = vadd.xlane.f32.xlu0 %v5829
        %v5831 = vpop.xlane.xlu0 %5830
        %v5832 = vsel %vm5402, %v5766, 0.0
        %5833 = vadd.xlane.f32.xlu0 %v5832
        %v5834 = vpop.xlane.xlu0 %5833
        %v5835 = vsel %vm5402, %v5767, 0.0
        %5836 = vadd.xlane.f32.xlu0 %v5835
        %v5837 = vpop.xlane.xlu0 %5836
        %v5838 = vsel %vm5402, %v5768, 0.0
        %5839 = vadd.xlane.f32.xlu0 %v5838
        %v5840 = vpop.xlane.xlu0 %5839
        %v5841 = vsel %vm5402, %v5769, 0.0
        %5842 = vadd.xlane.f32.xlu0 %v5841
        %v5843 = vpop.xlane.xlu0 %5842
        %v5844 = vsel %vm5402, %v5770, 0.0
        %5845 = vadd.xlane.f32.xlu0 %v5844
        %v5846 = vpop.xlane.xlu0 %5845
        %v5847 = vsel %vm5402, %v5771, 0.0
        %5848 = vadd.xlane.f32.xlu0 %v5847
        %v5849 = vpop.xlane.xlu0 %5848
        %v5850 = vsel %vm5402, %v5772, 0.0
        %5851 = vadd.xlane.f32.xlu0 %v5850
        %v5852 = vpop.xlane.xlu0 %5851
        %v5853 = vsel %vm5402, %v5773, 0.0
        %5854 = vadd.xlane.f32.xlu0 %v5853
        %v5855 = vpop.xlane.xlu0 %5854
        %v5856 = vsel %vm5402, %v5774, 0.0
        %5857 = vadd.xlane.f32.xlu0 %v5856
        %v5858 = vpop.xlane.xlu0 %5857
        %v5859 = vsel %vm5402, %v5775, 0.0
        %5860 = vadd.xlane.f32.xlu0 %v5859
        %v5861 = vpop.xlane.xlu0 %5860
        %v5862 = vsel %vm5402, %v5776, 0.0
        %5863 = vadd.xlane.f32.xlu0 %v5862
        %v5864 = vpop.xlane.xlu0 %5863
        %v5865 = vsel %vm5402, %v5777, 0.0
        %5866 = vadd.xlane.f32.xlu0 %v5865
        %v5867 = vpop.xlane.xlu0 %5866
        %v5868 = vsel %vm5402, %v5778, 0.0
        %5869 = vadd.xlane.f32.xlu0 %v5868
        %v5870 = vpop.xlane.xlu0 %5869
        %v5871 = vsel %vm5402, %v5779, 0.0
        %5872 = vadd.xlane.f32.xlu0 %v5871
        %v5873 = vpop.xlane.xlu0 %5872
        %v5874 = vsel %vm5402, %v5780, 0.0
        %5875 = vadd.xlane.f32.xlu0 %v5874
        %v5876 = vpop.xlane.xlu0 %5875
        %5877 = vset.pattern.permute.xlu0 1
        %5878 = vperm.xlu0 %5877, %v5503
        %v5879 = vpop.permute.xlu0 %5878
        %v5881 = vadd.f32 %v5783, %v5879
        %v5882 = vadd.f32 %v5786, %v5879
        %v5883 = vadd.f32 %v5789, %v5879
        %v5884 = vadd.f32 %v5792, %v5879
        %v5885 = vadd.f32 %v5795, %v5879
        %v5886 = vadd.f32 %v5798, %v5879
        %v5887 = vadd.f32 %v5801, %v5879
        %v5888 = vadd.f32 %v5804, %v5879
        %v5889 = vadd.f32 %v5807, %v5879
        %v5890 = vadd.f32 %v5810, %v5879
        %v5891 = vadd.f32 %v5813, %v5879
        %v5892 = vadd.f32 %v5816, %v5879
        %v5893 = vadd.f32 %v5819, %v5879
        %v5894 = vadd.f32 %v5822, %v5879
        %v5895 = vadd.f32 %v5825, %v5879
        %v5896 = vadd.f32 %v5828, %v5879
        %v5897 = vadd.f32 %v5831, %v5879
        %v5898 = vadd.f32 %v5834, %v5879
        %v5899 = vadd.f32 %v5837, %v5879
        %v5900 = vadd.f32 %v5840, %v5879
        %v5901 = vadd.f32 %v5843, %v5879
        %v5902 = vadd.f32 %v5846, %v5879
        %v5903 = vadd.f32 %v5849, %v5879
        %v5904 = vadd.f32 %v5852, %v5879
        %v5905 = vadd.f32 %v5855, %v5879
        %v5906 = vadd.f32 %v5858, %v5879
        %v5907 = vadd.f32 %v5861, %v5879
        %v5908 = vadd.f32 %v5864, %v5879
        %v5909 = vadd.f32 %v5867, %v5879
        %v5910 = vadd.f32 %v5870, %v5879
        %v5911 = vadd.f32 %v5873, %v5879
        %v5912 = vadd.f32 %v5876, %v5879
        %v5945 = vlaneseq
        %v5946 = vshrl.u32 %v5945, 7
        %v5947 = vsub.s32 %v5573, %v5946
        %v5948 = vrot.slane %v5881, %v5947
        %v5949 = vlaneseq
        %v5950 = vshrl.u32 %v5949, 7
        %v5951 = vsub.s32 %v5578, %v5950
        %v5952 = vrot.slane %v5882, %v5951
        %v5953 = vsel %vm5583, %v5952, %v5948
        %v5954 = vlaneseq
        %v5955 = vshrl.u32 %v5954, 7
        %v5956 = vsub.s32 %v5573, %v5955
        %v5957 = vrot.slane %v5883, %v5956
        %v5958 = vlaneseq
        %v5959 = vshrl.u32 %v5958, 7
        %v5960 = vsub.s32 %v5578, %v5959
        %v5961 = vrot.slane %v5884, %v5960
        %v5962 = vsel %vm5583, %v5961, %v5957
        %v5963 = vlaneseq
        %v5964 = vshrl.u32 %v5963, 7
        %v5965 = vsub.s32 %v5573, %v5964
        %v5966 = vrot.slane %v5885, %v5965
        %v5967 = vlaneseq
        %v5968 = vshrl.u32 %v5967, 7
        %v5969 = vsub.s32 %v5578, %v5968
        %v5970 = vrot.slane %v5886, %v5969
        %v5971 = vsel %vm5583, %v5970, %v5966
        %v5972 = vlaneseq
        %v5973 = vshrl.u32 %v5972, 7
        %v5974 = vsub.s32 %v5573, %v5973
        %v5975 = vrot.slane %v5887, %v5974
        %v5976 = vlaneseq
        %v5977 = vshrl.u32 %v5976, 7
        %v5978 = vsub.s32 %v5578, %v5977
        %v5979 = vrot.slane %v5888, %v5978
        %v5980 = vsel %vm5583, %v5979, %v5975
        %v5981 = vlaneseq
        %v5982 = vshrl.u32 %v5981, 7
        %v5983 = vsub.s32 %v5573, %v5982
        %v5984 = vrot.slane %v5889, %v5983
        %v5985 = vlaneseq
        %v5986 = vshrl.u32 %v5985, 7
        %v5987 = vsub.s32 %v5578, %v5986
        %v5988 = vrot.slane %v5890, %v5987
        %v5989 = vsel %vm5583, %v5988, %v5984
        %v5990 = vlaneseq
        %v5991 = vshrl.u32 %v5990, 7
        %v5992 = vsub.s32 %v5573, %v5991
        %v5993 = vrot.slane %v5891, %v5992
        %v5994 = vlaneseq
        %v5995 = vshrl.u32 %v5994, 7
        %v5996 = vsub.s32 %v5578, %v5995
        %v5997 = vrot.slane %v5892, %v5996
        %v5998 = vsel %vm5583, %v5997, %v5993
        %v5999 = vlaneseq
        %v6000 = vshrl.u32 %v5999, 7
        %v6001 = vsub.s32 %v5573, %v6000
        %v6002 = vrot.slane %v5893, %v6001
        %v6003 = vlaneseq
        %v6004 = vshrl.u32 %v6003, 7
        %v6005 = vsub.s32 %v5578, %v6004
        %v6006 = vrot.slane %v5894, %v6005
        %v6007 = vsel %vm5583, %v6006, %v6002
        %v6008 = vlaneseq
        %v6009 = vshrl.u32 %v6008, 7
        %v6010 = vsub.s32 %v5573, %v6009
        %v6011 = vrot.slane %v5895, %v6010
        %v6012 = vlaneseq
        %v6013 = vshrl.u32 %v6012, 7
        %v6014 = vsub.s32 %v5578, %v6013
        %v6015 = vrot.slane %v5896, %v6014
        %v6016 = vsel %vm5583, %v6015, %v6011
        %v6017 = vlaneseq
        %v6018 = vshrl.u32 %v6017, 7
        %v6019 = vsub.s32 %v5573, %v6018
        %v6020 = vrot.slane %v5897, %v6019
        %v6021 = vlaneseq
        %v6022 = vshrl.u32 %v6021, 7
        %v6023 = vsub.s32 %v5578, %v6022
        %v6024 = vrot.slane %v5898, %v6023
        %v6025 = vsel %vm5583, %v6024, %v6020
        %v6026 = vlaneseq
        %v6027 = vshrl.u32 %v6026, 7
        %v6028 = vsub.s32 %v5573, %v6027
        %v6029 = vrot.slane %v5899, %v6028
        %v6030 = vlaneseq
        %v6031 = vshrl.u32 %v6030, 7
        %v6032 = vsub.s32 %v5578, %v6031
        %v6033 = vrot.slane %v5900, %v6032
        %v6034 = vsel %vm5583, %v6033, %v6029
        %v6035 = vlaneseq
        %v6036 = vshrl.u32 %v6035, 7
        %v6037 = vsub.s32 %v5573, %v6036
        %v6038 = vrot.slane %v5901, %v6037
        %v6039 = vlaneseq
        %v6040 = vshrl.u32 %v6039, 7
        %v6041 = vsub.s32 %v5578, %v6040
        %v6042 = vrot.slane %v5902, %v6041
        %v6043 = vsel %vm5583, %v6042, %v6038
        %v6044 = vlaneseq
        %v6045 = vshrl.u32 %v6044, 7
        %v6046 = vsub.s32 %v5573, %v6045
        %v6047 = vrot.slane %v5903, %v6046
        %v6048 = vlaneseq
        %v6049 = vshrl.u32 %v6048, 7
        %v6050 = vsub.s32 %v5578, %v6049
        %v6051 = vrot.slane %v5904, %v6050
        %v6052 = vsel %vm5583, %v6051, %v6047
        %v6053 = vlaneseq
        %v6054 = vshrl.u32 %v6053, 7
        %v6055 = vsub.s32 %v5573, %v6054
        %v6056 = vrot.slane %v5905, %v6055
        %v6057 = vlaneseq
        %v6058 = vshrl.u32 %v6057, 7
        %v6059 = vsub.s32 %v5578, %v6058
        %v6060 = vrot.slane %v5906, %v6059
        %v6061 = vsel %vm5583, %v6060, %v6056
        %v6062 = vlaneseq
        %v6063 = vshrl.u32 %v6062, 7
        %v6064 = vsub.s32 %v5573, %v6063
        %v6065 = vrot.slane %v5907, %v6064
        %v6066 = vlaneseq
        %v6067 = vshrl.u32 %v6066, 7
        %v6068 = vsub.s32 %v5578, %v6067
        %v6069 = vrot.slane %v5908, %v6068
        %v6070 = vsel %vm5583, %v6069, %v6065
        %v6071 = vlaneseq
        %v6072 = vshrl.u32 %v6071, 7
        %v6073 = vsub.s32 %v5573, %v6072
        %v6074 = vrot.slane %v5909, %v6073
        %v6075 = vlaneseq
        %v6076 = vshrl.u32 %v6075, 7
        %v6077 = vsub.s32 %v5578, %v6076
        %v6078 = vrot.slane %v5910, %v6077
        %v6079 = vsel %vm5583, %v6078, %v6074
        %v6080 = vlaneseq
        %v6081 = vshrl.u32 %v6080, 7
        %v6082 = vsub.s32 %v5573, %v6081
        %v6083 = vrot.slane %v5911, %v6082
        %v6084 = vlaneseq
        %v6085 = vshrl.u32 %v6084, 7
        %v6086 = vsub.s32 %v5578, %v6085
        %v6087 = vrot.slane %v5912, %v6086
        %v6088 = vsel %vm5583, %v6087, %v6083
        %v6089 = vsel %vm5720, %v5962, %v5953
        %v6090 = vsel %vm5722, %v5971, %v6089
        %v6091 = vsel %vm5724, %v5980, %v6090
        %v6092 = vsel %vm5726, %v5989, %v6091
        %v6093 = vsel %vm5728, %v5998, %v6092
        %v6094 = vsel %vm5730, %v6007, %v6093
        %v6095 = vsel %vm5732, %v6016, %v6094
        %v6096 = vsel %vm5720, %v6034, %v6025
        %v6097 = vsel %vm5722, %v6043, %v6096
        %v6098 = vsel %vm5724, %v6052, %v6097
        %v6099 = vsel %vm5726, %v6061, %v6098
        %v6100 = vsel %vm5728, %v6070, %v6099
        %v6101 = vsel %vm5730, %v6079, %v6100
        %v6102 = vsel %vm5732, %v6088, %v6101
        %s6105 = scalar_lea.vmem %s1635, 16 [#allocation59]
        %6106 = vst.msk [vmem:[%s6105] sm:$0xff] %vm5402, %v6095
        %6107 = vst.msk [vmem:[%s6105 + $0x8] sm:$0xff] %vm5402, %v6102
        %s6108 = sand.u32 %s907, 1
        %s6109 = scalar_lea.sflag [#allocation4], %s6108
        %s6110 = sand.u32 %s907, 1
        %s6111 = smul.addr %s6110, 32
        %s6112 = scalar_lea.vmem [#allocation59], %s6111
        // Predicated region
        $region317: #{tpu_custom_call.1} parent=167 // pred_check
          %p6113 = pneg %p917
        $region318: #{tpu_custom_call.1} parent=167 // pred_check_branch
          %6115 = sbr.rel (%p6113) target = $region320
        $region319: #{tpu_custom_call.1} parent=167 // pred_region
          %s6117 = ssub.s32 512, 512
          %6118 = vsyncadd %s6109, %s6117
          %s6119 = smul.addr %s112, 4
          %s6120 = smul.addr %s6119, 128
          %s6121 = scalar_lea.hbm %s75, %s6120
          %s6122 = sshll.u32 %s6112, 4
          %s6123 = int_to_ptr.vmem [resolvable:$true] %s6122
          %6128 = dma.vmem_to_hbm [thread:$0]  %s6123, 512, %s6121, %s6109, 128, 128, 8
        $region320: #{tpu_custom_call.1} parent=167 // pred_fallthru
          _
      $region168: #{tpu_custom_call.1} parent=5 // pred_fallthru
        _
      %p6129 = scmp.le.s32.totalorder 2, %s107
      // Predicated region
      $region321: #{tpu_custom_call.1} parent=5 // pred_check
        %p6130 = pneg %p6129
      $region322: #{tpu_custom_call.1} parent=5 // pred_check_branch
        %6132 = sbr.rel (%p6130) target = $region324
      $region323: #{tpu_custom_call.1} parent=5 // pred_region
        %s6133 = ssub.s32 %s107, 2
        // Predicated region
        $region325: #{tpu_custom_call.1} parent=323 // pred_check
          %p6134 = pneg %p923
        $region326: #{tpu_custom_call.1} parent=323 // pred_check_branch
          %6136 = sbr.rel (%p6134) target = $region328
        $region327: #{tpu_custom_call.1} parent=323 // pred_region
          %s6137 = sand.u32 %s908, 1
          %s6138 = scalar_lea.sflag [#allocation4], %s6137
          %s6139 = sand.u32 %s908, 1
          %s6140 = smul.addr %s6139, 32
          %s6141 = scalar_lea.vmem [#allocation59], %s6140
          %6142 = dma.done %s6138, 512
        $region328: #{tpu_custom_call.1} parent=323 // pred_fallthru
          _
      $region324: #{tpu_custom_call.1} parent=5 // pred_fallthru
        _
    $region6: #{tpu_custom_call.1} parent=1 // loop_footer
      %s111 = sadd.s32 1, %s107
    $region7: #{tpu_custom_call.1} parent=1 // loop_footer_branch
      %106 = sbr.rel target = $region3
    $region8: #{tpu_custom_call.1} parent=1 // loop_exit
      _
    %6143 = vsyncpa [#allocation3], 1
    %s6144 = scalar_lea.sflag [#allocation3], 1
    %6145 = vsyncpa %s6144, 1
    %6146 = vsyncpa [#allocation6], 1
    %s6147 = scalar_lea.sflag [#allocation6], 1
    %6148 = vsyncpa %s6147, 1
    %6149 = vsyncpa [#allocation9], 1
    %6150 = vsyncpa [#allocation12], 1
    %6151 = vsyncpa [#allocation15], 1
    %6152 = vsyncpa [#allocation18], 1
    %6153 = vsyncpa [#allocation21], 1
    %6154 = vsyncpa [#allocation24], 1
    %6155 = vsyncpa [#allocation27], 1
    %6156 = vsyncpa [#allocation30], 1
    %6157 = vsyncpa [#allocation33], 1
    %6158 = vsyncpa [#allocation36], 1
    %6159 = vsyncpa [#allocation39], 1
    %6160 = vsyncpa [#allocation42], 1
    %6161 = vsyncpa [#allocation45], 1
    %6162 = vsyncpa [#allocation48], 1
    %6163 = vsyncpa [#allocation51], 1
    %6164 = vsyncpa [#allocation54], 1
    %6165 = vsyncpa [#allocation57], 1
    %6166 = vsyncpa [#allocation4], 1
    %s6167 = scalar_lea.sflag [#allocation4], 1
    %6168 = vsyncpa %s6167, 1

</llo_original>
